<compile_context>
chip_gen: v5e
topology: v5e:2x2
jax: 0.10.0
libtpu: 0.0.40
codegen_flags: <defaults>
</compile_context>

<pallas_src>
import jax
import jax.numpy as jnp
from jax.experimental import pallas as pl
from jax.experimental.pallas import tpu as pltpu  # noqa: F401  (TPU backend)


VOCAB = 80
EMB = 8
HID = 256
OUT = 80
OUT_PAD = 128   # output dim padded 80 -> 128 (lane-dense store)


# ----------------------------------------------------------------------------
# Kernel: 2-layer LSTM recurrence over all T steps + fused output Linear.
# ----------------------------------------------------------------------------
def _lstm2_fused_kernel(gx_ref, whh1_ref, wih2_ref, b2_ref, whh2_ref,
                        wo_ref, bo_ref, o_ref):
    """Single invocation; everything resident in VMEM.

    gx_ref : (T, Bp, 4H) f32  precomputed layer-1 gates (emb@Wih1^T + b1, per tok)
    whh1   : (H, 4H)  bf16    layer-1 recurrent weights (transposed)
    wih2   : (H, 4H)  bf16    layer-2 input weights (transposed)
    b2     : (1, 4H)  f32     layer-2 bias (b_ih2 + b_hh2)
    whh2   : (H, 4H)  bf16    layer-2 recurrent weights (transposed)
    wo     : (H, OUT_PAD) bf16, bo : (1, OUT_PAD) f32   final Linear (padded)
    o_ref  : (Bp, OUT_PAD) f32  logits for the last time step
    """
    T, Bp, _ = gx_ref.shape
    H = whh1_ref.shape[0]

    # Weights loaded once; reused by every unrolled step.
    whh1 = whh1_ref[...]
    wih2 = wih2_ref[...]
    whh2 = whh2_ref[...]
    b2 = b2_ref[...]

    def cell(gates, c_prev):
        # PyTorch gate order: i, f, g, o (lane-aligned 256-wide slices).
        i = jax.nn.sigmoid(gates[:, 0 * H:1 * H])
        f = jax.nn.sigmoid(gates[:, 1 * H:2 * H])
        g = jnp.tanh(gates[:, 2 * H:3 * H])
        o = jax.nn.sigmoid(gates[:, 3 * H:4 * H])
        c = f * c_prev + i * g
        h = o * jnp.tanh(c)
        return h, c

    def step(t, carry):
        h1, c1, h2, c2 = carry                      # h* bf16, c* f32
        # ---- layer 1 ----
        g1 = gx_ref[t] + jnp.dot(h1, whh1, preferred_element_type=jnp.float32)
        h1f, c1 = cell(g1, c1)
        h1 = h1f.astype(jnp.bfloat16)
        # ---- layer 2 (input = layer-1 h at this step) ----
        g2 = (jnp.dot(h1, wih2, preferred_element_type=jnp.float32)
              + b2
              + jnp.dot(h2, whh2, preferred_element_type=jnp.float32))
        h2f, c2 = cell(g2, c2)
        h2 = h2f.astype(jnp.bfloat16)
        return h1, c1, h2, c2

    init = (jnp.zeros((Bp, H), jnp.bfloat16),
            jnp.zeros((Bp, H), jnp.float32),
            jnp.zeros((Bp, H), jnp.bfloat16),
            jnp.zeros((Bp, H), jnp.float32))
    _, _, h2, _ = jax.lax.fori_loop(0, T, step, init, unroll=True)

    # ---- fused output Linear on the last step (dropout = identity) ----
    o_ref[...] = (jnp.dot(h2, wo_ref[...], preferred_element_type=jnp.float32)
                  + bo_ref[...])


# ----------------------------------------------------------------------------
# Wrappers
# ----------------------------------------------------------------------------
def lstm2_fused(gx1, whh1_t, wih2_t, b2, whh2_t, wo_t, bo):
    """gx1: (T, Bp, 4H) f32.  Returns padded logits (Bp, OUT_PAD) f32."""
    T, Bp, G = gx1.shape
    # Grid-less call: every operand is a full VMEM block, no pipelining needed
    # (total footprint < 2 MiB on every generation, incl. v7x's 64 MiB VMEM).
    return pl.pallas_call(
        _lstm2_fused_kernel,
        out_shape=jax.ShapeDtypeStruct((Bp, OUT_PAD), jnp.float32),
    )(gx1, whh1_t, wih2_t, b2.reshape(1, G), whh2_t, wo_t,
      bo.reshape(1, OUT_PAD))


def lstm_forward(tokens, p):
    """tokens: (B, T) int32 in [0, 80). Returns logits (B, 80) f32."""
    B, T = tokens.shape
    assert T >= 1, "sequence length must be >= 1"
    # Pad batch to the f32 sublane multiple so every kernel tile is unmasked.
    Bp = max(8, ((B + 7) // 8) * 8)
    tok = tokens
    if Bp != B:
        tok = jnp.concatenate([tok, jnp.zeros((Bp - B, T), tok.dtype)], axis=0)
    # Fused Embedding + layer-1 input projection: one time-major gather.
    gx1 = p["gate_tab"][tok.T]                                    # (T, Bp, 4H)
    logits_pad = lstm2_fused(gx1, p["whh1_t"], p["wih2_t"], p["b2"],
                             p["whh2_t"], p["wo_t"], p["bo"])
    return logits_pad[:B, :OUT]                                   # (B, 80)


# ----------------------------------------------------------------------------
# Deterministic parameter construction + example run
# ----------------------------------------------------------------------------
def make_params(key):
    ks = jax.random.split(key, 11)
    s = 0.1

    emb = jax.random.normal(ks[0], (VOCAB, EMB), jnp.float32)
    # torch LSTM params: weight_ih_l0 (4H, E), weight_hh_l0 (4H, H), biases (4H,)
    wih1 = jax.random.normal(ks[1], (4 * HID, EMB), jnp.float32) * s
    whh1 = jax.random.normal(ks[2], (4 * HID, HID), jnp.float32) * s
    bih1 = jax.random.normal(ks[3], (4 * HID,), jnp.float32) * s
    bhh1 = jax.random.normal(ks[4], (4 * HID,), jnp.float32) * s
    wih2 = jax.random.normal(ks[5], (4 * HID, HID), jnp.float32) * s
    whh2 = jax.random.normal(ks[6], (4 * HID, HID), jnp.float32) * s
    bih2 = jax.random.normal(ks[7], (4 * HID,), jnp.float32) * s
    bhh2 = jax.random.normal(ks[8], (4 * HID,), jnp.float32) * s
    # out Linear(256, 80): weight (80, 256), bias (80,) -> padded to 128 lanes
    wo = jax.random.normal(ks[9], (OUT, HID), jnp.float32) * s
    bo = jax.random.normal(ks[10], (OUT,), jnp.float32) * s

    # Fused embedding + layer-1 input projection lookup table (f32, exact).
    gate_tab = emb @ wih1.T + (bih1 + bhh1)                 # (80, 4H)

    wo_t = jnp.zeros((HID, OUT_PAD), jnp.float32).at[:, :OUT].set(wo.T)
    bo_p = jnp.zeros((OUT_PAD,), jnp.float32).at[:OUT].set(bo)

    return {
        "gate_tab": gate_tab.astype(jnp.float32),       # (80, 1024) f32
        "whh1_t": whh1.T.astype(jnp.bfloat16),          # (256, 1024) bf16
        "wih2_t": wih2.T.astype(jnp.bfloat16),          # (256, 1024) bf16
        "b2": (bih2 + bhh2).astype(jnp.float32),        # (1024,) f32
        "whh2_t": whh2.T.astype(jnp.bfloat16),          # (256, 1024) bf16
        "wo_t": wo_t.astype(jnp.bfloat16),              # (256, 128) bf16
        "bo": bo_p,                                     # (128,) f32
    }


if __name__ == "__main__":
    key = jax.random.PRNGKey(0)
    kp, kx = jax.random.split(key, 2)
    B, T = 2, 8
    params = make_params(kp)
    tokens = jax.random.randint(kx, (B, T), 0, VOCAB, jnp.int32)

    fwd = jax.jit(lstm_forward)
    logits = fwd(tokens, params)
    jax.block_until_ready(logits)
    assert logits.shape == (B, OUT) and logits.dtype == jnp.float32
    assert bool(jnp.all(jnp.isfinite(logits)))
    print("KERNEL_OK")
</pallas_src>

<mosaic_0001>
module attributes {stable_mosaic.version = 11 : i64} {
  func.func @_lstm2_fused_kernel(%arg0: memref<8x8x1024xf32, #tpu.memory_space<vmem>>, %arg1: memref<256x1024xbf16, #tpu.memory_space<vmem>>, %arg2: memref<256x1024xbf16, #tpu.memory_space<vmem>>, %arg3: memref<1x1024xf32, #tpu.memory_space<vmem>>, %arg4: memref<256x1024xbf16, #tpu.memory_space<vmem>>, %arg5: memref<256x128xbf16, #tpu.memory_space<vmem>>, %arg6: memref<1x128xf32, #tpu.memory_space<vmem>>, %arg7: memref<8x128xf32, #tpu.memory_space<vmem>>) attributes {dimension_semantics = [], scalar_prefetch = 0 : i64, scratch_operands = 0 : i64, tpu.core_type = #tpu.core_type<tc>} {
    %c0 = arith.constant 0 : index
    %c0_0 = arith.constant 0 : index
    %0 = vector.load %arg1[%c0, %c0_0] : memref<256x1024xbf16, #tpu.memory_space<vmem>>, vector<256x1024xbf16>
    %c0_1 = arith.constant 0 : index
    %c0_2 = arith.constant 0 : index
    %1 = vector.load %arg2[%c0_1, %c0_2] : memref<256x1024xbf16, #tpu.memory_space<vmem>>, vector<256x1024xbf16>
    %c0_3 = arith.constant 0 : index
    %c0_4 = arith.constant 0 : index
    %2 = vector.load %arg4[%c0_3, %c0_4] : memref<256x1024xbf16, #tpu.memory_space<vmem>>, vector<256x1024xbf16>
    %c0_5 = arith.constant 0 : index
    %c0_6 = arith.constant 0 : index
    %3 = vector.load %arg3[%c0_5, %c0_6] : memref<1x1024xf32, #tpu.memory_space<vmem>>, vector<1x1024xf32>
    %cst = arith.constant 0.000000e+00 : bf16
    %4 = vector.broadcast %cst : bf16 to vector<8x256xbf16>
    %cst_7 = arith.constant 0.000000e+00 : f32
    %5 = vector.broadcast %cst_7 : f32 to vector<8x256xf32>
    %cst_8 = arith.constant 0.000000e+00 : bf16
    %6 = vector.broadcast %cst_8 : bf16 to vector<8x256xbf16>
    %cst_9 = arith.constant 0.000000e+00 : f32
    %7 = vector.broadcast %cst_9 : f32 to vector<8x256xf32>
    %c0_i32 = arith.constant 0 : i32
    %8 = arith.index_cast %c0_i32 : i32 to index
    %c0_10 = arith.constant 0 : index
    %c0_11 = arith.constant 0 : index
    %9 = vector.load %arg0[%8, %c0_10, %c0_11] : memref<8x8x1024xf32, #tpu.memory_space<vmem>>, vector<1x8x1024xf32>
    %10 = vector.shape_cast %9 : vector<1x8x1024xf32> to vector<8x1024xf32>
    %cst_12 = arith.constant dense<0.000000e+00> : vector<8x1024xf32>
    %11 = tpu.matmul %4, %0, %cst_12 {dimension_numbers = #tpu.dot_dimension_numbers<[1], [0], [0], [1], [0, 0, 1, 1], [], []>} : vector<8x256xbf16>, vector<256x1024xbf16>, vector<8x1024xf32> -> vector<8x1024xf32>
    %12 = arith.addf %10, %11 : vector<8x1024xf32>
    %13 = vector.extract_strided_slice %12 {offsets = [0, 0], sizes = [8, 256], strides = [1, 1]} : vector<8x1024xf32> to vector<8x256xf32>
    %14 = arith.negf %13 : vector<8x256xf32>
    %15 = math.exp %14 : vector<8x256xf32>
    %cst_13 = arith.constant 1.000000e+00 : f32
    %16 = vector.broadcast %cst_13 : f32 to vector<8x256xf32>
    %17 = arith.addf %16, %15 : vector<8x256xf32>
    %18 = arith.divf %16, %17 : vector<8x256xf32>
    %19 = vector.extract_strided_slice %12 {offsets = [0, 256], sizes = [8, 256], strides = [1, 1]} : vector<8x1024xf32> to vector<8x256xf32>
    %20 = arith.negf %19 : vector<8x256xf32>
    %21 = math.exp %20 : vector<8x256xf32>
    %cst_14 = arith.constant 1.000000e+00 : f32
    %22 = vector.broadcast %cst_14 : f32 to vector<8x256xf32>
    %23 = arith.addf %22, %21 : vector<8x256xf32>
    %24 = arith.divf %22, %23 : vector<8x256xf32>
    %25 = vector.extract_strided_slice %12 {offsets = [0, 512], sizes = [8, 256], strides = [1, 1]} : vector<8x1024xf32> to vector<8x256xf32>
    %26 = math.tanh %25 : vector<8x256xf32>
    %27 = vector.extract_strided_slice %12 {offsets = [0, 768], sizes = [8, 256], strides = [1, 1]} : vector<8x1024xf32> to vector<8x256xf32>
    %28 = arith.negf %27 : vector<8x256xf32>
    %29 = math.exp %28 : vector<8x256xf32>
    %cst_15 = arith.constant 1.000000e+00 : f32
    %30 = vector.broadcast %cst_15 : f32 to vector<8x256xf32>
    %31 = arith.addf %30, %29 : vector<8x256xf32>
    %32 = arith.divf %30, %31 : vector<8x256xf32>
    %33 = arith.mulf %24, %5 : vector<8x256xf32>
    %34 = arith.mulf %18, %26 : vector<8x256xf32>
    %35 = arith.addf %33, %34 : vector<8x256xf32>
    %36 = math.tanh %35 : vector<8x256xf32>
    %37 = arith.mulf %32, %36 : vector<8x256xf32>
    %38 = arith.truncf %37 : vector<8x256xf32> to vector<8x256xbf16>
    %cst_16 = arith.constant dense<0.000000e+00> : vector<8x1024xf32>
    %39 = tpu.matmul %38, %1, %cst_16 {dimension_numbers = #tpu.dot_dimension_numbers<[1], [0], [0], [1], [0, 0, 1, 1], [], []>} : vector<8x256xbf16>, vector<256x1024xbf16>, vector<8x1024xf32> -> vector<8x1024xf32>
    %40 = vector.broadcast %3 : vector<1x1024xf32> to vector<8x1024xf32>
    %41 = arith.addf %39, %40 : vector<8x1024xf32>
    %cst_17 = arith.constant dense<0.000000e+00> : vector<8x1024xf32>
    %42 = tpu.matmul %6, %2, %cst_17 {dimension_numbers = #tpu.dot_dimension_numbers<[1], [0], [0], [1], [0, 0, 1, 1], [], []>} : vector<8x256xbf16>, vector<256x1024xbf16>, vector<8x1024xf32> -> vector<8x1024xf32>
    %43 = arith.addf %41, %42 : vector<8x1024xf32>
    %44 = vector.extract_strided_slice %43 {offsets = [0, 0], sizes = [8, 256], strides = [1, 1]} : vector<8x1024xf32> to vector<8x256xf32>
    %45 = arith.negf %44 : vector<8x256xf32>
    %46 = math.exp %45 : vector<8x256xf32>
    %cst_18 = arith.constant 1.000000e+00 : f32
    %47 = vector.broadcast %cst_18 : f32 to vector<8x256xf32>
    %48 = arith.addf %47, %46 : vector<8x256xf32>
    %49 = arith.divf %47, %48 : vector<8x256xf32>
    %50 = vector.extract_strided_slice %43 {offsets = [0, 256], sizes = [8, 256], strides = [1, 1]} : vector<8x1024xf32> to vector<8x256xf32>
    %51 = arith.negf %50 : vector<8x256xf32>
    %52 = math.exp %51 : vector<8x256xf32>
    %cst_19 = arith.constant 1.000000e+00 : f32
    %53 = vector.broadcast %cst_19 : f32 to vector<8x256xf32>
    %54 = arith.addf %53, %52 : vector<8x256xf32>
    %55 = arith.divf %53, %54 : vector<8x256xf32>
    %56 = vector.extract_strided_slice %43 {offsets = [0, 512], sizes = [8, 256], strides = [1, 1]} : vector<8x1024xf32> to vector<8x256xf32>
    %57 = math.tanh %56 : vector<8x256xf32>
    %58 = vector.extract_strided_slice %43 {offsets = [0, 768], sizes = [8, 256], strides = [1, 1]} : vector<8x1024xf32> to vector<8x256xf32>
    %59 = arith.negf %58 : vector<8x256xf32>
    %60 = math.exp %59 : vector<8x256xf32>
    %cst_20 = arith.constant 1.000000e+00 : f32
    %61 = vector.broadcast %cst_20 : f32 to vector<8x256xf32>
    %62 = arith.addf %61, %60 : vector<8x256xf32>
    %63 = arith.divf %61, %62 : vector<8x256xf32>
    %64 = arith.mulf %55, %7 : vector<8x256xf32>
    %65 = arith.mulf %49, %57 : vector<8x256xf32>
    %66 = arith.addf %64, %65 : vector<8x256xf32>
    %67 = math.tanh %66 : vector<8x256xf32>
    %68 = arith.mulf %63, %67 : vector<8x256xf32>
    %69 = arith.truncf %68 : vector<8x256xf32> to vector<8x256xbf16>
    %c1_i32 = arith.constant 1 : i32
    %70 = arith.index_cast %c1_i32 : i32 to index
    %c0_21 = arith.constant 0 : index
    %c0_22 = arith.constant 0 : index
    %71 = vector.load %arg0[%70, %c0_21, %c0_22] : memref<8x8x1024xf32, #tpu.memory_space<vmem>>, vector<1x8x1024xf32>
    %72 = vector.shape_cast %71 : vector<1x8x1024xf32> to vector<8x1024xf32>
    %cst_23 = arith.constant dense<0.000000e+00> : vector<8x1024xf32>
    %73 = tpu.matmul %38, %0, %cst_23 {dimension_numbers = #tpu.dot_dimension_numbers<[1], [0], [0], [1], [0, 0, 1, 1], [], []>} : vector<8x256xbf16>, vector<256x1024xbf16>, vector<8x1024xf32> -> vector<8x1024xf32>
    %74 = arith.addf %72, %73 : vector<8x1024xf32>
    %75 = vector.extract_strided_slice %74 {offsets = [0, 0], sizes = [8, 256], strides = [1, 1]} : vector<8x1024xf32> to vector<8x256xf32>
    %76 = arith.negf %75 : vector<8x256xf32>
    %77 = math.exp %76 : vector<8x256xf32>
    %cst_24 = arith.constant 1.000000e+00 : f32
    %78 = vector.broadcast %cst_24 : f32 to vector<8x256xf32>
    %79 = arith.addf %78, %77 : vector<8x256xf32>
    %80 = arith.divf %78, %79 : vector<8x256xf32>
    %81 = vector.extract_strided_slice %74 {offsets = [0, 256], sizes = [8, 256], strides = [1, 1]} : vector<8x1024xf32> to vector<8x256xf32>
    %82 = arith.negf %81 : vector<8x256xf32>
    %83 = math.exp %82 : vector<8x256xf32>
    %cst_25 = arith.constant 1.000000e+00 : f32
    %84 = vector.broadcast %cst_25 : f32 to vector<8x256xf32>
    %85 = arith.addf %84, %83 : vector<8x256xf32>
    %86 = arith.divf %84, %85 : vector<8x256xf32>
    %87 = vector.extract_strided_slice %74 {offsets = [0, 512], sizes = [8, 256], strides = [1, 1]} : vector<8x1024xf32> to vector<8x256xf32>
    %88 = math.tanh %87 : vector<8x256xf32>
    %89 = vector.extract_strided_slice %74 {offsets = [0, 768], sizes = [8, 256], strides = [1, 1]} : vector<8x1024xf32> to vector<8x256xf32>
    %90 = arith.negf %89 : vector<8x256xf32>
    %91 = math.exp %90 : vector<8x256xf32>
    %cst_26 = arith.constant 1.000000e+00 : f32
    %92 = vector.broadcast %cst_26 : f32 to vector<8x256xf32>
    %93 = arith.addf %92, %91 : vector<8x256xf32>
    %94 = arith.divf %92, %93 : vector<8x256xf32>
    %95 = arith.mulf %86, %35 : vector<8x256xf32>
    %96 = arith.mulf %80, %88 : vector<8x256xf32>
    %97 = arith.addf %95, %96 : vector<8x256xf32>
    %98 = math.tanh %97 : vector<8x256xf32>
    %99 = arith.mulf %94, %98 : vector<8x256xf32>
    %100 = arith.truncf %99 : vector<8x256xf32> to vector<8x256xbf16>
    %cst_27 = arith.constant dense<0.000000e+00> : vector<8x1024xf32>
    %101 = tpu.matmul %100, %1, %cst_27 {dimension_numbers = #tpu.dot_dimension_numbers<[1], [0], [0], [1], [0, 0, 1, 1], [], []>} : vector<8x256xbf16>, vector<256x1024xbf16>, vector<8x1024xf32> -> vector<8x1024xf32>
    %102 = vector.broadcast %3 : vector<1x1024xf32> to vector<8x1024xf32>
    %103 = arith.addf %101, %102 : vector<8x1024xf32>
    %cst_28 = arith.constant dense<0.000000e+00> : vector<8x1024xf32>
    %104 = tpu.matmul %69, %2, %cst_28 {dimension_numbers = #tpu.dot_dimension_numbers<[1], [0], [0], [1], [0, 0, 1, 1], [], []>} : vector<8x256xbf16>, vector<256x1024xbf16>, vector<8x1024xf32> -> vector<8x1024xf32>
    %105 = arith.addf %103, %104 : vector<8x1024xf32>
    %106 = vector.extract_strided_slice %105 {offsets = [0, 0], sizes = [8, 256], strides = [1, 1]} : vector<8x1024xf32> to vector<8x256xf32>
    %107 = arith.negf %106 : vector<8x256xf32>
    %108 = math.exp %107 : vector<8x256xf32>
    %cst_29 = arith.constant 1.000000e+00 : f32
    %109 = vector.broadcast %cst_29 : f32 to vector<8x256xf32>
    %110 = arith.addf %109, %108 : vector<8x256xf32>
    %111 = arith.divf %109, %110 : vector<8x256xf32>
    %112 = vector.extract_strided_slice %105 {offsets = [0, 256], sizes = [8, 256], strides = [1, 1]} : vector<8x1024xf32> to vector<8x256xf32>
    %113 = arith.negf %112 : vector<8x256xf32>
    %114 = math.exp %113 : vector<8x256xf32>
    %cst_30 = arith.constant 1.000000e+00 : f32
    %115 = vector.broadcast %cst_30 : f32 to vector<8x256xf32>
    %116 = arith.addf %115, %114 : vector<8x256xf32>
    %117 = arith.divf %115, %116 : vector<8x256xf32>
    %118 = vector.extract_strided_slice %105 {offsets = [0, 512], sizes = [8, 256], strides = [1, 1]} : vector<8x1024xf32> to vector<8x256xf32>
    %119 = math.tanh %118 : vector<8x256xf32>
    %120 = vector.extract_strided_slice %105 {offsets = [0, 768], sizes = [8, 256], strides = [1, 1]} : vector<8x1024xf32> to vector<8x256xf32>
    %121 = arith.negf %120 : vector<8x256xf32>
    %122 = math.exp %121 : vector<8x256xf32>
    %cst_31 = arith.constant 1.000000e+00 : f32
    %123 = vector.broadcast %cst_31 : f32 to vector<8x256xf32>
    %124 = arith.addf %123, %122 : vector<8x256xf32>
    %125 = arith.divf %123, %124 : vector<8x256xf32>
    %126 = arith.mulf %117, %66 : vector<8x256xf32>
    %127 = arith.mulf %111, %119 : vector<8x256xf32>
    %128 = arith.addf %126, %127 : vector<8x256xf32>
    %129 = math.tanh %128 : vector<8x256xf32>
    %130 = arith.mulf %125, %129 : vector<8x256xf32>
    %131 = arith.truncf %130 : vector<8x256xf32> to vector<8x256xbf16>
    %c2_i32 = arith.constant 2 : i32
    %132 = arith.index_cast %c2_i32 : i32 to index
    %c0_32 = arith.constant 0 : index
    %c0_33 = arith.constant 0 : index
    %133 = vector.load %arg0[%132, %c0_32, %c0_33] : memref<8x8x1024xf32, #tpu.memory_space<vmem>>, vector<1x8x1024xf32>
    %134 = vector.shape_cast %133 : vector<1x8x1024xf32> to vector<8x1024xf32>
    %cst_34 = arith.constant dense<0.000000e+00> : vector<8x1024xf32>
    %135 = tpu.matmul %100, %0, %cst_34 {dimension_numbers = #tpu.dot_dimension_numbers<[1], [0], [0], [1], [0, 0, 1, 1], [], []>} : vector<8x256xbf16>, vector<256x1024xbf16>, vector<8x1024xf32> -> vector<8x1024xf32>
    %136 = arith.addf %134, %135 : vector<8x1024xf32>
    %137 = vector.extract_strided_slice %136 {offsets = [0, 0], sizes = [8, 256], strides = [1, 1]} : vector<8x1024xf32> to vector<8x256xf32>
    %138 = arith.negf %137 : vector<8x256xf32>
    %139 = math.exp %138 : vector<8x256xf32>
    %cst_35 = arith.constant 1.000000e+00 : f32
    %140 = vector.broadcast %cst_35 : f32 to vector<8x256xf32>
    %141 = arith.addf %140, %139 : vector<8x256xf32>
    %142 = arith.divf %140, %141 : vector<8x256xf32>
    %143 = vector.extract_strided_slice %136 {offsets = [0, 256], sizes = [8, 256], strides = [1, 1]} : vector<8x1024xf32> to vector<8x256xf32>
    %144 = arith.negf %143 : vector<8x256xf32>
    %145 = math.exp %144 : vector<8x256xf32>
    %cst_36 = arith.constant 1.000000e+00 : f32
    %146 = vector.broadcast %cst_36 : f32 to vector<8x256xf32>
    %147 = arith.addf %146, %145 : vector<8x256xf32>
    %148 = arith.divf %146, %147 : vector<8x256xf32>
    %149 = vector.extract_strided_slice %136 {offsets = [0, 512], sizes = [8, 256], strides = [1, 1]} : vector<8x1024xf32> to vector<8x256xf32>
    %150 = math.tanh %149 : vector<8x256xf32>
    %151 = vector.extract_strided_slice %136 {offsets = [0, 768], sizes = [8, 256], strides = [1, 1]} : vector<8x1024xf32> to vector<8x256xf32>
    %152 = arith.negf %151 : vector<8x256xf32>
    %153 = math.exp %152 : vector<8x256xf32>
    %cst_37 = arith.constant 1.000000e+00 : f32
    %154 = vector.broadcast %cst_37 : f32 to vector<8x256xf32>
    %155 = arith.addf %154, %153 : vector<8x256xf32>
    %156 = arith.divf %154, %155 : vector<8x256xf32>
    %157 = arith.mulf %148, %97 : vector<8x256xf32>
    %158 = arith.mulf %142, %150 : vector<8x256xf32>
    %159 = arith.addf %157, %158 : vector<8x256xf32>
    %160 = math.tanh %159 : vector<8x256xf32>
    %161 = arith.mulf %156, %160 : vector<8x256xf32>
    %162 = arith.truncf %161 : vector<8x256xf32> to vector<8x256xbf16>
    %cst_38 = arith.constant dense<0.000000e+00> : vector<8x1024xf32>
    %163 = tpu.matmul %162, %1, %cst_38 {dimension_numbers = #tpu.dot_dimension_numbers<[1], [0], [0], [1], [0, 0, 1, 1], [], []>} : vector<8x256xbf16>, vector<256x1024xbf16>, vector<8x1024xf32> -> vector<8x1024xf32>
    %164 = vector.broadcast %3 : vector<1x1024xf32> to vector<8x1024xf32>
    %165 = arith.addf %163, %164 : vector<8x1024xf32>
    %cst_39 = arith.constant dense<0.000000e+00> : vector<8x1024xf32>
    %166 = tpu.matmul %131, %2, %cst_39 {dimension_numbers = #tpu.dot_dimension_numbers<[1], [0], [0], [1], [0, 0, 1, 1], [], []>} : vector<8x256xbf16>, vector<256x1024xbf16>, vector<8x1024xf32> -> vector<8x1024xf32>
    %167 = arith.addf %165, %166 : vector<8x1024xf32>
    %168 = vector.extract_strided_slice %167 {offsets = [0, 0], sizes = [8, 256], strides = [1, 1]} : vector<8x1024xf32> to vector<8x256xf32>
    %169 = arith.negf %168 : vector<8x256xf32>
    %170 = math.exp %169 : vector<8x256xf32>
    %cst_40 = arith.constant 1.000000e+00 : f32
    %171 = vector.broadcast %cst_40 : f32 to vector<8x256xf32>
    %172 = arith.addf %171, %170 : vector<8x256xf32>
    %173 = arith.divf %171, %172 : vector<8x256xf32>
    %174 = vector.extract_strided_slice %167 {offsets = [0, 256], sizes = [8, 256], strides = [1, 1]} : vector<8x1024xf32> to vector<8x256xf32>
    %175 = arith.negf %174 : vector<8x256xf32>
    %176 = math.exp %175 : vector<8x256xf32>
    %cst_41 = arith.constant 1.000000e+00 : f32
    %177 = vector.broadcast %cst_41 : f32 to vector<8x256xf32>
    %178 = arith.addf %177, %176 : vector<8x256xf32>
    %179 = arith.divf %177, %178 : vector<8x256xf32>
    %180 = vector.extract_strided_slice %167 {offsets = [0, 512], sizes = [8, 256], strides = [1, 1]} : vector<8x1024xf32> to vector<8x256xf32>
    %181 = math.tanh %180 : vector<8x256xf32>
    %182 = vector.extract_strided_slice %167 {offsets = [0, 768], sizes = [8, 256], strides = [1, 1]} : vector<8x1024xf32> to vector<8x256xf32>
    %183 = arith.negf %182 : vector<8x256xf32>
    %184 = math.exp %183 : vector<8x256xf32>
    %cst_42 = arith.constant 1.000000e+00 : f32
    %185 = vector.broadcast %cst_42 : f32 to vector<8x256xf32>
    %186 = arith.addf %185, %184 : vector<8x256xf32>
    %187 = arith.divf %185, %186 : vector<8x256xf32>
    %188 = arith.mulf %179, %128 : vector<8x256xf32>
    %189 = arith.mulf %173, %181 : vector<8x256xf32>
    %190 = arith.addf %188, %189 : vector<8x256xf32>
    %191 = math.tanh %190 : vector<8x256xf32>
    %192 = arith.mulf %187, %191 : vector<8x256xf32>
    %193 = arith.truncf %192 : vector<8x256xf32> to vector<8x256xbf16>
    %c3_i32 = arith.constant 3 : i32
    %194 = arith.index_cast %c3_i32 : i32 to index
    %c0_43 = arith.constant 0 : index
    %c0_44 = arith.constant 0 : index
    %195 = vector.load %arg0[%194, %c0_43, %c0_44] : memref<8x8x1024xf32, #tpu.memory_space<vmem>>, vector<1x8x1024xf32>
    %196 = vector.shape_cast %195 : vector<1x8x1024xf32> to vector<8x1024xf32>
    %cst_45 = arith.constant dense<0.000000e+00> : vector<8x1024xf32>
    %197 = tpu.matmul %162, %0, %cst_45 {dimension_numbers = #tpu.dot_dimension_numbers<[1], [0], [0], [1], [0, 0, 1, 1], [], []>} : vector<8x256xbf16>, vector<256x1024xbf16>, vector<8x1024xf32> -> vector<8x1024xf32>
    %198 = arith.addf %196, %197 : vector<8x1024xf32>
    %199 = vector.extract_strided_slice %198 {offsets = [0, 0], sizes = [8, 256], strides = [1, 1]} : vector<8x1024xf32> to vector<8x256xf32>
    %200 = arith.negf %199 : vector<8x256xf32>
    %201 = math.exp %200 : vector<8x256xf32>
    %cst_46 = arith.constant 1.000000e+00 : f32
    %202 = vector.broadcast %cst_46 : f32 to vector<8x256xf32>
    %203 = arith.addf %202, %201 : vector<8x256xf32>
    %204 = arith.divf %202, %203 : vector<8x256xf32>
    %205 = vector.extract_strided_slice %198 {offsets = [0, 256], sizes = [8, 256], strides = [1, 1]} : vector<8x1024xf32> to vector<8x256xf32>
    %206 = arith.negf %205 : vector<8x256xf32>
    %207 = math.exp %206 : vector<8x256xf32>
    %cst_47 = arith.constant 1.000000e+00 : f32
    %208 = vector.broadcast %cst_47 : f32 to vector<8x256xf32>
    %209 = arith.addf %208, %207 : vector<8x256xf32>
    %210 = arith.divf %208, %209 : vector<8x256xf32>
    %211 = vector.extract_strided_slice %198 {offsets = [0, 512], sizes = [8, 256], strides = [1, 1]} : vector<8x1024xf32> to vector<8x256xf32>
    %212 = math.tanh %211 : vector<8x256xf32>
    %213 = vector.extract_strided_slice %198 {offsets = [0, 768], sizes = [8, 256], strides = [1, 1]} : vector<8x1024xf32> to vector<8x256xf32>
    %214 = arith.negf %213 : vector<8x256xf32>
    %215 = math.exp %214 : vector<8x256xf32>
    %cst_48 = arith.constant 1.000000e+00 : f32
    %216 = vector.broadcast %cst_48 : f32 to vector<8x256xf32>
    %217 = arith.addf %216, %215 : vector<8x256xf32>
    %218 = arith.divf %216, %217 : vector<8x256xf32>
    %219 = arith.mulf %210, %159 : vector<8x256xf32>
    %220 = arith.mulf %204, %212 : vector<8x256xf32>
    %221 = arith.addf %219, %220 : vector<8x256xf32>
    %222 = math.tanh %221 : vector<8x256xf32>
    %223 = arith.mulf %218, %222 : vector<8x256xf32>
    %224 = arith.truncf %223 : vector<8x256xf32> to vector<8x256xbf16>
    %cst_49 = arith.constant dense<0.000000e+00> : vector<8x1024xf32>
    %225 = tpu.matmul %224, %1, %cst_49 {dimension_numbers = #tpu.dot_dimension_numbers<[1], [0], [0], [1], [0, 0, 1, 1], [], []>} : vector<8x256xbf16>, vector<256x1024xbf16>, vector<8x1024xf32> -> vector<8x1024xf32>
    %226 = vector.broadcast %3 : vector<1x1024xf32> to vector<8x1024xf32>
    %227 = arith.addf %225, %226 : vector<8x1024xf32>
    %cst_50 = arith.constant dense<0.000000e+00> : vector<8x1024xf32>
    %228 = tpu.matmul %193, %2, %cst_50 {dimension_numbers = #tpu.dot_dimension_numbers<[1], [0], [0], [1], [0, 0, 1, 1], [], []>} : vector<8x256xbf16>, vector<256x1024xbf16>, vector<8x1024xf32> -> vector<8x1024xf32>
    %229 = arith.addf %227, %228 : vector<8x1024xf32>
    %230 = vector.extract_strided_slice %229 {offsets = [0, 0], sizes = [8, 256], strides = [1, 1]} : vector<8x1024xf32> to vector<8x256xf32>
    %231 = arith.negf %230 : vector<8x256xf32>
    %232 = math.exp %231 : vector<8x256xf32>
    %cst_51 = arith.constant 1.000000e+00 : f32
    %233 = vector.broadcast %cst_51 : f32 to vector<8x256xf32>
    %234 = arith.addf %233, %232 : vector<8x256xf32>
    %235 = arith.divf %233, %234 : vector<8x256xf32>
    %236 = vector.extract_strided_slice %229 {offsets = [0, 256], sizes = [8, 256], strides = [1, 1]} : vector<8x1024xf32> to vector<8x256xf32>
    %237 = arith.negf %236 : vector<8x256xf32>
    %238 = math.exp %237 : vector<8x256xf32>
    %cst_52 = arith.constant 1.000000e+00 : f32
    %239 = vector.broadcast %cst_52 : f32 to vector<8x256xf32>
    %240 = arith.addf %239, %238 : vector<8x256xf32>
    %241 = arith.divf %239, %240 : vector<8x256xf32>
    %242 = vector.extract_strided_slice %229 {offsets = [0, 512], sizes = [8, 256], strides = [1, 1]} : vector<8x1024xf32> to vector<8x256xf32>
    %243 = math.tanh %242 : vector<8x256xf32>
    %244 = vector.extract_strided_slice %229 {offsets = [0, 768], sizes = [8, 256], strides = [1, 1]} : vector<8x1024xf32> to vector<8x256xf32>
    %245 = arith.negf %244 : vector<8x256xf32>
    %246 = math.exp %245 : vector<8x256xf32>
    %cst_53 = arith.constant 1.000000e+00 : f32
    %247 = vector.broadcast %cst_53 : f32 to vector<8x256xf32>
    %248 = arith.addf %247, %246 : vector<8x256xf32>
    %249 = arith.divf %247, %248 : vector<8x256xf32>
    %250 = arith.mulf %241, %190 : vector<8x256xf32>
    %251 = arith.mulf %235, %243 : vector<8x256xf32>
    %252 = arith.addf %250, %251 : vector<8x256xf32>
    %253 = math.tanh %252 : vector<8x256xf32>
    %254 = arith.mulf %249, %253 : vector<8x256xf32>
    %255 = arith.truncf %254 : vector<8x256xf32> to vector<8x256xbf16>
    %c4_i32 = arith.constant 4 : i32
    %256 = arith.index_cast %c4_i32 : i32 to index
    %c0_54 = arith.constant 0 : index
    %c0_55 = arith.constant 0 : index
    %257 = vector.load %arg0[%256, %c0_54, %c0_55] : memref<8x8x1024xf32, #tpu.memory_space<vmem>>, vector<1x8x1024xf32>
    %258 = vector.shape_cast %257 : vector<1x8x1024xf32> to vector<8x1024xf32>
    %cst_56 = arith.constant dense<0.000000e+00> : vector<8x1024xf32>
    %259 = tpu.matmul %224, %0, %cst_56 {dimension_numbers = #tpu.dot_dimension_numbers<[1], [0], [0], [1], [0, 0, 1, 1], [], []>} : vector<8x256xbf16>, vector<256x1024xbf16>, vector<8x1024xf32> -> vector<8x1024xf32>
    %260 = arith.addf %258, %259 : vector<8x1024xf32>
    %261 = vector.extract_strided_slice %260 {offsets = [0, 0], sizes = [8, 256], strides = [1, 1]} : vector<8x1024xf32> to vector<8x256xf32>
    %262 = arith.negf %261 : vector<8x256xf32>
    %263 = math.exp %262 : vector<8x256xf32>
    %cst_57 = arith.constant 1.000000e+00 : f32
    %264 = vector.broadcast %cst_57 : f32 to vector<8x256xf32>
    %265 = arith.addf %264, %263 : vector<8x256xf32>
    %266 = arith.divf %264, %265 : vector<8x256xf32>
    %267 = vector.extract_strided_slice %260 {offsets = [0, 256], sizes = [8, 256], strides = [1, 1]} : vector<8x1024xf32> to vector<8x256xf32>
    %268 = arith.negf %267 : vector<8x256xf32>
    %269 = math.exp %268 : vector<8x256xf32>
    %cst_58 = arith.constant 1.000000e+00 : f32
    %270 = vector.broadcast %cst_58 : f32 to vector<8x256xf32>
    %271 = arith.addf %270, %269 : vector<8x256xf32>
    %272 = arith.divf %270, %271 : vector<8x256xf32>
    %273 = vector.extract_strided_slice %260 {offsets = [0, 512], sizes = [8, 256], strides = [1, 1]} : vector<8x1024xf32> to vector<8x256xf32>
    %274 = math.tanh %273 : vector<8x256xf32>
    %275 = vector.extract_strided_slice %260 {offsets = [0, 768], sizes = [8, 256], strides = [1, 1]} : vector<8x1024xf32> to vector<8x256xf32>
    %276 = arith.negf %275 : vector<8x256xf32>
    %277 = math.exp %276 : vector<8x256xf32>
    %cst_59 = arith.constant 1.000000e+00 : f32
    %278 = vector.broadcast %cst_59 : f32 to vector<8x256xf32>
    %279 = arith.addf %278, %277 : vector<8x256xf32>
    %280 = arith.divf %278, %279 : vector<8x256xf32>
    %281 = arith.mulf %272, %221 : vector<8x256xf32>
    %282 = arith.mulf %266, %274 : vector<8x256xf32>
    %283 = arith.addf %281, %282 : vector<8x256xf32>
    %284 = math.tanh %283 : vector<8x256xf32>
    %285 = arith.mulf %280, %284 : vector<8x256xf32>
    %286 = arith.truncf %285 : vector<8x256xf32> to vector<8x256xbf16>
    %cst_60 = arith.constant dense<0.000000e+00> : vector<8x1024xf32>
    %287 = tpu.matmul %286, %1, %cst_60 {dimension_numbers = #tpu.dot_dimension_numbers<[1], [0], [0], [1], [0, 0, 1, 1], [], []>} : vector<8x256xbf16>, vector<256x1024xbf16>, vector<8x1024xf32> -> vector<8x1024xf32>
    %288 = vector.broadcast %3 : vector<1x1024xf32> to vector<8x1024xf32>
    %289 = arith.addf %287, %288 : vector<8x1024xf32>
    %cst_61 = arith.constant dense<0.000000e+00> : vector<8x1024xf32>
    %290 = tpu.matmul %255, %2, %cst_61 {dimension_numbers = #tpu.dot_dimension_numbers<[1], [0], [0], [1], [0, 0, 1, 1], [], []>} : vector<8x256xbf16>, vector<256x1024xbf16>, vector<8x1024xf32> -> vector<8x1024xf32>
    %291 = arith.addf %289, %290 : vector<8x1024xf32>
    %292 = vector.extract_strided_slice %291 {offsets = [0, 0], sizes = [8, 256], strides = [1, 1]} : vector<8x1024xf32> to vector<8x256xf32>
    %293 = arith.negf %292 : vector<8x256xf32>
    %294 = math.exp %293 : vector<8x256xf32>
    %cst_62 = arith.constant 1.000000e+00 : f32
    %295 = vector.broadcast %cst_62 : f32 to vector<8x256xf32>
    %296 = arith.addf %295, %294 : vector<8x256xf32>
    %297 = arith.divf %295, %296 : vector<8x256xf32>
    %298 = vector.extract_strided_slice %291 {offsets = [0, 256], sizes = [8, 256], strides = [1, 1]} : vector<8x1024xf32> to vector<8x256xf32>
    %299 = arith.negf %298 : vector<8x256xf32>
    %300 = math.exp %299 : vector<8x256xf32>
    %cst_63 = arith.constant 1.000000e+00 : f32
    %301 = vector.broadcast %cst_63 : f32 to vector<8x256xf32>
    %302 = arith.addf %301, %300 : vector<8x256xf32>
    %303 = arith.divf %301, %302 : vector<8x256xf32>
    %304 = vector.extract_strided_slice %291 {offsets = [0, 512], sizes = [8, 256], strides = [1, 1]} : vector<8x1024xf32> to vector<8x256xf32>
    %305 = math.tanh %304 : vector<8x256xf32>
    %306 = vector.extract_strided_slice %291 {offsets = [0, 768], sizes = [8, 256], strides = [1, 1]} : vector<8x1024xf32> to vector<8x256xf32>
    %307 = arith.negf %306 : vector<8x256xf32>
    %308 = math.exp %307 : vector<8x256xf32>
    %cst_64 = arith.constant 1.000000e+00 : f32
    %309 = vector.broadcast %cst_64 : f32 to vector<8x256xf32>
    %310 = arith.addf %309, %308 : vector<8x256xf32>
    %311 = arith.divf %309, %310 : vector<8x256xf32>
    %312 = arith.mulf %303, %252 : vector<8x256xf32>
    %313 = arith.mulf %297, %305 : vector<8x256xf32>
    %314 = arith.addf %312, %313 : vector<8x256xf32>
    %315 = math.tanh %314 : vector<8x256xf32>
    %316 = arith.mulf %311, %315 : vector<8x256xf32>
    %317 = arith.truncf %316 : vector<8x256xf32> to vector<8x256xbf16>
    %c5_i32 = arith.constant 5 : i32
    %318 = arith.index_cast %c5_i32 : i32 to index
    %c0_65 = arith.constant 0 : index
    %c0_66 = arith.constant 0 : index
    %319 = vector.load %arg0[%318, %c0_65, %c0_66] : memref<8x8x1024xf32, #tpu.memory_space<vmem>>, vector<1x8x1024xf32>
    %320 = vector.shape_cast %319 : vector<1x8x1024xf32> to vector<8x1024xf32>
    %cst_67 = arith.constant dense<0.000000e+00> : vector<8x1024xf32>
    %321 = tpu.matmul %286, %0, %cst_67 {dimension_numbers = #tpu.dot_dimension_numbers<[1], [0], [0], [1], [0, 0, 1, 1], [], []>} : vector<8x256xbf16>, vector<256x1024xbf16>, vector<8x1024xf32> -> vector<8x1024xf32>
    %322 = arith.addf %320, %321 : vector<8x1024xf32>
    %323 = vector.extract_strided_slice %322 {offsets = [0, 0], sizes = [8, 256], strides = [1, 1]} : vector<8x1024xf32> to vector<8x256xf32>
    %324 = arith.negf %323 : vector<8x256xf32>
    %325 = math.exp %324 : vector<8x256xf32>
    %cst_68 = arith.constant 1.000000e+00 : f32
    %326 = vector.broadcast %cst_68 : f32 to vector<8x256xf32>
    %327 = arith.addf %326, %325 : vector<8x256xf32>
    %328 = arith.divf %326, %327 : vector<8x256xf32>
    %329 = vector.extract_strided_slice %322 {offsets = [0, 256], sizes = [8, 256], strides = [1, 1]} : vector<8x1024xf32> to vector<8x256xf32>
    %330 = arith.negf %329 : vector<8x256xf32>
    %331 = math.exp %330 : vector<8x256xf32>
    %cst_69 = arith.constant 1.000000e+00 : f32
    %332 = vector.broadcast %cst_69 : f32 to vector<8x256xf32>
    %333 = arith.addf %332, %331 : vector<8x256xf32>
    %334 = arith.divf %332, %333 : vector<8x256xf32>
    %335 = vector.extract_strided_slice %322 {offsets = [0, 512], sizes = [8, 256], strides = [1, 1]} : vector<8x1024xf32> to vector<8x256xf32>
    %336 = math.tanh %335 : vector<8x256xf32>
    %337 = vector.extract_strided_slice %322 {offsets = [0, 768], sizes = [8, 256], strides = [1, 1]} : vector<8x1024xf32> to vector<8x256xf32>
    %338 = arith.negf %337 : vector<8x256xf32>
    %339 = math.exp %338 : vector<8x256xf32>
    %cst_70 = arith.constant 1.000000e+00 : f32
    %340 = vector.broadcast %cst_70 : f32 to vector<8x256xf32>
    %341 = arith.addf %340, %339 : vector<8x256xf32>
    %342 = arith.divf %340, %341 : vector<8x256xf32>
    %343 = arith.mulf %334, %283 : vector<8x256xf32>
    %344 = arith.mulf %328, %336 : vector<8x256xf32>
    %345 = arith.addf %343, %344 : vector<8x256xf32>
    %346 = math.tanh %345 : vector<8x256xf32>
    %347 = arith.mulf %342, %346 : vector<8x256xf32>
    %348 = arith.truncf %347 : vector<8x256xf32> to vector<8x256xbf16>
    %cst_71 = arith.constant dense<0.000000e+00> : vector<8x1024xf32>
    %349 = tpu.matmul %348, %1, %cst_71 {dimension_numbers = #tpu.dot_dimension_numbers<[1], [0], [0], [1], [0, 0, 1, 1], [], []>} : vector<8x256xbf16>, vector<256x1024xbf16>, vector<8x1024xf32> -> vector<8x1024xf32>
    %350 = vector.broadcast %3 : vector<1x1024xf32> to vector<8x1024xf32>
    %351 = arith.addf %349, %350 : vector<8x1024xf32>
    %cst_72 = arith.constant dense<0.000000e+00> : vector<8x1024xf32>
    %352 = tpu.matmul %317, %2, %cst_72 {dimension_numbers = #tpu.dot_dimension_numbers<[1], [0], [0], [1], [0, 0, 1, 1], [], []>} : vector<8x256xbf16>, vector<256x1024xbf16>, vector<8x1024xf32> -> vector<8x1024xf32>
    %353 = arith.addf %351, %352 : vector<8x1024xf32>
    %354 = vector.extract_strided_slice %353 {offsets = [0, 0], sizes = [8, 256], strides = [1, 1]} : vector<8x1024xf32> to vector<8x256xf32>
    %355 = arith.negf %354 : vector<8x256xf32>
    %356 = math.exp %355 : vector<8x256xf32>
    %cst_73 = arith.constant 1.000000e+00 : f32
    %357 = vector.broadcast %cst_73 : f32 to vector<8x256xf32>
    %358 = arith.addf %357, %356 : vector<8x256xf32>
    %359 = arith.divf %357, %358 : vector<8x256xf32>
    %360 = vector.extract_strided_slice %353 {offsets = [0, 256], sizes = [8, 256], strides = [1, 1]} : vector<8x1024xf32> to vector<8x256xf32>
    %361 = arith.negf %360 : vector<8x256xf32>
    %362 = math.exp %361 : vector<8x256xf32>
    %cst_74 = arith.constant 1.000000e+00 : f32
    %363 = vector.broadcast %cst_74 : f32 to vector<8x256xf32>
    %364 = arith.addf %363, %362 : vector<8x256xf32>
    %365 = arith.divf %363, %364 : vector<8x256xf32>
    %366 = vector.extract_strided_slice %353 {offsets = [0, 512], sizes = [8, 256], strides = [1, 1]} : vector<8x1024xf32> to vector<8x256xf32>
    %367 = math.tanh %366 : vector<8x256xf32>
    %368 = vector.extract_strided_slice %353 {offsets = [0, 768], sizes = [8, 256], strides = [1, 1]} : vector<8x1024xf32> to vector<8x256xf32>
    %369 = arith.negf %368 : vector<8x256xf32>
    %370 = math.exp %369 : vector<8x256xf32>
    %cst_75 = arith.constant 1.000000e+00 : f32
    %371 = vector.broadcast %cst_75 : f32 to vector<8x256xf32>
    %372 = arith.addf %371, %370 : vector<8x256xf32>
    %373 = arith.divf %371, %372 : vector<8x256xf32>
    %374 = arith.mulf %365, %314 : vector<8x256xf32>
    %375 = arith.mulf %359, %367 : vector<8x256xf32>
    %376 = arith.addf %374, %375 : vector<8x256xf32>
    %377 = math.tanh %376 : vector<8x256xf32>
    %378 = arith.mulf %373, %377 : vector<8x256xf32>
    %379 = arith.truncf %378 : vector<8x256xf32> to vector<8x256xbf16>
    %c6_i32 = arith.constant 6 : i32
    %380 = arith.index_cast %c6_i32 : i32 to index
    %c0_76 = arith.constant 0 : index
    %c0_77 = arith.constant 0 : index
    %381 = vector.load %arg0[%380, %c0_76, %c0_77] : memref<8x8x1024xf32, #tpu.memory_space<vmem>>, vector<1x8x1024xf32>
    %382 = vector.shape_cast %381 : vector<1x8x1024xf32> to vector<8x1024xf32>
    %cst_78 = arith.constant dense<0.000000e+00> : vector<8x1024xf32>
    %383 = tpu.matmul %348, %0, %cst_78 {dimension_numbers = #tpu.dot_dimension_numbers<[1], [0], [0], [1], [0, 0, 1, 1], [], []>} : vector<8x256xbf16>, vector<256x1024xbf16>, vector<8x1024xf32> -> vector<8x1024xf32>
    %384 = arith.addf %382, %383 : vector<8x1024xf32>
    %385 = vector.extract_strided_slice %384 {offsets = [0, 0], sizes = [8, 256], strides = [1, 1]} : vector<8x1024xf32> to vector<8x256xf32>
    %386 = arith.negf %385 : vector<8x256xf32>
    %387 = math.exp %386 : vector<8x256xf32>
    %cst_79 = arith.constant 1.000000e+00 : f32
    %388 = vector.broadcast %cst_79 : f32 to vector<8x256xf32>
    %389 = arith.addf %388, %387 : vector<8x256xf32>
    %390 = arith.divf %388, %389 : vector<8x256xf32>
    %391 = vector.extract_strided_slice %384 {offsets = [0, 256], sizes = [8, 256], strides = [1, 1]} : vector<8x1024xf32> to vector<8x256xf32>
    %392 = arith.negf %391 : vector<8x256xf32>
    %393 = math.exp %392 : vector<8x256xf32>
    %cst_80 = arith.constant 1.000000e+00 : f32
    %394 = vector.broadcast %cst_80 : f32 to vector<8x256xf32>
    %395 = arith.addf %394, %393 : vector<8x256xf32>
    %396 = arith.divf %394, %395 : vector<8x256xf32>
    %397 = vector.extract_strided_slice %384 {offsets = [0, 512], sizes = [8, 256], strides = [1, 1]} : vector<8x1024xf32> to vector<8x256xf32>
    %398 = math.tanh %397 : vector<8x256xf32>
    %399 = vector.extract_strided_slice %384 {offsets = [0, 768], sizes = [8, 256], strides = [1, 1]} : vector<8x1024xf32> to vector<8x256xf32>
    %400 = arith.negf %399 : vector<8x256xf32>
    %401 = math.exp %400 : vector<8x256xf32>
    %cst_81 = arith.constant 1.000000e+00 : f32
    %402 = vector.broadcast %cst_81 : f32 to vector<8x256xf32>
    %403 = arith.addf %402, %401 : vector<8x256xf32>
    %404 = arith.divf %402, %403 : vector<8x256xf32>
    %405 = arith.mulf %396, %345 : vector<8x256xf32>
    %406 = arith.mulf %390, %398 : vector<8x256xf32>
    %407 = arith.addf %405, %406 : vector<8x256xf32>
    %408 = math.tanh %407 : vector<8x256xf32>
    %409 = arith.mulf %404, %408 : vector<8x256xf32>
    %410 = arith.truncf %409 : vector<8x256xf32> to vector<8x256xbf16>
    %cst_82 = arith.constant dense<0.000000e+00> : vector<8x1024xf32>
    %411 = tpu.matmul %410, %1, %cst_82 {dimension_numbers = #tpu.dot_dimension_numbers<[1], [0], [0], [1], [0, 0, 1, 1], [], []>} : vector<8x256xbf16>, vector<256x1024xbf16>, vector<8x1024xf32> -> vector<8x1024xf32>
    %412 = vector.broadcast %3 : vector<1x1024xf32> to vector<8x1024xf32>
    %413 = arith.addf %411, %412 : vector<8x1024xf32>
    %cst_83 = arith.constant dense<0.000000e+00> : vector<8x1024xf32>
    %414 = tpu.matmul %379, %2, %cst_83 {dimension_numbers = #tpu.dot_dimension_numbers<[1], [0], [0], [1], [0, 0, 1, 1], [], []>} : vector<8x256xbf16>, vector<256x1024xbf16>, vector<8x1024xf32> -> vector<8x1024xf32>
    %415 = arith.addf %413, %414 : vector<8x1024xf32>
    %416 = vector.extract_strided_slice %415 {offsets = [0, 0], sizes = [8, 256], strides = [1, 1]} : vector<8x1024xf32> to vector<8x256xf32>
    %417 = arith.negf %416 : vector<8x256xf32>
    %418 = math.exp %417 : vector<8x256xf32>
    %cst_84 = arith.constant 1.000000e+00 : f32
    %419 = vector.broadcast %cst_84 : f32 to vector<8x256xf32>
    %420 = arith.addf %419, %418 : vector<8x256xf32>
    %421 = arith.divf %419, %420 : vector<8x256xf32>
    %422 = vector.extract_strided_slice %415 {offsets = [0, 256], sizes = [8, 256], strides = [1, 1]} : vector<8x1024xf32> to vector<8x256xf32>
    %423 = arith.negf %422 : vector<8x256xf32>
    %424 = math.exp %423 : vector<8x256xf32>
    %cst_85 = arith.constant 1.000000e+00 : f32
    %425 = vector.broadcast %cst_85 : f32 to vector<8x256xf32>
    %426 = arith.addf %425, %424 : vector<8x256xf32>
    %427 = arith.divf %425, %426 : vector<8x256xf32>
    %428 = vector.extract_strided_slice %415 {offsets = [0, 512], sizes = [8, 256], strides = [1, 1]} : vector<8x1024xf32> to vector<8x256xf32>
    %429 = math.tanh %428 : vector<8x256xf32>
    %430 = vector.extract_strided_slice %415 {offsets = [0, 768], sizes = [8, 256], strides = [1, 1]} : vector<8x1024xf32> to vector<8x256xf32>
    %431 = arith.negf %430 : vector<8x256xf32>
    %432 = math.exp %431 : vector<8x256xf32>
    %cst_86 = arith.constant 1.000000e+00 : f32
    %433 = vector.broadcast %cst_86 : f32 to vector<8x256xf32>
    %434 = arith.addf %433, %432 : vector<8x256xf32>
    %435 = arith.divf %433, %434 : vector<8x256xf32>
    %436 = arith.mulf %427, %376 : vector<8x256xf32>
    %437 = arith.mulf %421, %429 : vector<8x256xf32>
    %438 = arith.addf %436, %437 : vector<8x256xf32>
    %439 = math.tanh %438 : vector<8x256xf32>
    %440 = arith.mulf %435, %439 : vector<8x256xf32>
    %441 = arith.truncf %440 : vector<8x256xf32> to vector<8x256xbf16>
    %c7_i32 = arith.constant 7 : i32
    %442 = arith.index_cast %c7_i32 : i32 to index
    %c0_87 = arith.constant 0 : index
    %c0_88 = arith.constant 0 : index
    %443 = vector.load %arg0[%442, %c0_87, %c0_88] : memref<8x8x1024xf32, #tpu.memory_space<vmem>>, vector<1x8x1024xf32>
    %444 = vector.shape_cast %443 : vector<1x8x1024xf32> to vector<8x1024xf32>
    %cst_89 = arith.constant dense<0.000000e+00> : vector<8x1024xf32>
    %445 = tpu.matmul %410, %0, %cst_89 {dimension_numbers = #tpu.dot_dimension_numbers<[1], [0], [0], [1], [0, 0, 1, 1], [], []>} : vector<8x256xbf16>, vector<256x1024xbf16>, vector<8x1024xf32> -> vector<8x1024xf32>
    %446 = arith.addf %444, %445 : vector<8x1024xf32>
    %447 = vector.extract_strided_slice %446 {offsets = [0, 0], sizes = [8, 256], strides = [1, 1]} : vector<8x1024xf32> to vector<8x256xf32>
    %448 = arith.negf %447 : vector<8x256xf32>
    %449 = math.exp %448 : vector<8x256xf32>
    %cst_90 = arith.constant 1.000000e+00 : f32
    %450 = vector.broadcast %cst_90 : f32 to vector<8x256xf32>
    %451 = arith.addf %450, %449 : vector<8x256xf32>
    %452 = arith.divf %450, %451 : vector<8x256xf32>
    %453 = vector.extract_strided_slice %446 {offsets = [0, 256], sizes = [8, 256], strides = [1, 1]} : vector<8x1024xf32> to vector<8x256xf32>
    %454 = arith.negf %453 : vector<8x256xf32>
    %455 = math.exp %454 : vector<8x256xf32>
    %cst_91 = arith.constant 1.000000e+00 : f32
    %456 = vector.broadcast %cst_91 : f32 to vector<8x256xf32>
    %457 = arith.addf %456, %455 : vector<8x256xf32>
    %458 = arith.divf %456, %457 : vector<8x256xf32>
    %459 = vector.extract_strided_slice %446 {offsets = [0, 512], sizes = [8, 256], strides = [1, 1]} : vector<8x1024xf32> to vector<8x256xf32>
    %460 = math.tanh %459 : vector<8x256xf32>
    %461 = vector.extract_strided_slice %446 {offsets = [0, 768], sizes = [8, 256], strides = [1, 1]} : vector<8x1024xf32> to vector<8x256xf32>
    %462 = arith.negf %461 : vector<8x256xf32>
    %463 = math.exp %462 : vector<8x256xf32>
    %cst_92 = arith.constant 1.000000e+00 : f32
    %464 = vector.broadcast %cst_92 : f32 to vector<8x256xf32>
    %465 = arith.addf %464, %463 : vector<8x256xf32>
    %466 = arith.divf %464, %465 : vector<8x256xf32>
    %467 = arith.mulf %458, %407 : vector<8x256xf32>
    %468 = arith.mulf %452, %460 : vector<8x256xf32>
    %469 = arith.addf %467, %468 : vector<8x256xf32>
    %470 = math.tanh %469 : vector<8x256xf32>
    %471 = arith.mulf %466, %470 : vector<8x256xf32>
    %472 = arith.truncf %471 : vector<8x256xf32> to vector<8x256xbf16>
    %cst_93 = arith.constant dense<0.000000e+00> : vector<8x1024xf32>
    %473 = tpu.matmul %472, %1, %cst_93 {dimension_numbers = #tpu.dot_dimension_numbers<[1], [0], [0], [1], [0, 0, 1, 1], [], []>} : vector<8x256xbf16>, vector<256x1024xbf16>, vector<8x1024xf32> -> vector<8x1024xf32>
    %474 = vector.broadcast %3 : vector<1x1024xf32> to vector<8x1024xf32>
    %475 = arith.addf %473, %474 : vector<8x1024xf32>
    %cst_94 = arith.constant dense<0.000000e+00> : vector<8x1024xf32>
    %476 = tpu.matmul %441, %2, %cst_94 {dimension_numbers = #tpu.dot_dimension_numbers<[1], [0], [0], [1], [0, 0, 1, 1], [], []>} : vector<8x256xbf16>, vector<256x1024xbf16>, vector<8x1024xf32> -> vector<8x1024xf32>
    %477 = arith.addf %475, %476 : vector<8x1024xf32>
    %478 = vector.extract_strided_slice %477 {offsets = [0, 0], sizes = [8, 256], strides = [1, 1]} : vector<8x1024xf32> to vector<8x256xf32>
    %479 = arith.negf %478 : vector<8x256xf32>
    %480 = math.exp %479 : vector<8x256xf32>
    %cst_95 = arith.constant 1.000000e+00 : f32
    %481 = vector.broadcast %cst_95 : f32 to vector<8x256xf32>
    %482 = arith.addf %481, %480 : vector<8x256xf32>
    %483 = arith.divf %481, %482 : vector<8x256xf32>
    %484 = vector.extract_strided_slice %477 {offsets = [0, 256], sizes = [8, 256], strides = [1, 1]} : vector<8x1024xf32> to vector<8x256xf32>
    %485 = arith.negf %484 : vector<8x256xf32>
    %486 = math.exp %485 : vector<8x256xf32>
    %cst_96 = arith.constant 1.000000e+00 : f32
    %487 = vector.broadcast %cst_96 : f32 to vector<8x256xf32>
    %488 = arith.addf %487, %486 : vector<8x256xf32>
    %489 = arith.divf %487, %488 : vector<8x256xf32>
    %490 = vector.extract_strided_slice %477 {offsets = [0, 512], sizes = [8, 256], strides = [1, 1]} : vector<8x1024xf32> to vector<8x256xf32>
    %491 = math.tanh %490 : vector<8x256xf32>
    %492 = vector.extract_strided_slice %477 {offsets = [0, 768], sizes = [8, 256], strides = [1, 1]} : vector<8x1024xf32> to vector<8x256xf32>
    %493 = arith.negf %492 : vector<8x256xf32>
    %494 = math.exp %493 : vector<8x256xf32>
    %cst_97 = arith.constant 1.000000e+00 : f32
    %495 = vector.broadcast %cst_97 : f32 to vector<8x256xf32>
    %496 = arith.addf %495, %494 : vector<8x256xf32>
    %497 = arith.divf %495, %496 : vector<8x256xf32>
    %498 = arith.mulf %489, %438 : vector<8x256xf32>
    %499 = arith.mulf %483, %491 : vector<8x256xf32>
    %500 = arith.addf %498, %499 : vector<8x256xf32>
    %501 = math.tanh %500 : vector<8x256xf32>
    %502 = arith.mulf %497, %501 : vector<8x256xf32>
    %503 = arith.truncf %502 : vector<8x256xf32> to vector<8x256xbf16>
    %c8_i32 = arith.constant 8 : i32
    %c0_98 = arith.constant 0 : index
    %c0_99 = arith.constant 0 : index
    %504 = vector.load %arg5[%c0_98, %c0_99] : memref<256x128xbf16, #tpu.memory_space<vmem>>, vector<256x128xbf16>
    %cst_100 = arith.constant dense<0.000000e+00> : vector<8x128xf32>
    %505 = tpu.matmul %503, %504, %cst_100 {dimension_numbers = #tpu.dot_dimension_numbers<[1], [0], [0], [1], [0, 0, 1, 1], [], []>} : vector<8x256xbf16>, vector<256x128xbf16>, vector<8x128xf32> -> vector<8x128xf32>
    %c0_101 = arith.constant 0 : index
    %c0_102 = arith.constant 0 : index
    %506 = vector.load %arg6[%c0_101, %c0_102] : memref<1x128xf32, #tpu.memory_space<vmem>>, vector<1x128xf32>
    %507 = vector.broadcast %506 : vector<1x128xf32> to vector<8x128xf32>
    %508 = arith.addf %505, %507 : vector<8x128xf32>
    %c0_103 = arith.constant 0 : index
    %c0_104 = arith.constant 0 : index
    %509 = vector.load %arg7[%c0_103, %c0_104] : memref<8x128xf32, #tpu.memory_space<vmem>>, vector<8x128xf32>
    tpu.vector_store %arg7[%c0_103, %c0_104], %508 {strides = array<i32>} : memref<8x128xf32, #tpu.memory_space<vmem>>, vector<8x128xf32>,
    return
  }
}

</mosaic_0001>

<llo_original>
// kernel: lstm_forward.1
$region0: #{lstm_forward.1}
  #allocation0 [shape = 'u32[]', space=smem, size = 0x4, offset = 0x4, fixed_abs, tag = 'smem constant byte address 0x4 - core index']
  #allocation1 [shape = 'u32[72,128]{1,0:T(1,128)}', space=vmem, size = 0x9000, scoped, tag = 'internal scratch']
  %s0 = inlined_call_operand.vmem [shape: f32[8,8,1024], index: 0, kind: input, shape index: {}]
  %s1 = inlined_call_operand.vmem [shape: bf16[256,1024], index: 1, kind: input, shape index: {}]
  %s2 = inlined_call_operand.vmem [shape: bf16[256,1024], index: 2, kind: input, shape index: {}]
  %s3 = inlined_call_operand.vmem [shape: f32[1,1024], index: 3, kind: input, shape index: {}]
  %s4 = inlined_call_operand.vmem [shape: bf16[256,1024], index: 4, kind: input, shape index: {}]
  %s5 = inlined_call_operand.vmem [shape: bf16[256,128], index: 5, kind: input, shape index: {}]
  %s6 = inlined_call_operand.vmem [shape: f32[1,128], index: 6, kind: input, shape index: {}]
  %s7 = inlined_call_operand.vmem [shape: f32[8,128], index: 7, kind: output, shape index: {}]
  %s8 = sld [smem:[#allocation0]]
  $region38: #{lstm_forward.1} parent=0
    _
  %s10 = ssub.s32 1, %s8
  %s11 = scalar_select 0, %s10, %s8
  // Predicated region
  $region2: #{lstm_forward.1} parent=0 // pred_check
    _
  $region3: #{lstm_forward.1} parent=0 // pred_check_branch
    %13 = sbr.rel (0) target = $region5
  $region4: #{lstm_forward.1} parent=0 // pred_region
    _
  $region5: #{lstm_forward.1} parent=0 // pred_fallthru
    _
  // Predicated region
  $region6: #{lstm_forward.1} parent=0 // pred_check
    _
  $region7: #{lstm_forward.1} parent=0 // pred_check_branch
    %15 = sbr.rel (0) target = $region9
  $region8: #{lstm_forward.1} parent=0 // pred_region
    _
  $region9: #{lstm_forward.1} parent=0 // pred_fallthru
    _
  // Predicated region
  $region10: #{lstm_forward.1} parent=0 // pred_check
    _
  $region11: #{lstm_forward.1} parent=0 // pred_check_branch
    %17 = sbr.rel (0) target = $region13
  $region12: #{lstm_forward.1} parent=0 // pred_region
    _
  $region13: #{lstm_forward.1} parent=0 // pred_fallthru
    _
  // Predicated region
  $region14: #{lstm_forward.1} parent=0 // pred_check
    _
  $region15: #{lstm_forward.1} parent=0 // pred_check_branch
    %19 = sbr.rel (0) target = $region17
  $region16: #{lstm_forward.1} parent=0 // pred_region
    _
  $region17: #{lstm_forward.1} parent=0 // pred_fallthru
    _
  // Predicated region
  $region18: #{lstm_forward.1} parent=0 // pred_check
    _
  $region19: #{lstm_forward.1} parent=0 // pred_check_branch
    %21 = sbr.rel (0) target = $region21
  $region20: #{lstm_forward.1} parent=0 // pred_region
    _
  $region21: #{lstm_forward.1} parent=0 // pred_fallthru
    _
  // Predicated region
  $region22: #{lstm_forward.1} parent=0 // pred_check
    _
  $region23: #{lstm_forward.1} parent=0 // pred_check_branch
    %23 = sbr.rel (0) target = $region25
  $region24: #{lstm_forward.1} parent=0 // pred_region
    _
  $region25: #{lstm_forward.1} parent=0 // pred_fallthru
    _
  // Predicated region
  $region26: #{lstm_forward.1} parent=0 // pred_check
    _
  $region27: #{lstm_forward.1} parent=0 // pred_check_branch
    %25 = sbr.rel (0) target = $region29
  $region28: #{lstm_forward.1} parent=0 // pred_region
    _
  $region29: #{lstm_forward.1} parent=0 // pred_fallthru
    _
  %v27 = vld [vmem:[%s1] sm:$0xff]
  %v28 = vld [vmem:[%s1 + $0x8] sm:$0xff]
  %v29 = vld [vmem:[%s1 + $0x10] sm:$0xff]
  %v30 = vld [vmem:[%s1 + $0x18] sm:$0xff]
  %v31 = vld [vmem:[%s1 + $0x20] sm:$0xff]
  %v32 = vld [vmem:[%s1 + $0x28] sm:$0xff]
  %v33 = vld [vmem:[%s1 + $0x30] sm:$0xff]
  %v34 = vld [vmem:[%s1 + $0x38] sm:$0xff]
  %v35 = vld [vmem:[%s1 + $0x40] sm:$0xff]
  %v36 = vld [vmem:[%s1 + $0x48] sm:$0xff]
  %v37 = vld [vmem:[%s1 + $0x50] sm:$0xff]
  %v38 = vld [vmem:[%s1 + $0x58] sm:$0xff]
  %v39 = vld [vmem:[%s1 + $0x60] sm:$0xff]
  %v40 = vld [vmem:[%s1 + $0x68] sm:$0xff]
  %v41 = vld [vmem:[%s1 + $0x70] sm:$0xff]
  %v42 = vld [vmem:[%s1 + $0x78] sm:$0xff]
  %v43 = vld [vmem:[%s1 + $0x80] sm:$0xff]
  %v44 = vld [vmem:[%s1 + $0x88] sm:$0xff]
  %v45 = vld [vmem:[%s1 + $0x90] sm:$0xff]
  %v46 = vld [vmem:[%s1 + $0x98] sm:$0xff]
  %v47 = vld [vmem:[%s1 + $0xa0] sm:$0xff]
  %v48 = vld [vmem:[%s1 + $0xa8] sm:$0xff]
  %v49 = vld [vmem:[%s1 + $0xb0] sm:$0xff]
  %v50 = vld [vmem:[%s1 + $0xb8] sm:$0xff]
  %v51 = vld [vmem:[%s1 + $0xc0] sm:$0xff]
  %v52 = vld [vmem:[%s1 + $0xc8] sm:$0xff]
  %v53 = vld [vmem:[%s1 + $0xd0] sm:$0xff]
  %v54 = vld [vmem:[%s1 + $0xd8] sm:$0xff]
  %v55 = vld [vmem:[%s1 + $0xe0] sm:$0xff]
  %v56 = vld [vmem:[%s1 + $0xe8] sm:$0xff]
  %v57 = vld [vmem:[%s1 + $0xf0] sm:$0xff]
  %v58 = vld [vmem:[%s1 + $0xf8] sm:$0xff]
  %v59 = vld [vmem:[%s1 + $0x100] sm:$0xff]
  %v60 = vld [vmem:[%s1 + $0x108] sm:$0xff]
  %v61 = vld [vmem:[%s1 + $0x110] sm:$0xff]
  %v62 = vld [vmem:[%s1 + $0x118] sm:$0xff]
  %v63 = vld [vmem:[%s1 + $0x120] sm:$0xff]
  %v64 = vld [vmem:[%s1 + $0x128] sm:$0xff]
  %v65 = vld [vmem:[%s1 + $0x130] sm:$0xff]
  %v66 = vld [vmem:[%s1 + $0x138] sm:$0xff]
  %v67 = vld [vmem:[%s1 + $0x140] sm:$0xff]
  %v68 = vld [vmem:[%s1 + $0x148] sm:$0xff]
  %v69 = vld [vmem:[%s1 + $0x150] sm:$0xff]
  %v70 = vld [vmem:[%s1 + $0x158] sm:$0xff]
  %v71 = vld [vmem:[%s1 + $0x160] sm:$0xff]
  %v72 = vld [vmem:[%s1 + $0x168] sm:$0xff]
  %v73 = vld [vmem:[%s1 + $0x170] sm:$0xff]
  %v74 = vld [vmem:[%s1 + $0x178] sm:$0xff]
  %v75 = vld [vmem:[%s1 + $0x180] sm:$0xff]
  %v76 = vld [vmem:[%s1 + $0x188] sm:$0xff]
  %v77 = vld [vmem:[%s1 + $0x190] sm:$0xff]
  %v78 = vld [vmem:[%s1 + $0x198] sm:$0xff]
  %v79 = vld [vmem:[%s1 + $0x1a0] sm:$0xff]
  %v80 = vld [vmem:[%s1 + $0x1a8] sm:$0xff]
  %v81 = vld [vmem:[%s1 + $0x1b0] sm:$0xff]
  %v82 = vld [vmem:[%s1 + $0x1b8] sm:$0xff]
  %v83 = vld [vmem:[%s1 + $0x1c0] sm:$0xff]
  %v84 = vld [vmem:[%s1 + $0x1c8] sm:$0xff]
  %v85 = vld [vmem:[%s1 + $0x1d0] sm:$0xff]
  %v86 = vld [vmem:[%s1 + $0x1d8] sm:$0xff]
  %v87 = vld [vmem:[%s1 + $0x1e0] sm:$0xff]
  %v88 = vld [vmem:[%s1 + $0x1e8] sm:$0xff]
  %v89 = vld [vmem:[%s1 + $0x1f0] sm:$0xff]
  %v90 = vld [vmem:[%s1 + $0x1f8] sm:$0xff]
  %v91 = vld [vmem:[%s1 + $0x200] sm:$0xff]
  %v92 = vld [vmem:[%s1 + $0x208] sm:$0xff]
  %v93 = vld [vmem:[%s1 + $0x210] sm:$0xff]
  %v94 = vld [vmem:[%s1 + $0x218] sm:$0xff]
  %v95 = vld [vmem:[%s1 + $0x220] sm:$0xff]
  %v96 = vld [vmem:[%s1 + $0x228] sm:$0xff]
  %v97 = vld [vmem:[%s1 + $0x230] sm:$0xff]
  %v98 = vld [vmem:[%s1 + $0x238] sm:$0xff]
  %v99 = vld [vmem:[%s1 + $0x240] sm:$0xff]
  %v100 = vld [vmem:[%s1 + $0x248] sm:$0xff]
  %v101 = vld [vmem:[%s1 + $0x250] sm:$0xff]
  %v102 = vld [vmem:[%s1 + $0x258] sm:$0xff]
  %v103 = vld [vmem:[%s1 + $0x260] sm:$0xff]
  %v104 = vld [vmem:[%s1 + $0x268] sm:$0xff]
  %v105 = vld [vmem:[%s1 + $0x270] sm:$0xff]
  %v106 = vld [vmem:[%s1 + $0x278] sm:$0xff]
  %v107 = vld [vmem:[%s1 + $0x280] sm:$0xff]
  %v108 = vld [vmem:[%s1 + $0x288] sm:$0xff]
  %v109 = vld [vmem:[%s1 + $0x290] sm:$0xff]
  %v110 = vld [vmem:[%s1 + $0x298] sm:$0xff]
  %v111 = vld [vmem:[%s1 + $0x2a0] sm:$0xff]
  %v112 = vld [vmem:[%s1 + $0x2a8] sm:$0xff]
  %v113 = vld [vmem:[%s1 + $0x2b0] sm:$0xff]
  %v114 = vld [vmem:[%s1 + $0x2b8] sm:$0xff]
  %v115 = vld [vmem:[%s1 + $0x2c0] sm:$0xff]
  %v116 = vld [vmem:[%s1 + $0x2c8] sm:$0xff]
  %v117 = vld [vmem:[%s1 + $0x2d0] sm:$0xff]
  %v118 = vld [vmem:[%s1 + $0x2d8] sm:$0xff]
  %v119 = vld [vmem:[%s1 + $0x2e0] sm:$0xff]
  %v120 = vld [vmem:[%s1 + $0x2e8] sm:$0xff]
  %v121 = vld [vmem:[%s1 + $0x2f0] sm:$0xff]
  %v122 = vld [vmem:[%s1 + $0x2f8] sm:$0xff]
  %v123 = vld [vmem:[%s1 + $0x300] sm:$0xff]
  %v124 = vld [vmem:[%s1 + $0x308] sm:$0xff]
  %v125 = vld [vmem:[%s1 + $0x310] sm:$0xff]
  %v126 = vld [vmem:[%s1 + $0x318] sm:$0xff]
  %v127 = vld [vmem:[%s1 + $0x320] sm:$0xff]
  %v128 = vld [vmem:[%s1 + $0x328] sm:$0xff]
  %v129 = vld [vmem:[%s1 + $0x330] sm:$0xff]
  %v130 = vld [vmem:[%s1 + $0x338] sm:$0xff]
  %v131 = vld [vmem:[%s1 + $0x340] sm:$0xff]
  %v132 = vld [vmem:[%s1 + $0x348] sm:$0xff]
  %v133 = vld [vmem:[%s1 + $0x350] sm:$0xff]
  %v134 = vld [vmem:[%s1 + $0x358] sm:$0xff]
  %v135 = vld [vmem:[%s1 + $0x360] sm:$0xff]
  %v136 = vld [vmem:[%s1 + $0x368] sm:$0xff]
  %v137 = vld [vmem:[%s1 + $0x370] sm:$0xff]
  %v138 = vld [vmem:[%s1 + $0x378] sm:$0xff]
  %v139 = vld [vmem:[%s1 + $0x380] sm:$0xff]
  %v140 = vld [vmem:[%s1 + $0x388] sm:$0xff]
  %v141 = vld [vmem:[%s1 + $0x390] sm:$0xff]
  %v142 = vld [vmem:[%s1 + $0x398] sm:$0xff]
  %v143 = vld [vmem:[%s1 + $0x3a0] sm:$0xff]
  %v144 = vld [vmem:[%s1 + $0x3a8] sm:$0xff]
  %v145 = vld [vmem:[%s1 + $0x3b0] sm:$0xff]
  %v146 = vld [vmem:[%s1 + $0x3b8] sm:$0xff]
  %v147 = vld [vmem:[%s1 + $0x3c0] sm:$0xff]
  %v148 = vld [vmem:[%s1 + $0x3c8] sm:$0xff]
  %v149 = vld [vmem:[%s1 + $0x3d0] sm:$0xff]
  %v150 = vld [vmem:[%s1 + $0x3d8] sm:$0xff]
  %v151 = vld [vmem:[%s1 + $0x3e0] sm:$0xff]
  %v152 = vld [vmem:[%s1 + $0x3e8] sm:$0xff]
  %v153 = vld [vmem:[%s1 + $0x3f0] sm:$0xff]
  %v154 = vld [vmem:[%s1 + $0x3f8] sm:$0xff]
  %v155 = vld [vmem:[%s2] sm:$0xff]
  %v156 = vld [vmem:[%s2 + $0x8] sm:$0xff]
  %v157 = vld [vmem:[%s2 + $0x10] sm:$0xff]
  %v158 = vld [vmem:[%s2 + $0x18] sm:$0xff]
  %v159 = vld [vmem:[%s2 + $0x20] sm:$0xff]
  %v160 = vld [vmem:[%s2 + $0x28] sm:$0xff]
  %v161 = vld [vmem:[%s2 + $0x30] sm:$0xff]
  %v162 = vld [vmem:[%s2 + $0x38] sm:$0xff]
  %v163 = vld [vmem:[%s2 + $0x40] sm:$0xff]
  %v164 = vld [vmem:[%s2 + $0x48] sm:$0xff]
  %v165 = vld [vmem:[%s2 + $0x50] sm:$0xff]
  %v166 = vld [vmem:[%s2 + $0x58] sm:$0xff]
  %v167 = vld [vmem:[%s2 + $0x60] sm:$0xff]
  %v168 = vld [vmem:[%s2 + $0x68] sm:$0xff]
  %v169 = vld [vmem:[%s2 + $0x70] sm:$0xff]
  %v170 = vld [vmem:[%s2 + $0x78] sm:$0xff]
  %v171 = vld [vmem:[%s2 + $0x80] sm:$0xff]
  %v172 = vld [vmem:[%s2 + $0x88] sm:$0xff]
  %v173 = vld [vmem:[%s2 + $0x90] sm:$0xff]
  %v174 = vld [vmem:[%s2 + $0x98] sm:$0xff]
  %v175 = vld [vmem:[%s2 + $0xa0] sm:$0xff]
  %v176 = vld [vmem:[%s2 + $0xa8] sm:$0xff]
  %v177 = vld [vmem:[%s2 + $0xb0] sm:$0xff]
  %v178 = vld [vmem:[%s2 + $0xb8] sm:$0xff]
  %v179 = vld [vmem:[%s2 + $0xc0] sm:$0xff]
  %v180 = vld [vmem:[%s2 + $0xc8] sm:$0xff]
  %v181 = vld [vmem:[%s2 + $0xd0] sm:$0xff]
  %v182 = vld [vmem:[%s2 + $0xd8] sm:$0xff]
  %v183 = vld [vmem:[%s2 + $0xe0] sm:$0xff]
  %v184 = vld [vmem:[%s2 + $0xe8] sm:$0xff]
  %v185 = vld [vmem:[%s2 + $0xf0] sm:$0xff]
  %v186 = vld [vmem:[%s2 + $0xf8] sm:$0xff]
  %v187 = vld [vmem:[%s2 + $0x100] sm:$0xff]
  %v188 = vld [vmem:[%s2 + $0x108] sm:$0xff]
  %v189 = vld [vmem:[%s2 + $0x110] sm:$0xff]
  %v190 = vld [vmem:[%s2 + $0x118] sm:$0xff]
  %v191 = vld [vmem:[%s2 + $0x120] sm:$0xff]
  %v192 = vld [vmem:[%s2 + $0x128] sm:$0xff]
  %v193 = vld [vmem:[%s2 + $0x130] sm:$0xff]
  %v194 = vld [vmem:[%s2 + $0x138] sm:$0xff]
  %v195 = vld [vmem:[%s2 + $0x140] sm:$0xff]
  %v196 = vld [vmem:[%s2 + $0x148] sm:$0xff]
  %v197 = vld [vmem:[%s2 + $0x150] sm:$0xff]
  %v198 = vld [vmem:[%s2 + $0x158] sm:$0xff]
  %v199 = vld [vmem:[%s2 + $0x160] sm:$0xff]
  %v200 = vld [vmem:[%s2 + $0x168] sm:$0xff]
  %v201 = vld [vmem:[%s2 + $0x170] sm:$0xff]
  %v202 = vld [vmem:[%s2 + $0x178] sm:$0xff]
  %v203 = vld [vmem:[%s2 + $0x180] sm:$0xff]
  %v204 = vld [vmem:[%s2 + $0x188] sm:$0xff]
  %v205 = vld [vmem:[%s2 + $0x190] sm:$0xff]
  %v206 = vld [vmem:[%s2 + $0x198] sm:$0xff]
  %v207 = vld [vmem:[%s2 + $0x1a0] sm:$0xff]
  %v208 = vld [vmem:[%s2 + $0x1a8] sm:$0xff]
  %v209 = vld [vmem:[%s2 + $0x1b0] sm:$0xff]
  %v210 = vld [vmem:[%s2 + $0x1b8] sm:$0xff]
  %v211 = vld [vmem:[%s2 + $0x1c0] sm:$0xff]
  %v212 = vld [vmem:[%s2 + $0x1c8] sm:$0xff]
  %v213 = vld [vmem:[%s2 + $0x1d0] sm:$0xff]
  %v214 = vld [vmem:[%s2 + $0x1d8] sm:$0xff]
  %v215 = vld [vmem:[%s2 + $0x1e0] sm:$0xff]
  %v216 = vld [vmem:[%s2 + $0x1e8] sm:$0xff]
  %v217 = vld [vmem:[%s2 + $0x1f0] sm:$0xff]
  %v218 = vld [vmem:[%s2 + $0x1f8] sm:$0xff]
  %v219 = vld [vmem:[%s2 + $0x200] sm:$0xff]
  %v220 = vld [vmem:[%s2 + $0x208] sm:$0xff]
  %v221 = vld [vmem:[%s2 + $0x210] sm:$0xff]
  %v222 = vld [vmem:[%s2 + $0x218] sm:$0xff]
  %v223 = vld [vmem:[%s2 + $0x220] sm:$0xff]
  %v224 = vld [vmem:[%s2 + $0x228] sm:$0xff]
  %v225 = vld [vmem:[%s2 + $0x230] sm:$0xff]
  %v226 = vld [vmem:[%s2 + $0x238] sm:$0xff]
  %v227 = vld [vmem:[%s2 + $0x240] sm:$0xff]
  %v228 = vld [vmem:[%s2 + $0x248] sm:$0xff]
  %v229 = vld [vmem:[%s2 + $0x250] sm:$0xff]
  %v230 = vld [vmem:[%s2 + $0x258] sm:$0xff]
  %v231 = vld [vmem:[%s2 + $0x260] sm:$0xff]
  %v232 = vld [vmem:[%s2 + $0x268] sm:$0xff]
  %v233 = vld [vmem:[%s2 + $0x270] sm:$0xff]
  %v234 = vld [vmem:[%s2 + $0x278] sm:$0xff]
  %v235 = vld [vmem:[%s2 + $0x280] sm:$0xff]
  %v236 = vld [vmem:[%s2 + $0x288] sm:$0xff]
  %v237 = vld [vmem:[%s2 + $0x290] sm:$0xff]
  %v238 = vld [vmem:[%s2 + $0x298] sm:$0xff]
  %v239 = vld [vmem:[%s2 + $0x2a0] sm:$0xff]
  %v240 = vld [vmem:[%s2 + $0x2a8] sm:$0xff]
  %v241 = vld [vmem:[%s2 + $0x2b0] sm:$0xff]
  %v242 = vld [vmem:[%s2 + $0x2b8] sm:$0xff]
  %v243 = vld [vmem:[%s2 + $0x2c0] sm:$0xff]
  %v244 = vld [vmem:[%s2 + $0x2c8] sm:$0xff]
  %v245 = vld [vmem:[%s2 + $0x2d0] sm:$0xff]
  %v246 = vld [vmem:[%s2 + $0x2d8] sm:$0xff]
  %v247 = vld [vmem:[%s2 + $0x2e0] sm:$0xff]
  %v248 = vld [vmem:[%s2 + $0x2e8] sm:$0xff]
  %v249 = vld [vmem:[%s2 + $0x2f0] sm:$0xff]
  %v250 = vld [vmem:[%s2 + $0x2f8] sm:$0xff]
  %v251 = vld [vmem:[%s2 + $0x300] sm:$0xff]
  %v252 = vld [vmem:[%s2 + $0x308] sm:$0xff]
  %v253 = vld [vmem:[%s2 + $0x310] sm:$0xff]
  %v254 = vld [vmem:[%s2 + $0x318] sm:$0xff]
  %v255 = vld [vmem:[%s2 + $0x320] sm:$0xff]
  %v256 = vld [vmem:[%s2 + $0x328] sm:$0xff]
  %v257 = vld [vmem:[%s2 + $0x330] sm:$0xff]
  %v258 = vld [vmem:[%s2 + $0x338] sm:$0xff]
  %v259 = vld [vmem:[%s2 + $0x340] sm:$0xff]
  %v260 = vld [vmem:[%s2 + $0x348] sm:$0xff]
  %v261 = vld [vmem:[%s2 + $0x350] sm:$0xff]
  %v262 = vld [vmem:[%s2 + $0x358] sm:$0xff]
  %v263 = vld [vmem:[%s2 + $0x360] sm:$0xff]
  %v264 = vld [vmem:[%s2 + $0x368] sm:$0xff]
  %v265 = vld [vmem:[%s2 + $0x370] sm:$0xff]
  %v266 = vld [vmem:[%s2 + $0x378] sm:$0xff]
  %v267 = vld [vmem:[%s2 + $0x380] sm:$0xff]
  %v268 = vld [vmem:[%s2 + $0x388] sm:$0xff]
  %v269 = vld [vmem:[%s2 + $0x390] sm:$0xff]
  %v270 = vld [vmem:[%s2 + $0x398] sm:$0xff]
  %v271 = vld [vmem:[%s2 + $0x3a0] sm:$0xff]
  %v272 = vld [vmem:[%s2 + $0x3a8] sm:$0xff]
  %v273 = vld [vmem:[%s2 + $0x3b0] sm:$0xff]
  %v274 = vld [vmem:[%s2 + $0x3b8] sm:$0xff]
  %v275 = vld [vmem:[%s2 + $0x3c0] sm:$0xff]
  %v276 = vld [vmem:[%s2 + $0x3c8] sm:$0xff]
  %v277 = vld [vmem:[%s2 + $0x3d0] sm:$0xff]
  %v278 = vld [vmem:[%s2 + $0x3d8] sm:$0xff]
  %v279 = vld [vmem:[%s2 + $0x3e0] sm:$0xff]
  %v280 = vld [vmem:[%s2 + $0x3e8] sm:$0xff]
  %v281 = vld [vmem:[%s2 + $0x3f0] sm:$0xff]
  %v282 = vld [vmem:[%s2 + $0x3f8] sm:$0xff]
  %v283 = vld [vmem:[%s4] sm:$0xff]
  %v284 = vld [vmem:[%s4 + $0x8] sm:$0xff]
  %v285 = vld [vmem:[%s4 + $0x10] sm:$0xff]
  %v286 = vld [vmem:[%s4 + $0x18] sm:$0xff]
  %v287 = vld [vmem:[%s4 + $0x20] sm:$0xff]
  %v288 = vld [vmem:[%s4 + $0x28] sm:$0xff]
  %v289 = vld [vmem:[%s4 + $0x30] sm:$0xff]
  %v290 = vld [vmem:[%s4 + $0x38] sm:$0xff]
  %v291 = vld [vmem:[%s4 + $0x40] sm:$0xff]
  %v292 = vld [vmem:[%s4 + $0x48] sm:$0xff]
  %v293 = vld [vmem:[%s4 + $0x50] sm:$0xff]
  %v294 = vld [vmem:[%s4 + $0x58] sm:$0xff]
  %v295 = vld [vmem:[%s4 + $0x60] sm:$0xff]
  %v296 = vld [vmem:[%s4 + $0x68] sm:$0xff]
  %v297 = vld [vmem:[%s4 + $0x70] sm:$0xff]
  %v298 = vld [vmem:[%s4 + $0x78] sm:$0xff]
  %v299 = vld [vmem:[%s4 + $0x80] sm:$0xff]
  %v300 = vld [vmem:[%s4 + $0x88] sm:$0xff]
  %v301 = vld [vmem:[%s4 + $0x90] sm:$0xff]
  %v302 = vld [vmem:[%s4 + $0x98] sm:$0xff]
  %v303 = vld [vmem:[%s4 + $0xa0] sm:$0xff]
  %v304 = vld [vmem:[%s4 + $0xa8] sm:$0xff]
  %v305 = vld [vmem:[%s4 + $0xb0] sm:$0xff]
  %v306 = vld [vmem:[%s4 + $0xb8] sm:$0xff]
  %v307 = vld [vmem:[%s4 + $0xc0] sm:$0xff]
  %v308 = vld [vmem:[%s4 + $0xc8] sm:$0xff]
  %v309 = vld [vmem:[%s4 + $0xd0] sm:$0xff]
  %v310 = vld [vmem:[%s4 + $0xd8] sm:$0xff]
  %v311 = vld [vmem:[%s4 + $0xe0] sm:$0xff]
  %v312 = vld [vmem:[%s4 + $0xe8] sm:$0xff]
  %v313 = vld [vmem:[%s4 + $0xf0] sm:$0xff]
  %v314 = vld [vmem:[%s4 + $0xf8] sm:$0xff]
  %v315 = vld [vmem:[%s4 + $0x100] sm:$0xff]
  %v316 = vld [vmem:[%s4 + $0x108] sm:$0xff]
  %v317 = vld [vmem:[%s4 + $0x110] sm:$0xff]
  %v318 = vld [vmem:[%s4 + $0x118] sm:$0xff]
  %v319 = vld [vmem:[%s4 + $0x120] sm:$0xff]
  %v320 = vld [vmem:[%s4 + $0x128] sm:$0xff]
  %v321 = vld [vmem:[%s4 + $0x130] sm:$0xff]
  %v322 = vld [vmem:[%s4 + $0x138] sm:$0xff]
  %v323 = vld [vmem:[%s4 + $0x140] sm:$0xff]
  %v324 = vld [vmem:[%s4 + $0x148] sm:$0xff]
  %v325 = vld [vmem:[%s4 + $0x150] sm:$0xff]
  %v326 = vld [vmem:[%s4 + $0x158] sm:$0xff]
  %v327 = vld [vmem:[%s4 + $0x160] sm:$0xff]
  %v328 = vld [vmem:[%s4 + $0x168] sm:$0xff]
  %v329 = vld [vmem:[%s4 + $0x170] sm:$0xff]
  %v330 = vld [vmem:[%s4 + $0x178] sm:$0xff]
  %v331 = vld [vmem:[%s4 + $0x180] sm:$0xff]
  %v332 = vld [vmem:[%s4 + $0x188] sm:$0xff]
  %v333 = vld [vmem:[%s4 + $0x190] sm:$0xff]
  %v334 = vld [vmem:[%s4 + $0x198] sm:$0xff]
  %v335 = vld [vmem:[%s4 + $0x1a0] sm:$0xff]
  %v336 = vld [vmem:[%s4 + $0x1a8] sm:$0xff]
  %v337 = vld [vmem:[%s4 + $0x1b0] sm:$0xff]
  %v338 = vld [vmem:[%s4 + $0x1b8] sm:$0xff]
  %v339 = vld [vmem:[%s4 + $0x1c0] sm:$0xff]
  %v340 = vld [vmem:[%s4 + $0x1c8] sm:$0xff]
  %v341 = vld [vmem:[%s4 + $0x1d0] sm:$0xff]
  %v342 = vld [vmem:[%s4 + $0x1d8] sm:$0xff]
  %v343 = vld [vmem:[%s4 + $0x1e0] sm:$0xff]
  %v344 = vld [vmem:[%s4 + $0x1e8] sm:$0xff]
  %v345 = vld [vmem:[%s4 + $0x1f0] sm:$0xff]
  %v346 = vld [vmem:[%s4 + $0x1f8] sm:$0xff]
  %v347 = vld [vmem:[%s4 + $0x200] sm:$0xff]
  %v348 = vld [vmem:[%s4 + $0x208] sm:$0xff]
  %v349 = vld [vmem:[%s4 + $0x210] sm:$0xff]
  %v350 = vld [vmem:[%s4 + $0x218] sm:$0xff]
  %v351 = vld [vmem:[%s4 + $0x220] sm:$0xff]
  %v352 = vld [vmem:[%s4 + $0x228] sm:$0xff]
  %v353 = vld [vmem:[%s4 + $0x230] sm:$0xff]
  %v354 = vld [vmem:[%s4 + $0x238] sm:$0xff]
  %v355 = vld [vmem:[%s4 + $0x240] sm:$0xff]
  %v356 = vld [vmem:[%s4 + $0x248] sm:$0xff]
  %v357 = vld [vmem:[%s4 + $0x250] sm:$0xff]
  %v358 = vld [vmem:[%s4 + $0x258] sm:$0xff]
  %v359 = vld [vmem:[%s4 + $0x260] sm:$0xff]
  %v360 = vld [vmem:[%s4 + $0x268] sm:$0xff]
  %v361 = vld [vmem:[%s4 + $0x270] sm:$0xff]
  %v362 = vld [vmem:[%s4 + $0x278] sm:$0xff]
  %v363 = vld [vmem:[%s4 + $0x280] sm:$0xff]
  %v364 = vld [vmem:[%s4 + $0x288] sm:$0xff]
  %v365 = vld [vmem:[%s4 + $0x290] sm:$0xff]
  %v366 = vld [vmem:[%s4 + $0x298] sm:$0xff]
  %v367 = vld [vmem:[%s4 + $0x2a0] sm:$0xff]
  %v368 = vld [vmem:[%s4 + $0x2a8] sm:$0xff]
  %v369 = vld [vmem:[%s4 + $0x2b0] sm:$0xff]
  %v370 = vld [vmem:[%s4 + $0x2b8] sm:$0xff]
  %v371 = vld [vmem:[%s4 + $0x2c0] sm:$0xff]
  %v372 = vld [vmem:[%s4 + $0x2c8] sm:$0xff]
  %v373 = vld [vmem:[%s4 + $0x2d0] sm:$0xff]
  %v374 = vld [vmem:[%s4 + $0x2d8] sm:$0xff]
  %v375 = vld [vmem:[%s4 + $0x2e0] sm:$0xff]
  %v376 = vld [vmem:[%s4 + $0x2e8] sm:$0xff]
  %v377 = vld [vmem:[%s4 + $0x2f0] sm:$0xff]
  %v378 = vld [vmem:[%s4 + $0x2f8] sm:$0xff]
  %v379 = vld [vmem:[%s4 + $0x300] sm:$0xff]
  %v380 = vld [vmem:[%s4 + $0x308] sm:$0xff]
  %v381 = vld [vmem:[%s4 + $0x310] sm:$0xff]
  %v382 = vld [vmem:[%s4 + $0x318] sm:$0xff]
  %v383 = vld [vmem:[%s4 + $0x320] sm:$0xff]
  %v384 = vld [vmem:[%s4 + $0x328] sm:$0xff]
  %v385 = vld [vmem:[%s4 + $0x330] sm:$0xff]
  %v386 = vld [vmem:[%s4 + $0x338] sm:$0xff]
  %v387 = vld [vmem:[%s4 + $0x340] sm:$0xff]
  %v388 = vld [vmem:[%s4 + $0x348] sm:$0xff]
  %v389 = vld [vmem:[%s4 + $0x350] sm:$0xff]
  %v390 = vld [vmem:[%s4 + $0x358] sm:$0xff]
  %v391 = vld [vmem:[%s4 + $0x360] sm:$0xff]
  %v392 = vld [vmem:[%s4 + $0x368] sm:$0xff]
  %v393 = vld [vmem:[%s4 + $0x370] sm:$0xff]
  %v394 = vld [vmem:[%s4 + $0x378] sm:$0xff]
  %v395 = vld [vmem:[%s4 + $0x380] sm:$0xff]
  %v396 = vld [vmem:[%s4 + $0x388] sm:$0xff]
  %v397 = vld [vmem:[%s4 + $0x390] sm:$0xff]
  %v398 = vld [vmem:[%s4 + $0x398] sm:$0xff]
  %v399 = vld [vmem:[%s4 + $0x3a0] sm:$0xff]
  %v400 = vld [vmem:[%s4 + $0x3a8] sm:$0xff]
  %v401 = vld [vmem:[%s4 + $0x3b0] sm:$0xff]
  %v402 = vld [vmem:[%s4 + $0x3b8] sm:$0xff]
  %v403 = vld [vmem:[%s4 + $0x3c0] sm:$0xff]
  %v404 = vld [vmem:[%s4 + $0x3c8] sm:$0xff]
  %v405 = vld [vmem:[%s4 + $0x3d0] sm:$0xff]
  %v406 = vld [vmem:[%s4 + $0x3d8] sm:$0xff]
  %v407 = vld [vmem:[%s4 + $0x3e0] sm:$0xff]
  %v408 = vld [vmem:[%s4 + $0x3e8] sm:$0xff]
  %v409 = vld [vmem:[%s4 + $0x3f0] sm:$0xff]
  %v410 = vld [vmem:[%s4 + $0x3f8] sm:$0xff]
  %v411 = vld [vmem:[%s3] sm:$0xff]
  %v412 = vld [vmem:[%s0] sm:$0xff]
  %v413 = vld [vmem:[%s0 + $0x8] sm:$0xff]
  %v414 = vld [vmem:[%s0 + $0x10] sm:$0xff]
  %v415 = vld [vmem:[%s0 + $0x18] sm:$0xff]
  %v416 = vld [vmem:[%s0 + $0x20] sm:$0xff]
  %v417 = vld [vmem:[%s0 + $0x28] sm:$0xff]
  %v418 = vld [vmem:[%s0 + $0x30] sm:$0xff]
  %v419 = vld [vmem:[%s0 + $0x38] sm:$0xff]
  %v548 = vunpack.c.l.b16 %v27
  %v549 = vunpack.c.h.b16 %v27
  %v550 = vunpack.c.l.b16 %v28
  %v551 = vunpack.c.h.b16 %v28
  %v552 = vunpack.c.l.b16 %v29
  %v553 = vunpack.c.h.b16 %v29
  %v554 = vunpack.c.l.b16 %v30
  %v555 = vunpack.c.h.b16 %v30
  %v556 = vunpack.c.l.b16 %v31
  %v557 = vunpack.c.h.b16 %v31
  %v558 = vunpack.c.l.b16 %v32
  %v559 = vunpack.c.h.b16 %v32
  %v560 = vunpack.c.l.b16 %v33
  %v561 = vunpack.c.h.b16 %v33
  %v562 = vunpack.c.l.b16 %v34
  %v563 = vunpack.c.h.b16 %v34
  %v564 = vunpack.c.l.b16 %v35
  %v565 = vunpack.c.h.b16 %v35
  %v566 = vunpack.c.l.b16 %v36
  %v567 = vunpack.c.h.b16 %v36
  %v568 = vunpack.c.l.b16 %v37
  %v569 = vunpack.c.h.b16 %v37
  %v570 = vunpack.c.l.b16 %v38
  %v571 = vunpack.c.h.b16 %v38
  %v572 = vunpack.c.l.b16 %v39
  %v573 = vunpack.c.h.b16 %v39
  %v574 = vunpack.c.l.b16 %v40
  %v575 = vunpack.c.h.b16 %v40
  %v576 = vunpack.c.l.b16 %v41
  %v577 = vunpack.c.h.b16 %v41
  %v578 = vunpack.c.l.b16 %v42
  %v579 = vunpack.c.h.b16 %v42
  %v580 = vunpack.c.l.b16 %v43
  %v581 = vunpack.c.h.b16 %v43
  %v582 = vunpack.c.l.b16 %v44
  %v583 = vunpack.c.h.b16 %v44
  %v584 = vunpack.c.l.b16 %v45
  %v585 = vunpack.c.h.b16 %v45
  %v586 = vunpack.c.l.b16 %v46
  %v587 = vunpack.c.h.b16 %v46
  %v588 = vunpack.c.l.b16 %v47
  %v589 = vunpack.c.h.b16 %v47
  %v590 = vunpack.c.l.b16 %v48
  %v591 = vunpack.c.h.b16 %v48
  %v592 = vunpack.c.l.b16 %v49
  %v593 = vunpack.c.h.b16 %v49
  %v594 = vunpack.c.l.b16 %v50
  %v595 = vunpack.c.h.b16 %v50
  %v596 = vunpack.c.l.b16 %v51
  %v597 = vunpack.c.h.b16 %v51
  %v598 = vunpack.c.l.b16 %v52
  %v599 = vunpack.c.h.b16 %v52
  %v600 = vunpack.c.l.b16 %v53
  %v601 = vunpack.c.h.b16 %v53
  %v602 = vunpack.c.l.b16 %v54
  %v603 = vunpack.c.h.b16 %v54
  %v604 = vunpack.c.l.b16 %v55
  %v605 = vunpack.c.h.b16 %v55
  %v606 = vunpack.c.l.b16 %v56
  %v607 = vunpack.c.h.b16 %v56
  %v608 = vunpack.c.l.b16 %v57
  %v609 = vunpack.c.h.b16 %v57
  %v610 = vunpack.c.l.b16 %v58
  %v611 = vunpack.c.h.b16 %v58
  %v612 = vunpack.c.l.b16 %v59
  %v613 = vunpack.c.h.b16 %v59
  %v614 = vunpack.c.l.b16 %v60
  %v615 = vunpack.c.h.b16 %v60
  %v616 = vunpack.c.l.b16 %v61
  %v617 = vunpack.c.h.b16 %v61
  %v618 = vunpack.c.l.b16 %v62
  %v619 = vunpack.c.h.b16 %v62
  %v620 = vunpack.c.l.b16 %v63
  %v621 = vunpack.c.h.b16 %v63
  %v622 = vunpack.c.l.b16 %v64
  %v623 = vunpack.c.h.b16 %v64
  %v624 = vunpack.c.l.b16 %v65
  %v625 = vunpack.c.h.b16 %v65
  %v626 = vunpack.c.l.b16 %v66
  %v627 = vunpack.c.h.b16 %v66
  %v628 = vunpack.c.l.b16 %v67
  %v629 = vunpack.c.h.b16 %v67
  %v630 = vunpack.c.l.b16 %v68
  %v631 = vunpack.c.h.b16 %v68
  %v632 = vunpack.c.l.b16 %v69
  %v633 = vunpack.c.h.b16 %v69
  %v634 = vunpack.c.l.b16 %v70
  %v635 = vunpack.c.h.b16 %v70
  %v636 = vunpack.c.l.b16 %v71
  %v637 = vunpack.c.h.b16 %v71
  %v638 = vunpack.c.l.b16 %v72
  %v639 = vunpack.c.h.b16 %v72
  %v640 = vunpack.c.l.b16 %v73
  %v641 = vunpack.c.h.b16 %v73
  %v642 = vunpack.c.l.b16 %v74
  %v643 = vunpack.c.h.b16 %v74
  %v644 = vunpack.c.l.b16 %v75
  %v645 = vunpack.c.h.b16 %v75
  %v646 = vunpack.c.l.b16 %v76
  %v647 = vunpack.c.h.b16 %v76
  %v648 = vunpack.c.l.b16 %v77
  %v649 = vunpack.c.h.b16 %v77
  %v650 = vunpack.c.l.b16 %v78
  %v651 = vunpack.c.h.b16 %v78
  %v652 = vunpack.c.l.b16 %v79
  %v653 = vunpack.c.h.b16 %v79
  %v654 = vunpack.c.l.b16 %v80
  %v655 = vunpack.c.h.b16 %v80
  %v656 = vunpack.c.l.b16 %v81
  %v657 = vunpack.c.h.b16 %v81
  %v658 = vunpack.c.l.b16 %v82
  %v659 = vunpack.c.h.b16 %v82
  %v660 = vunpack.c.l.b16 %v83
  %v661 = vunpack.c.h.b16 %v83
  %v662 = vunpack.c.l.b16 %v84
  %v663 = vunpack.c.h.b16 %v84
  %v664 = vunpack.c.l.b16 %v85
  %v665 = vunpack.c.h.b16 %v85
  %v666 = vunpack.c.l.b16 %v86
  %v667 = vunpack.c.h.b16 %v86
  %v668 = vunpack.c.l.b16 %v87
  %v669 = vunpack.c.h.b16 %v87
  %v670 = vunpack.c.l.b16 %v88
  %v671 = vunpack.c.h.b16 %v88
  %v672 = vunpack.c.l.b16 %v89
  %v673 = vunpack.c.h.b16 %v89
  %v674 = vunpack.c.l.b16 %v90
  %v675 = vunpack.c.h.b16 %v90
  %v676 = vunpack.c.l.b16 %v91
  %v677 = vunpack.c.h.b16 %v91
  %v678 = vunpack.c.l.b16 %v92
  %v679 = vunpack.c.h.b16 %v92
  %v680 = vunpack.c.l.b16 %v93
  %v681 = vunpack.c.h.b16 %v93
  %v682 = vunpack.c.l.b16 %v94
  %v683 = vunpack.c.h.b16 %v94
  %v684 = vunpack.c.l.b16 %v95
  %v685 = vunpack.c.h.b16 %v95
  %v686 = vunpack.c.l.b16 %v96
  %v687 = vunpack.c.h.b16 %v96
  %v688 = vunpack.c.l.b16 %v97
  %v689 = vunpack.c.h.b16 %v97
  %v690 = vunpack.c.l.b16 %v98
  %v691 = vunpack.c.h.b16 %v98
  %v692 = vunpack.c.l.b16 %v99
  %v693 = vunpack.c.h.b16 %v99
  %v694 = vunpack.c.l.b16 %v100
  %v695 = vunpack.c.h.b16 %v100
  %v696 = vunpack.c.l.b16 %v101
  %v697 = vunpack.c.h.b16 %v101
  %v698 = vunpack.c.l.b16 %v102
  %v699 = vunpack.c.h.b16 %v102
  %v700 = vunpack.c.l.b16 %v103
  %v701 = vunpack.c.h.b16 %v103
  %v702 = vunpack.c.l.b16 %v104
  %v703 = vunpack.c.h.b16 %v104
  %v704 = vunpack.c.l.b16 %v105
  %v705 = vunpack.c.h.b16 %v105
  %v706 = vunpack.c.l.b16 %v106
  %v707 = vunpack.c.h.b16 %v106
  %v708 = vunpack.c.l.b16 %v107
  %v709 = vunpack.c.h.b16 %v107
  %v710 = vunpack.c.l.b16 %v108
  %v711 = vunpack.c.h.b16 %v108
  %v712 = vunpack.c.l.b16 %v109
  %v713 = vunpack.c.h.b16 %v109
  %v714 = vunpack.c.l.b16 %v110
  %v715 = vunpack.c.h.b16 %v110
  %v716 = vunpack.c.l.b16 %v111
  %v717 = vunpack.c.h.b16 %v111
  %v718 = vunpack.c.l.b16 %v112
  %v719 = vunpack.c.h.b16 %v112
  %v720 = vunpack.c.l.b16 %v113
  %v721 = vunpack.c.h.b16 %v113
  %v722 = vunpack.c.l.b16 %v114
  %v723 = vunpack.c.h.b16 %v114
  %v724 = vunpack.c.l.b16 %v115
  %v725 = vunpack.c.h.b16 %v115
  %v726 = vunpack.c.l.b16 %v116
  %v727 = vunpack.c.h.b16 %v116
  %v728 = vunpack.c.l.b16 %v117
  %v729 = vunpack.c.h.b16 %v117
  %v730 = vunpack.c.l.b16 %v118
  %v731 = vunpack.c.h.b16 %v118
  %v732 = vunpack.c.l.b16 %v119
  %v733 = vunpack.c.h.b16 %v119
  %v734 = vunpack.c.l.b16 %v120
  %v735 = vunpack.c.h.b16 %v120
  %v736 = vunpack.c.l.b16 %v121
  %v737 = vunpack.c.h.b16 %v121
  %v738 = vunpack.c.l.b16 %v122
  %v739 = vunpack.c.h.b16 %v122
  %v740 = vunpack.c.l.b16 %v123
  %v741 = vunpack.c.h.b16 %v123
  %v742 = vunpack.c.l.b16 %v124
  %v743 = vunpack.c.h.b16 %v124
  %v744 = vunpack.c.l.b16 %v125
  %v745 = vunpack.c.h.b16 %v125
  %v746 = vunpack.c.l.b16 %v126
  %v747 = vunpack.c.h.b16 %v126
  %v748 = vunpack.c.l.b16 %v127
  %v749 = vunpack.c.h.b16 %v127
  %v750 = vunpack.c.l.b16 %v128
  %v751 = vunpack.c.h.b16 %v128
  %v752 = vunpack.c.l.b16 %v129
  %v753 = vunpack.c.h.b16 %v129
  %v754 = vunpack.c.l.b16 %v130
  %v755 = vunpack.c.h.b16 %v130
  %v756 = vunpack.c.l.b16 %v131
  %v757 = vunpack.c.h.b16 %v131
  %v758 = vunpack.c.l.b16 %v132
  %v759 = vunpack.c.h.b16 %v132
  %v760 = vunpack.c.l.b16 %v133
  %v761 = vunpack.c.h.b16 %v133
  %v762 = vunpack.c.l.b16 %v134
  %v763 = vunpack.c.h.b16 %v134
  %v764 = vunpack.c.l.b16 %v135
  %v765 = vunpack.c.h.b16 %v135
  %v766 = vunpack.c.l.b16 %v136
  %v767 = vunpack.c.h.b16 %v136
  %v768 = vunpack.c.l.b16 %v137
  %v769 = vunpack.c.h.b16 %v137
  %v770 = vunpack.c.l.b16 %v138
  %v771 = vunpack.c.h.b16 %v138
  %v772 = vunpack.c.l.b16 %v139
  %v773 = vunpack.c.h.b16 %v139
  %v774 = vunpack.c.l.b16 %v140
  %v775 = vunpack.c.h.b16 %v140
  %v776 = vunpack.c.l.b16 %v141
  %v777 = vunpack.c.h.b16 %v141
  %v778 = vunpack.c.l.b16 %v142
  %v779 = vunpack.c.h.b16 %v142
  %v780 = vunpack.c.l.b16 %v143
  %v781 = vunpack.c.h.b16 %v143
  %v782 = vunpack.c.l.b16 %v144
  %v783 = vunpack.c.h.b16 %v144
  %v784 = vunpack.c.l.b16 %v145
  %v785 = vunpack.c.h.b16 %v145
  %v786 = vunpack.c.l.b16 %v146
  %v787 = vunpack.c.h.b16 %v146
  %v788 = vunpack.c.l.b16 %v147
  %v789 = vunpack.c.h.b16 %v147
  %v790 = vunpack.c.l.b16 %v148
  %v791 = vunpack.c.h.b16 %v148
  %v792 = vunpack.c.l.b16 %v149
  %v793 = vunpack.c.h.b16 %v149
  %v794 = vunpack.c.l.b16 %v150
  %v795 = vunpack.c.h.b16 %v150
  %v796 = vunpack.c.l.b16 %v151
  %v797 = vunpack.c.h.b16 %v151
  %v798 = vunpack.c.l.b16 %v152
  %v799 = vunpack.c.h.b16 %v152
  %v800 = vunpack.c.l.b16 %v153
  %v801 = vunpack.c.h.b16 %v153
  %v802 = vunpack.c.l.b16 %v154
  %v803 = vunpack.c.h.b16 %v154
  %v804 = vpack.c.b16 %v556, %v548
  %v805 = vpack.c.b16 %v557, %v549
  %v806 = vpack.c.b16 %v558, %v550
  %v807 = vpack.c.b16 %v559, %v551
  %v808 = vpack.c.b16 %v560, %v552
  %v809 = vpack.c.b16 %v561, %v553
  %v810 = vpack.c.b16 %v562, %v554
  %v811 = vpack.c.b16 %v563, %v555
  %v812 = vpack.c.b16 %v572, %v564
  %v813 = vpack.c.b16 %v573, %v565
  %v814 = vpack.c.b16 %v574, %v566
  %v815 = vpack.c.b16 %v575, %v567
  %v816 = vpack.c.b16 %v576, %v568
  %v817 = vpack.c.b16 %v577, %v569
  %v818 = vpack.c.b16 %v578, %v570
  %v819 = vpack.c.b16 %v579, %v571
  %v820 = vpack.c.b16 %v588, %v580
  %v821 = vpack.c.b16 %v589, %v581
  %v822 = vpack.c.b16 %v590, %v582
  %v823 = vpack.c.b16 %v591, %v583
  %v824 = vpack.c.b16 %v592, %v584
  %v825 = vpack.c.b16 %v593, %v585
  %v826 = vpack.c.b16 %v594, %v586
  %v827 = vpack.c.b16 %v595, %v587
  %v828 = vpack.c.b16 %v604, %v596
  %v829 = vpack.c.b16 %v605, %v597
  %v830 = vpack.c.b16 %v606, %v598
  %v831 = vpack.c.b16 %v607, %v599
  %v832 = vpack.c.b16 %v608, %v600
  %v833 = vpack.c.b16 %v609, %v601
  %v834 = vpack.c.b16 %v610, %v602
  %v835 = vpack.c.b16 %v611, %v603
  %v836 = vpack.c.b16 %v620, %v612
  %v837 = vpack.c.b16 %v621, %v613
  %v838 = vpack.c.b16 %v622, %v614
  %v839 = vpack.c.b16 %v623, %v615
  %v840 = vpack.c.b16 %v624, %v616
  %v841 = vpack.c.b16 %v625, %v617
  %v842 = vpack.c.b16 %v626, %v618
  %v843 = vpack.c.b16 %v627, %v619
  %v844 = vpack.c.b16 %v636, %v628
  %v845 = vpack.c.b16 %v637, %v629
  %v846 = vpack.c.b16 %v638, %v630
  %v847 = vpack.c.b16 %v639, %v631
  %v848 = vpack.c.b16 %v640, %v632
  %v849 = vpack.c.b16 %v641, %v633
  %v850 = vpack.c.b16 %v642, %v634
  %v851 = vpack.c.b16 %v643, %v635
  %v852 = vpack.c.b16 %v652, %v644
  %v853 = vpack.c.b16 %v653, %v645
  %v854 = vpack.c.b16 %v654, %v646
  %v855 = vpack.c.b16 %v655, %v647
  %v856 = vpack.c.b16 %v656, %v648
  %v857 = vpack.c.b16 %v657, %v649
  %v858 = vpack.c.b16 %v658, %v650
  %v859 = vpack.c.b16 %v659, %v651
  %v860 = vpack.c.b16 %v668, %v660
  %v861 = vpack.c.b16 %v669, %v661
  %v862 = vpack.c.b16 %v670, %v662
  %v863 = vpack.c.b16 %v671, %v663
  %v864 = vpack.c.b16 %v672, %v664
  %v865 = vpack.c.b16 %v673, %v665
  %v866 = vpack.c.b16 %v674, %v666
  %v867 = vpack.c.b16 %v675, %v667
  %v868 = vpack.c.b16 %v684, %v676
  %v869 = vpack.c.b16 %v685, %v677
  %v870 = vpack.c.b16 %v686, %v678
  %v871 = vpack.c.b16 %v687, %v679
  %v872 = vpack.c.b16 %v688, %v680
  %v873 = vpack.c.b16 %v689, %v681
  %v874 = vpack.c.b16 %v690, %v682
  %v875 = vpack.c.b16 %v691, %v683
  %v876 = vpack.c.b16 %v700, %v692
  %v877 = vpack.c.b16 %v701, %v693
  %v878 = vpack.c.b16 %v702, %v694
  %v879 = vpack.c.b16 %v703, %v695
  %v880 = vpack.c.b16 %v704, %v696
  %v881 = vpack.c.b16 %v705, %v697
  %v882 = vpack.c.b16 %v706, %v698
  %v883 = vpack.c.b16 %v707, %v699
  %v884 = vpack.c.b16 %v716, %v708
  %v885 = vpack.c.b16 %v717, %v709
  %v886 = vpack.c.b16 %v718, %v710
  %v887 = vpack.c.b16 %v719, %v711
  %v888 = vpack.c.b16 %v720, %v712
  %v889 = vpack.c.b16 %v721, %v713
  %v890 = vpack.c.b16 %v722, %v714
  %v891 = vpack.c.b16 %v723, %v715
  %v892 = vpack.c.b16 %v732, %v724
  %v893 = vpack.c.b16 %v733, %v725
  %v894 = vpack.c.b16 %v734, %v726
  %v895 = vpack.c.b16 %v735, %v727
  %v896 = vpack.c.b16 %v736, %v728
  %v897 = vpack.c.b16 %v737, %v729
  %v898 = vpack.c.b16 %v738, %v730
  %v899 = vpack.c.b16 %v739, %v731
  %v900 = vpack.c.b16 %v748, %v740
  %v901 = vpack.c.b16 %v749, %v741
  %v902 = vpack.c.b16 %v750, %v742
  %v903 = vpack.c.b16 %v751, %v743
  %v904 = vpack.c.b16 %v752, %v744
  %v905 = vpack.c.b16 %v753, %v745
  %v906 = vpack.c.b16 %v754, %v746
  %v907 = vpack.c.b16 %v755, %v747
  %v908 = vpack.c.b16 %v764, %v756
  %v909 = vpack.c.b16 %v765, %v757
  %v910 = vpack.c.b16 %v766, %v758
  %v911 = vpack.c.b16 %v767, %v759
  %v912 = vpack.c.b16 %v768, %v760
  %v913 = vpack.c.b16 %v769, %v761
  %v914 = vpack.c.b16 %v770, %v762
  %v915 = vpack.c.b16 %v771, %v763
  %v916 = vpack.c.b16 %v780, %v772
  %v917 = vpack.c.b16 %v781, %v773
  %v918 = vpack.c.b16 %v782, %v774
  %v919 = vpack.c.b16 %v783, %v775
  %v920 = vpack.c.b16 %v784, %v776
  %v921 = vpack.c.b16 %v785, %v777
  %v922 = vpack.c.b16 %v786, %v778
  %v923 = vpack.c.b16 %v787, %v779
  %v924 = vpack.c.b16 %v796, %v788
  %v925 = vpack.c.b16 %v797, %v789
  %v926 = vpack.c.b16 %v798, %v790
  %v927 = vpack.c.b16 %v799, %v791
  %v928 = vpack.c.b16 %v800, %v792
  %v929 = vpack.c.b16 %v801, %v793
  %v930 = vpack.c.b16 %v802, %v794
  %v931 = vpack.c.b16 %v803, %v795
  %1060 = vmatpush.bf16.msra.mxu0 %v860
  %1061 = vmatpush.bf16.msra.mxu0 %v852
  %1062 = vmatpush.bf16.msra.mxu0 %v844
  %1063 = vmatpush.bf16.msra.mxu0 %v836
  %1064 = vmatpush.bf16.msra.mxu0 %v828
  %1065 = vmatpush.bf16.msra.mxu0 %v820
  %1066 = vmatpush.bf16.msra.mxu0 %v812
  %1067 = vmatpush.bf16.msra.mxu0 %v804
  %1068 = vmatmul.bf16.gmra.mxu0 0
  %v1069 = vpop.f32.mrf.mxu0
  %v1070 = vadd.f32 0.0, %v1069
  %v1071 = vpop.f32.mrf.mxu0
  %1072 = vdwg.mxu0
  %1073 = vmatpush.bf16.msra.mxu0 %v924
  %1074 = vmatpush.bf16.msra.mxu0 %v916
  %1075 = vmatpush.bf16.msra.mxu0 %v908
  %1076 = vmatpush.bf16.msra.mxu0 %v900
  %1077 = vmatpush.bf16.msra.mxu0 %v892
  %1078 = vmatpush.bf16.msra.mxu0 %v884
  %1079 = vmatpush.bf16.msra.mxu0 %v876
  %1080 = vmatpush.bf16.msra.mxu0 %v868
  %1081 = vmatmul.bf16.gmra.mxu0 0
  %v1082 = vpop.f32.mrf.mxu0
  %v1083 = vadd.f32 %v1070, %v1082
  %v1084 = vpop.f32.mrf.mxu0
  %1085 = vdwg.mxu0
  %1086 = vmatpush.bf16.msra.mxu0 %v861
  %1087 = vmatpush.bf16.msra.mxu0 %v853
  %1088 = vmatpush.bf16.msra.mxu0 %v845
  %1089 = vmatpush.bf16.msra.mxu0 %v837
  %1090 = vmatpush.bf16.msra.mxu0 %v829
  %1091 = vmatpush.bf16.msra.mxu0 %v821
  %1092 = vmatpush.bf16.msra.mxu0 %v813
  %1093 = vmatpush.bf16.msra.mxu0 %v805
  %1094 = vmatmul.bf16.gmra.mxu0 0
  %v1095 = vpop.f32.mrf.mxu0
  %v1096 = vadd.f32 0.0, %v1095
  %v1097 = vpop.f32.mrf.mxu0
  %1098 = vdwg.mxu0
  %1099 = vmatpush.bf16.msra.mxu0 %v925
  %1100 = vmatpush.bf16.msra.mxu0 %v917
  %1101 = vmatpush.bf16.msra.mxu0 %v909
  %1102 = vmatpush.bf16.msra.mxu0 %v901
  %1103 = vmatpush.bf16.msra.mxu0 %v893
  %1104 = vmatpush.bf16.msra.mxu0 %v885
  %1105 = vmatpush.bf16.msra.mxu0 %v877
  %1106 = vmatpush.bf16.msra.mxu0 %v869
  %1107 = vmatmul.bf16.gmra.mxu0 0
  %v1108 = vpop.f32.mrf.mxu0
  %v1109 = vadd.f32 %v1096, %v1108
  %v1110 = vpop.f32.mrf.mxu0
  %1111 = vdwg.mxu0
  %1112 = vmatpush.bf16.msra.mxu0 %v862
  %1113 = vmatpush.bf16.msra.mxu0 %v854
  %1114 = vmatpush.bf16.msra.mxu0 %v846
  %1115 = vmatpush.bf16.msra.mxu0 %v838
  %1116 = vmatpush.bf16.msra.mxu0 %v830
  %1117 = vmatpush.bf16.msra.mxu0 %v822
  %1118 = vmatpush.bf16.msra.mxu0 %v814
  %1119 = vmatpush.bf16.msra.mxu0 %v806
  %1120 = vmatmul.bf16.gmra.mxu0 0
  %v1121 = vpop.f32.mrf.mxu0
  %v1122 = vadd.f32 0.0, %v1121
  %v1123 = vpop.f32.mrf.mxu0
  %1124 = vdwg.mxu0
  %1125 = vmatpush.bf16.msra.mxu0 %v926
  %1126 = vmatpush.bf16.msra.mxu0 %v918
  %1127 = vmatpush.bf16.msra.mxu0 %v910
  %1128 = vmatpush.bf16.msra.mxu0 %v902
  %1129 = vmatpush.bf16.msra.mxu0 %v894
  %1130 = vmatpush.bf16.msra.mxu0 %v886
  %1131 = vmatpush.bf16.msra.mxu0 %v878
  %1132 = vmatpush.bf16.msra.mxu0 %v870
  %1133 = vmatmul.bf16.gmra.mxu0 0
  %v1134 = vpop.f32.mrf.mxu0
  %v1135 = vadd.f32 %v1122, %v1134
  %v1136 = vpop.f32.mrf.mxu0
  %1137 = vdwg.mxu0
  %1138 = vmatpush.bf16.msra.mxu0 %v863
  %1139 = vmatpush.bf16.msra.mxu0 %v855
  %1140 = vmatpush.bf16.msra.mxu0 %v847
  %1141 = vmatpush.bf16.msra.mxu0 %v839
  %1142 = vmatpush.bf16.msra.mxu0 %v831
  %1143 = vmatpush.bf16.msra.mxu0 %v823
  %1144 = vmatpush.bf16.msra.mxu0 %v815
  %1145 = vmatpush.bf16.msra.mxu0 %v807
  %1146 = vmatmul.bf16.gmra.mxu0 0
  %v1147 = vpop.f32.mrf.mxu0
  %v1148 = vadd.f32 0.0, %v1147
  %v1149 = vpop.f32.mrf.mxu0
  %1150 = vdwg.mxu0
  %1151 = vmatpush.bf16.msra.mxu0 %v927
  %1152 = vmatpush.bf16.msra.mxu0 %v919
  %1153 = vmatpush.bf16.msra.mxu0 %v911
  %1154 = vmatpush.bf16.msra.mxu0 %v903
  %1155 = vmatpush.bf16.msra.mxu0 %v895
  %1156 = vmatpush.bf16.msra.mxu0 %v887
  %1157 = vmatpush.bf16.msra.mxu0 %v879
  %1158 = vmatpush.bf16.msra.mxu0 %v871
  %1159 = vmatmul.bf16.gmra.mxu0 0
  %v1160 = vpop.f32.mrf.mxu0
  %v1161 = vadd.f32 %v1148, %v1160
  %v1162 = vpop.f32.mrf.mxu0
  %1163 = vdwg.mxu0
  %1164 = vmatpush.bf16.msra.mxu0 %v864
  %1165 = vmatpush.bf16.msra.mxu0 %v856
  %1166 = vmatpush.bf16.msra.mxu0 %v848
  %1167 = vmatpush.bf16.msra.mxu0 %v840
  %1168 = vmatpush.bf16.msra.mxu0 %v832
  %1169 = vmatpush.bf16.msra.mxu0 %v824
  %1170 = vmatpush.bf16.msra.mxu0 %v816
  %1171 = vmatpush.bf16.msra.mxu0 %v808
  %1172 = vmatmul.bf16.gmra.mxu0 0
  %v1173 = vpop.f32.mrf.mxu0
  %v1174 = vadd.f32 0.0, %v1173
  %v1175 = vpop.f32.mrf.mxu0
  %1176 = vdwg.mxu0
  %1177 = vmatpush.bf16.msra.mxu0 %v928
  %1178 = vmatpush.bf16.msra.mxu0 %v920
  %1179 = vmatpush.bf16.msra.mxu0 %v912
  %1180 = vmatpush.bf16.msra.mxu0 %v904
  %1181 = vmatpush.bf16.msra.mxu0 %v896
  %1182 = vmatpush.bf16.msra.mxu0 %v888
  %1183 = vmatpush.bf16.msra.mxu0 %v880
  %1184 = vmatpush.bf16.msra.mxu0 %v872
  %1185 = vmatmul.bf16.gmra.mxu0 0
  %v1186 = vpop.f32.mrf.mxu0
  %v1187 = vadd.f32 %v1174, %v1186
  %v1188 = vpop.f32.mrf.mxu0
  %1189 = vdwg.mxu0
  %1190 = vmatpush.bf16.msra.mxu0 %v865
  %1191 = vmatpush.bf16.msra.mxu0 %v857
  %1192 = vmatpush.bf16.msra.mxu0 %v849
  %1193 = vmatpush.bf16.msra.mxu0 %v841
  %1194 = vmatpush.bf16.msra.mxu0 %v833
  %1195 = vmatpush.bf16.msra.mxu0 %v825
  %1196 = vmatpush.bf16.msra.mxu0 %v817
  %1197 = vmatpush.bf16.msra.mxu0 %v809
  %1198 = vmatmul.bf16.gmra.mxu0 0
  %v1199 = vpop.f32.mrf.mxu0
  %v1200 = vadd.f32 0.0, %v1199
  %v1201 = vpop.f32.mrf.mxu0
  %1202 = vdwg.mxu0
  %1203 = vmatpush.bf16.msra.mxu0 %v929
  %1204 = vmatpush.bf16.msra.mxu0 %v921
  %1205 = vmatpush.bf16.msra.mxu0 %v913
  %1206 = vmatpush.bf16.msra.mxu0 %v905
  %1207 = vmatpush.bf16.msra.mxu0 %v897
  %1208 = vmatpush.bf16.msra.mxu0 %v889
  %1209 = vmatpush.bf16.msra.mxu0 %v881
  %1210 = vmatpush.bf16.msra.mxu0 %v873
  %1211 = vmatmul.bf16.gmra.mxu0 0
  %v1212 = vpop.f32.mrf.mxu0
  %v1213 = vadd.f32 %v1200, %v1212
  %v1214 = vpop.f32.mrf.mxu0
  %1215 = vdwg.mxu0
  %1216 = vmatpush.bf16.msra.mxu0 %v866
  %1217 = vmatpush.bf16.msra.mxu0 %v858
  %1218 = vmatpush.bf16.msra.mxu0 %v850
  %1219 = vmatpush.bf16.msra.mxu0 %v842
  %1220 = vmatpush.bf16.msra.mxu0 %v834
  %1221 = vmatpush.bf16.msra.mxu0 %v826
  %1222 = vmatpush.bf16.msra.mxu0 %v818
  %1223 = vmatpush.bf16.msra.mxu0 %v810
  %1224 = vmatmul.bf16.gmra.mxu0 0
  %v1225 = vpop.f32.mrf.mxu0
  %v1226 = vadd.f32 0.0, %v1225
  %v1227 = vpop.f32.mrf.mxu0
  %1228 = vdwg.mxu0
  %1229 = vmatpush.bf16.msra.mxu0 %v930
  %1230 = vmatpush.bf16.msra.mxu0 %v922
  %1231 = vmatpush.bf16.msra.mxu0 %v914
  %1232 = vmatpush.bf16.msra.mxu0 %v906
  %1233 = vmatpush.bf16.msra.mxu0 %v898
  %1234 = vmatpush.bf16.msra.mxu0 %v890
  %1235 = vmatpush.bf16.msra.mxu0 %v882
  %1236 = vmatpush.bf16.msra.mxu0 %v874
  %1237 = vmatmul.bf16.gmra.mxu0 0
  %v1238 = vpop.f32.mrf.mxu0
  %v1239 = vadd.f32 %v1226, %v1238
  %v1240 = vpop.f32.mrf.mxu0
  %1241 = vdwg.mxu0
  %1242 = vmatpush.bf16.msra.mxu0 %v867
  %1243 = vmatpush.bf16.msra.mxu0 %v859
  %1244 = vmatpush.bf16.msra.mxu0 %v851
  %1245 = vmatpush.bf16.msra.mxu0 %v843
  %1246 = vmatpush.bf16.msra.mxu0 %v835
  %1247 = vmatpush.bf16.msra.mxu0 %v827
  %1248 = vmatpush.bf16.msra.mxu0 %v819
  %1249 = vmatpush.bf16.msra.mxu0 %v811
  %1250 = vmatmul.bf16.gmra.mxu0 0
  %v1251 = vpop.f32.mrf.mxu0
  %v1252 = vadd.f32 0.0, %v1251
  %v1253 = vpop.f32.mrf.mxu0
  %1254 = vdwg.mxu0
  %1255 = vmatpush.bf16.msra.mxu0 %v931
  %1256 = vmatpush.bf16.msra.mxu0 %v923
  %1257 = vmatpush.bf16.msra.mxu0 %v915
  %1258 = vmatpush.bf16.msra.mxu0 %v907
  %1259 = vmatpush.bf16.msra.mxu0 %v899
  %1260 = vmatpush.bf16.msra.mxu0 %v891
  %1261 = vmatpush.bf16.msra.mxu0 %v883
  %1262 = vmatpush.bf16.msra.mxu0 %v875
  %1263 = vmatmul.bf16.gmra.mxu0 0
  %v1264 = vpop.f32.mrf.mxu0
  %v1265 = vadd.f32 %v1252, %v1264
  %v1266 = vpop.f32.mrf.mxu0
  %1267 = vdwg.mxu0
  %v1268 = vadd.f32 %v412, %v1083
  %v1269 = vadd.f32 %v413, %v1109
  %v1270 = vadd.f32 %v414, %v1135
  %v1271 = vadd.f32 %v415, %v1161
  %v1272 = vadd.f32 %v416, %v1187
  %v1273 = vadd.f32 %v417, %v1213
  %v1274 = vadd.f32 %v418, %v1239
  %v1275 = vadd.f32 %v419, %v1265
  %v1276 = vxor.u32 %v1268, 2147483648
  %v1277 = vxor.u32 %v1269, 2147483648
  %v1278 = vmul.f32 %v1276, 1.442695
  %v1279 = vpow.pop %v1278
  %v1280 = vmul.f32 %v1277, 1.442695
  %v1281 = vpow.pop %v1280
  %v1282 = vadd.f32 %v1279, 1.0
  %v1283 = vadd.f32 %v1281, 1.0
  %v1284 = vrcp.pop %v1282
  %v1285 = vmul.f32 %v1282, %v1284
  %v1286 = vsub.f32 1.0, %v1285
  %v1287 = vmul.f32 %v1284, %v1286
  %v1288 = vadd.f32 %v1284, %v1287
  %vm1289 = vweird.f32 %v1282
  %vm1290 = vweird.f32 %v1284
  %vm1291 = vmor %vm1289, %vm1290
  %v1292 = vsel %vm1291, %v1284, %v1288
  %v1293 = vand.u32 2147483647, %v1282
  %vm1294 = vcmp.eq.f32.partialorder %v1293, 8.507059e+37
  %v1295 = vand.u32 %v1282, 2147483648
  %v1296 = vor.u32 1.1754944e-38, %v1295
  %v1297 = vsel %vm1294, %v1296, %v1292
  %v1298 = vmul.f32 1.0, %v1297
  %v1299 = vrcp.pop %v1283
  %v1300 = vmul.f32 %v1283, %v1299
  %v1301 = vsub.f32 1.0, %v1300
  %v1302 = vmul.f32 %v1299, %v1301
  %v1303 = vadd.f32 %v1299, %v1302
  %vm1304 = vweird.f32 %v1283
  %vm1305 = vweird.f32 %v1299
  %vm1306 = vmor %vm1304, %vm1305
  %v1307 = vsel %vm1306, %v1299, %v1303
  %v1308 = vand.u32 2147483647, %v1283
  %vm1309 = vcmp.eq.f32.partialorder %v1308, 8.507059e+37
  %v1310 = vand.u32 %v1283, 2147483648
  %v1311 = vor.u32 1.1754944e-38, %v1310
  %v1312 = vsel %vm1309, %v1311, %v1307
  %v1313 = vmul.f32 1.0, %v1312
  %v1314 = vxor.u32 %v1270, 2147483648
  %v1315 = vxor.u32 %v1271, 2147483648
  %v1316 = vmul.f32 %v1314, 1.442695
  %v1317 = vpow.pop %v1316
  %v1318 = vmul.f32 %v1315, 1.442695
  %v1319 = vpow.pop %v1318
  %v1320 = vadd.f32 %v1317, 1.0
  %v1321 = vadd.f32 %v1319, 1.0
  %v1322 = vrcp.pop %v1320
  %v1323 = vmul.f32 %v1320, %v1322
  %v1324 = vsub.f32 1.0, %v1323
  %v1325 = vmul.f32 %v1322, %v1324
  %v1326 = vadd.f32 %v1322, %v1325
  %vm1327 = vweird.f32 %v1320
  %vm1328 = vweird.f32 %v1322
  %vm1329 = vmor %vm1327, %vm1328
  %v1330 = vsel %vm1329, %v1322, %v1326
  %v1331 = vand.u32 2147483647, %v1320
  %vm1332 = vcmp.eq.f32.partialorder %v1331, 8.507059e+37
  %v1333 = vand.u32 %v1320, 2147483648
  %v1334 = vor.u32 1.1754944e-38, %v1333
  %v1335 = vsel %vm1332, %v1334, %v1330
  %v1336 = vmul.f32 1.0, %v1335
  %v1337 = vrcp.pop %v1321
  %v1338 = vmul.f32 %v1321, %v1337
  %v1339 = vsub.f32 1.0, %v1338
  %v1340 = vmul.f32 %v1337, %v1339
  %v1341 = vadd.f32 %v1337, %v1340
  %vm1342 = vweird.f32 %v1321
  %vm1343 = vweird.f32 %v1337
  %vm1344 = vmor %vm1342, %vm1343
  %v1345 = vsel %vm1344, %v1337, %v1341
  %v1346 = vand.u32 2147483647, %v1321
  %vm1347 = vcmp.eq.f32.partialorder %v1346, 8.507059e+37
  %v1348 = vand.u32 %v1321, 2147483648
  %v1349 = vor.u32 1.1754944e-38, %v1348
  %v1350 = vsel %vm1347, %v1349, %v1345
  %v1351 = vmul.f32 1.0, %v1350
  %v1352 = vtanh.pop %v1272
  %v1353 = vtanh.pop %v1273
  %v1354 = vxor.u32 %v1274, 2147483648
  %v1355 = vxor.u32 %v1275, 2147483648
  %v1356 = vmul.f32 %v1354, 1.442695
  %v1357 = vpow.pop %v1356
  %v1358 = vmul.f32 %v1355, 1.442695
  %v1359 = vpow.pop %v1358
  %v1360 = vadd.f32 %v1357, 1.0
  %v1361 = vadd.f32 %v1359, 1.0
  %v1362 = vrcp.pop %v1360
  %v1363 = vmul.f32 %v1360, %v1362
  %v1364 = vsub.f32 1.0, %v1363
  %v1365 = vmul.f32 %v1362, %v1364
  %v1366 = vadd.f32 %v1362, %v1365
  %vm1367 = vweird.f32 %v1360
  %vm1368 = vweird.f32 %v1362
  %vm1369 = vmor %vm1367, %vm1368
  %v1370 = vsel %vm1369, %v1362, %v1366
  %v1371 = vand.u32 2147483647, %v1360
  %vm1372 = vcmp.eq.f32.partialorder %v1371, 8.507059e+37
  %v1373 = vand.u32 %v1360, 2147483648
  %v1374 = vor.u32 1.1754944e-38, %v1373
  %v1375 = vsel %vm1372, %v1374, %v1370
  %v1376 = vmul.f32 1.0, %v1375
  %v1377 = vrcp.pop %v1361
  %v1378 = vmul.f32 %v1361, %v1377
  %v1379 = vsub.f32 1.0, %v1378
  %v1380 = vmul.f32 %v1377, %v1379
  %v1381 = vadd.f32 %v1377, %v1380
  %vm1382 = vweird.f32 %v1361
  %vm1383 = vweird.f32 %v1377
  %vm1384 = vmor %vm1382, %vm1383
  %v1385 = vsel %vm1384, %v1377, %v1381
  %v1386 = vand.u32 2147483647, %v1361
  %vm1387 = vcmp.eq.f32.partialorder %v1386, 8.507059e+37
  %v1388 = vand.u32 %v1361, 2147483648
  %v1389 = vor.u32 1.1754944e-38, %v1388
  %v1390 = vsel %vm1387, %v1389, %v1385
  %v1391 = vmul.f32 1.0, %v1390
  %v1392 = vmul.f32 %v1336, 0.0
  %v1393 = vmul.f32 %v1351, 0.0
  %v1394 = vmul.f32 %v1298, %v1352
  %v1395 = vmul.f32 %v1313, %v1353
  %v1396 = vadd.f32 %v1392, %v1394
  %v1397 = vadd.f32 %v1393, %v1395
  %v1398 = vtanh.pop %v1396
  %v1399 = vtanh.pop %v1397
  %v1400 = vmul.f32 %v1376, %v1398
  %v1401 = vmul.f32 %v1391, %v1399
  %v1402 = vpack.c.bf16 %v1400, %v1400
  %v1403 = vpack.c.bf16 %v1401, %v1401
  %v1405 = vperm.slane %v411, 0
  %v1406 = vperm.slane %v411, 1
  %v1407 = vperm.slane %v411, 2
  %v1408 = vperm.slane %v411, 3
  %v1409 = vperm.slane %v411, 4
  %v1410 = vperm.slane %v411, 5
  %v1411 = vperm.slane %v411, 6
  %v1412 = vperm.slane %v411, 7
  %v1549 = vunpack.c.l.b16 %v155
  %v1550 = vunpack.c.h.b16 %v155
  %v1551 = vunpack.c.l.b16 %v156
  %v1552 = vunpack.c.h.b16 %v156
  %v1553 = vunpack.c.l.b16 %v157
  %v1554 = vunpack.c.h.b16 %v157
  %v1555 = vunpack.c.l.b16 %v158
  %v1556 = vunpack.c.h.b16 %v158
  %v1557 = vunpack.c.l.b16 %v159
  %v1558 = vunpack.c.h.b16 %v159
  %v1559 = vunpack.c.l.b16 %v160
  %v1560 = vunpack.c.h.b16 %v160
  %v1561 = vunpack.c.l.b16 %v161
  %v1562 = vunpack.c.h.b16 %v161
  %v1563 = vunpack.c.l.b16 %v162
  %v1564 = vunpack.c.h.b16 %v162
  %v1565 = vunpack.c.l.b16 %v163
  %v1566 = vunpack.c.h.b16 %v163
  %v1567 = vunpack.c.l.b16 %v164
  %v1568 = vunpack.c.h.b16 %v164
  %v1569 = vunpack.c.l.b16 %v165
  %v1570 = vunpack.c.h.b16 %v165
  %v1571 = vunpack.c.l.b16 %v166
  %v1572 = vunpack.c.h.b16 %v166
  %v1573 = vunpack.c.l.b16 %v167
  %v1574 = vunpack.c.h.b16 %v167
  %v1575 = vunpack.c.l.b16 %v168
  %v1576 = vunpack.c.h.b16 %v168
  %v1577 = vunpack.c.l.b16 %v169
  %v1578 = vunpack.c.h.b16 %v169
  %v1579 = vunpack.c.l.b16 %v170
  %v1580 = vunpack.c.h.b16 %v170
  %v1581 = vunpack.c.l.b16 %v171
  %v1582 = vunpack.c.h.b16 %v171
  %v1583 = vunpack.c.l.b16 %v172
  %v1584 = vunpack.c.h.b16 %v172
  %v1585 = vunpack.c.l.b16 %v173
  %v1586 = vunpack.c.h.b16 %v173
  %v1587 = vunpack.c.l.b16 %v174
  %v1588 = vunpack.c.h.b16 %v174
  %v1589 = vunpack.c.l.b16 %v175
  %v1590 = vunpack.c.h.b16 %v175
  %v1591 = vunpack.c.l.b16 %v176
  %v1592 = vunpack.c.h.b16 %v176
  %v1593 = vunpack.c.l.b16 %v177
  %v1594 = vunpack.c.h.b16 %v177
  %v1595 = vunpack.c.l.b16 %v178
  %v1596 = vunpack.c.h.b16 %v178
  %v1597 = vunpack.c.l.b16 %v179
  %v1598 = vunpack.c.h.b16 %v179
  %v1599 = vunpack.c.l.b16 %v180
  %v1600 = vunpack.c.h.b16 %v180
  %v1601 = vunpack.c.l.b16 %v181
  %v1602 = vunpack.c.h.b16 %v181
  %v1603 = vunpack.c.l.b16 %v182
  %v1604 = vunpack.c.h.b16 %v182
  %v1605 = vunpack.c.l.b16 %v183
  %v1606 = vunpack.c.h.b16 %v183
  %v1607 = vunpack.c.l.b16 %v184
  %v1608 = vunpack.c.h.b16 %v184
  %v1609 = vunpack.c.l.b16 %v185
  %v1610 = vunpack.c.h.b16 %v185
  %v1611 = vunpack.c.l.b16 %v186
  %v1612 = vunpack.c.h.b16 %v186
  %v1613 = vunpack.c.l.b16 %v187
  %v1614 = vunpack.c.h.b16 %v187
  %v1615 = vunpack.c.l.b16 %v188
  %v1616 = vunpack.c.h.b16 %v188
  %v1617 = vunpack.c.l.b16 %v189
  %v1618 = vunpack.c.h.b16 %v189
  %v1619 = vunpack.c.l.b16 %v190
  %v1620 = vunpack.c.h.b16 %v190
  %v1621 = vunpack.c.l.b16 %v191
  %v1622 = vunpack.c.h.b16 %v191
  %v1623 = vunpack.c.l.b16 %v192
  %v1624 = vunpack.c.h.b16 %v192
  %v1625 = vunpack.c.l.b16 %v193
  %v1626 = vunpack.c.h.b16 %v193
  %v1627 = vunpack.c.l.b16 %v194
  %v1628 = vunpack.c.h.b16 %v194
  %v1629 = vunpack.c.l.b16 %v195
  %v1630 = vunpack.c.h.b16 %v195
  %v1631 = vunpack.c.l.b16 %v196
  %v1632 = vunpack.c.h.b16 %v196
  %v1633 = vunpack.c.l.b16 %v197
  %v1634 = vunpack.c.h.b16 %v197
  %v1635 = vunpack.c.l.b16 %v198
  %v1636 = vunpack.c.h.b16 %v198
  %v1637 = vunpack.c.l.b16 %v199
  %v1638 = vunpack.c.h.b16 %v199
  %v1639 = vunpack.c.l.b16 %v200
  %v1640 = vunpack.c.h.b16 %v200
  %v1641 = vunpack.c.l.b16 %v201
  %v1642 = vunpack.c.h.b16 %v201
  %v1643 = vunpack.c.l.b16 %v202
  %v1644 = vunpack.c.h.b16 %v202
  %v1645 = vunpack.c.l.b16 %v203
  %v1646 = vunpack.c.h.b16 %v203
  %v1647 = vunpack.c.l.b16 %v204
  %v1648 = vunpack.c.h.b16 %v204
  %v1649 = vunpack.c.l.b16 %v205
  %v1650 = vunpack.c.h.b16 %v205
  %v1651 = vunpack.c.l.b16 %v206
  %v1652 = vunpack.c.h.b16 %v206
  %v1653 = vunpack.c.l.b16 %v207
  %v1654 = vunpack.c.h.b16 %v207
  %v1655 = vunpack.c.l.b16 %v208
  %v1656 = vunpack.c.h.b16 %v208
  %v1657 = vunpack.c.l.b16 %v209
  %v1658 = vunpack.c.h.b16 %v209
  %v1659 = vunpack.c.l.b16 %v210
  %v1660 = vunpack.c.h.b16 %v210
  %v1661 = vunpack.c.l.b16 %v211
  %v1662 = vunpack.c.h.b16 %v211
  %v1663 = vunpack.c.l.b16 %v212
  %v1664 = vunpack.c.h.b16 %v212
  %v1665 = vunpack.c.l.b16 %v213
  %v1666 = vunpack.c.h.b16 %v213
  %v1667 = vunpack.c.l.b16 %v214
  %v1668 = vunpack.c.h.b16 %v214
  %v1669 = vunpack.c.l.b16 %v215
  %v1670 = vunpack.c.h.b16 %v215
  %v1671 = vunpack.c.l.b16 %v216
  %v1672 = vunpack.c.h.b16 %v216
  %v1673 = vunpack.c.l.b16 %v217
  %v1674 = vunpack.c.h.b16 %v217
  %v1675 = vunpack.c.l.b16 %v218
  %v1676 = vunpack.c.h.b16 %v218
  %v1677 = vunpack.c.l.b16 %v219
  %v1678 = vunpack.c.h.b16 %v219
  %v1679 = vunpack.c.l.b16 %v220
  %v1680 = vunpack.c.h.b16 %v220
  %v1681 = vunpack.c.l.b16 %v221
  %v1682 = vunpack.c.h.b16 %v221
  %v1683 = vunpack.c.l.b16 %v222
  %v1684 = vunpack.c.h.b16 %v222
  %v1685 = vunpack.c.l.b16 %v223
  %v1686 = vunpack.c.h.b16 %v223
  %v1687 = vunpack.c.l.b16 %v224
  %v1688 = vunpack.c.h.b16 %v224
  %v1689 = vunpack.c.l.b16 %v225
  %v1690 = vunpack.c.h.b16 %v225
  %v1691 = vunpack.c.l.b16 %v226
  %v1692 = vunpack.c.h.b16 %v226
  %v1693 = vunpack.c.l.b16 %v227
  %v1694 = vunpack.c.h.b16 %v227
  %v1695 = vunpack.c.l.b16 %v228
  %v1696 = vunpack.c.h.b16 %v228
  %v1697 = vunpack.c.l.b16 %v229
  %v1698 = vunpack.c.h.b16 %v229
  %v1699 = vunpack.c.l.b16 %v230
  %v1700 = vunpack.c.h.b16 %v230
  %v1701 = vunpack.c.l.b16 %v231
  %v1702 = vunpack.c.h.b16 %v231
  %v1703 = vunpack.c.l.b16 %v232
  %v1704 = vunpack.c.h.b16 %v232
  %v1705 = vunpack.c.l.b16 %v233
  %v1706 = vunpack.c.h.b16 %v233
  %v1707 = vunpack.c.l.b16 %v234
  %v1708 = vunpack.c.h.b16 %v234
  %v1709 = vunpack.c.l.b16 %v235
  %v1710 = vunpack.c.h.b16 %v235
  %v1711 = vunpack.c.l.b16 %v236
  %v1712 = vunpack.c.h.b16 %v236
  %v1713 = vunpack.c.l.b16 %v237
  %v1714 = vunpack.c.h.b16 %v237
  %v1715 = vunpack.c.l.b16 %v238
  %v1716 = vunpack.c.h.b16 %v238
  %v1717 = vunpack.c.l.b16 %v239
  %v1718 = vunpack.c.h.b16 %v239
  %v1719 = vunpack.c.l.b16 %v240
  %v1720 = vunpack.c.h.b16 %v240
  %v1721 = vunpack.c.l.b16 %v241
  %v1722 = vunpack.c.h.b16 %v241
  %v1723 = vunpack.c.l.b16 %v242
  %v1724 = vunpack.c.h.b16 %v242
  %v1725 = vunpack.c.l.b16 %v243
  %v1726 = vunpack.c.h.b16 %v243
  %v1727 = vunpack.c.l.b16 %v244
  %v1728 = vunpack.c.h.b16 %v244
  %v1729 = vunpack.c.l.b16 %v245
  %v1730 = vunpack.c.h.b16 %v245
  %v1731 = vunpack.c.l.b16 %v246
  %v1732 = vunpack.c.h.b16 %v246
  %v1733 = vunpack.c.l.b16 %v247
  %v1734 = vunpack.c.h.b16 %v247
  %v1735 = vunpack.c.l.b16 %v248
  %v1736 = vunpack.c.h.b16 %v248
  %v1737 = vunpack.c.l.b16 %v249
  %v1738 = vunpack.c.h.b16 %v249
  %v1739 = vunpack.c.l.b16 %v250
  %v1740 = vunpack.c.h.b16 %v250
  %v1741 = vunpack.c.l.b16 %v251
  %v1742 = vunpack.c.h.b16 %v251
  %v1743 = vunpack.c.l.b16 %v252
  %v1744 = vunpack.c.h.b16 %v252
  %v1745 = vunpack.c.l.b16 %v253
  %v1746 = vunpack.c.h.b16 %v253
  %v1747 = vunpack.c.l.b16 %v254
  %v1748 = vunpack.c.h.b16 %v254
  %v1749 = vunpack.c.l.b16 %v255
  %v1750 = vunpack.c.h.b16 %v255
  %v1751 = vunpack.c.l.b16 %v256
  %v1752 = vunpack.c.h.b16 %v256
  %v1753 = vunpack.c.l.b16 %v257
  %v1754 = vunpack.c.h.b16 %v257
  %v1755 = vunpack.c.l.b16 %v258
  %v1756 = vunpack.c.h.b16 %v258
  %v1757 = vunpack.c.l.b16 %v259
  %v1758 = vunpack.c.h.b16 %v259
  %v1759 = vunpack.c.l.b16 %v260
  %v1760 = vunpack.c.h.b16 %v260
  %v1761 = vunpack.c.l.b16 %v261
  %v1762 = vunpack.c.h.b16 %v261
  %v1763 = vunpack.c.l.b16 %v262
  %v1764 = vunpack.c.h.b16 %v262
  %v1765 = vunpack.c.l.b16 %v263
  %v1766 = vunpack.c.h.b16 %v263
  %v1767 = vunpack.c.l.b16 %v264
  %v1768 = vunpack.c.h.b16 %v264
  %v1769 = vunpack.c.l.b16 %v265
  %v1770 = vunpack.c.h.b16 %v265
  %v1771 = vunpack.c.l.b16 %v266
  %v1772 = vunpack.c.h.b16 %v266
  %v1773 = vunpack.c.l.b16 %v267
  %v1774 = vunpack.c.h.b16 %v267
  %v1775 = vunpack.c.l.b16 %v268
  %v1776 = vunpack.c.h.b16 %v268
  %v1777 = vunpack.c.l.b16 %v269
  %v1778 = vunpack.c.h.b16 %v269
  %v1779 = vunpack.c.l.b16 %v270
  %v1780 = vunpack.c.h.b16 %v270
  %v1781 = vunpack.c.l.b16 %v271
  %v1782 = vunpack.c.h.b16 %v271
  %v1783 = vunpack.c.l.b16 %v272
  %v1784 = vunpack.c.h.b16 %v272
  %v1785 = vunpack.c.l.b16 %v273
  %v1786 = vunpack.c.h.b16 %v273
  %v1787 = vunpack.c.l.b16 %v274
  %v1788 = vunpack.c.h.b16 %v274
  %v1789 = vunpack.c.l.b16 %v275
  %v1790 = vunpack.c.h.b16 %v275
  %v1791 = vunpack.c.l.b16 %v276
  %v1792 = vunpack.c.h.b16 %v276
  %v1793 = vunpack.c.l.b16 %v277
  %v1794 = vunpack.c.h.b16 %v277
  %v1795 = vunpack.c.l.b16 %v278
  %v1796 = vunpack.c.h.b16 %v278
  %v1797 = vunpack.c.l.b16 %v279
  %v1798 = vunpack.c.h.b16 %v279
  %v1799 = vunpack.c.l.b16 %v280
  %v1800 = vunpack.c.h.b16 %v280
  %v1801 = vunpack.c.l.b16 %v281
  %v1802 = vunpack.c.h.b16 %v281
  %v1803 = vunpack.c.l.b16 %v282
  %v1804 = vunpack.c.h.b16 %v282
  %v1805 = vpack.c.b16 %v1557, %v1549
  %v1806 = vpack.c.b16 %v1558, %v1550
  %v1807 = vpack.c.b16 %v1559, %v1551
  %v1808 = vpack.c.b16 %v1560, %v1552
  %v1809 = vpack.c.b16 %v1561, %v1553
  %v1810 = vpack.c.b16 %v1562, %v1554
  %v1811 = vpack.c.b16 %v1563, %v1555
  %v1812 = vpack.c.b16 %v1564, %v1556
  %v1813 = vpack.c.b16 %v1573, %v1565
  %v1814 = vpack.c.b16 %v1574, %v1566
  %v1815 = vpack.c.b16 %v1575, %v1567
  %v1816 = vpack.c.b16 %v1576, %v1568
  %v1817 = vpack.c.b16 %v1577, %v1569
  %v1818 = vpack.c.b16 %v1578, %v1570
  %v1819 = vpack.c.b16 %v1579, %v1571
  %v1820 = vpack.c.b16 %v1580, %v1572
  %v1821 = vpack.c.b16 %v1589, %v1581
  %v1822 = vpack.c.b16 %v1590, %v1582
  %v1823 = vpack.c.b16 %v1591, %v1583
  %v1824 = vpack.c.b16 %v1592, %v1584
  %v1825 = vpack.c.b16 %v1593, %v1585
  %v1826 = vpack.c.b16 %v1594, %v1586
  %v1827 = vpack.c.b16 %v1595, %v1587
  %v1828 = vpack.c.b16 %v1596, %v1588
  %v1829 = vpack.c.b16 %v1605, %v1597
  %v1830 = vpack.c.b16 %v1606, %v1598
  %v1831 = vpack.c.b16 %v1607, %v1599
  %v1832 = vpack.c.b16 %v1608, %v1600
  %v1833 = vpack.c.b16 %v1609, %v1601
  %v1834 = vpack.c.b16 %v1610, %v1602
  %v1835 = vpack.c.b16 %v1611, %v1603
  %v1836 = vpack.c.b16 %v1612, %v1604
  %v1837 = vpack.c.b16 %v1621, %v1613
  %v1838 = vpack.c.b16 %v1622, %v1614
  %v1839 = vpack.c.b16 %v1623, %v1615
  %v1840 = vpack.c.b16 %v1624, %v1616
  %v1841 = vpack.c.b16 %v1625, %v1617
  %v1842 = vpack.c.b16 %v1626, %v1618
  %v1843 = vpack.c.b16 %v1627, %v1619
  %v1844 = vpack.c.b16 %v1628, %v1620
  %v1845 = vpack.c.b16 %v1637, %v1629
  %v1846 = vpack.c.b16 %v1638, %v1630
  %v1847 = vpack.c.b16 %v1639, %v1631
  %v1848 = vpack.c.b16 %v1640, %v1632
  %v1849 = vpack.c.b16 %v1641, %v1633
  %v1850 = vpack.c.b16 %v1642, %v1634
  %v1851 = vpack.c.b16 %v1643, %v1635
  %v1852 = vpack.c.b16 %v1644, %v1636
  %v1853 = vpack.c.b16 %v1653, %v1645
  %v1854 = vpack.c.b16 %v1654, %v1646
  %v1855 = vpack.c.b16 %v1655, %v1647
  %v1856 = vpack.c.b16 %v1656, %v1648
  %v1857 = vpack.c.b16 %v1657, %v1649
  %v1858 = vpack.c.b16 %v1658, %v1650
  %v1859 = vpack.c.b16 %v1659, %v1651
  %v1860 = vpack.c.b16 %v1660, %v1652
  %v1861 = vpack.c.b16 %v1669, %v1661
  %v1862 = vpack.c.b16 %v1670, %v1662
  %v1863 = vpack.c.b16 %v1671, %v1663
  %v1864 = vpack.c.b16 %v1672, %v1664
  %v1865 = vpack.c.b16 %v1673, %v1665
  %v1866 = vpack.c.b16 %v1674, %v1666
  %v1867 = vpack.c.b16 %v1675, %v1667
  %v1868 = vpack.c.b16 %v1676, %v1668
  %v1869 = vpack.c.b16 %v1685, %v1677
  %v1870 = vpack.c.b16 %v1686, %v1678
  %v1871 = vpack.c.b16 %v1687, %v1679
  %v1872 = vpack.c.b16 %v1688, %v1680
  %v1873 = vpack.c.b16 %v1689, %v1681
  %v1874 = vpack.c.b16 %v1690, %v1682
  %v1875 = vpack.c.b16 %v1691, %v1683
  %v1876 = vpack.c.b16 %v1692, %v1684
  %v1877 = vpack.c.b16 %v1701, %v1693
  %v1878 = vpack.c.b16 %v1702, %v1694
  %v1879 = vpack.c.b16 %v1703, %v1695
  %v1880 = vpack.c.b16 %v1704, %v1696
  %v1881 = vpack.c.b16 %v1705, %v1697
  %v1882 = vpack.c.b16 %v1706, %v1698
  %v1883 = vpack.c.b16 %v1707, %v1699
  %v1884 = vpack.c.b16 %v1708, %v1700
  %v1885 = vpack.c.b16 %v1717, %v1709
  %v1886 = vpack.c.b16 %v1718, %v1710
  %v1887 = vpack.c.b16 %v1719, %v1711
  %v1888 = vpack.c.b16 %v1720, %v1712
  %v1889 = vpack.c.b16 %v1721, %v1713
  %v1890 = vpack.c.b16 %v1722, %v1714
  %v1891 = vpack.c.b16 %v1723, %v1715
  %v1892 = vpack.c.b16 %v1724, %v1716
  %v1893 = vpack.c.b16 %v1733, %v1725
  %v1894 = vpack.c.b16 %v1734, %v1726
  %v1895 = vpack.c.b16 %v1735, %v1727
  %v1896 = vpack.c.b16 %v1736, %v1728
  %v1897 = vpack.c.b16 %v1737, %v1729
  %v1898 = vpack.c.b16 %v1738, %v1730
  %v1899 = vpack.c.b16 %v1739, %v1731
  %v1900 = vpack.c.b16 %v1740, %v1732
  %v1901 = vpack.c.b16 %v1749, %v1741
  %v1902 = vpack.c.b16 %v1750, %v1742
  %v1903 = vpack.c.b16 %v1751, %v1743
  %v1904 = vpack.c.b16 %v1752, %v1744
  %v1905 = vpack.c.b16 %v1753, %v1745
  %v1906 = vpack.c.b16 %v1754, %v1746
  %v1907 = vpack.c.b16 %v1755, %v1747
  %v1908 = vpack.c.b16 %v1756, %v1748
  %v1909 = vpack.c.b16 %v1765, %v1757
  %v1910 = vpack.c.b16 %v1766, %v1758
  %v1911 = vpack.c.b16 %v1767, %v1759
  %v1912 = vpack.c.b16 %v1768, %v1760
  %v1913 = vpack.c.b16 %v1769, %v1761
  %v1914 = vpack.c.b16 %v1770, %v1762
  %v1915 = vpack.c.b16 %v1771, %v1763
  %v1916 = vpack.c.b16 %v1772, %v1764
  %v1917 = vpack.c.b16 %v1781, %v1773
  %v1918 = vpack.c.b16 %v1782, %v1774
  %v1919 = vpack.c.b16 %v1783, %v1775
  %v1920 = vpack.c.b16 %v1784, %v1776
  %v1921 = vpack.c.b16 %v1785, %v1777
  %v1922 = vpack.c.b16 %v1786, %v1778
  %v1923 = vpack.c.b16 %v1787, %v1779
  %v1924 = vpack.c.b16 %v1788, %v1780
  %v1925 = vpack.c.b16 %v1797, %v1789
  %v1926 = vpack.c.b16 %v1798, %v1790
  %v1927 = vpack.c.b16 %v1799, %v1791
  %v1928 = vpack.c.b16 %v1800, %v1792
  %v1929 = vpack.c.b16 %v1801, %v1793
  %v1930 = vpack.c.b16 %v1802, %v1794
  %v1931 = vpack.c.b16 %v1803, %v1795
  %v1932 = vpack.c.b16 %v1804, %v1796
  %2061 = vmatpush.bf16.msra.mxu0 %v1861
  %2062 = vmatpush.bf16.msra.mxu0 %v1853
  %2063 = vmatpush.bf16.msra.mxu0 %v1845
  %2064 = vmatpush.bf16.msra.mxu0 %v1837
  %2065 = vmatpush.bf16.msra.mxu0 %v1829
  %2066 = vmatpush.bf16.msra.mxu0 %v1821
  %2067 = vmatpush.bf16.msra.mxu0 %v1813
  %2068 = vmatpush.bf16.msra.mxu0 %v1805
  %2069 = vmatmul.bf16.gmra.mxu0 %v1402
  %v2070 = vpop.f32.mrf.mxu0
  %v2071 = vadd.f32 %v1405, %v2070
  %v2072 = vpop.f32.mrf.mxu0
  %2073 = vdwg.mxu0
  %2074 = vmatpush.bf16.msra.mxu0 %v1925
  %2075 = vmatpush.bf16.msra.mxu0 %v1917
  %2076 = vmatpush.bf16.msra.mxu0 %v1909
  %2077 = vmatpush.bf16.msra.mxu0 %v1901
  %2078 = vmatpush.bf16.msra.mxu0 %v1893
  %2079 = vmatpush.bf16.msra.mxu0 %v1885
  %2080 = vmatpush.bf16.msra.mxu0 %v1877
  %2081 = vmatpush.bf16.msra.mxu0 %v1869
  %2082 = vmatmul.bf16.gmra.mxu0 %v1403
  %v2083 = vpop.f32.mrf.mxu0
  %v2084 = vadd.f32 %v2071, %v2083
  %v2085 = vpop.f32.mrf.mxu0
  %2086 = vdwg.mxu0
  %2087 = vmatpush.bf16.msra.mxu0 %v1862
  %2088 = vmatpush.bf16.msra.mxu0 %v1854
  %2089 = vmatpush.bf16.msra.mxu0 %v1846
  %2090 = vmatpush.bf16.msra.mxu0 %v1838
  %2091 = vmatpush.bf16.msra.mxu0 %v1830
  %2092 = vmatpush.bf16.msra.mxu0 %v1822
  %2093 = vmatpush.bf16.msra.mxu0 %v1814
  %2094 = vmatpush.bf16.msra.mxu0 %v1806
  %2095 = vmatmul.bf16.gmra.mxu0 %v1402
  %v2096 = vpop.f32.mrf.mxu0
  %v2097 = vadd.f32 %v1406, %v2096
  %v2098 = vpop.f32.mrf.mxu0
  %2099 = vdwg.mxu0
  %2100 = vmatpush.bf16.msra.mxu0 %v1926
  %2101 = vmatpush.bf16.msra.mxu0 %v1918
  %2102 = vmatpush.bf16.msra.mxu0 %v1910
  %2103 = vmatpush.bf16.msra.mxu0 %v1902
  %2104 = vmatpush.bf16.msra.mxu0 %v1894
  %2105 = vmatpush.bf16.msra.mxu0 %v1886
  %2106 = vmatpush.bf16.msra.mxu0 %v1878
  %2107 = vmatpush.bf16.msra.mxu0 %v1870
  %2108 = vmatmul.bf16.gmra.mxu0 %v1403
  %v2109 = vpop.f32.mrf.mxu0
  %v2110 = vadd.f32 %v2097, %v2109
  %v2111 = vpop.f32.mrf.mxu0
  %2112 = vdwg.mxu0
  %2113 = vmatpush.bf16.msra.mxu0 %v1863
  %2114 = vmatpush.bf16.msra.mxu0 %v1855
  %2115 = vmatpush.bf16.msra.mxu0 %v1847
  %2116 = vmatpush.bf16.msra.mxu0 %v1839
  %2117 = vmatpush.bf16.msra.mxu0 %v1831
  %2118 = vmatpush.bf16.msra.mxu0 %v1823
  %2119 = vmatpush.bf16.msra.mxu0 %v1815
  %2120 = vmatpush.bf16.msra.mxu0 %v1807
  %2121 = vmatmul.bf16.gmra.mxu0 %v1402
  %v2122 = vpop.f32.mrf.mxu0
  %v2123 = vadd.f32 %v1407, %v2122
  %v2124 = vpop.f32.mrf.mxu0
  %2125 = vdwg.mxu0
  %2126 = vmatpush.bf16.msra.mxu0 %v1927
  %2127 = vmatpush.bf16.msra.mxu0 %v1919
  %2128 = vmatpush.bf16.msra.mxu0 %v1911
  %2129 = vmatpush.bf16.msra.mxu0 %v1903
  %2130 = vmatpush.bf16.msra.mxu0 %v1895
  %2131 = vmatpush.bf16.msra.mxu0 %v1887
  %2132 = vmatpush.bf16.msra.mxu0 %v1879
  %2133 = vmatpush.bf16.msra.mxu0 %v1871
  %2134 = vmatmul.bf16.gmra.mxu0 %v1403
  %v2135 = vpop.f32.mrf.mxu0
  %v2136 = vadd.f32 %v2123, %v2135
  %v2137 = vpop.f32.mrf.mxu0
  %2138 = vdwg.mxu0
  %2139 = vmatpush.bf16.msra.mxu0 %v1864
  %2140 = vmatpush.bf16.msra.mxu0 %v1856
  %2141 = vmatpush.bf16.msra.mxu0 %v1848
  %2142 = vmatpush.bf16.msra.mxu0 %v1840
  %2143 = vmatpush.bf16.msra.mxu0 %v1832
  %2144 = vmatpush.bf16.msra.mxu0 %v1824
  %2145 = vmatpush.bf16.msra.mxu0 %v1816
  %2146 = vmatpush.bf16.msra.mxu0 %v1808
  %2147 = vmatmul.bf16.gmra.mxu0 %v1402
  %v2148 = vpop.f32.mrf.mxu0
  %v2149 = vadd.f32 %v1408, %v2148
  %v2150 = vpop.f32.mrf.mxu0
  %2151 = vdwg.mxu0
  %2152 = vmatpush.bf16.msra.mxu0 %v1928
  %2153 = vmatpush.bf16.msra.mxu0 %v1920
  %2154 = vmatpush.bf16.msra.mxu0 %v1912
  %2155 = vmatpush.bf16.msra.mxu0 %v1904
  %2156 = vmatpush.bf16.msra.mxu0 %v1896
  %2157 = vmatpush.bf16.msra.mxu0 %v1888
  %2158 = vmatpush.bf16.msra.mxu0 %v1880
  %2159 = vmatpush.bf16.msra.mxu0 %v1872
  %2160 = vmatmul.bf16.gmra.mxu0 %v1403
  %v2161 = vpop.f32.mrf.mxu0
  %v2162 = vadd.f32 %v2149, %v2161
  %v2163 = vpop.f32.mrf.mxu0
  %2164 = vdwg.mxu0
  %2165 = vmatpush.bf16.msra.mxu0 %v1865
  %2166 = vmatpush.bf16.msra.mxu0 %v1857
  %2167 = vmatpush.bf16.msra.mxu0 %v1849
  %2168 = vmatpush.bf16.msra.mxu0 %v1841
  %2169 = vmatpush.bf16.msra.mxu0 %v1833
  %2170 = vmatpush.bf16.msra.mxu0 %v1825
  %2171 = vmatpush.bf16.msra.mxu0 %v1817
  %2172 = vmatpush.bf16.msra.mxu0 %v1809
  %2173 = vmatmul.bf16.gmra.mxu0 %v1402
  %v2174 = vpop.f32.mrf.mxu0
  %v2175 = vadd.f32 %v1409, %v2174
  %v2176 = vpop.f32.mrf.mxu0
  %2177 = vdwg.mxu0
  %2178 = vmatpush.bf16.msra.mxu0 %v1929
  %2179 = vmatpush.bf16.msra.mxu0 %v1921
  %2180 = vmatpush.bf16.msra.mxu0 %v1913
  %2181 = vmatpush.bf16.msra.mxu0 %v1905
  %2182 = vmatpush.bf16.msra.mxu0 %v1897
  %2183 = vmatpush.bf16.msra.mxu0 %v1889
  %2184 = vmatpush.bf16.msra.mxu0 %v1881
  %2185 = vmatpush.bf16.msra.mxu0 %v1873
  %2186 = vmatmul.bf16.gmra.mxu0 %v1403
  %v2187 = vpop.f32.mrf.mxu0
  %v2188 = vadd.f32 %v2175, %v2187
  %v2189 = vpop.f32.mrf.mxu0
  %2190 = vdwg.mxu0
  %2191 = vmatpush.bf16.msra.mxu0 %v1866
  %2192 = vmatpush.bf16.msra.mxu0 %v1858
  %2193 = vmatpush.bf16.msra.mxu0 %v1850
  %2194 = vmatpush.bf16.msra.mxu0 %v1842
  %2195 = vmatpush.bf16.msra.mxu0 %v1834
  %2196 = vmatpush.bf16.msra.mxu0 %v1826
  %2197 = vmatpush.bf16.msra.mxu0 %v1818
  %2198 = vmatpush.bf16.msra.mxu0 %v1810
  %2199 = vmatmul.bf16.gmra.mxu0 %v1402
  %v2200 = vpop.f32.mrf.mxu0
  %v2201 = vadd.f32 %v1410, %v2200
  %v2202 = vpop.f32.mrf.mxu0
  %2203 = vdwg.mxu0
  %2204 = vmatpush.bf16.msra.mxu0 %v1930
  %2205 = vmatpush.bf16.msra.mxu0 %v1922
  %2206 = vmatpush.bf16.msra.mxu0 %v1914
  %2207 = vmatpush.bf16.msra.mxu0 %v1906
  %2208 = vmatpush.bf16.msra.mxu0 %v1898
  %2209 = vmatpush.bf16.msra.mxu0 %v1890
  %2210 = vmatpush.bf16.msra.mxu0 %v1882
  %2211 = vmatpush.bf16.msra.mxu0 %v1874
  %2212 = vmatmul.bf16.gmra.mxu0 %v1403
  %v2213 = vpop.f32.mrf.mxu0
  %v2214 = vadd.f32 %v2201, %v2213
  %v2215 = vpop.f32.mrf.mxu0
  %2216 = vdwg.mxu0
  %2217 = vmatpush.bf16.msra.mxu0 %v1867
  %2218 = vmatpush.bf16.msra.mxu0 %v1859
  %2219 = vmatpush.bf16.msra.mxu0 %v1851
  %2220 = vmatpush.bf16.msra.mxu0 %v1843
  %2221 = vmatpush.bf16.msra.mxu0 %v1835
  %2222 = vmatpush.bf16.msra.mxu0 %v1827
  %2223 = vmatpush.bf16.msra.mxu0 %v1819
  %2224 = vmatpush.bf16.msra.mxu0 %v1811
  %2225 = vmatmul.bf16.gmra.mxu0 %v1402
  %v2226 = vpop.f32.mrf.mxu0
  %v2227 = vadd.f32 %v1411, %v2226
  %v2228 = vpop.f32.mrf.mxu0
  %2229 = vdwg.mxu0
  %2230 = vmatpush.bf16.msra.mxu0 %v1931
  %2231 = vmatpush.bf16.msra.mxu0 %v1923
  %2232 = vmatpush.bf16.msra.mxu0 %v1915
  %2233 = vmatpush.bf16.msra.mxu0 %v1907
  %2234 = vmatpush.bf16.msra.mxu0 %v1899
  %2235 = vmatpush.bf16.msra.mxu0 %v1891
  %2236 = vmatpush.bf16.msra.mxu0 %v1883
  %2237 = vmatpush.bf16.msra.mxu0 %v1875
  %2238 = vmatmul.bf16.gmra.mxu0 %v1403
  %v2239 = vpop.f32.mrf.mxu0
  %v2240 = vadd.f32 %v2227, %v2239
  %v2241 = vpop.f32.mrf.mxu0
  %2242 = vdwg.mxu0
  %2243 = vmatpush.bf16.msra.mxu0 %v1868
  %2244 = vmatpush.bf16.msra.mxu0 %v1860
  %2245 = vmatpush.bf16.msra.mxu0 %v1852
  %2246 = vmatpush.bf16.msra.mxu0 %v1844
  %2247 = vmatpush.bf16.msra.mxu0 %v1836
  %2248 = vmatpush.bf16.msra.mxu0 %v1828
  %2249 = vmatpush.bf16.msra.mxu0 %v1820
  %2250 = vmatpush.bf16.msra.mxu0 %v1812
  %2251 = vmatmul.bf16.gmra.mxu0 %v1402
  %v2252 = vpop.f32.mrf.mxu0
  %v2253 = vadd.f32 %v1412, %v2252
  %v2254 = vpop.f32.mrf.mxu0
  %2255 = vdwg.mxu0
  %2256 = vmatpush.bf16.msra.mxu0 %v1932
  %2257 = vmatpush.bf16.msra.mxu0 %v1924
  %2258 = vmatpush.bf16.msra.mxu0 %v1916
  %2259 = vmatpush.bf16.msra.mxu0 %v1908
  %2260 = vmatpush.bf16.msra.mxu0 %v1900
  %2261 = vmatpush.bf16.msra.mxu0 %v1892
  %2262 = vmatpush.bf16.msra.mxu0 %v1884
  %2263 = vmatpush.bf16.msra.mxu0 %v1876
  %2264 = vmatmul.bf16.gmra.mxu0 %v1403
  %v2265 = vpop.f32.mrf.mxu0
  %v2266 = vadd.f32 %v2253, %v2265
  %v2267 = vpop.f32.mrf.mxu0
  %2268 = vdwg.mxu0
  %v2397 = vunpack.c.l.b16 %v283
  %v2398 = vunpack.c.h.b16 %v283
  %v2399 = vunpack.c.l.b16 %v284
  %v2400 = vunpack.c.h.b16 %v284
  %v2401 = vunpack.c.l.b16 %v285
  %v2402 = vunpack.c.h.b16 %v285
  %v2403 = vunpack.c.l.b16 %v286
  %v2404 = vunpack.c.h.b16 %v286
  %v2405 = vunpack.c.l.b16 %v287
  %v2406 = vunpack.c.h.b16 %v287
  %v2407 = vunpack.c.l.b16 %v288
  %v2408 = vunpack.c.h.b16 %v288
  %v2409 = vunpack.c.l.b16 %v289
  %v2410 = vunpack.c.h.b16 %v289
  %v2411 = vunpack.c.l.b16 %v290
  %v2412 = vunpack.c.h.b16 %v290
  %v2413 = vunpack.c.l.b16 %v291
  %v2414 = vunpack.c.h.b16 %v291
  %v2415 = vunpack.c.l.b16 %v292
  %v2416 = vunpack.c.h.b16 %v292
  %v2417 = vunpack.c.l.b16 %v293
  %v2418 = vunpack.c.h.b16 %v293
  %v2419 = vunpack.c.l.b16 %v294
  %v2420 = vunpack.c.h.b16 %v294
  %v2421 = vunpack.c.l.b16 %v295
  %v2422 = vunpack.c.h.b16 %v295
  %v2423 = vunpack.c.l.b16 %v296
  %v2424 = vunpack.c.h.b16 %v296
  %v2425 = vunpack.c.l.b16 %v297
  %v2426 = vunpack.c.h.b16 %v297
  %v2427 = vunpack.c.l.b16 %v298
  %v2428 = vunpack.c.h.b16 %v298
  %v2429 = vunpack.c.l.b16 %v299
  %v2430 = vunpack.c.h.b16 %v299
  %v2431 = vunpack.c.l.b16 %v300
  %v2432 = vunpack.c.h.b16 %v300
  %v2433 = vunpack.c.l.b16 %v301
  %v2434 = vunpack.c.h.b16 %v301
  %v2435 = vunpack.c.l.b16 %v302
  %v2436 = vunpack.c.h.b16 %v302
  %v2437 = vunpack.c.l.b16 %v303
  %v2438 = vunpack.c.h.b16 %v303
  %v2439 = vunpack.c.l.b16 %v304
  %v2440 = vunpack.c.h.b16 %v304
  %v2441 = vunpack.c.l.b16 %v305
  %v2442 = vunpack.c.h.b16 %v305
  %v2443 = vunpack.c.l.b16 %v306
  %v2444 = vunpack.c.h.b16 %v306
  %v2445 = vunpack.c.l.b16 %v307
  %v2446 = vunpack.c.h.b16 %v307
  %v2447 = vunpack.c.l.b16 %v308
  %v2448 = vunpack.c.h.b16 %v308
  %v2449 = vunpack.c.l.b16 %v309
  %v2450 = vunpack.c.h.b16 %v309
  %v2451 = vunpack.c.l.b16 %v310
  %v2452 = vunpack.c.h.b16 %v310
  %v2453 = vunpack.c.l.b16 %v311
  %v2454 = vunpack.c.h.b16 %v311
  %v2455 = vunpack.c.l.b16 %v312
  %v2456 = vunpack.c.h.b16 %v312
  %v2457 = vunpack.c.l.b16 %v313
  %v2458 = vunpack.c.h.b16 %v313
  %v2459 = vunpack.c.l.b16 %v314
  %v2460 = vunpack.c.h.b16 %v314
  %v2461 = vunpack.c.l.b16 %v315
  %v2462 = vunpack.c.h.b16 %v315
  %v2463 = vunpack.c.l.b16 %v316
  %v2464 = vunpack.c.h.b16 %v316
  %v2465 = vunpack.c.l.b16 %v317
  %v2466 = vunpack.c.h.b16 %v317
  %v2467 = vunpack.c.l.b16 %v318
  %v2468 = vunpack.c.h.b16 %v318
  %v2469 = vunpack.c.l.b16 %v319
  %v2470 = vunpack.c.h.b16 %v319
  %v2471 = vunpack.c.l.b16 %v320
  %v2472 = vunpack.c.h.b16 %v320
  %v2473 = vunpack.c.l.b16 %v321
  %v2474 = vunpack.c.h.b16 %v321
  %v2475 = vunpack.c.l.b16 %v322
  %v2476 = vunpack.c.h.b16 %v322
  %v2477 = vunpack.c.l.b16 %v323
  %v2478 = vunpack.c.h.b16 %v323
  %v2479 = vunpack.c.l.b16 %v324
  %v2480 = vunpack.c.h.b16 %v324
  %v2481 = vunpack.c.l.b16 %v325
  %v2482 = vunpack.c.h.b16 %v325
  %v2483 = vunpack.c.l.b16 %v326
  %v2484 = vunpack.c.h.b16 %v326
  %v2485 = vunpack.c.l.b16 %v327
  %v2486 = vunpack.c.h.b16 %v327
  %v2487 = vunpack.c.l.b16 %v328
  %v2488 = vunpack.c.h.b16 %v328
  %v2489 = vunpack.c.l.b16 %v329
  %v2490 = vunpack.c.h.b16 %v329
  %v2491 = vunpack.c.l.b16 %v330
  %v2492 = vunpack.c.h.b16 %v330
  %v2493 = vunpack.c.l.b16 %v331
  %v2494 = vunpack.c.h.b16 %v331
  %v2495 = vunpack.c.l.b16 %v332
  %v2496 = vunpack.c.h.b16 %v332
  %v2497 = vunpack.c.l.b16 %v333
  %v2498 = vunpack.c.h.b16 %v333
  %v2499 = vunpack.c.l.b16 %v334
  %v2500 = vunpack.c.h.b16 %v334
  %v2501 = vunpack.c.l.b16 %v335
  %v2502 = vunpack.c.h.b16 %v335
  %v2503 = vunpack.c.l.b16 %v336
  %v2504 = vunpack.c.h.b16 %v336
  %v2505 = vunpack.c.l.b16 %v337
  %v2506 = vunpack.c.h.b16 %v337
  %v2507 = vunpack.c.l.b16 %v338
  %v2508 = vunpack.c.h.b16 %v338
  %v2509 = vunpack.c.l.b16 %v339
  %v2510 = vunpack.c.h.b16 %v339
  %v2511 = vunpack.c.l.b16 %v340
  %v2512 = vunpack.c.h.b16 %v340
  %v2513 = vunpack.c.l.b16 %v341
  %v2514 = vunpack.c.h.b16 %v341
  %v2515 = vunpack.c.l.b16 %v342
  %v2516 = vunpack.c.h.b16 %v342
  %v2517 = vunpack.c.l.b16 %v343
  %v2518 = vunpack.c.h.b16 %v343
  %v2519 = vunpack.c.l.b16 %v344
  %v2520 = vunpack.c.h.b16 %v344
  %v2521 = vunpack.c.l.b16 %v345
  %v2522 = vunpack.c.h.b16 %v345
  %v2523 = vunpack.c.l.b16 %v346
  %v2524 = vunpack.c.h.b16 %v346
  %v2525 = vunpack.c.l.b16 %v347
  %v2526 = vunpack.c.h.b16 %v347
  %v2527 = vunpack.c.l.b16 %v348
  %v2528 = vunpack.c.h.b16 %v348
  %v2529 = vunpack.c.l.b16 %v349
  %v2530 = vunpack.c.h.b16 %v349
  %v2531 = vunpack.c.l.b16 %v350
  %v2532 = vunpack.c.h.b16 %v350
  %v2533 = vunpack.c.l.b16 %v351
  %v2534 = vunpack.c.h.b16 %v351
  %v2535 = vunpack.c.l.b16 %v352
  %v2536 = vunpack.c.h.b16 %v352
  %v2537 = vunpack.c.l.b16 %v353
  %v2538 = vunpack.c.h.b16 %v353
  %v2539 = vunpack.c.l.b16 %v354
  %v2540 = vunpack.c.h.b16 %v354
  %v2541 = vunpack.c.l.b16 %v355
  %v2542 = vunpack.c.h.b16 %v355
  %v2543 = vunpack.c.l.b16 %v356
  %v2544 = vunpack.c.h.b16 %v356
  %v2545 = vunpack.c.l.b16 %v357
  %v2546 = vunpack.c.h.b16 %v357
  %v2547 = vunpack.c.l.b16 %v358
  %v2548 = vunpack.c.h.b16 %v358
  %v2549 = vunpack.c.l.b16 %v359
  %v2550 = vunpack.c.h.b16 %v359
  %v2551 = vunpack.c.l.b16 %v360
  %v2552 = vunpack.c.h.b16 %v360
  %v2553 = vunpack.c.l.b16 %v361
  %v2554 = vunpack.c.h.b16 %v361
  %v2555 = vunpack.c.l.b16 %v362
  %v2556 = vunpack.c.h.b16 %v362
  %v2557 = vunpack.c.l.b16 %v363
  %v2558 = vunpack.c.h.b16 %v363
  %v2559 = vunpack.c.l.b16 %v364
  %v2560 = vunpack.c.h.b16 %v364
  %v2561 = vunpack.c.l.b16 %v365
  %v2562 = vunpack.c.h.b16 %v365
  %v2563 = vunpack.c.l.b16 %v366
  %v2564 = vunpack.c.h.b16 %v366
  %v2565 = vunpack.c.l.b16 %v367
  %v2566 = vunpack.c.h.b16 %v367
  %v2567 = vunpack.c.l.b16 %v368
  %v2568 = vunpack.c.h.b16 %v368
  %v2569 = vunpack.c.l.b16 %v369
  %v2570 = vunpack.c.h.b16 %v369
  %v2571 = vunpack.c.l.b16 %v370
  %v2572 = vunpack.c.h.b16 %v370
  %v2573 = vunpack.c.l.b16 %v371
  %v2574 = vunpack.c.h.b16 %v371
  %v2575 = vunpack.c.l.b16 %v372
  %v2576 = vunpack.c.h.b16 %v372
  %v2577 = vunpack.c.l.b16 %v373
  %v2578 = vunpack.c.h.b16 %v373
  %v2579 = vunpack.c.l.b16 %v374
  %v2580 = vunpack.c.h.b16 %v374
  %v2581 = vunpack.c.l.b16 %v375
  %v2582 = vunpack.c.h.b16 %v375
  %v2583 = vunpack.c.l.b16 %v376
  %v2584 = vunpack.c.h.b16 %v376
  %v2585 = vunpack.c.l.b16 %v377
  %v2586 = vunpack.c.h.b16 %v377
  %v2587 = vunpack.c.l.b16 %v378
  %v2588 = vunpack.c.h.b16 %v378
  %v2589 = vunpack.c.l.b16 %v379
  %v2590 = vunpack.c.h.b16 %v379
  %v2591 = vunpack.c.l.b16 %v380
  %v2592 = vunpack.c.h.b16 %v380
  %v2593 = vunpack.c.l.b16 %v381
  %v2594 = vunpack.c.h.b16 %v381
  %v2595 = vunpack.c.l.b16 %v382
  %v2596 = vunpack.c.h.b16 %v382
  %v2597 = vunpack.c.l.b16 %v383
  %v2598 = vunpack.c.h.b16 %v383
  %v2599 = vunpack.c.l.b16 %v384
  %v2600 = vunpack.c.h.b16 %v384
  %v2601 = vunpack.c.l.b16 %v385
  %v2602 = vunpack.c.h.b16 %v385
  %v2603 = vunpack.c.l.b16 %v386
  %v2604 = vunpack.c.h.b16 %v386
  %v2605 = vunpack.c.l.b16 %v387
  %v2606 = vunpack.c.h.b16 %v387
  %v2607 = vunpack.c.l.b16 %v388
  %v2608 = vunpack.c.h.b16 %v388
  %v2609 = vunpack.c.l.b16 %v389
  %v2610 = vunpack.c.h.b16 %v389
  %v2611 = vunpack.c.l.b16 %v390
  %v2612 = vunpack.c.h.b16 %v390
  %v2613 = vunpack.c.l.b16 %v391
  %v2614 = vunpack.c.h.b16 %v391
  %v2615 = vunpack.c.l.b16 %v392
  %v2616 = vunpack.c.h.b16 %v392
  %v2617 = vunpack.c.l.b16 %v393
  %v2618 = vunpack.c.h.b16 %v393
  %v2619 = vunpack.c.l.b16 %v394
  %v2620 = vunpack.c.h.b16 %v394
  %v2621 = vunpack.c.l.b16 %v395
  %v2622 = vunpack.c.h.b16 %v395
  %v2623 = vunpack.c.l.b16 %v396
  %v2624 = vunpack.c.h.b16 %v396
  %v2625 = vunpack.c.l.b16 %v397
  %v2626 = vunpack.c.h.b16 %v397
  %v2627 = vunpack.c.l.b16 %v398
  %v2628 = vunpack.c.h.b16 %v398
  %v2629 = vunpack.c.l.b16 %v399
  %v2630 = vunpack.c.h.b16 %v399
  %v2631 = vunpack.c.l.b16 %v400
  %v2632 = vunpack.c.h.b16 %v400
  %v2633 = vunpack.c.l.b16 %v401
  %v2634 = vunpack.c.h.b16 %v401
  %v2635 = vunpack.c.l.b16 %v402
  %v2636 = vunpack.c.h.b16 %v402
  %v2637 = vunpack.c.l.b16 %v403
  %v2638 = vunpack.c.h.b16 %v403
  %v2639 = vunpack.c.l.b16 %v404
  %v2640 = vunpack.c.h.b16 %v404
  %v2641 = vunpack.c.l.b16 %v405
  %v2642 = vunpack.c.h.b16 %v405
  %v2643 = vunpack.c.l.b16 %v406
  %v2644 = vunpack.c.h.b16 %v406
  %v2645 = vunpack.c.l.b16 %v407
  %v2646 = vunpack.c.h.b16 %v407
  %v2647 = vunpack.c.l.b16 %v408
  %v2648 = vunpack.c.h.b16 %v408
  %v2649 = vunpack.c.l.b16 %v409
  %v2650 = vunpack.c.h.b16 %v409
  %v2651 = vunpack.c.l.b16 %v410
  %v2652 = vunpack.c.h.b16 %v410
  %v2653 = vpack.c.b16 %v2405, %v2397
  %v2654 = vpack.c.b16 %v2406, %v2398
  %v2655 = vpack.c.b16 %v2407, %v2399
  %v2656 = vpack.c.b16 %v2408, %v2400
  %v2657 = vpack.c.b16 %v2409, %v2401
  %v2658 = vpack.c.b16 %v2410, %v2402
  %v2659 = vpack.c.b16 %v2411, %v2403
  %v2660 = vpack.c.b16 %v2412, %v2404
  %v2661 = vpack.c.b16 %v2421, %v2413
  %v2662 = vpack.c.b16 %v2422, %v2414
  %v2663 = vpack.c.b16 %v2423, %v2415
  %v2664 = vpack.c.b16 %v2424, %v2416
  %v2665 = vpack.c.b16 %v2425, %v2417
  %v2666 = vpack.c.b16 %v2426, %v2418
  %v2667 = vpack.c.b16 %v2427, %v2419
  %v2668 = vpack.c.b16 %v2428, %v2420
  %v2669 = vpack.c.b16 %v2437, %v2429
  %v2670 = vpack.c.b16 %v2438, %v2430
  %v2671 = vpack.c.b16 %v2439, %v2431
  %v2672 = vpack.c.b16 %v2440, %v2432
  %v2673 = vpack.c.b16 %v2441, %v2433
  %v2674 = vpack.c.b16 %v2442, %v2434
  %v2675 = vpack.c.b16 %v2443, %v2435
  %v2676 = vpack.c.b16 %v2444, %v2436
  %v2677 = vpack.c.b16 %v2453, %v2445
  %v2678 = vpack.c.b16 %v2454, %v2446
  %v2679 = vpack.c.b16 %v2455, %v2447
  %v2680 = vpack.c.b16 %v2456, %v2448
  %v2681 = vpack.c.b16 %v2457, %v2449
  %v2682 = vpack.c.b16 %v2458, %v2450
  %v2683 = vpack.c.b16 %v2459, %v2451
  %v2684 = vpack.c.b16 %v2460, %v2452
  %v2685 = vpack.c.b16 %v2469, %v2461
  %v2686 = vpack.c.b16 %v2470, %v2462
  %v2687 = vpack.c.b16 %v2471, %v2463
  %v2688 = vpack.c.b16 %v2472, %v2464
  %v2689 = vpack.c.b16 %v2473, %v2465
  %v2690 = vpack.c.b16 %v2474, %v2466
  %v2691 = vpack.c.b16 %v2475, %v2467
  %v2692 = vpack.c.b16 %v2476, %v2468
  %v2693 = vpack.c.b16 %v2485, %v2477
  %v2694 = vpack.c.b16 %v2486, %v2478
  %v2695 = vpack.c.b16 %v2487, %v2479
  %v2696 = vpack.c.b16 %v2488, %v2480
  %v2697 = vpack.c.b16 %v2489, %v2481
  %v2698 = vpack.c.b16 %v2490, %v2482
  %v2699 = vpack.c.b16 %v2491, %v2483
  %v2700 = vpack.c.b16 %v2492, %v2484
  %v2701 = vpack.c.b16 %v2501, %v2493
  %v2702 = vpack.c.b16 %v2502, %v2494
  %v2703 = vpack.c.b16 %v2503, %v2495
  %v2704 = vpack.c.b16 %v2504, %v2496
  %v2705 = vpack.c.b16 %v2505, %v2497
  %v2706 = vpack.c.b16 %v2506, %v2498
  %v2707 = vpack.c.b16 %v2507, %v2499
  %v2708 = vpack.c.b16 %v2508, %v2500
  %v2709 = vpack.c.b16 %v2517, %v2509
  %v2710 = vpack.c.b16 %v2518, %v2510
  %v2711 = vpack.c.b16 %v2519, %v2511
  %v2712 = vpack.c.b16 %v2520, %v2512
  %v2713 = vpack.c.b16 %v2521, %v2513
  %v2714 = vpack.c.b16 %v2522, %v2514
  %v2715 = vpack.c.b16 %v2523, %v2515
  %v2716 = vpack.c.b16 %v2524, %v2516
  %v2717 = vpack.c.b16 %v2533, %v2525
  %v2718 = vpack.c.b16 %v2534, %v2526
  %v2719 = vpack.c.b16 %v2535, %v2527
  %v2720 = vpack.c.b16 %v2536, %v2528
  %v2721 = vpack.c.b16 %v2537, %v2529
  %v2722 = vpack.c.b16 %v2538, %v2530
  %v2723 = vpack.c.b16 %v2539, %v2531
  %v2724 = vpack.c.b16 %v2540, %v2532
  %v2725 = vpack.c.b16 %v2549, %v2541
  %v2726 = vpack.c.b16 %v2550, %v2542
  %v2727 = vpack.c.b16 %v2551, %v2543
  %v2728 = vpack.c.b16 %v2552, %v2544
  %v2729 = vpack.c.b16 %v2553, %v2545
  %v2730 = vpack.c.b16 %v2554, %v2546
  %v2731 = vpack.c.b16 %v2555, %v2547
  %v2732 = vpack.c.b16 %v2556, %v2548
  %v2733 = vpack.c.b16 %v2565, %v2557
  %v2734 = vpack.c.b16 %v2566, %v2558
  %v2735 = vpack.c.b16 %v2567, %v2559
  %v2736 = vpack.c.b16 %v2568, %v2560
  %v2737 = vpack.c.b16 %v2569, %v2561
  %v2738 = vpack.c.b16 %v2570, %v2562
  %v2739 = vpack.c.b16 %v2571, %v2563
  %v2740 = vpack.c.b16 %v2572, %v2564
  %v2741 = vpack.c.b16 %v2581, %v2573
  %v2742 = vpack.c.b16 %v2582, %v2574
  %v2743 = vpack.c.b16 %v2583, %v2575
  %v2744 = vpack.c.b16 %v2584, %v2576
  %v2745 = vpack.c.b16 %v2585, %v2577
  %v2746 = vpack.c.b16 %v2586, %v2578
  %v2747 = vpack.c.b16 %v2587, %v2579
  %v2748 = vpack.c.b16 %v2588, %v2580
  %v2749 = vpack.c.b16 %v2597, %v2589
  %v2750 = vpack.c.b16 %v2598, %v2590
  %v2751 = vpack.c.b16 %v2599, %v2591
  %v2752 = vpack.c.b16 %v2600, %v2592
  %v2753 = vpack.c.b16 %v2601, %v2593
  %v2754 = vpack.c.b16 %v2602, %v2594
  %v2755 = vpack.c.b16 %v2603, %v2595
  %v2756 = vpack.c.b16 %v2604, %v2596
  %v2757 = vpack.c.b16 %v2613, %v2605
  %v2758 = vpack.c.b16 %v2614, %v2606
  %v2759 = vpack.c.b16 %v2615, %v2607
  %v2760 = vpack.c.b16 %v2616, %v2608
  %v2761 = vpack.c.b16 %v2617, %v2609
  %v2762 = vpack.c.b16 %v2618, %v2610
  %v2763 = vpack.c.b16 %v2619, %v2611
  %v2764 = vpack.c.b16 %v2620, %v2612
  %v2765 = vpack.c.b16 %v2629, %v2621
  %v2766 = vpack.c.b16 %v2630, %v2622
  %v2767 = vpack.c.b16 %v2631, %v2623
  %v2768 = vpack.c.b16 %v2632, %v2624
  %v2769 = vpack.c.b16 %v2633, %v2625
  %v2770 = vpack.c.b16 %v2634, %v2626
  %v2771 = vpack.c.b16 %v2635, %v2627
  %v2772 = vpack.c.b16 %v2636, %v2628
  %v2773 = vpack.c.b16 %v2645, %v2637
  %v2774 = vpack.c.b16 %v2646, %v2638
  %v2775 = vpack.c.b16 %v2647, %v2639
  %v2776 = vpack.c.b16 %v2648, %v2640
  %v2777 = vpack.c.b16 %v2649, %v2641
  %v2778 = vpack.c.b16 %v2650, %v2642
  %v2779 = vpack.c.b16 %v2651, %v2643
  %v2780 = vpack.c.b16 %v2652, %v2644
  %2909 = vmatpush.bf16.msra.mxu0 %v2709
  %2910 = vmatpush.bf16.msra.mxu0 %v2701
  %2911 = vmatpush.bf16.msra.mxu0 %v2693
  %2912 = vmatpush.bf16.msra.mxu0 %v2685
  %2913 = vmatpush.bf16.msra.mxu0 %v2677
  %2914 = vmatpush.bf16.msra.mxu0 %v2669
  %2915 = vmatpush.bf16.msra.mxu0 %v2661
  %2916 = vmatpush.bf16.msra.mxu0 %v2653
  %2917 = vmatmul.bf16.gmra.mxu0 0
  %v2918 = vpop.f32.mrf.mxu0
  %v2919 = vadd.f32 0.0, %v2918
  %v2920 = vpop.f32.mrf.mxu0
  %2921 = vdwg.mxu0
  %2922 = vmatpush.bf16.msra.mxu0 %v2773
  %2923 = vmatpush.bf16.msra.mxu0 %v2765
  %2924 = vmatpush.bf16.msra.mxu0 %v2757
  %2925 = vmatpush.bf16.msra.mxu0 %v2749
  %2926 = vmatpush.bf16.msra.mxu0 %v2741
  %2927 = vmatpush.bf16.msra.mxu0 %v2733
  %2928 = vmatpush.bf16.msra.mxu0 %v2725
  %2929 = vmatpush.bf16.msra.mxu0 %v2717
  %2930 = vmatmul.bf16.gmra.mxu0 0
  %v2931 = vpop.f32.mrf.mxu0
  %v2932 = vadd.f32 %v2919, %v2931
  %v2933 = vpop.f32.mrf.mxu0
  %2934 = vdwg.mxu0
  %2935 = vmatpush.bf16.msra.mxu0 %v2710
  %2936 = vmatpush.bf16.msra.mxu0 %v2702
  %2937 = vmatpush.bf16.msra.mxu0 %v2694
  %2938 = vmatpush.bf16.msra.mxu0 %v2686
  %2939 = vmatpush.bf16.msra.mxu0 %v2678
  %2940 = vmatpush.bf16.msra.mxu0 %v2670
  %2941 = vmatpush.bf16.msra.mxu0 %v2662
  %2942 = vmatpush.bf16.msra.mxu0 %v2654
  %2943 = vmatmul.bf16.gmra.mxu0 0
  %v2944 = vpop.f32.mrf.mxu0
  %v2945 = vadd.f32 0.0, %v2944
  %v2946 = vpop.f32.mrf.mxu0
  %2947 = vdwg.mxu0
  %2948 = vmatpush.bf16.msra.mxu0 %v2774
  %2949 = vmatpush.bf16.msra.mxu0 %v2766
  %2950 = vmatpush.bf16.msra.mxu0 %v2758
  %2951 = vmatpush.bf16.msra.mxu0 %v2750
  %2952 = vmatpush.bf16.msra.mxu0 %v2742
  %2953 = vmatpush.bf16.msra.mxu0 %v2734
  %2954 = vmatpush.bf16.msra.mxu0 %v2726
  %2955 = vmatpush.bf16.msra.mxu0 %v2718
  %2956 = vmatmul.bf16.gmra.mxu0 0
  %v2957 = vpop.f32.mrf.mxu0
  %v2958 = vadd.f32 %v2945, %v2957
  %v2959 = vpop.f32.mrf.mxu0
  %2960 = vdwg.mxu0
  %2961 = vmatpush.bf16.msra.mxu0 %v2711
  %2962 = vmatpush.bf16.msra.mxu0 %v2703
  %2963 = vmatpush.bf16.msra.mxu0 %v2695
  %2964 = vmatpush.bf16.msra.mxu0 %v2687
  %2965 = vmatpush.bf16.msra.mxu0 %v2679
  %2966 = vmatpush.bf16.msra.mxu0 %v2671
  %2967 = vmatpush.bf16.msra.mxu0 %v2663
  %2968 = vmatpush.bf16.msra.mxu0 %v2655
  %2969 = vmatmul.bf16.gmra.mxu0 0
  %v2970 = vpop.f32.mrf.mxu0
  %v2971 = vadd.f32 0.0, %v2970
  %v2972 = vpop.f32.mrf.mxu0
  %2973 = vdwg.mxu0
  %2974 = vmatpush.bf16.msra.mxu0 %v2775
  %2975 = vmatpush.bf16.msra.mxu0 %v2767
  %2976 = vmatpush.bf16.msra.mxu0 %v2759
  %2977 = vmatpush.bf16.msra.mxu0 %v2751
  %2978 = vmatpush.bf16.msra.mxu0 %v2743
  %2979 = vmatpush.bf16.msra.mxu0 %v2735
  %2980 = vmatpush.bf16.msra.mxu0 %v2727
  %2981 = vmatpush.bf16.msra.mxu0 %v2719
  %2982 = vmatmul.bf16.gmra.mxu0 0
  %v2983 = vpop.f32.mrf.mxu0
  %v2984 = vadd.f32 %v2971, %v2983
  %v2985 = vpop.f32.mrf.mxu0
  %2986 = vdwg.mxu0
  %2987 = vmatpush.bf16.msra.mxu0 %v2712
  %2988 = vmatpush.bf16.msra.mxu0 %v2704
  %2989 = vmatpush.bf16.msra.mxu0 %v2696
  %2990 = vmatpush.bf16.msra.mxu0 %v2688
  %2991 = vmatpush.bf16.msra.mxu0 %v2680
  %2992 = vmatpush.bf16.msra.mxu0 %v2672
  %2993 = vmatpush.bf16.msra.mxu0 %v2664
  %2994 = vmatpush.bf16.msra.mxu0 %v2656
  %2995 = vmatmul.bf16.gmra.mxu0 0
  %v2996 = vpop.f32.mrf.mxu0
  %v2997 = vadd.f32 0.0, %v2996
  %v2998 = vpop.f32.mrf.mxu0
  %2999 = vdwg.mxu0
  %3000 = vmatpush.bf16.msra.mxu0 %v2776
  %3001 = vmatpush.bf16.msra.mxu0 %v2768
  %3002 = vmatpush.bf16.msra.mxu0 %v2760
  %3003 = vmatpush.bf16.msra.mxu0 %v2752
  %3004 = vmatpush.bf16.msra.mxu0 %v2744
  %3005 = vmatpush.bf16.msra.mxu0 %v2736
  %3006 = vmatpush.bf16.msra.mxu0 %v2728
  %3007 = vmatpush.bf16.msra.mxu0 %v2720
  %3008 = vmatmul.bf16.gmra.mxu0 0
  %v3009 = vpop.f32.mrf.mxu0
  %v3010 = vadd.f32 %v2997, %v3009
  %v3011 = vpop.f32.mrf.mxu0
  %3012 = vdwg.mxu0
  %3013 = vmatpush.bf16.msra.mxu0 %v2713
  %3014 = vmatpush.bf16.msra.mxu0 %v2705
  %3015 = vmatpush.bf16.msra.mxu0 %v2697
  %3016 = vmatpush.bf16.msra.mxu0 %v2689
  %3017 = vmatpush.bf16.msra.mxu0 %v2681
  %3018 = vmatpush.bf16.msra.mxu0 %v2673
  %3019 = vmatpush.bf16.msra.mxu0 %v2665
  %3020 = vmatpush.bf16.msra.mxu0 %v2657
  %3021 = vmatmul.bf16.gmra.mxu0 0
  %v3022 = vpop.f32.mrf.mxu0
  %v3023 = vadd.f32 0.0, %v3022
  %v3024 = vpop.f32.mrf.mxu0
  %3025 = vdwg.mxu0
  %3026 = vmatpush.bf16.msra.mxu0 %v2777
  %3027 = vmatpush.bf16.msra.mxu0 %v2769
  %3028 = vmatpush.bf16.msra.mxu0 %v2761
  %3029 = vmatpush.bf16.msra.mxu0 %v2753
  %3030 = vmatpush.bf16.msra.mxu0 %v2745
  %3031 = vmatpush.bf16.msra.mxu0 %v2737
  %3032 = vmatpush.bf16.msra.mxu0 %v2729
  %3033 = vmatpush.bf16.msra.mxu0 %v2721
  %3034 = vmatmul.bf16.gmra.mxu0 0
  %v3035 = vpop.f32.mrf.mxu0
  %v3036 = vadd.f32 %v3023, %v3035
  %v3037 = vpop.f32.mrf.mxu0
  %3038 = vdwg.mxu0
  %3039 = vmatpush.bf16.msra.mxu0 %v2714
  %3040 = vmatpush.bf16.msra.mxu0 %v2706
  %3041 = vmatpush.bf16.msra.mxu0 %v2698
  %3042 = vmatpush.bf16.msra.mxu0 %v2690
  %3043 = vmatpush.bf16.msra.mxu0 %v2682
  %3044 = vmatpush.bf16.msra.mxu0 %v2674
  %3045 = vmatpush.bf16.msra.mxu0 %v2666
  %3046 = vmatpush.bf16.msra.mxu0 %v2658
  %3047 = vmatmul.bf16.gmra.mxu0 0
  %v3048 = vpop.f32.mrf.mxu0
  %v3049 = vadd.f32 0.0, %v3048
  %v3050 = vpop.f32.mrf.mxu0
  %3051 = vdwg.mxu0
  %3052 = vmatpush.bf16.msra.mxu0 %v2778
  %3053 = vmatpush.bf16.msra.mxu0 %v2770
  %3054 = vmatpush.bf16.msra.mxu0 %v2762
  %3055 = vmatpush.bf16.msra.mxu0 %v2754
  %3056 = vmatpush.bf16.msra.mxu0 %v2746
  %3057 = vmatpush.bf16.msra.mxu0 %v2738
  %3058 = vmatpush.bf16.msra.mxu0 %v2730
  %3059 = vmatpush.bf16.msra.mxu0 %v2722
  %3060 = vmatmul.bf16.gmra.mxu0 0
  %v3061 = vpop.f32.mrf.mxu0
  %v3062 = vadd.f32 %v3049, %v3061
  %v3063 = vpop.f32.mrf.mxu0
  %3064 = vdwg.mxu0
  %3065 = vmatpush.bf16.msra.mxu0 %v2715
  %3066 = vmatpush.bf16.msra.mxu0 %v2707
  %3067 = vmatpush.bf16.msra.mxu0 %v2699
  %3068 = vmatpush.bf16.msra.mxu0 %v2691
  %3069 = vmatpush.bf16.msra.mxu0 %v2683
  %3070 = vmatpush.bf16.msra.mxu0 %v2675
  %3071 = vmatpush.bf16.msra.mxu0 %v2667
  %3072 = vmatpush.bf16.msra.mxu0 %v2659
  %3073 = vmatmul.bf16.gmra.mxu0 0
  %v3074 = vpop.f32.mrf.mxu0
  %v3075 = vadd.f32 0.0, %v3074
  %v3076 = vpop.f32.mrf.mxu0
  %3077 = vdwg.mxu0
  %3078 = vmatpush.bf16.msra.mxu0 %v2779
  %3079 = vmatpush.bf16.msra.mxu0 %v2771
  %3080 = vmatpush.bf16.msra.mxu0 %v2763
  %3081 = vmatpush.bf16.msra.mxu0 %v2755
  %3082 = vmatpush.bf16.msra.mxu0 %v2747
  %3083 = vmatpush.bf16.msra.mxu0 %v2739
  %3084 = vmatpush.bf16.msra.mxu0 %v2731
  %3085 = vmatpush.bf16.msra.mxu0 %v2723
  %3086 = vmatmul.bf16.gmra.mxu0 0
  %v3087 = vpop.f32.mrf.mxu0
  %v3088 = vadd.f32 %v3075, %v3087
  %v3089 = vpop.f32.mrf.mxu0
  %3090 = vdwg.mxu0
  %3091 = vmatpush.bf16.msra.mxu0 %v2716
  %3092 = vmatpush.bf16.msra.mxu0 %v2708
  %3093 = vmatpush.bf16.msra.mxu0 %v2700
  %3094 = vmatpush.bf16.msra.mxu0 %v2692
  %3095 = vmatpush.bf16.msra.mxu0 %v2684
  %3096 = vmatpush.bf16.msra.mxu0 %v2676
  %3097 = vmatpush.bf16.msra.mxu0 %v2668
  %3098 = vmatpush.bf16.msra.mxu0 %v2660
  %3099 = vmatmul.bf16.gmra.mxu0 0
  %v3100 = vpop.f32.mrf.mxu0
  %v3101 = vadd.f32 0.0, %v3100
  %v3102 = vpop.f32.mrf.mxu0
  %3103 = vdwg.mxu0
  %3104 = vmatpush.bf16.msra.mxu0 %v2780
  %3105 = vmatpush.bf16.msra.mxu0 %v2772
  %3106 = vmatpush.bf16.msra.mxu0 %v2764
  %3107 = vmatpush.bf16.msra.mxu0 %v2756
  %3108 = vmatpush.bf16.msra.mxu0 %v2748
  %3109 = vmatpush.bf16.msra.mxu0 %v2740
  %3110 = vmatpush.bf16.msra.mxu0 %v2732
  %3111 = vmatpush.bf16.msra.mxu0 %v2724
  %3112 = vmatmul.bf16.gmra.mxu0 0
  %v3113 = vpop.f32.mrf.mxu0
  %v3114 = vadd.f32 %v3101, %v3113
  %v3115 = vpop.f32.mrf.mxu0
  %3116 = vdwg.mxu0
  %v3117 = vadd.f32 %v2084, %v2932
  %v3118 = vadd.f32 %v2110, %v2958
  %v3119 = vadd.f32 %v2136, %v2984
  %v3120 = vadd.f32 %v2162, %v3010
  %v3121 = vadd.f32 %v2188, %v3036
  %v3122 = vadd.f32 %v2214, %v3062
  %v3123 = vadd.f32 %v2240, %v3088
  %v3124 = vadd.f32 %v2266, %v3114
  %v3125 = vxor.u32 %v3117, 2147483648
  %v3126 = vxor.u32 %v3118, 2147483648
  %v3127 = vmul.f32 %v3125, 1.442695
  %v3128 = vpow.pop %v3127
  %v3129 = vmul.f32 %v3126, 1.442695
  %v3130 = vpow.pop %v3129
  %v3131 = vadd.f32 %v3128, 1.0
  %v3132 = vadd.f32 %v3130, 1.0
  %v3133 = vrcp.pop %v3131
  %v3134 = vmul.f32 %v3131, %v3133
  %v3135 = vsub.f32 1.0, %v3134
  %v3136 = vmul.f32 %v3133, %v3135
  %v3137 = vadd.f32 %v3133, %v3136
  %vm3138 = vweird.f32 %v3131
  %vm3139 = vweird.f32 %v3133
  %vm3140 = vmor %vm3138, %vm3139
  %v3141 = vsel %vm3140, %v3133, %v3137
  %v3142 = vand.u32 2147483647, %v3131
  %vm3143 = vcmp.eq.f32.partialorder %v3142, 8.507059e+37
  %v3144 = vand.u32 %v3131, 2147483648
  %v3145 = vor.u32 1.1754944e-38, %v3144
  %v3146 = vsel %vm3143, %v3145, %v3141
  %v3147 = vmul.f32 1.0, %v3146
  %v3148 = vrcp.pop %v3132
  %v3149 = vmul.f32 %v3132, %v3148
  %v3150 = vsub.f32 1.0, %v3149
  %v3151 = vmul.f32 %v3148, %v3150
  %v3152 = vadd.f32 %v3148, %v3151
  %vm3153 = vweird.f32 %v3132
  %vm3154 = vweird.f32 %v3148
  %vm3155 = vmor %vm3153, %vm3154
  %v3156 = vsel %vm3155, %v3148, %v3152
  %v3157 = vand.u32 2147483647, %v3132
  %vm3158 = vcmp.eq.f32.partialorder %v3157, 8.507059e+37
  %v3159 = vand.u32 %v3132, 2147483648
  %v3160 = vor.u32 1.1754944e-38, %v3159
  %v3161 = vsel %vm3158, %v3160, %v3156
  %v3162 = vmul.f32 1.0, %v3161
  %v3163 = vxor.u32 %v3119, 2147483648
  %v3164 = vxor.u32 %v3120, 2147483648
  %v3165 = vmul.f32 %v3163, 1.442695
  %v3166 = vpow.pop %v3165
  %v3167 = vmul.f32 %v3164, 1.442695
  %v3168 = vpow.pop %v3167
  %v3169 = vadd.f32 %v3166, 1.0
  %v3170 = vadd.f32 %v3168, 1.0
  %v3171 = vrcp.pop %v3169
  %v3172 = vmul.f32 %v3169, %v3171
  %v3173 = vsub.f32 1.0, %v3172
  %v3174 = vmul.f32 %v3171, %v3173
  %v3175 = vadd.f32 %v3171, %v3174
  %vm3176 = vweird.f32 %v3169
  %vm3177 = vweird.f32 %v3171
  %vm3178 = vmor %vm3176, %vm3177
  %v3179 = vsel %vm3178, %v3171, %v3175
  %v3180 = vand.u32 2147483647, %v3169
  %vm3181 = vcmp.eq.f32.partialorder %v3180, 8.507059e+37
  %v3182 = vand.u32 %v3169, 2147483648
  %v3183 = vor.u32 1.1754944e-38, %v3182
  %v3184 = vsel %vm3181, %v3183, %v3179
  %v3185 = vmul.f32 1.0, %v3184
  %v3186 = vrcp.pop %v3170
  %v3187 = vmul.f32 %v3170, %v3186
  %v3188 = vsub.f32 1.0, %v3187
  %v3189 = vmul.f32 %v3186, %v3188
  %v3190 = vadd.f32 %v3186, %v3189
  %vm3191 = vweird.f32 %v3170
  %vm3192 = vweird.f32 %v3186
  %vm3193 = vmor %vm3191, %vm3192
  %v3194 = vsel %vm3193, %v3186, %v3190
  %v3195 = vand.u32 2147483647, %v3170
  %vm3196 = vcmp.eq.f32.partialorder %v3195, 8.507059e+37
  %v3197 = vand.u32 %v3170, 2147483648
  %v3198 = vor.u32 1.1754944e-38, %v3197
  %v3199 = vsel %vm3196, %v3198, %v3194
  %v3200 = vmul.f32 1.0, %v3199
  %v3201 = vtanh.pop %v3121
  %v3202 = vtanh.pop %v3122
  %v3203 = vxor.u32 %v3123, 2147483648
  %v3204 = vxor.u32 %v3124, 2147483648
  %v3205 = vmul.f32 %v3203, 1.442695
  %v3206 = vpow.pop %v3205
  %v3207 = vmul.f32 %v3204, 1.442695
  %v3208 = vpow.pop %v3207
  %v3209 = vadd.f32 %v3206, 1.0
  %v3210 = vadd.f32 %v3208, 1.0
  %v3211 = vrcp.pop %v3209
  %v3212 = vmul.f32 %v3209, %v3211
  %v3213 = vsub.f32 1.0, %v3212
  %v3214 = vmul.f32 %v3211, %v3213
  %v3215 = vadd.f32 %v3211, %v3214
  %vm3216 = vweird.f32 %v3209
  %vm3217 = vweird.f32 %v3211
  %vm3218 = vmor %vm3216, %vm3217
  %v3219 = vsel %vm3218, %v3211, %v3215
  %v3220 = vand.u32 2147483647, %v3209
  %vm3221 = vcmp.eq.f32.partialorder %v3220, 8.507059e+37
  %v3222 = vand.u32 %v3209, 2147483648
  %v3223 = vor.u32 1.1754944e-38, %v3222
  %v3224 = vsel %vm3221, %v3223, %v3219
  %v3225 = vmul.f32 1.0, %v3224
  %v3226 = vrcp.pop %v3210
  %v3227 = vmul.f32 %v3210, %v3226
  %v3228 = vsub.f32 1.0, %v3227
  %v3229 = vmul.f32 %v3226, %v3228
  %v3230 = vadd.f32 %v3226, %v3229
  %vm3231 = vweird.f32 %v3210
  %vm3232 = vweird.f32 %v3226
  %vm3233 = vmor %vm3231, %vm3232
  %v3234 = vsel %vm3233, %v3226, %v3230
  %v3235 = vand.u32 2147483647, %v3210
  %vm3236 = vcmp.eq.f32.partialorder %v3235, 8.507059e+37
  %v3237 = vand.u32 %v3210, 2147483648
  %v3238 = vor.u32 1.1754944e-38, %v3237
  %v3239 = vsel %vm3236, %v3238, %v3234
  %v3240 = vmul.f32 1.0, %v3239
  %v3241 = vmul.f32 %v3185, 0.0
  %v3242 = vmul.f32 %v3200, 0.0
  %v3243 = vmul.f32 %v3147, %v3201
  %v3244 = vmul.f32 %v3162, %v3202
  %v3245 = vadd.f32 %v3241, %v3243
  %v3246 = vadd.f32 %v3242, %v3244
  %v3247 = vtanh.pop %v3245
  %v3248 = vtanh.pop %v3246
  %v3249 = vmul.f32 %v3225, %v3247
  %v3250 = vmul.f32 %v3240, %v3248
  %v3251 = vpack.c.bf16 %v3249, %v3249
  %v3252 = vpack.c.bf16 %v3250, %v3250
  %s3253 = scalar_lea.vmem %s0, 64
  %v3254 = vld [vmem:[%s3253] sm:$0xff]
  %v3255 = vld [vmem:[%s3253 + $0x8] sm:$0xff]
  %v3256 = vld [vmem:[%s3253 + $0x10] sm:$0xff]
  %v3257 = vld [vmem:[%s3253 + $0x18] sm:$0xff]
  %v3258 = vld [vmem:[%s3253 + $0x20] sm:$0xff]
  %v3259 = vld [vmem:[%s3253 + $0x28] sm:$0xff]
  %v3260 = vld [vmem:[%s3253 + $0x30] sm:$0xff]
  %v3261 = vld [vmem:[%s3253 + $0x38] sm:$0xff]
  %3262 = vmatpush.bf16.msra.mxu0 %v860
  %3263 = vmatpush.bf16.msra.mxu0 %v852
  %3264 = vmatpush.bf16.msra.mxu0 %v844
  %3265 = vmatpush.bf16.msra.mxu0 %v836
  %3266 = vmatpush.bf16.msra.mxu0 %v828
  %3267 = vmatpush.bf16.msra.mxu0 %v820
  %3268 = vmatpush.bf16.msra.mxu0 %v812
  %3269 = vmatpush.bf16.msra.mxu0 %v804
  %3270 = vmatmul.bf16.gmra.mxu0 %v1402
  %v3271 = vpop.f32.mrf.mxu0
  %v3272 = vadd.f32 0.0, %v3271
  %v3273 = vpop.f32.mrf.mxu0
  %3274 = vdwg.mxu0
  %3275 = vmatpush.bf16.msra.mxu0 %v924
  %3276 = vmatpush.bf16.msra.mxu0 %v916
  %3277 = vmatpush.bf16.msra.mxu0 %v908
  %3278 = vmatpush.bf16.msra.mxu0 %v900
  %3279 = vmatpush.bf16.msra.mxu0 %v892
  %3280 = vmatpush.bf16.msra.mxu0 %v884
  %3281 = vmatpush.bf16.msra.mxu0 %v876
  %3282 = vmatpush.bf16.msra.mxu0 %v868
  %3283 = vmatmul.bf16.gmra.mxu0 %v1403
  %v3284 = vpop.f32.mrf.mxu0
  %v3285 = vadd.f32 %v3272, %v3284
  %v3286 = vpop.f32.mrf.mxu0
  %3287 = vdwg.mxu0
  %3288 = vmatpush.bf16.msra.mxu0 %v861
  %3289 = vmatpush.bf16.msra.mxu0 %v853
  %3290 = vmatpush.bf16.msra.mxu0 %v845
  %3291 = vmatpush.bf16.msra.mxu0 %v837
  %3292 = vmatpush.bf16.msra.mxu0 %v829
  %3293 = vmatpush.bf16.msra.mxu0 %v821
  %3294 = vmatpush.bf16.msra.mxu0 %v813
  %3295 = vmatpush.bf16.msra.mxu0 %v805
  %3296 = vmatmul.bf16.gmra.mxu0 %v1402
  %v3297 = vpop.f32.mrf.mxu0
  %v3298 = vadd.f32 0.0, %v3297
  %v3299 = vpop.f32.mrf.mxu0
  %3300 = vdwg.mxu0
  %3301 = vmatpush.bf16.msra.mxu0 %v925
  %3302 = vmatpush.bf16.msra.mxu0 %v917
  %3303 = vmatpush.bf16.msra.mxu0 %v909
  %3304 = vmatpush.bf16.msra.mxu0 %v901
  %3305 = vmatpush.bf16.msra.mxu0 %v893
  %3306 = vmatpush.bf16.msra.mxu0 %v885
  %3307 = vmatpush.bf16.msra.mxu0 %v877
  %3308 = vmatpush.bf16.msra.mxu0 %v869
  %3309 = vmatmul.bf16.gmra.mxu0 %v1403
  %v3310 = vpop.f32.mrf.mxu0
  %v3311 = vadd.f32 %v3298, %v3310
  %v3312 = vpop.f32.mrf.mxu0
  %3313 = vdwg.mxu0
  %3314 = vmatpush.bf16.msra.mxu0 %v862
  %3315 = vmatpush.bf16.msra.mxu0 %v854
  %3316 = vmatpush.bf16.msra.mxu0 %v846
  %3317 = vmatpush.bf16.msra.mxu0 %v838
  %3318 = vmatpush.bf16.msra.mxu0 %v830
  %3319 = vmatpush.bf16.msra.mxu0 %v822
  %3320 = vmatpush.bf16.msra.mxu0 %v814
  %3321 = vmatpush.bf16.msra.mxu0 %v806
  %3322 = vmatmul.bf16.gmra.mxu0 %v1402
  %v3323 = vpop.f32.mrf.mxu0
  %v3324 = vadd.f32 0.0, %v3323
  %v3325 = vpop.f32.mrf.mxu0
  %3326 = vdwg.mxu0
  %3327 = vmatpush.bf16.msra.mxu0 %v926
  %3328 = vmatpush.bf16.msra.mxu0 %v918
  %3329 = vmatpush.bf16.msra.mxu0 %v910
  %3330 = vmatpush.bf16.msra.mxu0 %v902
  %3331 = vmatpush.bf16.msra.mxu0 %v894
  %3332 = vmatpush.bf16.msra.mxu0 %v886
  %3333 = vmatpush.bf16.msra.mxu0 %v878
  %3334 = vmatpush.bf16.msra.mxu0 %v870
  %3335 = vmatmul.bf16.gmra.mxu0 %v1403
  %v3336 = vpop.f32.mrf.mxu0
  %v3337 = vadd.f32 %v3324, %v3336
  %v3338 = vpop.f32.mrf.mxu0
  %3339 = vdwg.mxu0
  %3340 = vmatpush.bf16.msra.mxu0 %v863
  %3341 = vmatpush.bf16.msra.mxu0 %v855
  %3342 = vmatpush.bf16.msra.mxu0 %v847
  %3343 = vmatpush.bf16.msra.mxu0 %v839
  %3344 = vmatpush.bf16.msra.mxu0 %v831
  %3345 = vmatpush.bf16.msra.mxu0 %v823
  %3346 = vmatpush.bf16.msra.mxu0 %v815
  %3347 = vmatpush.bf16.msra.mxu0 %v807
  %3348 = vmatmul.bf16.gmra.mxu0 %v1402
  %v3349 = vpop.f32.mrf.mxu0
  %v3350 = vadd.f32 0.0, %v3349
  %v3351 = vpop.f32.mrf.mxu0
  %3352 = vdwg.mxu0
  %3353 = vmatpush.bf16.msra.mxu0 %v927
  %3354 = vmatpush.bf16.msra.mxu0 %v919
  %3355 = vmatpush.bf16.msra.mxu0 %v911
  %3356 = vmatpush.bf16.msra.mxu0 %v903
  %3357 = vmatpush.bf16.msra.mxu0 %v895
  %3358 = vmatpush.bf16.msra.mxu0 %v887
  %3359 = vmatpush.bf16.msra.mxu0 %v879
  %3360 = vmatpush.bf16.msra.mxu0 %v871
  %3361 = vmatmul.bf16.gmra.mxu0 %v1403
  %v3362 = vpop.f32.mrf.mxu0
  %v3363 = vadd.f32 %v3350, %v3362
  %v3364 = vpop.f32.mrf.mxu0
  %3365 = vdwg.mxu0
  %3366 = vmatpush.bf16.msra.mxu0 %v864
  %3367 = vmatpush.bf16.msra.mxu0 %v856
  %3368 = vmatpush.bf16.msra.mxu0 %v848
  %3369 = vmatpush.bf16.msra.mxu0 %v840
  %3370 = vmatpush.bf16.msra.mxu0 %v832
  %3371 = vmatpush.bf16.msra.mxu0 %v824
  %3372 = vmatpush.bf16.msra.mxu0 %v816
  %3373 = vmatpush.bf16.msra.mxu0 %v808
  %3374 = vmatmul.bf16.gmra.mxu0 %v1402
  %v3375 = vpop.f32.mrf.mxu0
  %v3376 = vadd.f32 0.0, %v3375
  %v3377 = vpop.f32.mrf.mxu0
  %3378 = vdwg.mxu0
  %3379 = vmatpush.bf16.msra.mxu0 %v928
  %3380 = vmatpush.bf16.msra.mxu0 %v920
  %3381 = vmatpush.bf16.msra.mxu0 %v912
  %3382 = vmatpush.bf16.msra.mxu0 %v904
  %3383 = vmatpush.bf16.msra.mxu0 %v896
  %3384 = vmatpush.bf16.msra.mxu0 %v888
  %3385 = vmatpush.bf16.msra.mxu0 %v880
  %3386 = vmatpush.bf16.msra.mxu0 %v872
  %3387 = vmatmul.bf16.gmra.mxu0 %v1403
  %v3388 = vpop.f32.mrf.mxu0
  %v3389 = vadd.f32 %v3376, %v3388
  %v3390 = vpop.f32.mrf.mxu0
  %3391 = vdwg.mxu0
  %3392 = vmatpush.bf16.msra.mxu0 %v865
  %3393 = vmatpush.bf16.msra.mxu0 %v857
  %3394 = vmatpush.bf16.msra.mxu0 %v849
  %3395 = vmatpush.bf16.msra.mxu0 %v841
  %3396 = vmatpush.bf16.msra.mxu0 %v833
  %3397 = vmatpush.bf16.msra.mxu0 %v825
  %3398 = vmatpush.bf16.msra.mxu0 %v817
  %3399 = vmatpush.bf16.msra.mxu0 %v809
  %3400 = vmatmul.bf16.gmra.mxu0 %v1402
  %v3401 = vpop.f32.mrf.mxu0
  %v3402 = vadd.f32 0.0, %v3401
  %v3403 = vpop.f32.mrf.mxu0
  %3404 = vdwg.mxu0
  %3405 = vmatpush.bf16.msra.mxu0 %v929
  %3406 = vmatpush.bf16.msra.mxu0 %v921
  %3407 = vmatpush.bf16.msra.mxu0 %v913
  %3408 = vmatpush.bf16.msra.mxu0 %v905
  %3409 = vmatpush.bf16.msra.mxu0 %v897
  %3410 = vmatpush.bf16.msra.mxu0 %v889
  %3411 = vmatpush.bf16.msra.mxu0 %v881
  %3412 = vmatpush.bf16.msra.mxu0 %v873
  %3413 = vmatmul.bf16.gmra.mxu0 %v1403
  %v3414 = vpop.f32.mrf.mxu0
  %v3415 = vadd.f32 %v3402, %v3414
  %v3416 = vpop.f32.mrf.mxu0
  %3417 = vdwg.mxu0
  %3418 = vmatpush.bf16.msra.mxu0 %v866
  %3419 = vmatpush.bf16.msra.mxu0 %v858
  %3420 = vmatpush.bf16.msra.mxu0 %v850
  %3421 = vmatpush.bf16.msra.mxu0 %v842
  %3422 = vmatpush.bf16.msra.mxu0 %v834
  %3423 = vmatpush.bf16.msra.mxu0 %v826
  %3424 = vmatpush.bf16.msra.mxu0 %v818
  %3425 = vmatpush.bf16.msra.mxu0 %v810
  %3426 = vmatmul.bf16.gmra.mxu0 %v1402
  %v3427 = vpop.f32.mrf.mxu0
  %v3428 = vadd.f32 0.0, %v3427
  %v3429 = vpop.f32.mrf.mxu0
  %3430 = vdwg.mxu0
  %3431 = vmatpush.bf16.msra.mxu0 %v930
  %3432 = vmatpush.bf16.msra.mxu0 %v922
  %3433 = vmatpush.bf16.msra.mxu0 %v914
  %3434 = vmatpush.bf16.msra.mxu0 %v906
  %3435 = vmatpush.bf16.msra.mxu0 %v898
  %3436 = vmatpush.bf16.msra.mxu0 %v890
  %3437 = vmatpush.bf16.msra.mxu0 %v882
  %3438 = vmatpush.bf16.msra.mxu0 %v874
  %3439 = vmatmul.bf16.gmra.mxu0 %v1403
  %v3440 = vpop.f32.mrf.mxu0
  %v3441 = vadd.f32 %v3428, %v3440
  %v3442 = vpop.f32.mrf.mxu0
  %3443 = vdwg.mxu0
  %3444 = vmatpush.bf16.msra.mxu0 %v867
  %3445 = vmatpush.bf16.msra.mxu0 %v859
  %3446 = vmatpush.bf16.msra.mxu0 %v851
  %3447 = vmatpush.bf16.msra.mxu0 %v843
  %3448 = vmatpush.bf16.msra.mxu0 %v835
  %3449 = vmatpush.bf16.msra.mxu0 %v827
  %3450 = vmatpush.bf16.msra.mxu0 %v819
  %3451 = vmatpush.bf16.msra.mxu0 %v811
  %3452 = vmatmul.bf16.gmra.mxu0 %v1402
  %v3453 = vpop.f32.mrf.mxu0
  %v3454 = vadd.f32 0.0, %v3453
  %v3455 = vpop.f32.mrf.mxu0
  %3456 = vdwg.mxu0
  %3457 = vmatpush.bf16.msra.mxu0 %v931
  %3458 = vmatpush.bf16.msra.mxu0 %v923
  %3459 = vmatpush.bf16.msra.mxu0 %v915
  %3460 = vmatpush.bf16.msra.mxu0 %v907
  %3461 = vmatpush.bf16.msra.mxu0 %v899
  %3462 = vmatpush.bf16.msra.mxu0 %v891
  %3463 = vmatpush.bf16.msra.mxu0 %v883
  %3464 = vmatpush.bf16.msra.mxu0 %v875
  %3465 = vmatmul.bf16.gmra.mxu0 %v1403
  %v3466 = vpop.f32.mrf.mxu0
  %v3467 = vadd.f32 %v3454, %v3466
  %v3468 = vpop.f32.mrf.mxu0
  %3469 = vdwg.mxu0
  %v3470 = vadd.f32 %v3254, %v3285
  %v3471 = vadd.f32 %v3255, %v3311
  %v3472 = vadd.f32 %v3256, %v3337
  %v3473 = vadd.f32 %v3257, %v3363
  %v3474 = vadd.f32 %v3258, %v3389
  %v3475 = vadd.f32 %v3259, %v3415
  %v3476 = vadd.f32 %v3260, %v3441
  %v3477 = vadd.f32 %v3261, %v3467
  %v3478 = vxor.u32 %v3470, 2147483648
  %v3479 = vxor.u32 %v3471, 2147483648
  %v3480 = vmul.f32 %v3478, 1.442695
  %v3481 = vpow.pop %v3480
  %v3482 = vmul.f32 %v3479, 1.442695
  %v3483 = vpow.pop %v3482
  %v3484 = vadd.f32 %v3481, 1.0
  %v3485 = vadd.f32 %v3483, 1.0
  %v3486 = vrcp.pop %v3484
  %v3487 = vmul.f32 %v3484, %v3486
  %v3488 = vsub.f32 1.0, %v3487
  %v3489 = vmul.f32 %v3486, %v3488
  %v3490 = vadd.f32 %v3486, %v3489
  %vm3491 = vweird.f32 %v3484
  %vm3492 = vweird.f32 %v3486
  %vm3493 = vmor %vm3491, %vm3492
  %v3494 = vsel %vm3493, %v3486, %v3490
  %v3495 = vand.u32 2147483647, %v3484
  %vm3496 = vcmp.eq.f32.partialorder %v3495, 8.507059e+37
  %v3497 = vand.u32 %v3484, 2147483648
  %v3498 = vor.u32 1.1754944e-38, %v3497
  %v3499 = vsel %vm3496, %v3498, %v3494
  %v3500 = vmul.f32 1.0, %v3499
  %v3501 = vrcp.pop %v3485
  %v3502 = vmul.f32 %v3485, %v3501
  %v3503 = vsub.f32 1.0, %v3502
  %v3504 = vmul.f32 %v3501, %v3503
  %v3505 = vadd.f32 %v3501, %v3504
  %vm3506 = vweird.f32 %v3485
  %vm3507 = vweird.f32 %v3501
  %vm3508 = vmor %vm3506, %vm3507
  %v3509 = vsel %vm3508, %v3501, %v3505
  %v3510 = vand.u32 2147483647, %v3485
  %vm3511 = vcmp.eq.f32.partialorder %v3510, 8.507059e+37
  %v3512 = vand.u32 %v3485, 2147483648
  %v3513 = vor.u32 1.1754944e-38, %v3512
  %v3514 = vsel %vm3511, %v3513, %v3509
  %v3515 = vmul.f32 1.0, %v3514
  %v3516 = vxor.u32 %v3472, 2147483648
  %v3517 = vxor.u32 %v3473, 2147483648
  %v3518 = vmul.f32 %v3516, 1.442695
  %v3519 = vpow.pop %v3518
  %v3520 = vmul.f32 %v3517, 1.442695
  %v3521 = vpow.pop %v3520
  %v3522 = vadd.f32 %v3519, 1.0
  %v3523 = vadd.f32 %v3521, 1.0
  %v3524 = vrcp.pop %v3522
  %v3525 = vmul.f32 %v3522, %v3524
  %v3526 = vsub.f32 1.0, %v3525
  %v3527 = vmul.f32 %v3524, %v3526
  %v3528 = vadd.f32 %v3524, %v3527
  %vm3529 = vweird.f32 %v3522
  %vm3530 = vweird.f32 %v3524
  %vm3531 = vmor %vm3529, %vm3530
  %v3532 = vsel %vm3531, %v3524, %v3528
  %v3533 = vand.u32 2147483647, %v3522
  %vm3534 = vcmp.eq.f32.partialorder %v3533, 8.507059e+37
  %v3535 = vand.u32 %v3522, 2147483648
  %v3536 = vor.u32 1.1754944e-38, %v3535
  %v3537 = vsel %vm3534, %v3536, %v3532
  %v3538 = vmul.f32 1.0, %v3537
  %v3539 = vrcp.pop %v3523
  %v3540 = vmul.f32 %v3523, %v3539
  %v3541 = vsub.f32 1.0, %v3540
  %v3542 = vmul.f32 %v3539, %v3541
  %v3543 = vadd.f32 %v3539, %v3542
  %vm3544 = vweird.f32 %v3523
  %vm3545 = vweird.f32 %v3539
  %vm3546 = vmor %vm3544, %vm3545
  %v3547 = vsel %vm3546, %v3539, %v3543
  %v3548 = vand.u32 2147483647, %v3523
  %vm3549 = vcmp.eq.f32.partialorder %v3548, 8.507059e+37
  %v3550 = vand.u32 %v3523, 2147483648
  %v3551 = vor.u32 1.1754944e-38, %v3550
  %v3552 = vsel %vm3549, %v3551, %v3547
  %v3553 = vmul.f32 1.0, %v3552
  %v3554 = vtanh.pop %v3474
  %v3555 = vtanh.pop %v3475
  %v3556 = vxor.u32 %v3476, 2147483648
  %v3557 = vxor.u32 %v3477, 2147483648
  %v3558 = vmul.f32 %v3556, 1.442695
  %v3559 = vpow.pop %v3558
  %v3560 = vmul.f32 %v3557, 1.442695
  %v3561 = vpow.pop %v3560
  %v3562 = vadd.f32 %v3559, 1.0
  %v3563 = vadd.f32 %v3561, 1.0
  %v3564 = vrcp.pop %v3562
  %v3565 = vmul.f32 %v3562, %v3564
  %v3566 = vsub.f32 1.0, %v3565
  %v3567 = vmul.f32 %v3564, %v3566
  %v3568 = vadd.f32 %v3564, %v3567
  %vm3569 = vweird.f32 %v3562
  %vm3570 = vweird.f32 %v3564
  %vm3571 = vmor %vm3569, %vm3570
  %v3572 = vsel %vm3571, %v3564, %v3568
  %v3573 = vand.u32 2147483647, %v3562
  %vm3574 = vcmp.eq.f32.partialorder %v3573, 8.507059e+37
  %v3575 = vand.u32 %v3562, 2147483648
  %v3576 = vor.u32 1.1754944e-38, %v3575
  %v3577 = vsel %vm3574, %v3576, %v3572
  %v3578 = vmul.f32 1.0, %v3577
  %v3579 = vrcp.pop %v3563
  %v3580 = vmul.f32 %v3563, %v3579
  %v3581 = vsub.f32 1.0, %v3580
  %v3582 = vmul.f32 %v3579, %v3581
  %v3583 = vadd.f32 %v3579, %v3582
  %vm3584 = vweird.f32 %v3563
  %vm3585 = vweird.f32 %v3579
  %vm3586 = vmor %vm3584, %vm3585
  %v3587 = vsel %vm3586, %v3579, %v3583
  %v3588 = vand.u32 2147483647, %v3563
  %vm3589 = vcmp.eq.f32.partialorder %v3588, 8.507059e+37
  %v3590 = vand.u32 %v3563, 2147483648
  %v3591 = vor.u32 1.1754944e-38, %v3590
  %v3592 = vsel %vm3589, %v3591, %v3587
  %v3593 = vmul.f32 1.0, %v3592
  %v3594 = vmul.f32 %v3538, %v1396
  %v3595 = vmul.f32 %v3553, %v1397
  %v3596 = vmul.f32 %v3500, %v3554
  %v3597 = vmul.f32 %v3515, %v3555
  %v3598 = vadd.f32 %v3594, %v3596
  %v3599 = vadd.f32 %v3595, %v3597
  %v3600 = vtanh.pop %v3598
  %v3601 = vtanh.pop %v3599
  %v3602 = vmul.f32 %v3578, %v3600
  %v3603 = vmul.f32 %v3593, %v3601
  %v3604 = vpack.c.bf16 %v3602, %v3602
  %v3605 = vpack.c.bf16 %v3603, %v3603
  %3606 = vmatpush.bf16.msra.mxu0 %v1861
  %3607 = vmatpush.bf16.msra.mxu0 %v1853
  %3608 = vmatpush.bf16.msra.mxu0 %v1845
  %3609 = vmatpush.bf16.msra.mxu0 %v1837
  %3610 = vmatpush.bf16.msra.mxu0 %v1829
  %3611 = vmatpush.bf16.msra.mxu0 %v1821
  %3612 = vmatpush.bf16.msra.mxu0 %v1813
  %3613 = vmatpush.bf16.msra.mxu0 %v1805
  %3614 = vmatmul.bf16.gmra.mxu0 %v3604
  %v3615 = vpop.f32.mrf.mxu0
  %v3616 = vadd.f32 %v1405, %v3615
  %v3617 = vpop.f32.mrf.mxu0
  %3618 = vdwg.mxu0
  %3619 = vmatpush.bf16.msra.mxu0 %v1925
  %3620 = vmatpush.bf16.msra.mxu0 %v1917
  %3621 = vmatpush.bf16.msra.mxu0 %v1909
  %3622 = vmatpush.bf16.msra.mxu0 %v1901
  %3623 = vmatpush.bf16.msra.mxu0 %v1893
  %3624 = vmatpush.bf16.msra.mxu0 %v1885
  %3625 = vmatpush.bf16.msra.mxu0 %v1877
  %3626 = vmatpush.bf16.msra.mxu0 %v1869
  %3627 = vmatmul.bf16.gmra.mxu0 %v3605
  %v3628 = vpop.f32.mrf.mxu0
  %v3629 = vadd.f32 %v3616, %v3628
  %v3630 = vpop.f32.mrf.mxu0
  %3631 = vdwg.mxu0
  %3632 = vmatpush.bf16.msra.mxu0 %v1862
  %3633 = vmatpush.bf16.msra.mxu0 %v1854
  %3634 = vmatpush.bf16.msra.mxu0 %v1846
  %3635 = vmatpush.bf16.msra.mxu0 %v1838
  %3636 = vmatpush.bf16.msra.mxu0 %v1830
  %3637 = vmatpush.bf16.msra.mxu0 %v1822
  %3638 = vmatpush.bf16.msra.mxu0 %v1814
  %3639 = vmatpush.bf16.msra.mxu0 %v1806
  %3640 = vmatmul.bf16.gmra.mxu0 %v3604
  %v3641 = vpop.f32.mrf.mxu0
  %v3642 = vadd.f32 %v1406, %v3641
  %v3643 = vpop.f32.mrf.mxu0
  %3644 = vdwg.mxu0
  %3645 = vmatpush.bf16.msra.mxu0 %v1926
  %3646 = vmatpush.bf16.msra.mxu0 %v1918
  %3647 = vmatpush.bf16.msra.mxu0 %v1910
  %3648 = vmatpush.bf16.msra.mxu0 %v1902
  %3649 = vmatpush.bf16.msra.mxu0 %v1894
  %3650 = vmatpush.bf16.msra.mxu0 %v1886
  %3651 = vmatpush.bf16.msra.mxu0 %v1878
  %3652 = vmatpush.bf16.msra.mxu0 %v1870
  %3653 = vmatmul.bf16.gmra.mxu0 %v3605
  %v3654 = vpop.f32.mrf.mxu0
  %v3655 = vadd.f32 %v3642, %v3654
  %v3656 = vpop.f32.mrf.mxu0
  %3657 = vdwg.mxu0
  %3658 = vmatpush.bf16.msra.mxu0 %v1863
  %3659 = vmatpush.bf16.msra.mxu0 %v1855
  %3660 = vmatpush.bf16.msra.mxu0 %v1847
  %3661 = vmatpush.bf16.msra.mxu0 %v1839
  %3662 = vmatpush.bf16.msra.mxu0 %v1831
  %3663 = vmatpush.bf16.msra.mxu0 %v1823
  %3664 = vmatpush.bf16.msra.mxu0 %v1815
  %3665 = vmatpush.bf16.msra.mxu0 %v1807
  %3666 = vmatmul.bf16.gmra.mxu0 %v3604
  %v3667 = vpop.f32.mrf.mxu0
  %v3668 = vadd.f32 %v1407, %v3667
  %v3669 = vpop.f32.mrf.mxu0
  %3670 = vdwg.mxu0
  %3671 = vmatpush.bf16.msra.mxu0 %v1927
  %3672 = vmatpush.bf16.msra.mxu0 %v1919
  %3673 = vmatpush.bf16.msra.mxu0 %v1911
  %3674 = vmatpush.bf16.msra.mxu0 %v1903
  %3675 = vmatpush.bf16.msra.mxu0 %v1895
  %3676 = vmatpush.bf16.msra.mxu0 %v1887
  %3677 = vmatpush.bf16.msra.mxu0 %v1879
  %3678 = vmatpush.bf16.msra.mxu0 %v1871
  %3679 = vmatmul.bf16.gmra.mxu0 %v3605
  %v3680 = vpop.f32.mrf.mxu0
  %v3681 = vadd.f32 %v3668, %v3680
  %v3682 = vpop.f32.mrf.mxu0
  %3683 = vdwg.mxu0
  %3684 = vmatpush.bf16.msra.mxu0 %v1864
  %3685 = vmatpush.bf16.msra.mxu0 %v1856
  %3686 = vmatpush.bf16.msra.mxu0 %v1848
  %3687 = vmatpush.bf16.msra.mxu0 %v1840
  %3688 = vmatpush.bf16.msra.mxu0 %v1832
  %3689 = vmatpush.bf16.msra.mxu0 %v1824
  %3690 = vmatpush.bf16.msra.mxu0 %v1816
  %3691 = vmatpush.bf16.msra.mxu0 %v1808
  %3692 = vmatmul.bf16.gmra.mxu0 %v3604
  %v3693 = vpop.f32.mrf.mxu0
  %v3694 = vadd.f32 %v1408, %v3693
  %v3695 = vpop.f32.mrf.mxu0
  %3696 = vdwg.mxu0
  %3697 = vmatpush.bf16.msra.mxu0 %v1928
  %3698 = vmatpush.bf16.msra.mxu0 %v1920
  %3699 = vmatpush.bf16.msra.mxu0 %v1912
  %3700 = vmatpush.bf16.msra.mxu0 %v1904
  %3701 = vmatpush.bf16.msra.mxu0 %v1896
  %3702 = vmatpush.bf16.msra.mxu0 %v1888
  %3703 = vmatpush.bf16.msra.mxu0 %v1880
  %3704 = vmatpush.bf16.msra.mxu0 %v1872
  %3705 = vmatmul.bf16.gmra.mxu0 %v3605
  %v3706 = vpop.f32.mrf.mxu0
  %v3707 = vadd.f32 %v3694, %v3706
  %v3708 = vpop.f32.mrf.mxu0
  %3709 = vdwg.mxu0
  %3710 = vmatpush.bf16.msra.mxu0 %v1865
  %3711 = vmatpush.bf16.msra.mxu0 %v1857
  %3712 = vmatpush.bf16.msra.mxu0 %v1849
  %3713 = vmatpush.bf16.msra.mxu0 %v1841
  %3714 = vmatpush.bf16.msra.mxu0 %v1833
  %3715 = vmatpush.bf16.msra.mxu0 %v1825
  %3716 = vmatpush.bf16.msra.mxu0 %v1817
  %3717 = vmatpush.bf16.msra.mxu0 %v1809
  %3718 = vmatmul.bf16.gmra.mxu0 %v3604
  %v3719 = vpop.f32.mrf.mxu0
  %v3720 = vadd.f32 %v1409, %v3719
  %v3721 = vpop.f32.mrf.mxu0
  %3722 = vdwg.mxu0
  %3723 = vmatpush.bf16.msra.mxu0 %v1929
  %3724 = vmatpush.bf16.msra.mxu0 %v1921
  %3725 = vmatpush.bf16.msra.mxu0 %v1913
  %3726 = vmatpush.bf16.msra.mxu0 %v1905
  %3727 = vmatpush.bf16.msra.mxu0 %v1897
  %3728 = vmatpush.bf16.msra.mxu0 %v1889
  %3729 = vmatpush.bf16.msra.mxu0 %v1881
  %3730 = vmatpush.bf16.msra.mxu0 %v1873
  %3731 = vmatmul.bf16.gmra.mxu0 %v3605
  %v3732 = vpop.f32.mrf.mxu0
  %v3733 = vadd.f32 %v3720, %v3732
  %v3734 = vpop.f32.mrf.mxu0
  %3735 = vdwg.mxu0
  %3736 = vmatpush.bf16.msra.mxu0 %v1866
  %3737 = vmatpush.bf16.msra.mxu0 %v1858
  %3738 = vmatpush.bf16.msra.mxu0 %v1850
  %3739 = vmatpush.bf16.msra.mxu0 %v1842
  %3740 = vmatpush.bf16.msra.mxu0 %v1834
  %3741 = vmatpush.bf16.msra.mxu0 %v1826
  %3742 = vmatpush.bf16.msra.mxu0 %v1818
  %3743 = vmatpush.bf16.msra.mxu0 %v1810
  %3744 = vmatmul.bf16.gmra.mxu0 %v3604
  %v3745 = vpop.f32.mrf.mxu0
  %v3746 = vadd.f32 %v1410, %v3745
  %v3747 = vpop.f32.mrf.mxu0
  %3748 = vdwg.mxu0
  %3749 = vmatpush.bf16.msra.mxu0 %v1930
  %3750 = vmatpush.bf16.msra.mxu0 %v1922
  %3751 = vmatpush.bf16.msra.mxu0 %v1914
  %3752 = vmatpush.bf16.msra.mxu0 %v1906
  %3753 = vmatpush.bf16.msra.mxu0 %v1898
  %3754 = vmatpush.bf16.msra.mxu0 %v1890
  %3755 = vmatpush.bf16.msra.mxu0 %v1882
  %3756 = vmatpush.bf16.msra.mxu0 %v1874
  %3757 = vmatmul.bf16.gmra.mxu0 %v3605
  %v3758 = vpop.f32.mrf.mxu0
  %v3759 = vadd.f32 %v3746, %v3758
  %v3760 = vpop.f32.mrf.mxu0
  %3761 = vdwg.mxu0
  %3762 = vmatpush.bf16.msra.mxu0 %v1867
  %3763 = vmatpush.bf16.msra.mxu0 %v1859
  %3764 = vmatpush.bf16.msra.mxu0 %v1851
  %3765 = vmatpush.bf16.msra.mxu0 %v1843
  %3766 = vmatpush.bf16.msra.mxu0 %v1835
  %3767 = vmatpush.bf16.msra.mxu0 %v1827
  %3768 = vmatpush.bf16.msra.mxu0 %v1819
  %3769 = vmatpush.bf16.msra.mxu0 %v1811
  %3770 = vmatmul.bf16.gmra.mxu0 %v3604
  %v3771 = vpop.f32.mrf.mxu0
  %v3772 = vadd.f32 %v1411, %v3771
  %v3773 = vpop.f32.mrf.mxu0
  %3774 = vdwg.mxu0
  %3775 = vmatpush.bf16.msra.mxu0 %v1931
  %3776 = vmatpush.bf16.msra.mxu0 %v1923
  %3777 = vmatpush.bf16.msra.mxu0 %v1915
  %3778 = vmatpush.bf16.msra.mxu0 %v1907
  %3779 = vmatpush.bf16.msra.mxu0 %v1899
  %3780 = vmatpush.bf16.msra.mxu0 %v1891
  %3781 = vmatpush.bf16.msra.mxu0 %v1883
  %3782 = vmatpush.bf16.msra.mxu0 %v1875
  %3783 = vmatmul.bf16.gmra.mxu0 %v3605
  %v3784 = vpop.f32.mrf.mxu0
  %v3785 = vadd.f32 %v3772, %v3784
  %v3786 = vpop.f32.mrf.mxu0
  %3787 = vdwg.mxu0
  %3788 = vmatpush.bf16.msra.mxu0 %v1868
  %3789 = vmatpush.bf16.msra.mxu0 %v1860
  %3790 = vmatpush.bf16.msra.mxu0 %v1852
  %3791 = vmatpush.bf16.msra.mxu0 %v1844
  %3792 = vmatpush.bf16.msra.mxu0 %v1836
  %3793 = vmatpush.bf16.msra.mxu0 %v1828
  %3794 = vmatpush.bf16.msra.mxu0 %v1820
  %3795 = vmatpush.bf16.msra.mxu0 %v1812
  %3796 = vmatmul.bf16.gmra.mxu0 %v3604
  %v3797 = vpop.f32.mrf.mxu0
  %v3798 = vadd.f32 %v1412, %v3797
  %v3799 = vpop.f32.mrf.mxu0
  %3800 = vdwg.mxu0
  %3801 = vmatpush.bf16.msra.mxu0 %v1932
  %3802 = vmatpush.bf16.msra.mxu0 %v1924
  %3803 = vmatpush.bf16.msra.mxu0 %v1916
  %3804 = vmatpush.bf16.msra.mxu0 %v1908
  %3805 = vmatpush.bf16.msra.mxu0 %v1900
  %3806 = vmatpush.bf16.msra.mxu0 %v1892
  %3807 = vmatpush.bf16.msra.mxu0 %v1884
  %3808 = vmatpush.bf16.msra.mxu0 %v1876
  %3809 = vmatmul.bf16.gmra.mxu0 %v3605
  %v3810 = vpop.f32.mrf.mxu0
  %v3811 = vadd.f32 %v3798, %v3810
  %v3812 = vpop.f32.mrf.mxu0
  %3813 = vdwg.mxu0
  %3814 = vmatpush.bf16.msra.mxu0 %v2709
  %3815 = vmatpush.bf16.msra.mxu0 %v2701
  %3816 = vmatpush.bf16.msra.mxu0 %v2693
  %3817 = vmatpush.bf16.msra.mxu0 %v2685
  %3818 = vmatpush.bf16.msra.mxu0 %v2677
  %3819 = vmatpush.bf16.msra.mxu0 %v2669
  %3820 = vmatpush.bf16.msra.mxu0 %v2661
  %3821 = vmatpush.bf16.msra.mxu0 %v2653
  %3822 = vmatmul.bf16.gmra.mxu0 %v3251
  %v3823 = vpop.f32.mrf.mxu0
  %v3824 = vadd.f32 0.0, %v3823
  %v3825 = vpop.f32.mrf.mxu0
  %3826 = vdwg.mxu0
  %3827 = vmatpush.bf16.msra.mxu0 %v2773
  %3828 = vmatpush.bf16.msra.mxu0 %v2765
  %3829 = vmatpush.bf16.msra.mxu0 %v2757
  %3830 = vmatpush.bf16.msra.mxu0 %v2749
  %3831 = vmatpush.bf16.msra.mxu0 %v2741
  %3832 = vmatpush.bf16.msra.mxu0 %v2733
  %3833 = vmatpush.bf16.msra.mxu0 %v2725
  %3834 = vmatpush.bf16.msra.mxu0 %v2717
  %3835 = vmatmul.bf16.gmra.mxu0 %v3252
  %v3836 = vpop.f32.mrf.mxu0
  %v3837 = vadd.f32 %v3824, %v3836
  %v3838 = vpop.f32.mrf.mxu0
  %3839 = vdwg.mxu0
  %3840 = vmatpush.bf16.msra.mxu0 %v2710
  %3841 = vmatpush.bf16.msra.mxu0 %v2702
  %3842 = vmatpush.bf16.msra.mxu0 %v2694
  %3843 = vmatpush.bf16.msra.mxu0 %v2686
  %3844 = vmatpush.bf16.msra.mxu0 %v2678
  %3845 = vmatpush.bf16.msra.mxu0 %v2670
  %3846 = vmatpush.bf16.msra.mxu0 %v2662
  %3847 = vmatpush.bf16.msra.mxu0 %v2654
  %3848 = vmatmul.bf16.gmra.mxu0 %v3251
  %v3849 = vpop.f32.mrf.mxu0
  %v3850 = vadd.f32 0.0, %v3849
  %v3851 = vpop.f32.mrf.mxu0
  %3852 = vdwg.mxu0
  %3853 = vmatpush.bf16.msra.mxu0 %v2774
  %3854 = vmatpush.bf16.msra.mxu0 %v2766
  %3855 = vmatpush.bf16.msra.mxu0 %v2758
  %3856 = vmatpush.bf16.msra.mxu0 %v2750
  %3857 = vmatpush.bf16.msra.mxu0 %v2742
  %3858 = vmatpush.bf16.msra.mxu0 %v2734
  %3859 = vmatpush.bf16.msra.mxu0 %v2726
  %3860 = vmatpush.bf16.msra.mxu0 %v2718
  %3861 = vmatmul.bf16.gmra.mxu0 %v3252
  %v3862 = vpop.f32.mrf.mxu0
  %v3863 = vadd.f32 %v3850, %v3862
  %v3864 = vpop.f32.mrf.mxu0
  %3865 = vdwg.mxu0
  %3866 = vmatpush.bf16.msra.mxu0 %v2711
  %3867 = vmatpush.bf16.msra.mxu0 %v2703
  %3868 = vmatpush.bf16.msra.mxu0 %v2695
  %3869 = vmatpush.bf16.msra.mxu0 %v2687
  %3870 = vmatpush.bf16.msra.mxu0 %v2679
  %3871 = vmatpush.bf16.msra.mxu0 %v2671
  %3872 = vmatpush.bf16.msra.mxu0 %v2663
  %3873 = vmatpush.bf16.msra.mxu0 %v2655
  %3874 = vmatmul.bf16.gmra.mxu0 %v3251
  %v3875 = vpop.f32.mrf.mxu0
  %v3876 = vadd.f32 0.0, %v3875
  %v3877 = vpop.f32.mrf.mxu0
  %3878 = vdwg.mxu0
  %3879 = vmatpush.bf16.msra.mxu0 %v2775
  %3880 = vmatpush.bf16.msra.mxu0 %v2767
  %3881 = vmatpush.bf16.msra.mxu0 %v2759
  %3882 = vmatpush.bf16.msra.mxu0 %v2751
  %3883 = vmatpush.bf16.msra.mxu0 %v2743
  %3884 = vmatpush.bf16.msra.mxu0 %v2735
  %3885 = vmatpush.bf16.msra.mxu0 %v2727
  %3886 = vmatpush.bf16.msra.mxu0 %v2719
  %3887 = vmatmul.bf16.gmra.mxu0 %v3252
  %v3888 = vpop.f32.mrf.mxu0
  %v3889 = vadd.f32 %v3876, %v3888
  %v3890 = vpop.f32.mrf.mxu0
  %3891 = vdwg.mxu0
  %3892 = vmatpush.bf16.msra.mxu0 %v2712
  %3893 = vmatpush.bf16.msra.mxu0 %v2704
  %3894 = vmatpush.bf16.msra.mxu0 %v2696
  %3895 = vmatpush.bf16.msra.mxu0 %v2688
  %3896 = vmatpush.bf16.msra.mxu0 %v2680
  %3897 = vmatpush.bf16.msra.mxu0 %v2672
  %3898 = vmatpush.bf16.msra.mxu0 %v2664
  %3899 = vmatpush.bf16.msra.mxu0 %v2656
  %3900 = vmatmul.bf16.gmra.mxu0 %v3251
  %v3901 = vpop.f32.mrf.mxu0
  %v3902 = vadd.f32 0.0, %v3901
  %v3903 = vpop.f32.mrf.mxu0
  %3904 = vdwg.mxu0
  %3905 = vmatpush.bf16.msra.mxu0 %v2776
  %3906 = vmatpush.bf16.msra.mxu0 %v2768
  %3907 = vmatpush.bf16.msra.mxu0 %v2760
  %3908 = vmatpush.bf16.msra.mxu0 %v2752
  %3909 = vmatpush.bf16.msra.mxu0 %v2744
  %3910 = vmatpush.bf16.msra.mxu0 %v2736
  %3911 = vmatpush.bf16.msra.mxu0 %v2728
  %3912 = vmatpush.bf16.msra.mxu0 %v2720
  %3913 = vmatmul.bf16.gmra.mxu0 %v3252
  %v3914 = vpop.f32.mrf.mxu0
  %v3915 = vadd.f32 %v3902, %v3914
  %v3916 = vpop.f32.mrf.mxu0
  %3917 = vdwg.mxu0
  %3918 = vmatpush.bf16.msra.mxu0 %v2713
  %3919 = vmatpush.bf16.msra.mxu0 %v2705
  %3920 = vmatpush.bf16.msra.mxu0 %v2697
  %3921 = vmatpush.bf16.msra.mxu0 %v2689
  %3922 = vmatpush.bf16.msra.mxu0 %v2681
  %3923 = vmatpush.bf16.msra.mxu0 %v2673
  %3924 = vmatpush.bf16.msra.mxu0 %v2665
  %3925 = vmatpush.bf16.msra.mxu0 %v2657
  %3926 = vmatmul.bf16.gmra.mxu0 %v3251
  %v3927 = vpop.f32.mrf.mxu0
  %v3928 = vadd.f32 0.0, %v3927
  %v3929 = vpop.f32.mrf.mxu0
  %3930 = vdwg.mxu0
  %3931 = vmatpush.bf16.msra.mxu0 %v2777
  %3932 = vmatpush.bf16.msra.mxu0 %v2769
  %3933 = vmatpush.bf16.msra.mxu0 %v2761
  %3934 = vmatpush.bf16.msra.mxu0 %v2753
  %3935 = vmatpush.bf16.msra.mxu0 %v2745
  %3936 = vmatpush.bf16.msra.mxu0 %v2737
  %3937 = vmatpush.bf16.msra.mxu0 %v2729
  %3938 = vmatpush.bf16.msra.mxu0 %v2721
  %3939 = vmatmul.bf16.gmra.mxu0 %v3252
  %v3940 = vpop.f32.mrf.mxu0
  %v3941 = vadd.f32 %v3928, %v3940
  %v3942 = vpop.f32.mrf.mxu0
  %3943 = vdwg.mxu0
  %3944 = vmatpush.bf16.msra.mxu0 %v2714
  %3945 = vmatpush.bf16.msra.mxu0 %v2706
  %3946 = vmatpush.bf16.msra.mxu0 %v2698
  %3947 = vmatpush.bf16.msra.mxu0 %v2690
  %3948 = vmatpush.bf16.msra.mxu0 %v2682
  %3949 = vmatpush.bf16.msra.mxu0 %v2674
  %3950 = vmatpush.bf16.msra.mxu0 %v2666
  %3951 = vmatpush.bf16.msra.mxu0 %v2658
  %3952 = vmatmul.bf16.gmra.mxu0 %v3251
  %v3953 = vpop.f32.mrf.mxu0
  %v3954 = vadd.f32 0.0, %v3953
  %v3955 = vpop.f32.mrf.mxu0
  %3956 = vdwg.mxu0
  %3957 = vmatpush.bf16.msra.mxu0 %v2778
  %3958 = vmatpush.bf16.msra.mxu0 %v2770
  %3959 = vmatpush.bf16.msra.mxu0 %v2762
  %3960 = vmatpush.bf16.msra.mxu0 %v2754
  %3961 = vmatpush.bf16.msra.mxu0 %v2746
  %3962 = vmatpush.bf16.msra.mxu0 %v2738
  %3963 = vmatpush.bf16.msra.mxu0 %v2730
  %3964 = vmatpush.bf16.msra.mxu0 %v2722
  %3965 = vmatmul.bf16.gmra.mxu0 %v3252
  %v3966 = vpop.f32.mrf.mxu0
  %v3967 = vadd.f32 %v3954, %v3966
  %v3968 = vpop.f32.mrf.mxu0
  %3969 = vdwg.mxu0
  %3970 = vmatpush.bf16.msra.mxu0 %v2715
  %3971 = vmatpush.bf16.msra.mxu0 %v2707
  %3972 = vmatpush.bf16.msra.mxu0 %v2699
  %3973 = vmatpush.bf16.msra.mxu0 %v2691
  %3974 = vmatpush.bf16.msra.mxu0 %v2683
  %3975 = vmatpush.bf16.msra.mxu0 %v2675
  %3976 = vmatpush.bf16.msra.mxu0 %v2667
  %3977 = vmatpush.bf16.msra.mxu0 %v2659
  %3978 = vmatmul.bf16.gmra.mxu0 %v3251
  %v3979 = vpop.f32.mrf.mxu0
  %v3980 = vadd.f32 0.0, %v3979
  %v3981 = vpop.f32.mrf.mxu0
  %3982 = vdwg.mxu0
  %3983 = vmatpush.bf16.msra.mxu0 %v2779
  %3984 = vmatpush.bf16.msra.mxu0 %v2771
  %3985 = vmatpush.bf16.msra.mxu0 %v2763
  %3986 = vmatpush.bf16.msra.mxu0 %v2755
  %3987 = vmatpush.bf16.msra.mxu0 %v2747
  %3988 = vmatpush.bf16.msra.mxu0 %v2739
  %3989 = vmatpush.bf16.msra.mxu0 %v2731
  %3990 = vmatpush.bf16.msra.mxu0 %v2723
  %3991 = vmatmul.bf16.gmra.mxu0 %v3252
  %v3992 = vpop.f32.mrf.mxu0
  %v3993 = vadd.f32 %v3980, %v3992
  %v3994 = vpop.f32.mrf.mxu0
  %3995 = vdwg.mxu0
  %3996 = vmatpush.bf16.msra.mxu0 %v2716
  %3997 = vmatpush.bf16.msra.mxu0 %v2708
  %3998 = vmatpush.bf16.msra.mxu0 %v2700
  %3999 = vmatpush.bf16.msra.mxu0 %v2692
  %4000 = vmatpush.bf16.msra.mxu0 %v2684
  %4001 = vmatpush.bf16.msra.mxu0 %v2676
  %4002 = vmatpush.bf16.msra.mxu0 %v2668
  %4003 = vmatpush.bf16.msra.mxu0 %v2660
  %4004 = vmatmul.bf16.gmra.mxu0 %v3251
  %v4005 = vpop.f32.mrf.mxu0
  %v4006 = vadd.f32 0.0, %v4005
  %v4007 = vpop.f32.mrf.mxu0
  %4008 = vdwg.mxu0
  %4009 = vmatpush.bf16.msra.mxu0 %v2780
  %4010 = vmatpush.bf16.msra.mxu0 %v2772
  %4011 = vmatpush.bf16.msra.mxu0 %v2764
  %4012 = vmatpush.bf16.msra.mxu0 %v2756
  %4013 = vmatpush.bf16.msra.mxu0 %v2748
  %4014 = vmatpush.bf16.msra.mxu0 %v2740
  %4015 = vmatpush.bf16.msra.mxu0 %v2732
  %4016 = vmatpush.bf16.msra.mxu0 %v2724
  %4017 = vmatmul.bf16.gmra.mxu0 %v3252
  %v4018 = vpop.f32.mrf.mxu0
  %v4019 = vadd.f32 %v4006, %v4018
  %v4020 = vpop.f32.mrf.mxu0
  %4021 = vdwg.mxu0
  %v4022 = vadd.f32 %v3629, %v3837
  %v4023 = vadd.f32 %v3655, %v3863
  %v4024 = vadd.f32 %v3681, %v3889
  %v4025 = vadd.f32 %v3707, %v3915
  %v4026 = vadd.f32 %v3733, %v3941
  %v4027 = vadd.f32 %v3759, %v3967
  %v4028 = vadd.f32 %v3785, %v3993
  %v4029 = vadd.f32 %v3811, %v4019
  %v4030 = vxor.u32 %v4022, 2147483648
  %v4031 = vxor.u32 %v4023, 2147483648
  %v4032 = vmul.f32 %v4030, 1.442695
  %v4033 = vpow.pop %v4032
  %v4034 = vmul.f32 %v4031, 1.442695
  %v4035 = vpow.pop %v4034
  %v4036 = vadd.f32 %v4033, 1.0
  %v4037 = vadd.f32 %v4035, 1.0
  %v4038 = vrcp.pop %v4036
  %v4039 = vmul.f32 %v4036, %v4038
  %v4040 = vsub.f32 1.0, %v4039
  %v4041 = vmul.f32 %v4038, %v4040
  %v4042 = vadd.f32 %v4038, %v4041
  %vm4043 = vweird.f32 %v4036
  %vm4044 = vweird.f32 %v4038
  %vm4045 = vmor %vm4043, %vm4044
  %v4046 = vsel %vm4045, %v4038, %v4042
  %v4047 = vand.u32 2147483647, %v4036
  %vm4048 = vcmp.eq.f32.partialorder %v4047, 8.507059e+37
  %v4049 = vand.u32 %v4036, 2147483648
  %v4050 = vor.u32 1.1754944e-38, %v4049
  %v4051 = vsel %vm4048, %v4050, %v4046
  %v4052 = vmul.f32 1.0, %v4051
  %v4053 = vrcp.pop %v4037
  %v4054 = vmul.f32 %v4037, %v4053
  %v4055 = vsub.f32 1.0, %v4054
  %v4056 = vmul.f32 %v4053, %v4055
  %v4057 = vadd.f32 %v4053, %v4056
  %vm4058 = vweird.f32 %v4037
  %vm4059 = vweird.f32 %v4053
  %vm4060 = vmor %vm4058, %vm4059
  %v4061 = vsel %vm4060, %v4053, %v4057
  %v4062 = vand.u32 2147483647, %v4037
  %vm4063 = vcmp.eq.f32.partialorder %v4062, 8.507059e+37
  %v4064 = vand.u32 %v4037, 2147483648
  %v4065 = vor.u32 1.1754944e-38, %v4064
  %v4066 = vsel %vm4063, %v4065, %v4061
  %v4067 = vmul.f32 1.0, %v4066
  %v4068 = vxor.u32 %v4024, 2147483648
  %v4069 = vxor.u32 %v4025, 2147483648
  %v4070 = vmul.f32 %v4068, 1.442695
  %v4071 = vpow.pop %v4070
  %v4072 = vmul.f32 %v4069, 1.442695
  %v4073 = vpow.pop %v4072
  %v4074 = vadd.f32 %v4071, 1.0
  %v4075 = vadd.f32 %v4073, 1.0
  %v4076 = vrcp.pop %v4074
  %v4077 = vmul.f32 %v4074, %v4076
  %v4078 = vsub.f32 1.0, %v4077
  %v4079 = vmul.f32 %v4076, %v4078
  %v4080 = vadd.f32 %v4076, %v4079
  %vm4081 = vweird.f32 %v4074
  %vm4082 = vweird.f32 %v4076
  %vm4083 = vmor %vm4081, %vm4082
  %v4084 = vsel %vm4083, %v4076, %v4080
  %v4085 = vand.u32 2147483647, %v4074
  %vm4086 = vcmp.eq.f32.partialorder %v4085, 8.507059e+37
  %v4087 = vand.u32 %v4074, 2147483648
  %v4088 = vor.u32 1.1754944e-38, %v4087
  %v4089 = vsel %vm4086, %v4088, %v4084
  %v4090 = vmul.f32 1.0, %v4089
  %v4091 = vrcp.pop %v4075
  %v4092 = vmul.f32 %v4075, %v4091
  %v4093 = vsub.f32 1.0, %v4092
  %v4094 = vmul.f32 %v4091, %v4093
  %v4095 = vadd.f32 %v4091, %v4094
  %vm4096 = vweird.f32 %v4075
  %vm4097 = vweird.f32 %v4091
  %vm4098 = vmor %vm4096, %vm4097
  %v4099 = vsel %vm4098, %v4091, %v4095
  %v4100 = vand.u32 2147483647, %v4075
  %vm4101 = vcmp.eq.f32.partialorder %v4100, 8.507059e+37
  %v4102 = vand.u32 %v4075, 2147483648
  %v4103 = vor.u32 1.1754944e-38, %v4102
  %v4104 = vsel %vm4101, %v4103, %v4099
  %v4105 = vmul.f32 1.0, %v4104
  %v4106 = vtanh.pop %v4026
  %v4107 = vtanh.pop %v4027
  %v4108 = vxor.u32 %v4028, 2147483648
  %v4109 = vxor.u32 %v4029, 2147483648
  %v4110 = vmul.f32 %v4108, 1.442695
  %v4111 = vpow.pop %v4110
  %v4112 = vmul.f32 %v4109, 1.442695
  %v4113 = vpow.pop %v4112
  %v4114 = vadd.f32 %v4111, 1.0
  %v4115 = vadd.f32 %v4113, 1.0
  %v4116 = vrcp.pop %v4114
  %v4117 = vmul.f32 %v4114, %v4116
  %v4118 = vsub.f32 1.0, %v4117
  %v4119 = vmul.f32 %v4116, %v4118
  %v4120 = vadd.f32 %v4116, %v4119
  %vm4121 = vweird.f32 %v4114
  %vm4122 = vweird.f32 %v4116
  %vm4123 = vmor %vm4121, %vm4122
  %v4124 = vsel %vm4123, %v4116, %v4120
  %v4125 = vand.u32 2147483647, %v4114
  %vm4126 = vcmp.eq.f32.partialorder %v4125, 8.507059e+37
  %v4127 = vand.u32 %v4114, 2147483648
  %v4128 = vor.u32 1.1754944e-38, %v4127
  %v4129 = vsel %vm4126, %v4128, %v4124
  %v4130 = vmul.f32 1.0, %v4129
  %v4131 = vrcp.pop %v4115
  %v4132 = vmul.f32 %v4115, %v4131
  %v4133 = vsub.f32 1.0, %v4132
  %v4134 = vmul.f32 %v4131, %v4133
  %v4135 = vadd.f32 %v4131, %v4134
  %vm4136 = vweird.f32 %v4115
  %vm4137 = vweird.f32 %v4131
  %vm4138 = vmor %vm4136, %vm4137
  %v4139 = vsel %vm4138, %v4131, %v4135
  %v4140 = vand.u32 2147483647, %v4115
  %vm4141 = vcmp.eq.f32.partialorder %v4140, 8.507059e+37
  %v4142 = vand.u32 %v4115, 2147483648
  %v4143 = vor.u32 1.1754944e-38, %v4142
  %v4144 = vsel %vm4141, %v4143, %v4139
  %v4145 = vmul.f32 1.0, %v4144
  %v4146 = vmul.f32 %v4090, %v3245
  %v4147 = vmul.f32 %v4105, %v3246
  %v4148 = vmul.f32 %v4052, %v4106
  %v4149 = vmul.f32 %v4067, %v4107
  %v4150 = vadd.f32 %v4146, %v4148
  %v4151 = vadd.f32 %v4147, %v4149
  %v4152 = vtanh.pop %v4150
  %v4153 = vtanh.pop %v4151
  %v4154 = vmul.f32 %v4130, %v4152
  %v4155 = vmul.f32 %v4145, %v4153
  %v4156 = vpack.c.bf16 %v4154, %v4154
  %v4157 = vpack.c.bf16 %v4155, %v4155
  %s4158 = scalar_lea.vmem %s0, 128
  %v4159 = vld [vmem:[%s4158] sm:$0xff]
  %v4160 = vld [vmem:[%s4158 + $0x8] sm:$0xff]
  %v4161 = vld [vmem:[%s4158 + $0x10] sm:$0xff]
  %v4162 = vld [vmem:[%s4158 + $0x18] sm:$0xff]
  %v4163 = vld [vmem:[%s4158 + $0x20] sm:$0xff]
  %v4164 = vld [vmem:[%s4158 + $0x28] sm:$0xff]
  %v4165 = vld [vmem:[%s4158 + $0x30] sm:$0xff]
  %v4166 = vld [vmem:[%s4158 + $0x38] sm:$0xff]
  %4167 = vmatpush.bf16.msra.mxu0 %v860
  %4168 = vmatpush.bf16.msra.mxu0 %v852
  %4169 = vmatpush.bf16.msra.mxu0 %v844
  %4170 = vmatpush.bf16.msra.mxu0 %v836
  %4171 = vmatpush.bf16.msra.mxu0 %v828
  %4172 = vmatpush.bf16.msra.mxu0 %v820
  %4173 = vmatpush.bf16.msra.mxu0 %v812
  %4174 = vmatpush.bf16.msra.mxu0 %v804
  %4175 = vmatmul.bf16.gmra.mxu0 %v3604
  %v4176 = vpop.f32.mrf.mxu0
  %v4177 = vadd.f32 0.0, %v4176
  %v4178 = vpop.f32.mrf.mxu0
  %4179 = vdwg.mxu0
  %4180 = vmatpush.bf16.msra.mxu0 %v924
  %4181 = vmatpush.bf16.msra.mxu0 %v916
  %4182 = vmatpush.bf16.msra.mxu0 %v908
  %4183 = vmatpush.bf16.msra.mxu0 %v900
  %4184 = vmatpush.bf16.msra.mxu0 %v892
  %4185 = vmatpush.bf16.msra.mxu0 %v884
  %4186 = vmatpush.bf16.msra.mxu0 %v876
  %4187 = vmatpush.bf16.msra.mxu0 %v868
  %4188 = vmatmul.bf16.gmra.mxu0 %v3605
  %v4189 = vpop.f32.mrf.mxu0
  %v4190 = vadd.f32 %v4177, %v4189
  %v4191 = vpop.f32.mrf.mxu0
  %4192 = vdwg.mxu0
  %4193 = vmatpush.bf16.msra.mxu0 %v861
  %4194 = vmatpush.bf16.msra.mxu0 %v853
  %4195 = vmatpush.bf16.msra.mxu0 %v845
  %4196 = vmatpush.bf16.msra.mxu0 %v837
  %4197 = vmatpush.bf16.msra.mxu0 %v829
  %4198 = vmatpush.bf16.msra.mxu0 %v821
  %4199 = vmatpush.bf16.msra.mxu0 %v813
  %4200 = vmatpush.bf16.msra.mxu0 %v805
  %4201 = vmatmul.bf16.gmra.mxu0 %v3604
  %v4202 = vpop.f32.mrf.mxu0
  %v4203 = vadd.f32 0.0, %v4202
  %v4204 = vpop.f32.mrf.mxu0
  %4205 = vdwg.mxu0
  %4206 = vmatpush.bf16.msra.mxu0 %v925
  %4207 = vmatpush.bf16.msra.mxu0 %v917
  %4208 = vmatpush.bf16.msra.mxu0 %v909
  %4209 = vmatpush.bf16.msra.mxu0 %v901
  %4210 = vmatpush.bf16.msra.mxu0 %v893
  %4211 = vmatpush.bf16.msra.mxu0 %v885
  %4212 = vmatpush.bf16.msra.mxu0 %v877
  %4213 = vmatpush.bf16.msra.mxu0 %v869
  %4214 = vmatmul.bf16.gmra.mxu0 %v3605
  %v4215 = vpop.f32.mrf.mxu0
  %v4216 = vadd.f32 %v4203, %v4215
  %v4217 = vpop.f32.mrf.mxu0
  %4218 = vdwg.mxu0
  %4219 = vmatpush.bf16.msra.mxu0 %v862
  %4220 = vmatpush.bf16.msra.mxu0 %v854
  %4221 = vmatpush.bf16.msra.mxu0 %v846
  %4222 = vmatpush.bf16.msra.mxu0 %v838
  %4223 = vmatpush.bf16.msra.mxu0 %v830
  %4224 = vmatpush.bf16.msra.mxu0 %v822
  %4225 = vmatpush.bf16.msra.mxu0 %v814
  %4226 = vmatpush.bf16.msra.mxu0 %v806
  %4227 = vmatmul.bf16.gmra.mxu0 %v3604
  %v4228 = vpop.f32.mrf.mxu0
  %v4229 = vadd.f32 0.0, %v4228
  %v4230 = vpop.f32.mrf.mxu0
  %4231 = vdwg.mxu0
  %4232 = vmatpush.bf16.msra.mxu0 %v926
  %4233 = vmatpush.bf16.msra.mxu0 %v918
  %4234 = vmatpush.bf16.msra.mxu0 %v910
  %4235 = vmatpush.bf16.msra.mxu0 %v902
  %4236 = vmatpush.bf16.msra.mxu0 %v894
  %4237 = vmatpush.bf16.msra.mxu0 %v886
  %4238 = vmatpush.bf16.msra.mxu0 %v878
  %4239 = vmatpush.bf16.msra.mxu0 %v870
  %4240 = vmatmul.bf16.gmra.mxu0 %v3605
  %v4241 = vpop.f32.mrf.mxu0
  %v4242 = vadd.f32 %v4229, %v4241
  %v4243 = vpop.f32.mrf.mxu0
  %4244 = vdwg.mxu0
  %4245 = vmatpush.bf16.msra.mxu0 %v863
  %4246 = vmatpush.bf16.msra.mxu0 %v855
  %4247 = vmatpush.bf16.msra.mxu0 %v847
  %4248 = vmatpush.bf16.msra.mxu0 %v839
  %4249 = vmatpush.bf16.msra.mxu0 %v831
  %4250 = vmatpush.bf16.msra.mxu0 %v823
  %4251 = vmatpush.bf16.msra.mxu0 %v815
  %4252 = vmatpush.bf16.msra.mxu0 %v807
  %4253 = vmatmul.bf16.gmra.mxu0 %v3604
  %v4254 = vpop.f32.mrf.mxu0
  %v4255 = vadd.f32 0.0, %v4254
  %v4256 = vpop.f32.mrf.mxu0
  %4257 = vdwg.mxu0
  %4258 = vmatpush.bf16.msra.mxu0 %v927
  %4259 = vmatpush.bf16.msra.mxu0 %v919
  %4260 = vmatpush.bf16.msra.mxu0 %v911
  %4261 = vmatpush.bf16.msra.mxu0 %v903
  %4262 = vmatpush.bf16.msra.mxu0 %v895
  %4263 = vmatpush.bf16.msra.mxu0 %v887
  %4264 = vmatpush.bf16.msra.mxu0 %v879
  %4265 = vmatpush.bf16.msra.mxu0 %v871
  %4266 = vmatmul.bf16.gmra.mxu0 %v3605
  %v4267 = vpop.f32.mrf.mxu0
  %v4268 = vadd.f32 %v4255, %v4267
  %v4269 = vpop.f32.mrf.mxu0
  %4270 = vdwg.mxu0
  %4271 = vmatpush.bf16.msra.mxu0 %v864
  %4272 = vmatpush.bf16.msra.mxu0 %v856
  %4273 = vmatpush.bf16.msra.mxu0 %v848
  %4274 = vmatpush.bf16.msra.mxu0 %v840
  %4275 = vmatpush.bf16.msra.mxu0 %v832
  %4276 = vmatpush.bf16.msra.mxu0 %v824
  %4277 = vmatpush.bf16.msra.mxu0 %v816
  %4278 = vmatpush.bf16.msra.mxu0 %v808
  %4279 = vmatmul.bf16.gmra.mxu0 %v3604
  %v4280 = vpop.f32.mrf.mxu0
  %v4281 = vadd.f32 0.0, %v4280
  %v4282 = vpop.f32.mrf.mxu0
  %4283 = vdwg.mxu0
  %4284 = vmatpush.bf16.msra.mxu0 %v928
  %4285 = vmatpush.bf16.msra.mxu0 %v920
  %4286 = vmatpush.bf16.msra.mxu0 %v912
  %4287 = vmatpush.bf16.msra.mxu0 %v904
  %4288 = vmatpush.bf16.msra.mxu0 %v896
  %4289 = vmatpush.bf16.msra.mxu0 %v888
  %4290 = vmatpush.bf16.msra.mxu0 %v880
  %4291 = vmatpush.bf16.msra.mxu0 %v872
  %4292 = vmatmul.bf16.gmra.mxu0 %v3605
  %v4293 = vpop.f32.mrf.mxu0
  %v4294 = vadd.f32 %v4281, %v4293
  %v4295 = vpop.f32.mrf.mxu0
  %4296 = vdwg.mxu0
  %4297 = vmatpush.bf16.msra.mxu0 %v865
  %4298 = vmatpush.bf16.msra.mxu0 %v857
  %4299 = vmatpush.bf16.msra.mxu0 %v849
  %4300 = vmatpush.bf16.msra.mxu0 %v841
  %4301 = vmatpush.bf16.msra.mxu0 %v833
  %4302 = vmatpush.bf16.msra.mxu0 %v825
  %4303 = vmatpush.bf16.msra.mxu0 %v817
  %4304 = vmatpush.bf16.msra.mxu0 %v809
  %4305 = vmatmul.bf16.gmra.mxu0 %v3604
  %v4306 = vpop.f32.mrf.mxu0
  %v4307 = vadd.f32 0.0, %v4306
  %v4308 = vpop.f32.mrf.mxu0
  %4309 = vdwg.mxu0
  %4310 = vmatpush.bf16.msra.mxu0 %v929
  %4311 = vmatpush.bf16.msra.mxu0 %v921
  %4312 = vmatpush.bf16.msra.mxu0 %v913
  %4313 = vmatpush.bf16.msra.mxu0 %v905
  %4314 = vmatpush.bf16.msra.mxu0 %v897
  %4315 = vmatpush.bf16.msra.mxu0 %v889
  %4316 = vmatpush.bf16.msra.mxu0 %v881
  %4317 = vmatpush.bf16.msra.mxu0 %v873
  %4318 = vmatmul.bf16.gmra.mxu0 %v3605
  %v4319 = vpop.f32.mrf.mxu0
  %v4320 = vadd.f32 %v4307, %v4319
  %v4321 = vpop.f32.mrf.mxu0
  %4322 = vdwg.mxu0
  %4323 = vmatpush.bf16.msra.mxu0 %v866
  %4324 = vmatpush.bf16.msra.mxu0 %v858
  %4325 = vmatpush.bf16.msra.mxu0 %v850
  %4326 = vmatpush.bf16.msra.mxu0 %v842
  %4327 = vmatpush.bf16.msra.mxu0 %v834
  %4328 = vmatpush.bf16.msra.mxu0 %v826
  %4329 = vmatpush.bf16.msra.mxu0 %v818
  %4330 = vmatpush.bf16.msra.mxu0 %v810
  %4331 = vmatmul.bf16.gmra.mxu0 %v3604
  %v4332 = vpop.f32.mrf.mxu0
  %v4333 = vadd.f32 0.0, %v4332
  %v4334 = vpop.f32.mrf.mxu0
  %4335 = vdwg.mxu0
  %4336 = vmatpush.bf16.msra.mxu0 %v930
  %4337 = vmatpush.bf16.msra.mxu0 %v922
  %4338 = vmatpush.bf16.msra.mxu0 %v914
  %4339 = vmatpush.bf16.msra.mxu0 %v906
  %4340 = vmatpush.bf16.msra.mxu0 %v898
  %4341 = vmatpush.bf16.msra.mxu0 %v890
  %4342 = vmatpush.bf16.msra.mxu0 %v882
  %4343 = vmatpush.bf16.msra.mxu0 %v874
  %4344 = vmatmul.bf16.gmra.mxu0 %v3605
  %v4345 = vpop.f32.mrf.mxu0
  %v4346 = vadd.f32 %v4333, %v4345
  %v4347 = vpop.f32.mrf.mxu0
  %4348 = vdwg.mxu0
  %4349 = vmatpush.bf16.msra.mxu0 %v867
  %4350 = vmatpush.bf16.msra.mxu0 %v859
  %4351 = vmatpush.bf16.msra.mxu0 %v851
  %4352 = vmatpush.bf16.msra.mxu0 %v843
  %4353 = vmatpush.bf16.msra.mxu0 %v835
  %4354 = vmatpush.bf16.msra.mxu0 %v827
  %4355 = vmatpush.bf16.msra.mxu0 %v819
  %4356 = vmatpush.bf16.msra.mxu0 %v811
  %4357 = vmatmul.bf16.gmra.mxu0 %v3604
  %v4358 = vpop.f32.mrf.mxu0
  %v4359 = vadd.f32 0.0, %v4358
  %v4360 = vpop.f32.mrf.mxu0
  %4361 = vdwg.mxu0
  %4362 = vmatpush.bf16.msra.mxu0 %v931
  %4363 = vmatpush.bf16.msra.mxu0 %v923
  %4364 = vmatpush.bf16.msra.mxu0 %v915
  %4365 = vmatpush.bf16.msra.mxu0 %v907
  %4366 = vmatpush.bf16.msra.mxu0 %v899
  %4367 = vmatpush.bf16.msra.mxu0 %v891
  %4368 = vmatpush.bf16.msra.mxu0 %v883
  %4369 = vmatpush.bf16.msra.mxu0 %v875
  %4370 = vmatmul.bf16.gmra.mxu0 %v3605
  %v4371 = vpop.f32.mrf.mxu0
  %v4372 = vadd.f32 %v4359, %v4371
  %v4373 = vpop.f32.mrf.mxu0
  %4374 = vdwg.mxu0
  %v4375 = vadd.f32 %v4159, %v4190
  %v4376 = vadd.f32 %v4160, %v4216
  %v4377 = vadd.f32 %v4161, %v4242
  %v4378 = vadd.f32 %v4162, %v4268
  %v4379 = vadd.f32 %v4163, %v4294
  %v4380 = vadd.f32 %v4164, %v4320
  %v4381 = vadd.f32 %v4165, %v4346
  %v4382 = vadd.f32 %v4166, %v4372
  %v4383 = vxor.u32 %v4375, 2147483648
  %v4384 = vxor.u32 %v4376, 2147483648
  %v4385 = vmul.f32 %v4383, 1.442695
  %v4386 = vpow.pop %v4385
  %v4387 = vmul.f32 %v4384, 1.442695
  %v4388 = vpow.pop %v4387
  %v4389 = vadd.f32 %v4386, 1.0
  %v4390 = vadd.f32 %v4388, 1.0
  %v4391 = vrcp.pop %v4389
  %v4392 = vmul.f32 %v4389, %v4391
  %v4393 = vsub.f32 1.0, %v4392
  %v4394 = vmul.f32 %v4391, %v4393
  %v4395 = vadd.f32 %v4391, %v4394
  %vm4396 = vweird.f32 %v4389
  %vm4397 = vweird.f32 %v4391
  %vm4398 = vmor %vm4396, %vm4397
  %v4399 = vsel %vm4398, %v4391, %v4395
  %v4400 = vand.u32 2147483647, %v4389
  %vm4401 = vcmp.eq.f32.partialorder %v4400, 8.507059e+37
  %v4402 = vand.u32 %v4389, 2147483648
  %v4403 = vor.u32 1.1754944e-38, %v4402
  %v4404 = vsel %vm4401, %v4403, %v4399
  %v4405 = vmul.f32 1.0, %v4404
  %v4406 = vrcp.pop %v4390
  %v4407 = vmul.f32 %v4390, %v4406
  %v4408 = vsub.f32 1.0, %v4407
  %v4409 = vmul.f32 %v4406, %v4408
  %v4410 = vadd.f32 %v4406, %v4409
  %vm4411 = vweird.f32 %v4390
  %vm4412 = vweird.f32 %v4406
  %vm4413 = vmor %vm4411, %vm4412
  %v4414 = vsel %vm4413, %v4406, %v4410
  %v4415 = vand.u32 2147483647, %v4390
  %vm4416 = vcmp.eq.f32.partialorder %v4415, 8.507059e+37
  %v4417 = vand.u32 %v4390, 2147483648
  %v4418 = vor.u32 1.1754944e-38, %v4417
  %v4419 = vsel %vm4416, %v4418, %v4414
  %v4420 = vmul.f32 1.0, %v4419
  %v4421 = vxor.u32 %v4377, 2147483648
  %v4422 = vxor.u32 %v4378, 2147483648
  %v4423 = vmul.f32 %v4421, 1.442695
  %v4424 = vpow.pop %v4423
  %v4425 = vmul.f32 %v4422, 1.442695
  %v4426 = vpow.pop %v4425
  %v4427 = vadd.f32 %v4424, 1.0
  %v4428 = vadd.f32 %v4426, 1.0
  %v4429 = vrcp.pop %v4427
  %v4430 = vmul.f32 %v4427, %v4429
  %v4431 = vsub.f32 1.0, %v4430
  %v4432 = vmul.f32 %v4429, %v4431
  %v4433 = vadd.f32 %v4429, %v4432
  %vm4434 = vweird.f32 %v4427
  %vm4435 = vweird.f32 %v4429
  %vm4436 = vmor %vm4434, %vm4435
  %v4437 = vsel %vm4436, %v4429, %v4433
  %v4438 = vand.u32 2147483647, %v4427
  %vm4439 = vcmp.eq.f32.partialorder %v4438, 8.507059e+37
  %v4440 = vand.u32 %v4427, 2147483648
  %v4441 = vor.u32 1.1754944e-38, %v4440
  %v4442 = vsel %vm4439, %v4441, %v4437
  %v4443 = vmul.f32 1.0, %v4442
  %v4444 = vrcp.pop %v4428
  %v4445 = vmul.f32 %v4428, %v4444
  %v4446 = vsub.f32 1.0, %v4445
  %v4447 = vmul.f32 %v4444, %v4446
  %v4448 = vadd.f32 %v4444, %v4447
  %vm4449 = vweird.f32 %v4428
  %vm4450 = vweird.f32 %v4444
  %vm4451 = vmor %vm4449, %vm4450
  %v4452 = vsel %vm4451, %v4444, %v4448
  %v4453 = vand.u32 2147483647, %v4428
  %vm4454 = vcmp.eq.f32.partialorder %v4453, 8.507059e+37
  %v4455 = vand.u32 %v4428, 2147483648
  %v4456 = vor.u32 1.1754944e-38, %v4455
  %v4457 = vsel %vm4454, %v4456, %v4452
  %v4458 = vmul.f32 1.0, %v4457
  %v4459 = vtanh.pop %v4379
  %v4460 = vtanh.pop %v4380
  %v4461 = vxor.u32 %v4381, 2147483648
  %v4462 = vxor.u32 %v4382, 2147483648
  %v4463 = vmul.f32 %v4461, 1.442695
  %v4464 = vpow.pop %v4463
  %v4465 = vmul.f32 %v4462, 1.442695
  %v4466 = vpow.pop %v4465
  %v4467 = vadd.f32 %v4464, 1.0
  %v4468 = vadd.f32 %v4466, 1.0
  %v4469 = vrcp.pop %v4467
  %v4470 = vmul.f32 %v4467, %v4469
  %v4471 = vsub.f32 1.0, %v4470
  %v4472 = vmul.f32 %v4469, %v4471
  %v4473 = vadd.f32 %v4469, %v4472
  %vm4474 = vweird.f32 %v4467
  %vm4475 = vweird.f32 %v4469
  %vm4476 = vmor %vm4474, %vm4475
  %v4477 = vsel %vm4476, %v4469, %v4473
  %v4478 = vand.u32 2147483647, %v4467
  %vm4479 = vcmp.eq.f32.partialorder %v4478, 8.507059e+37
  %v4480 = vand.u32 %v4467, 2147483648
  %v4481 = vor.u32 1.1754944e-38, %v4480
  %v4482 = vsel %vm4479, %v4481, %v4477
  %v4483 = vmul.f32 1.0, %v4482
  %v4484 = vrcp.pop %v4468
  %v4485 = vmul.f32 %v4468, %v4484
  %v4486 = vsub.f32 1.0, %v4485
  %v4487 = vmul.f32 %v4484, %v4486
  %v4488 = vadd.f32 %v4484, %v4487
  %vm4489 = vweird.f32 %v4468
  %vm4490 = vweird.f32 %v4484
  %vm4491 = vmor %vm4489, %vm4490
  %v4492 = vsel %vm4491, %v4484, %v4488
  %v4493 = vand.u32 2147483647, %v4468
  %vm4494 = vcmp.eq.f32.partialorder %v4493, 8.507059e+37
  %v4495 = vand.u32 %v4468, 2147483648
  %v4496 = vor.u32 1.1754944e-38, %v4495
  %v4497 = vsel %vm4494, %v4496, %v4492
  %v4498 = vmul.f32 1.0, %v4497
  %v4499 = vmul.f32 %v4443, %v3598
  %v4500 = vmul.f32 %v4458, %v3599
  %v4501 = vmul.f32 %v4405, %v4459
  %v4502 = vmul.f32 %v4420, %v4460
  %v4503 = vadd.f32 %v4499, %v4501
  %v4504 = vadd.f32 %v4500, %v4502
  %v4505 = vtanh.pop %v4503
  %v4506 = vtanh.pop %v4504
  %v4507 = vmul.f32 %v4483, %v4505
  %v4508 = vmul.f32 %v4498, %v4506
  %v4509 = vpack.c.bf16 %v4507, %v4507
  %v4510 = vpack.c.bf16 %v4508, %v4508
  %4511 = vmatpush.bf16.msra.mxu0 %v1861
  %4512 = vmatpush.bf16.msra.mxu0 %v1853
  %4513 = vmatpush.bf16.msra.mxu0 %v1845
  %4514 = vmatpush.bf16.msra.mxu0 %v1837
  %4515 = vmatpush.bf16.msra.mxu0 %v1829
  %4516 = vmatpush.bf16.msra.mxu0 %v1821
  %4517 = vmatpush.bf16.msra.mxu0 %v1813
  %4518 = vmatpush.bf16.msra.mxu0 %v1805
  %4519 = vmatmul.bf16.gmra.mxu0 %v4509
  %v4520 = vpop.f32.mrf.mxu0
  %v4521 = vadd.f32 %v1405, %v4520
  %v4522 = vpop.f32.mrf.mxu0
  %4523 = vdwg.mxu0
  %4524 = vmatpush.bf16.msra.mxu0 %v1925
  %4525 = vmatpush.bf16.msra.mxu0 %v1917
  %4526 = vmatpush.bf16.msra.mxu0 %v1909
  %4527 = vmatpush.bf16.msra.mxu0 %v1901
  %4528 = vmatpush.bf16.msra.mxu0 %v1893
  %4529 = vmatpush.bf16.msra.mxu0 %v1885
  %4530 = vmatpush.bf16.msra.mxu0 %v1877
  %4531 = vmatpush.bf16.msra.mxu0 %v1869
  %4532 = vmatmul.bf16.gmra.mxu0 %v4510
  %v4533 = vpop.f32.mrf.mxu0
  %v4534 = vadd.f32 %v4521, %v4533
  %v4535 = vpop.f32.mrf.mxu0
  %4536 = vdwg.mxu0
  %4537 = vmatpush.bf16.msra.mxu0 %v1862
  %4538 = vmatpush.bf16.msra.mxu0 %v1854
  %4539 = vmatpush.bf16.msra.mxu0 %v1846
  %4540 = vmatpush.bf16.msra.mxu0 %v1838
  %4541 = vmatpush.bf16.msra.mxu0 %v1830
  %4542 = vmatpush.bf16.msra.mxu0 %v1822
  %4543 = vmatpush.bf16.msra.mxu0 %v1814
  %4544 = vmatpush.bf16.msra.mxu0 %v1806
  %4545 = vmatmul.bf16.gmra.mxu0 %v4509
  %v4546 = vpop.f32.mrf.mxu0
  %v4547 = vadd.f32 %v1406, %v4546
  %v4548 = vpop.f32.mrf.mxu0
  %4549 = vdwg.mxu0
  %4550 = vmatpush.bf16.msra.mxu0 %v1926
  %4551 = vmatpush.bf16.msra.mxu0 %v1918
  %4552 = vmatpush.bf16.msra.mxu0 %v1910
  %4553 = vmatpush.bf16.msra.mxu0 %v1902
  %4554 = vmatpush.bf16.msra.mxu0 %v1894
  %4555 = vmatpush.bf16.msra.mxu0 %v1886
  %4556 = vmatpush.bf16.msra.mxu0 %v1878
  %4557 = vmatpush.bf16.msra.mxu0 %v1870
  %4558 = vmatmul.bf16.gmra.mxu0 %v4510
  %v4559 = vpop.f32.mrf.mxu0
  %v4560 = vadd.f32 %v4547, %v4559
  %v4561 = vpop.f32.mrf.mxu0
  %4562 = vdwg.mxu0
  %4563 = vmatpush.bf16.msra.mxu0 %v1863
  %4564 = vmatpush.bf16.msra.mxu0 %v1855
  %4565 = vmatpush.bf16.msra.mxu0 %v1847
  %4566 = vmatpush.bf16.msra.mxu0 %v1839
  %4567 = vmatpush.bf16.msra.mxu0 %v1831
  %4568 = vmatpush.bf16.msra.mxu0 %v1823
  %4569 = vmatpush.bf16.msra.mxu0 %v1815
  %4570 = vmatpush.bf16.msra.mxu0 %v1807
  %4571 = vmatmul.bf16.gmra.mxu0 %v4509
  %v4572 = vpop.f32.mrf.mxu0
  %v4573 = vadd.f32 %v1407, %v4572
  %v4574 = vpop.f32.mrf.mxu0
  %4575 = vdwg.mxu0
  %4576 = vmatpush.bf16.msra.mxu0 %v1927
  %4577 = vmatpush.bf16.msra.mxu0 %v1919
  %4578 = vmatpush.bf16.msra.mxu0 %v1911
  %4579 = vmatpush.bf16.msra.mxu0 %v1903
  %4580 = vmatpush.bf16.msra.mxu0 %v1895
  %4581 = vmatpush.bf16.msra.mxu0 %v1887
  %4582 = vmatpush.bf16.msra.mxu0 %v1879
  %4583 = vmatpush.bf16.msra.mxu0 %v1871
  %4584 = vmatmul.bf16.gmra.mxu0 %v4510
  %v4585 = vpop.f32.mrf.mxu0
  %v4586 = vadd.f32 %v4573, %v4585
  %v4587 = vpop.f32.mrf.mxu0
  %4588 = vdwg.mxu0
  %4589 = vmatpush.bf16.msra.mxu0 %v1864
  %4590 = vmatpush.bf16.msra.mxu0 %v1856
  %4591 = vmatpush.bf16.msra.mxu0 %v1848
  %4592 = vmatpush.bf16.msra.mxu0 %v1840
  %4593 = vmatpush.bf16.msra.mxu0 %v1832
  %4594 = vmatpush.bf16.msra.mxu0 %v1824
  %4595 = vmatpush.bf16.msra.mxu0 %v1816
  %4596 = vmatpush.bf16.msra.mxu0 %v1808
  %4597 = vmatmul.bf16.gmra.mxu0 %v4509
  %v4598 = vpop.f32.mrf.mxu0
  %v4599 = vadd.f32 %v1408, %v4598
  %v4600 = vpop.f32.mrf.mxu0
  %4601 = vdwg.mxu0
  %4602 = vmatpush.bf16.msra.mxu0 %v1928
  %4603 = vmatpush.bf16.msra.mxu0 %v1920
  %4604 = vmatpush.bf16.msra.mxu0 %v1912
  %4605 = vmatpush.bf16.msra.mxu0 %v1904
  %4606 = vmatpush.bf16.msra.mxu0 %v1896
  %4607 = vmatpush.bf16.msra.mxu0 %v1888
  %4608 = vmatpush.bf16.msra.mxu0 %v1880
  %4609 = vmatpush.bf16.msra.mxu0 %v1872
  %4610 = vmatmul.bf16.gmra.mxu0 %v4510
  %v4611 = vpop.f32.mrf.mxu0
  %v4612 = vadd.f32 %v4599, %v4611
  %v4613 = vpop.f32.mrf.mxu0
  %4614 = vdwg.mxu0
  %4615 = vmatpush.bf16.msra.mxu0 %v1865
  %4616 = vmatpush.bf16.msra.mxu0 %v1857
  %4617 = vmatpush.bf16.msra.mxu0 %v1849
  %4618 = vmatpush.bf16.msra.mxu0 %v1841
  %4619 = vmatpush.bf16.msra.mxu0 %v1833
  %4620 = vmatpush.bf16.msra.mxu0 %v1825
  %4621 = vmatpush.bf16.msra.mxu0 %v1817
  %4622 = vmatpush.bf16.msra.mxu0 %v1809
  %4623 = vmatmul.bf16.gmra.mxu0 %v4509
  %v4624 = vpop.f32.mrf.mxu0
  %v4625 = vadd.f32 %v1409, %v4624
  %v4626 = vpop.f32.mrf.mxu0
  %4627 = vdwg.mxu0
  %4628 = vmatpush.bf16.msra.mxu0 %v1929
  %4629 = vmatpush.bf16.msra.mxu0 %v1921
  %4630 = vmatpush.bf16.msra.mxu0 %v1913
  %4631 = vmatpush.bf16.msra.mxu0 %v1905
  %4632 = vmatpush.bf16.msra.mxu0 %v1897
  %4633 = vmatpush.bf16.msra.mxu0 %v1889
  %4634 = vmatpush.bf16.msra.mxu0 %v1881
  %4635 = vmatpush.bf16.msra.mxu0 %v1873
  %4636 = vmatmul.bf16.gmra.mxu0 %v4510
  %v4637 = vpop.f32.mrf.mxu0
  %v4638 = vadd.f32 %v4625, %v4637
  %v4639 = vpop.f32.mrf.mxu0
  %4640 = vdwg.mxu0
  %4641 = vmatpush.bf16.msra.mxu0 %v1866
  %4642 = vmatpush.bf16.msra.mxu0 %v1858
  %4643 = vmatpush.bf16.msra.mxu0 %v1850
  %4644 = vmatpush.bf16.msra.mxu0 %v1842
  %4645 = vmatpush.bf16.msra.mxu0 %v1834
  %4646 = vmatpush.bf16.msra.mxu0 %v1826
  %4647 = vmatpush.bf16.msra.mxu0 %v1818
  %4648 = vmatpush.bf16.msra.mxu0 %v1810
  %4649 = vmatmul.bf16.gmra.mxu0 %v4509
  %v4650 = vpop.f32.mrf.mxu0
  %v4651 = vadd.f32 %v1410, %v4650
  %v4652 = vpop.f32.mrf.mxu0
  %4653 = vdwg.mxu0
  %4654 = vmatpush.bf16.msra.mxu0 %v1930
  %4655 = vmatpush.bf16.msra.mxu0 %v1922
  %4656 = vmatpush.bf16.msra.mxu0 %v1914
  %4657 = vmatpush.bf16.msra.mxu0 %v1906
  %4658 = vmatpush.bf16.msra.mxu0 %v1898
  %4659 = vmatpush.bf16.msra.mxu0 %v1890
  %4660 = vmatpush.bf16.msra.mxu0 %v1882
  %4661 = vmatpush.bf16.msra.mxu0 %v1874
  %4662 = vmatmul.bf16.gmra.mxu0 %v4510
  %v4663 = vpop.f32.mrf.mxu0
  %v4664 = vadd.f32 %v4651, %v4663
  %v4665 = vpop.f32.mrf.mxu0
  %4666 = vdwg.mxu0
  %4667 = vmatpush.bf16.msra.mxu0 %v1867
  %4668 = vmatpush.bf16.msra.mxu0 %v1859
  %4669 = vmatpush.bf16.msra.mxu0 %v1851
  %4670 = vmatpush.bf16.msra.mxu0 %v1843
  %4671 = vmatpush.bf16.msra.mxu0 %v1835
  %4672 = vmatpush.bf16.msra.mxu0 %v1827
  %4673 = vmatpush.bf16.msra.mxu0 %v1819
  %4674 = vmatpush.bf16.msra.mxu0 %v1811
  %4675 = vmatmul.bf16.gmra.mxu0 %v4509
  %v4676 = vpop.f32.mrf.mxu0
  %v4677 = vadd.f32 %v1411, %v4676
  %v4678 = vpop.f32.mrf.mxu0
  %4679 = vdwg.mxu0
  %4680 = vmatpush.bf16.msra.mxu0 %v1931
  %4681 = vmatpush.bf16.msra.mxu0 %v1923
  %4682 = vmatpush.bf16.msra.mxu0 %v1915
  %4683 = vmatpush.bf16.msra.mxu0 %v1907
  %4684 = vmatpush.bf16.msra.mxu0 %v1899
  %4685 = vmatpush.bf16.msra.mxu0 %v1891
  %4686 = vmatpush.bf16.msra.mxu0 %v1883
  %4687 = vmatpush.bf16.msra.mxu0 %v1875
  %4688 = vmatmul.bf16.gmra.mxu0 %v4510
  %v4689 = vpop.f32.mrf.mxu0
  %v4690 = vadd.f32 %v4677, %v4689
  %v4691 = vpop.f32.mrf.mxu0
  %4692 = vdwg.mxu0
  %4693 = vmatpush.bf16.msra.mxu0 %v1868
  %4694 = vmatpush.bf16.msra.mxu0 %v1860
  %4695 = vmatpush.bf16.msra.mxu0 %v1852
  %4696 = vmatpush.bf16.msra.mxu0 %v1844
  %4697 = vmatpush.bf16.msra.mxu0 %v1836
  %4698 = vmatpush.bf16.msra.mxu0 %v1828
  %4699 = vmatpush.bf16.msra.mxu0 %v1820
  %4700 = vmatpush.bf16.msra.mxu0 %v1812
  %4701 = vmatmul.bf16.gmra.mxu0 %v4509
  %v4702 = vpop.f32.mrf.mxu0
  %v4703 = vadd.f32 %v1412, %v4702
  %v4704 = vpop.f32.mrf.mxu0
  %4705 = vdwg.mxu0
  %4706 = vmatpush.bf16.msra.mxu0 %v1932
  %4707 = vmatpush.bf16.msra.mxu0 %v1924
  %4708 = vmatpush.bf16.msra.mxu0 %v1916
  %4709 = vmatpush.bf16.msra.mxu0 %v1908
  %4710 = vmatpush.bf16.msra.mxu0 %v1900
  %4711 = vmatpush.bf16.msra.mxu0 %v1892
  %4712 = vmatpush.bf16.msra.mxu0 %v1884
  %4713 = vmatpush.bf16.msra.mxu0 %v1876
  %4714 = vmatmul.bf16.gmra.mxu0 %v4510
  %v4715 = vpop.f32.mrf.mxu0
  %v4716 = vadd.f32 %v4703, %v4715
  %v4717 = vpop.f32.mrf.mxu0
  %4718 = vdwg.mxu0
  %4719 = vmatpush.bf16.msra.mxu0 %v2709
  %4720 = vmatpush.bf16.msra.mxu0 %v2701
  %4721 = vmatpush.bf16.msra.mxu0 %v2693
  %4722 = vmatpush.bf16.msra.mxu0 %v2685
  %4723 = vmatpush.bf16.msra.mxu0 %v2677
  %4724 = vmatpush.bf16.msra.mxu0 %v2669
  %4725 = vmatpush.bf16.msra.mxu0 %v2661
  %4726 = vmatpush.bf16.msra.mxu0 %v2653
  %4727 = vmatmul.bf16.gmra.mxu0 %v4156
  %v4728 = vpop.f32.mrf.mxu0
  %v4729 = vadd.f32 0.0, %v4728
  %v4730 = vpop.f32.mrf.mxu0
  %4731 = vdwg.mxu0
  %4732 = vmatpush.bf16.msra.mxu0 %v2773
  %4733 = vmatpush.bf16.msra.mxu0 %v2765
  %4734 = vmatpush.bf16.msra.mxu0 %v2757
  %4735 = vmatpush.bf16.msra.mxu0 %v2749
  %4736 = vmatpush.bf16.msra.mxu0 %v2741
  %4737 = vmatpush.bf16.msra.mxu0 %v2733
  %4738 = vmatpush.bf16.msra.mxu0 %v2725
  %4739 = vmatpush.bf16.msra.mxu0 %v2717
  %4740 = vmatmul.bf16.gmra.mxu0 %v4157
  %v4741 = vpop.f32.mrf.mxu0
  %v4742 = vadd.f32 %v4729, %v4741
  %v4743 = vpop.f32.mrf.mxu0
  %4744 = vdwg.mxu0
  %4745 = vmatpush.bf16.msra.mxu0 %v2710
  %4746 = vmatpush.bf16.msra.mxu0 %v2702
  %4747 = vmatpush.bf16.msra.mxu0 %v2694
  %4748 = vmatpush.bf16.msra.mxu0 %v2686
  %4749 = vmatpush.bf16.msra.mxu0 %v2678
  %4750 = vmatpush.bf16.msra.mxu0 %v2670
  %4751 = vmatpush.bf16.msra.mxu0 %v2662
  %4752 = vmatpush.bf16.msra.mxu0 %v2654
  %4753 = vmatmul.bf16.gmra.mxu0 %v4156
  %v4754 = vpop.f32.mrf.mxu0
  %v4755 = vadd.f32 0.0, %v4754
  %v4756 = vpop.f32.mrf.mxu0
  %4757 = vdwg.mxu0
  %4758 = vmatpush.bf16.msra.mxu0 %v2774
  %4759 = vmatpush.bf16.msra.mxu0 %v2766
  %4760 = vmatpush.bf16.msra.mxu0 %v2758
  %4761 = vmatpush.bf16.msra.mxu0 %v2750
  %4762 = vmatpush.bf16.msra.mxu0 %v2742
  %4763 = vmatpush.bf16.msra.mxu0 %v2734
  %4764 = vmatpush.bf16.msra.mxu0 %v2726
  %4765 = vmatpush.bf16.msra.mxu0 %v2718
  %4766 = vmatmul.bf16.gmra.mxu0 %v4157
  %v4767 = vpop.f32.mrf.mxu0
  %v4768 = vadd.f32 %v4755, %v4767
  %v4769 = vpop.f32.mrf.mxu0
  %4770 = vdwg.mxu0
  %4771 = vmatpush.bf16.msra.mxu0 %v2711
  %4772 = vmatpush.bf16.msra.mxu0 %v2703
  %4773 = vmatpush.bf16.msra.mxu0 %v2695
  %4774 = vmatpush.bf16.msra.mxu0 %v2687
  %4775 = vmatpush.bf16.msra.mxu0 %v2679
  %4776 = vmatpush.bf16.msra.mxu0 %v2671
  %4777 = vmatpush.bf16.msra.mxu0 %v2663
  %4778 = vmatpush.bf16.msra.mxu0 %v2655
  %4779 = vmatmul.bf16.gmra.mxu0 %v4156
  %v4780 = vpop.f32.mrf.mxu0
  %v4781 = vadd.f32 0.0, %v4780
  %v4782 = vpop.f32.mrf.mxu0
  %4783 = vdwg.mxu0
  %4784 = vmatpush.bf16.msra.mxu0 %v2775
  %4785 = vmatpush.bf16.msra.mxu0 %v2767
  %4786 = vmatpush.bf16.msra.mxu0 %v2759
  %4787 = vmatpush.bf16.msra.mxu0 %v2751
  %4788 = vmatpush.bf16.msra.mxu0 %v2743
  %4789 = vmatpush.bf16.msra.mxu0 %v2735
  %4790 = vmatpush.bf16.msra.mxu0 %v2727
  %4791 = vmatpush.bf16.msra.mxu0 %v2719
  %4792 = vmatmul.bf16.gmra.mxu0 %v4157
  %v4793 = vpop.f32.mrf.mxu0
  %v4794 = vadd.f32 %v4781, %v4793
  %v4795 = vpop.f32.mrf.mxu0
  %4796 = vdwg.mxu0
  %4797 = vmatpush.bf16.msra.mxu0 %v2712
  %4798 = vmatpush.bf16.msra.mxu0 %v2704
  %4799 = vmatpush.bf16.msra.mxu0 %v2696
  %4800 = vmatpush.bf16.msra.mxu0 %v2688
  %4801 = vmatpush.bf16.msra.mxu0 %v2680
  %4802 = vmatpush.bf16.msra.mxu0 %v2672
  %4803 = vmatpush.bf16.msra.mxu0 %v2664
  %4804 = vmatpush.bf16.msra.mxu0 %v2656
  %4805 = vmatmul.bf16.gmra.mxu0 %v4156
  %v4806 = vpop.f32.mrf.mxu0
  %v4807 = vadd.f32 0.0, %v4806
  %v4808 = vpop.f32.mrf.mxu0
  %4809 = vdwg.mxu0
  %4810 = vmatpush.bf16.msra.mxu0 %v2776
  %4811 = vmatpush.bf16.msra.mxu0 %v2768
  %4812 = vmatpush.bf16.msra.mxu0 %v2760
  %4813 = vmatpush.bf16.msra.mxu0 %v2752
  %4814 = vmatpush.bf16.msra.mxu0 %v2744
  %4815 = vmatpush.bf16.msra.mxu0 %v2736
  %4816 = vmatpush.bf16.msra.mxu0 %v2728
  %4817 = vmatpush.bf16.msra.mxu0 %v2720
  %4818 = vmatmul.bf16.gmra.mxu0 %v4157
  %v4819 = vpop.f32.mrf.mxu0
  %v4820 = vadd.f32 %v4807, %v4819
  %v4821 = vpop.f32.mrf.mxu0
  %4822 = vdwg.mxu0
  %4823 = vmatpush.bf16.msra.mxu0 %v2713
  %4824 = vmatpush.bf16.msra.mxu0 %v2705
  %4825 = vmatpush.bf16.msra.mxu0 %v2697
  %4826 = vmatpush.bf16.msra.mxu0 %v2689
  %4827 = vmatpush.bf16.msra.mxu0 %v2681
  %4828 = vmatpush.bf16.msra.mxu0 %v2673
  %4829 = vmatpush.bf16.msra.mxu0 %v2665
  %4830 = vmatpush.bf16.msra.mxu0 %v2657
  %4831 = vmatmul.bf16.gmra.mxu0 %v4156
  %v4832 = vpop.f32.mrf.mxu0
  %v4833 = vadd.f32 0.0, %v4832
  %v4834 = vpop.f32.mrf.mxu0
  %4835 = vdwg.mxu0
  %4836 = vmatpush.bf16.msra.mxu0 %v2777
  %4837 = vmatpush.bf16.msra.mxu0 %v2769
  %4838 = vmatpush.bf16.msra.mxu0 %v2761
  %4839 = vmatpush.bf16.msra.mxu0 %v2753
  %4840 = vmatpush.bf16.msra.mxu0 %v2745
  %4841 = vmatpush.bf16.msra.mxu0 %v2737
  %4842 = vmatpush.bf16.msra.mxu0 %v2729
  %4843 = vmatpush.bf16.msra.mxu0 %v2721
  %4844 = vmatmul.bf16.gmra.mxu0 %v4157
  %v4845 = vpop.f32.mrf.mxu0
  %v4846 = vadd.f32 %v4833, %v4845
  %v4847 = vpop.f32.mrf.mxu0
  %4848 = vdwg.mxu0
  %4849 = vmatpush.bf16.msra.mxu0 %v2714
  %4850 = vmatpush.bf16.msra.mxu0 %v2706
  %4851 = vmatpush.bf16.msra.mxu0 %v2698
  %4852 = vmatpush.bf16.msra.mxu0 %v2690
  %4853 = vmatpush.bf16.msra.mxu0 %v2682
  %4854 = vmatpush.bf16.msra.mxu0 %v2674
  %4855 = vmatpush.bf16.msra.mxu0 %v2666
  %4856 = vmatpush.bf16.msra.mxu0 %v2658
  %4857 = vmatmul.bf16.gmra.mxu0 %v4156
  %v4858 = vpop.f32.mrf.mxu0
  %v4859 = vadd.f32 0.0, %v4858
  %v4860 = vpop.f32.mrf.mxu0
  %4861 = vdwg.mxu0
  %4862 = vmatpush.bf16.msra.mxu0 %v2778
  %4863 = vmatpush.bf16.msra.mxu0 %v2770
  %4864 = vmatpush.bf16.msra.mxu0 %v2762
  %4865 = vmatpush.bf16.msra.mxu0 %v2754
  %4866 = vmatpush.bf16.msra.mxu0 %v2746
  %4867 = vmatpush.bf16.msra.mxu0 %v2738
  %4868 = vmatpush.bf16.msra.mxu0 %v2730
  %4869 = vmatpush.bf16.msra.mxu0 %v2722
  %4870 = vmatmul.bf16.gmra.mxu0 %v4157
  %v4871 = vpop.f32.mrf.mxu0
  %v4872 = vadd.f32 %v4859, %v4871
  %v4873 = vpop.f32.mrf.mxu0
  %4874 = vdwg.mxu0
  %4875 = vmatpush.bf16.msra.mxu0 %v2715
  %4876 = vmatpush.bf16.msra.mxu0 %v2707
  %4877 = vmatpush.bf16.msra.mxu0 %v2699
  %4878 = vmatpush.bf16.msra.mxu0 %v2691
  %4879 = vmatpush.bf16.msra.mxu0 %v2683
  %4880 = vmatpush.bf16.msra.mxu0 %v2675
  %4881 = vmatpush.bf16.msra.mxu0 %v2667
  %4882 = vmatpush.bf16.msra.mxu0 %v2659
  %4883 = vmatmul.bf16.gmra.mxu0 %v4156
  %v4884 = vpop.f32.mrf.mxu0
  %v4885 = vadd.f32 0.0, %v4884
  %v4886 = vpop.f32.mrf.mxu0
  %4887 = vdwg.mxu0
  %4888 = vmatpush.bf16.msra.mxu0 %v2779
  %4889 = vmatpush.bf16.msra.mxu0 %v2771
  %4890 = vmatpush.bf16.msra.mxu0 %v2763
  %4891 = vmatpush.bf16.msra.mxu0 %v2755
  %4892 = vmatpush.bf16.msra.mxu0 %v2747
  %4893 = vmatpush.bf16.msra.mxu0 %v2739
  %4894 = vmatpush.bf16.msra.mxu0 %v2731
  %4895 = vmatpush.bf16.msra.mxu0 %v2723
  %4896 = vmatmul.bf16.gmra.mxu0 %v4157
  %v4897 = vpop.f32.mrf.mxu0
  %v4898 = vadd.f32 %v4885, %v4897
  %v4899 = vpop.f32.mrf.mxu0
  %4900 = vdwg.mxu0
  %4901 = vmatpush.bf16.msra.mxu0 %v2716
  %4902 = vmatpush.bf16.msra.mxu0 %v2708
  %4903 = vmatpush.bf16.msra.mxu0 %v2700
  %4904 = vmatpush.bf16.msra.mxu0 %v2692
  %4905 = vmatpush.bf16.msra.mxu0 %v2684
  %4906 = vmatpush.bf16.msra.mxu0 %v2676
  %4907 = vmatpush.bf16.msra.mxu0 %v2668
  %4908 = vmatpush.bf16.msra.mxu0 %v2660
  %4909 = vmatmul.bf16.gmra.mxu0 %v4156
  %v4910 = vpop.f32.mrf.mxu0
  %v4911 = vadd.f32 0.0, %v4910
  %v4912 = vpop.f32.mrf.mxu0
  %4913 = vdwg.mxu0
  %4914 = vmatpush.bf16.msra.mxu0 %v2780
  %4915 = vmatpush.bf16.msra.mxu0 %v2772
  %4916 = vmatpush.bf16.msra.mxu0 %v2764
  %4917 = vmatpush.bf16.msra.mxu0 %v2756
  %4918 = vmatpush.bf16.msra.mxu0 %v2748
  %4919 = vmatpush.bf16.msra.mxu0 %v2740
  %4920 = vmatpush.bf16.msra.mxu0 %v2732
  %4921 = vmatpush.bf16.msra.mxu0 %v2724
  %4922 = vmatmul.bf16.gmra.mxu0 %v4157
  %v4923 = vpop.f32.mrf.mxu0
  %v4924 = vadd.f32 %v4911, %v4923
  %v4925 = vpop.f32.mrf.mxu0
  %4926 = vdwg.mxu0
  %v4927 = vadd.f32 %v4534, %v4742
  %v4928 = vadd.f32 %v4560, %v4768
  %v4929 = vadd.f32 %v4586, %v4794
  %v4930 = vadd.f32 %v4612, %v4820
  %v4931 = vadd.f32 %v4638, %v4846
  %v4932 = vadd.f32 %v4664, %v4872
  %v4933 = vadd.f32 %v4690, %v4898
  %v4934 = vadd.f32 %v4716, %v4924
  %v4935 = vxor.u32 %v4927, 2147483648
  %v4936 = vxor.u32 %v4928, 2147483648
  %v4937 = vmul.f32 %v4935, 1.442695
  %v4938 = vpow.pop %v4937
  %v4939 = vmul.f32 %v4936, 1.442695
  %v4940 = vpow.pop %v4939
  %v4941 = vadd.f32 %v4938, 1.0
  %v4942 = vadd.f32 %v4940, 1.0
  %v4943 = vrcp.pop %v4941
  %v4944 = vmul.f32 %v4941, %v4943
  %v4945 = vsub.f32 1.0, %v4944
  %v4946 = vmul.f32 %v4943, %v4945
  %v4947 = vadd.f32 %v4943, %v4946
  %vm4948 = vweird.f32 %v4941
  %vm4949 = vweird.f32 %v4943
  %vm4950 = vmor %vm4948, %vm4949
  %v4951 = vsel %vm4950, %v4943, %v4947
  %v4952 = vand.u32 2147483647, %v4941
  %vm4953 = vcmp.eq.f32.partialorder %v4952, 8.507059e+37
  %v4954 = vand.u32 %v4941, 2147483648
  %v4955 = vor.u32 1.1754944e-38, %v4954
  %v4956 = vsel %vm4953, %v4955, %v4951
  %v4957 = vmul.f32 1.0, %v4956
  %v4958 = vrcp.pop %v4942
  %v4959 = vmul.f32 %v4942, %v4958
  %v4960 = vsub.f32 1.0, %v4959
  %v4961 = vmul.f32 %v4958, %v4960
  %v4962 = vadd.f32 %v4958, %v4961
  %vm4963 = vweird.f32 %v4942
  %vm4964 = vweird.f32 %v4958
  %vm4965 = vmor %vm4963, %vm4964
  %v4966 = vsel %vm4965, %v4958, %v4962
  %v4967 = vand.u32 2147483647, %v4942
  %vm4968 = vcmp.eq.f32.partialorder %v4967, 8.507059e+37
  %v4969 = vand.u32 %v4942, 2147483648
  %v4970 = vor.u32 1.1754944e-38, %v4969
  %v4971 = vsel %vm4968, %v4970, %v4966
  %v4972 = vmul.f32 1.0, %v4971
  %v4973 = vxor.u32 %v4929, 2147483648
  %v4974 = vxor.u32 %v4930, 2147483648
  %v4975 = vmul.f32 %v4973, 1.442695
  %v4976 = vpow.pop %v4975
  %v4977 = vmul.f32 %v4974, 1.442695
  %v4978 = vpow.pop %v4977
  %v4979 = vadd.f32 %v4976, 1.0
  %v4980 = vadd.f32 %v4978, 1.0
  %v4981 = vrcp.pop %v4979
  %v4982 = vmul.f32 %v4979, %v4981
  %v4983 = vsub.f32 1.0, %v4982
  %v4984 = vmul.f32 %v4981, %v4983
  %v4985 = vadd.f32 %v4981, %v4984
  %vm4986 = vweird.f32 %v4979
  %vm4987 = vweird.f32 %v4981
  %vm4988 = vmor %vm4986, %vm4987
  %v4989 = vsel %vm4988, %v4981, %v4985
  %v4990 = vand.u32 2147483647, %v4979
  %vm4991 = vcmp.eq.f32.partialorder %v4990, 8.507059e+37
  %v4992 = vand.u32 %v4979, 2147483648
  %v4993 = vor.u32 1.1754944e-38, %v4992
  %v4994 = vsel %vm4991, %v4993, %v4989
  %v4995 = vmul.f32 1.0, %v4994
  %v4996 = vrcp.pop %v4980
  %v4997 = vmul.f32 %v4980, %v4996
  %v4998 = vsub.f32 1.0, %v4997
  %v4999 = vmul.f32 %v4996, %v4998
  %v5000 = vadd.f32 %v4996, %v4999
  %vm5001 = vweird.f32 %v4980
  %vm5002 = vweird.f32 %v4996
  %vm5003 = vmor %vm5001, %vm5002
  %v5004 = vsel %vm5003, %v4996, %v5000
  %v5005 = vand.u32 2147483647, %v4980
  %vm5006 = vcmp.eq.f32.partialorder %v5005, 8.507059e+37
  %v5007 = vand.u32 %v4980, 2147483648
  %v5008 = vor.u32 1.1754944e-38, %v5007
  %v5009 = vsel %vm5006, %v5008, %v5004
  %v5010 = vmul.f32 1.0, %v5009
  %v5011 = vtanh.pop %v4931
  %v5012 = vtanh.pop %v4932
  %v5013 = vxor.u32 %v4933, 2147483648
  %v5014 = vxor.u32 %v4934, 2147483648
  %v5015 = vmul.f32 %v5013, 1.442695
  %v5016 = vpow.pop %v5015
  %v5017 = vmul.f32 %v5014, 1.442695
  %v5018 = vpow.pop %v5017
  %v5019 = vadd.f32 %v5016, 1.0
  %v5020 = vadd.f32 %v5018, 1.0
  %v5021 = vrcp.pop %v5019
  %v5022 = vmul.f32 %v5019, %v5021
  %v5023 = vsub.f32 1.0, %v5022
  %v5024 = vmul.f32 %v5021, %v5023
  %v5025 = vadd.f32 %v5021, %v5024
  %vm5026 = vweird.f32 %v5019
  %vm5027 = vweird.f32 %v5021
  %vm5028 = vmor %vm5026, %vm5027
  %v5029 = vsel %vm5028, %v5021, %v5025
  %v5030 = vand.u32 2147483647, %v5019
  %vm5031 = vcmp.eq.f32.partialorder %v5030, 8.507059e+37
  %v5032 = vand.u32 %v5019, 2147483648
  %v5033 = vor.u32 1.1754944e-38, %v5032
  %v5034 = vsel %vm5031, %v5033, %v5029
  %v5035 = vmul.f32 1.0, %v5034
  %v5036 = vrcp.pop %v5020
  %v5037 = vmul.f32 %v5020, %v5036
  %v5038 = vsub.f32 1.0, %v5037
  %v5039 = vmul.f32 %v5036, %v5038
  %v5040 = vadd.f32 %v5036, %v5039
  %vm5041 = vweird.f32 %v5020
  %vm5042 = vweird.f32 %v5036
  %vm5043 = vmor %vm5041, %vm5042
  %v5044 = vsel %vm5043, %v5036, %v5040
  %v5045 = vand.u32 2147483647, %v5020
  %vm5046 = vcmp.eq.f32.partialorder %v5045, 8.507059e+37
  %v5047 = vand.u32 %v5020, 2147483648
  %v5048 = vor.u32 1.1754944e-38, %v5047
  %v5049 = vsel %vm5046, %v5048, %v5044
  %v5050 = vmul.f32 1.0, %v5049
  %v5051 = vmul.f32 %v4995, %v4150
  %v5052 = vmul.f32 %v5010, %v4151
  %v5053 = vmul.f32 %v4957, %v5011
  %v5054 = vmul.f32 %v4972, %v5012
  %v5055 = vadd.f32 %v5051, %v5053
  %v5056 = vadd.f32 %v5052, %v5054
  %v5057 = vtanh.pop %v5055
  %v5058 = vtanh.pop %v5056
  %v5059 = vmul.f32 %v5035, %v5057
  %v5060 = vmul.f32 %v5050, %v5058
  %v5061 = vpack.c.bf16 %v5059, %v5059
  %v5062 = vpack.c.bf16 %v5060, %v5060
  %s5063 = scalar_lea.vmem %s0, 192
  %v5064 = vld [vmem:[%s5063] sm:$0xff]
  %v5065 = vld [vmem:[%s5063 + $0x8] sm:$0xff]
  %v5066 = vld [vmem:[%s5063 + $0x10] sm:$0xff]
  %v5067 = vld [vmem:[%s5063 + $0x18] sm:$0xff]
  %v5068 = vld [vmem:[%s5063 + $0x20] sm:$0xff]
  %v5069 = vld [vmem:[%s5063 + $0x28] sm:$0xff]
  %v5070 = vld [vmem:[%s5063 + $0x30] sm:$0xff]
  %v5071 = vld [vmem:[%s5063 + $0x38] sm:$0xff]
  %5072 = vmatpush.bf16.msra.mxu0 %v860
  %5073 = vmatpush.bf16.msra.mxu0 %v852
  %5074 = vmatpush.bf16.msra.mxu0 %v844
  %5075 = vmatpush.bf16.msra.mxu0 %v836
  %5076 = vmatpush.bf16.msra.mxu0 %v828
  %5077 = vmatpush.bf16.msra.mxu0 %v820
  %5078 = vmatpush.bf16.msra.mxu0 %v812
  %5079 = vmatpush.bf16.msra.mxu0 %v804
  %5080 = vmatmul.bf16.gmra.mxu0 %v4509
  %v5081 = vpop.f32.mrf.mxu0
  %v5082 = vadd.f32 0.0, %v5081
  %v5083 = vpop.f32.mrf.mxu0
  %5084 = vdwg.mxu0
  %5085 = vmatpush.bf16.msra.mxu0 %v924
  %5086 = vmatpush.bf16.msra.mxu0 %v916
  %5087 = vmatpush.bf16.msra.mxu0 %v908
  %5088 = vmatpush.bf16.msra.mxu0 %v900
  %5089 = vmatpush.bf16.msra.mxu0 %v892
  %5090 = vmatpush.bf16.msra.mxu0 %v884
  %5091 = vmatpush.bf16.msra.mxu0 %v876
  %5092 = vmatpush.bf16.msra.mxu0 %v868
  %5093 = vmatmul.bf16.gmra.mxu0 %v4510
  %v5094 = vpop.f32.mrf.mxu0
  %v5095 = vadd.f32 %v5082, %v5094
  %v5096 = vpop.f32.mrf.mxu0
  %5097 = vdwg.mxu0
  %5098 = vmatpush.bf16.msra.mxu0 %v861
  %5099 = vmatpush.bf16.msra.mxu0 %v853
  %5100 = vmatpush.bf16.msra.mxu0 %v845
  %5101 = vmatpush.bf16.msra.mxu0 %v837
  %5102 = vmatpush.bf16.msra.mxu0 %v829
  %5103 = vmatpush.bf16.msra.mxu0 %v821
  %5104 = vmatpush.bf16.msra.mxu0 %v813
  %5105 = vmatpush.bf16.msra.mxu0 %v805
  %5106 = vmatmul.bf16.gmra.mxu0 %v4509
  %v5107 = vpop.f32.mrf.mxu0
  %v5108 = vadd.f32 0.0, %v5107
  %v5109 = vpop.f32.mrf.mxu0
  %5110 = vdwg.mxu0
  %5111 = vmatpush.bf16.msra.mxu0 %v925
  %5112 = vmatpush.bf16.msra.mxu0 %v917
  %5113 = vmatpush.bf16.msra.mxu0 %v909
  %5114 = vmatpush.bf16.msra.mxu0 %v901
  %5115 = vmatpush.bf16.msra.mxu0 %v893
  %5116 = vmatpush.bf16.msra.mxu0 %v885
  %5117 = vmatpush.bf16.msra.mxu0 %v877
  %5118 = vmatpush.bf16.msra.mxu0 %v869
  %5119 = vmatmul.bf16.gmra.mxu0 %v4510
  %v5120 = vpop.f32.mrf.mxu0
  %v5121 = vadd.f32 %v5108, %v5120
  %v5122 = vpop.f32.mrf.mxu0
  %5123 = vdwg.mxu0
  %5124 = vmatpush.bf16.msra.mxu0 %v862
  %5125 = vmatpush.bf16.msra.mxu0 %v854
  %5126 = vmatpush.bf16.msra.mxu0 %v846
  %5127 = vmatpush.bf16.msra.mxu0 %v838
  %5128 = vmatpush.bf16.msra.mxu0 %v830
  %5129 = vmatpush.bf16.msra.mxu0 %v822
  %5130 = vmatpush.bf16.msra.mxu0 %v814
  %5131 = vmatpush.bf16.msra.mxu0 %v806
  %5132 = vmatmul.bf16.gmra.mxu0 %v4509
  %v5133 = vpop.f32.mrf.mxu0
  %v5134 = vadd.f32 0.0, %v5133
  %v5135 = vpop.f32.mrf.mxu0
  %5136 = vdwg.mxu0
  %5137 = vmatpush.bf16.msra.mxu0 %v926
  %5138 = vmatpush.bf16.msra.mxu0 %v918
  %5139 = vmatpush.bf16.msra.mxu0 %v910
  %5140 = vmatpush.bf16.msra.mxu0 %v902
  %5141 = vmatpush.bf16.msra.mxu0 %v894
  %5142 = vmatpush.bf16.msra.mxu0 %v886
  %5143 = vmatpush.bf16.msra.mxu0 %v878
  %5144 = vmatpush.bf16.msra.mxu0 %v870
  %5145 = vmatmul.bf16.gmra.mxu0 %v4510
  %v5146 = vpop.f32.mrf.mxu0
  %v5147 = vadd.f32 %v5134, %v5146
  %v5148 = vpop.f32.mrf.mxu0
  %5149 = vdwg.mxu0
  %5150 = vmatpush.bf16.msra.mxu0 %v863
  %5151 = vmatpush.bf16.msra.mxu0 %v855
  %5152 = vmatpush.bf16.msra.mxu0 %v847
  %5153 = vmatpush.bf16.msra.mxu0 %v839
  %5154 = vmatpush.bf16.msra.mxu0 %v831
  %5155 = vmatpush.bf16.msra.mxu0 %v823
  %5156 = vmatpush.bf16.msra.mxu0 %v815
  %5157 = vmatpush.bf16.msra.mxu0 %v807
  %5158 = vmatmul.bf16.gmra.mxu0 %v4509
  %v5159 = vpop.f32.mrf.mxu0
  %v5160 = vadd.f32 0.0, %v5159
  %v5161 = vpop.f32.mrf.mxu0
  %5162 = vdwg.mxu0
  %5163 = vmatpush.bf16.msra.mxu0 %v927
  %5164 = vmatpush.bf16.msra.mxu0 %v919
  %5165 = vmatpush.bf16.msra.mxu0 %v911
  %5166 = vmatpush.bf16.msra.mxu0 %v903
  %5167 = vmatpush.bf16.msra.mxu0 %v895
  %5168 = vmatpush.bf16.msra.mxu0 %v887
  %5169 = vmatpush.bf16.msra.mxu0 %v879
  %5170 = vmatpush.bf16.msra.mxu0 %v871
  %5171 = vmatmul.bf16.gmra.mxu0 %v4510
  %v5172 = vpop.f32.mrf.mxu0
  %v5173 = vadd.f32 %v5160, %v5172
  %v5174 = vpop.f32.mrf.mxu0
  %5175 = vdwg.mxu0
  %5176 = vmatpush.bf16.msra.mxu0 %v864
  %5177 = vmatpush.bf16.msra.mxu0 %v856
  %5178 = vmatpush.bf16.msra.mxu0 %v848
  %5179 = vmatpush.bf16.msra.mxu0 %v840
  %5180 = vmatpush.bf16.msra.mxu0 %v832
  %5181 = vmatpush.bf16.msra.mxu0 %v824
  %5182 = vmatpush.bf16.msra.mxu0 %v816
  %5183 = vmatpush.bf16.msra.mxu0 %v808
  %5184 = vmatmul.bf16.gmra.mxu0 %v4509
  %v5185 = vpop.f32.mrf.mxu0
  %v5186 = vadd.f32 0.0, %v5185
  %v5187 = vpop.f32.mrf.mxu0
  %5188 = vdwg.mxu0
  %5189 = vmatpush.bf16.msra.mxu0 %v928
  %5190 = vmatpush.bf16.msra.mxu0 %v920
  %5191 = vmatpush.bf16.msra.mxu0 %v912
  %5192 = vmatpush.bf16.msra.mxu0 %v904
  %5193 = vmatpush.bf16.msra.mxu0 %v896
  %5194 = vmatpush.bf16.msra.mxu0 %v888
  %5195 = vmatpush.bf16.msra.mxu0 %v880
  %5196 = vmatpush.bf16.msra.mxu0 %v872
  %5197 = vmatmul.bf16.gmra.mxu0 %v4510
  %v5198 = vpop.f32.mrf.mxu0
  %v5199 = vadd.f32 %v5186, %v5198
  %v5200 = vpop.f32.mrf.mxu0
  %5201 = vdwg.mxu0
  %5202 = vmatpush.bf16.msra.mxu0 %v865
  %5203 = vmatpush.bf16.msra.mxu0 %v857
  %5204 = vmatpush.bf16.msra.mxu0 %v849
  %5205 = vmatpush.bf16.msra.mxu0 %v841
  %5206 = vmatpush.bf16.msra.mxu0 %v833
  %5207 = vmatpush.bf16.msra.mxu0 %v825
  %5208 = vmatpush.bf16.msra.mxu0 %v817
  %5209 = vmatpush.bf16.msra.mxu0 %v809
  %5210 = vmatmul.bf16.gmra.mxu0 %v4509
  %v5211 = vpop.f32.mrf.mxu0
  %v5212 = vadd.f32 0.0, %v5211
  %v5213 = vpop.f32.mrf.mxu0
  %5214 = vdwg.mxu0
  %5215 = vmatpush.bf16.msra.mxu0 %v929
  %5216 = vmatpush.bf16.msra.mxu0 %v921
  %5217 = vmatpush.bf16.msra.mxu0 %v913
  %5218 = vmatpush.bf16.msra.mxu0 %v905
  %5219 = vmatpush.bf16.msra.mxu0 %v897
  %5220 = vmatpush.bf16.msra.mxu0 %v889
  %5221 = vmatpush.bf16.msra.mxu0 %v881
  %5222 = vmatpush.bf16.msra.mxu0 %v873
  %5223 = vmatmul.bf16.gmra.mxu0 %v4510
  %v5224 = vpop.f32.mrf.mxu0
  %v5225 = vadd.f32 %v5212, %v5224
  %v5226 = vpop.f32.mrf.mxu0
  %5227 = vdwg.mxu0
  %5228 = vmatpush.bf16.msra.mxu0 %v866
  %5229 = vmatpush.bf16.msra.mxu0 %v858
  %5230 = vmatpush.bf16.msra.mxu0 %v850
  %5231 = vmatpush.bf16.msra.mxu0 %v842
  %5232 = vmatpush.bf16.msra.mxu0 %v834
  %5233 = vmatpush.bf16.msra.mxu0 %v826
  %5234 = vmatpush.bf16.msra.mxu0 %v818
  %5235 = vmatpush.bf16.msra.mxu0 %v810
  %5236 = vmatmul.bf16.gmra.mxu0 %v4509
  %v5237 = vpop.f32.mrf.mxu0
  %v5238 = vadd.f32 0.0, %v5237
  %v5239 = vpop.f32.mrf.mxu0
  %5240 = vdwg.mxu0
  %5241 = vmatpush.bf16.msra.mxu0 %v930
  %5242 = vmatpush.bf16.msra.mxu0 %v922
  %5243 = vmatpush.bf16.msra.mxu0 %v914
  %5244 = vmatpush.bf16.msra.mxu0 %v906
  %5245 = vmatpush.bf16.msra.mxu0 %v898
  %5246 = vmatpush.bf16.msra.mxu0 %v890
  %5247 = vmatpush.bf16.msra.mxu0 %v882
  %5248 = vmatpush.bf16.msra.mxu0 %v874
  %5249 = vmatmul.bf16.gmra.mxu0 %v4510
  %v5250 = vpop.f32.mrf.mxu0
  %v5251 = vadd.f32 %v5238, %v5250
  %v5252 = vpop.f32.mrf.mxu0
  %5253 = vdwg.mxu0
  %5254 = vmatpush.bf16.msra.mxu0 %v867
  %5255 = vmatpush.bf16.msra.mxu0 %v859
  %5256 = vmatpush.bf16.msra.mxu0 %v851
  %5257 = vmatpush.bf16.msra.mxu0 %v843
  %5258 = vmatpush.bf16.msra.mxu0 %v835
  %5259 = vmatpush.bf16.msra.mxu0 %v827
  %5260 = vmatpush.bf16.msra.mxu0 %v819
  %5261 = vmatpush.bf16.msra.mxu0 %v811
  %5262 = vmatmul.bf16.gmra.mxu0 %v4509
  %v5263 = vpop.f32.mrf.mxu0
  %v5264 = vadd.f32 0.0, %v5263
  %v5265 = vpop.f32.mrf.mxu0
  %5266 = vdwg.mxu0
  %5267 = vmatpush.bf16.msra.mxu0 %v931
  %5268 = vmatpush.bf16.msra.mxu0 %v923
  %5269 = vmatpush.bf16.msra.mxu0 %v915
  %5270 = vmatpush.bf16.msra.mxu0 %v907
  %5271 = vmatpush.bf16.msra.mxu0 %v899
  %5272 = vmatpush.bf16.msra.mxu0 %v891
  %5273 = vmatpush.bf16.msra.mxu0 %v883
  %5274 = vmatpush.bf16.msra.mxu0 %v875
  %5275 = vmatmul.bf16.gmra.mxu0 %v4510
  %v5276 = vpop.f32.mrf.mxu0
  %v5277 = vadd.f32 %v5264, %v5276
  %v5278 = vpop.f32.mrf.mxu0
  %5279 = vdwg.mxu0
  %v5280 = vadd.f32 %v5064, %v5095
  %v5281 = vadd.f32 %v5065, %v5121
  %v5282 = vadd.f32 %v5066, %v5147
  %v5283 = vadd.f32 %v5067, %v5173
  %v5284 = vadd.f32 %v5068, %v5199
  %v5285 = vadd.f32 %v5069, %v5225
  %v5286 = vadd.f32 %v5070, %v5251
  %v5287 = vadd.f32 %v5071, %v5277
  %v5288 = vxor.u32 %v5280, 2147483648
  %v5289 = vxor.u32 %v5281, 2147483648
  %v5290 = vmul.f32 %v5288, 1.442695
  %v5291 = vpow.pop %v5290
  %v5292 = vmul.f32 %v5289, 1.442695
  %v5293 = vpow.pop %v5292
  %v5294 = vadd.f32 %v5291, 1.0
  %v5295 = vadd.f32 %v5293, 1.0
  %v5296 = vrcp.pop %v5294
  %v5297 = vmul.f32 %v5294, %v5296
  %v5298 = vsub.f32 1.0, %v5297
  %v5299 = vmul.f32 %v5296, %v5298
  %v5300 = vadd.f32 %v5296, %v5299
  %vm5301 = vweird.f32 %v5294
  %vm5302 = vweird.f32 %v5296
  %vm5303 = vmor %vm5301, %vm5302
  %v5304 = vsel %vm5303, %v5296, %v5300
  %v5305 = vand.u32 2147483647, %v5294
  %vm5306 = vcmp.eq.f32.partialorder %v5305, 8.507059e+37
  %v5307 = vand.u32 %v5294, 2147483648
  %v5308 = vor.u32 1.1754944e-38, %v5307
  %v5309 = vsel %vm5306, %v5308, %v5304
  %v5310 = vmul.f32 1.0, %v5309
  %v5311 = vrcp.pop %v5295
  %v5312 = vmul.f32 %v5295, %v5311
  %v5313 = vsub.f32 1.0, %v5312
  %v5314 = vmul.f32 %v5311, %v5313
  %v5315 = vadd.f32 %v5311, %v5314
  %vm5316 = vweird.f32 %v5295
  %vm5317 = vweird.f32 %v5311
  %vm5318 = vmor %vm5316, %vm5317
  %v5319 = vsel %vm5318, %v5311, %v5315
  %v5320 = vand.u32 2147483647, %v5295
  %vm5321 = vcmp.eq.f32.partialorder %v5320, 8.507059e+37
  %v5322 = vand.u32 %v5295, 2147483648
  %v5323 = vor.u32 1.1754944e-38, %v5322
  %v5324 = vsel %vm5321, %v5323, %v5319
  %v5325 = vmul.f32 1.0, %v5324
  %v5326 = vxor.u32 %v5282, 2147483648
  %v5327 = vxor.u32 %v5283, 2147483648
  %v5328 = vmul.f32 %v5326, 1.442695
  %v5329 = vpow.pop %v5328
  %v5330 = vmul.f32 %v5327, 1.442695
  %v5331 = vpow.pop %v5330
  %v5332 = vadd.f32 %v5329, 1.0
  %v5333 = vadd.f32 %v5331, 1.0
  %v5334 = vrcp.pop %v5332
  %v5335 = vmul.f32 %v5332, %v5334
  %v5336 = vsub.f32 1.0, %v5335
  %v5337 = vmul.f32 %v5334, %v5336
  %v5338 = vadd.f32 %v5334, %v5337
  %vm5339 = vweird.f32 %v5332
  %vm5340 = vweird.f32 %v5334
  %vm5341 = vmor %vm5339, %vm5340
  %v5342 = vsel %vm5341, %v5334, %v5338
  %v5343 = vand.u32 2147483647, %v5332
  %vm5344 = vcmp.eq.f32.partialorder %v5343, 8.507059e+37
  %v5345 = vand.u32 %v5332, 2147483648
  %v5346 = vor.u32 1.1754944e-38, %v5345
  %v5347 = vsel %vm5344, %v5346, %v5342
  %v5348 = vmul.f32 1.0, %v5347
  %v5349 = vrcp.pop %v5333
  %v5350 = vmul.f32 %v5333, %v5349
  %v5351 = vsub.f32 1.0, %v5350
  %v5352 = vmul.f32 %v5349, %v5351
  %v5353 = vadd.f32 %v5349, %v5352
  %vm5354 = vweird.f32 %v5333
  %vm5355 = vweird.f32 %v5349
  %vm5356 = vmor %vm5354, %vm5355
  %v5357 = vsel %vm5356, %v5349, %v5353
  %v5358 = vand.u32 2147483647, %v5333
  %vm5359 = vcmp.eq.f32.partialorder %v5358, 8.507059e+37
  %v5360 = vand.u32 %v5333, 2147483648
  %v5361 = vor.u32 1.1754944e-38, %v5360
  %v5362 = vsel %vm5359, %v5361, %v5357
  %v5363 = vmul.f32 1.0, %v5362
  %v5364 = vtanh.pop %v5284
  %v5365 = vtanh.pop %v5285
  %v5366 = vxor.u32 %v5286, 2147483648
  %v5367 = vxor.u32 %v5287, 2147483648
  %v5368 = vmul.f32 %v5366, 1.442695
  %v5369 = vpow.pop %v5368
  %v5370 = vmul.f32 %v5367, 1.442695
  %v5371 = vpow.pop %v5370
  %v5372 = vadd.f32 %v5369, 1.0
  %v5373 = vadd.f32 %v5371, 1.0
  %v5374 = vrcp.pop %v5372
  %v5375 = vmul.f32 %v5372, %v5374
  %v5376 = vsub.f32 1.0, %v5375
  %v5377 = vmul.f32 %v5374, %v5376
  %v5378 = vadd.f32 %v5374, %v5377
  %vm5379 = vweird.f32 %v5372
  %vm5380 = vweird.f32 %v5374
  %vm5381 = vmor %vm5379, %vm5380
  %v5382 = vsel %vm5381, %v5374, %v5378
  %v5383 = vand.u32 2147483647, %v5372
  %vm5384 = vcmp.eq.f32.partialorder %v5383, 8.507059e+37
  %v5385 = vand.u32 %v5372, 2147483648
  %v5386 = vor.u32 1.1754944e-38, %v5385
  %v5387 = vsel %vm5384, %v5386, %v5382
  %v5388 = vmul.f32 1.0, %v5387
  %v5389 = vrcp.pop %v5373
  %v5390 = vmul.f32 %v5373, %v5389
  %v5391 = vsub.f32 1.0, %v5390
  %v5392 = vmul.f32 %v5389, %v5391
  %v5393 = vadd.f32 %v5389, %v5392
  %vm5394 = vweird.f32 %v5373
  %vm5395 = vweird.f32 %v5389
  %vm5396 = vmor %vm5394, %vm5395
  %v5397 = vsel %vm5396, %v5389, %v5393
  %v5398 = vand.u32 2147483647, %v5373
  %vm5399 = vcmp.eq.f32.partialorder %v5398, 8.507059e+37
  %v5400 = vand.u32 %v5373, 2147483648
  %v5401 = vor.u32 1.1754944e-38, %v5400
  %v5402 = vsel %vm5399, %v5401, %v5397
  %v5403 = vmul.f32 1.0, %v5402
  %v5404 = vmul.f32 %v5348, %v4503
  %v5405 = vmul.f32 %v5363, %v4504
  %v5406 = vmul.f32 %v5310, %v5364
  %v5407 = vmul.f32 %v5325, %v5365
  %v5408 = vadd.f32 %v5404, %v5406
  %v5409 = vadd.f32 %v5405, %v5407
  %v5410 = vtanh.pop %v5408
  %v5411 = vtanh.pop %v5409
  %v5412 = vmul.f32 %v5388, %v5410
  %v5413 = vmul.f32 %v5403, %v5411
  %v5414 = vpack.c.bf16 %v5412, %v5412
  %v5415 = vpack.c.bf16 %v5413, %v5413
  %5416 = vmatpush.bf16.msra.mxu0 %v1861
  %5417 = vmatpush.bf16.msra.mxu0 %v1853
  %5418 = vmatpush.bf16.msra.mxu0 %v1845
  %5419 = vmatpush.bf16.msra.mxu0 %v1837
  %5420 = vmatpush.bf16.msra.mxu0 %v1829
  %5421 = vmatpush.bf16.msra.mxu0 %v1821
  %5422 = vmatpush.bf16.msra.mxu0 %v1813
  %5423 = vmatpush.bf16.msra.mxu0 %v1805
  %5424 = vmatmul.bf16.gmra.mxu0 %v5414
  %v5425 = vpop.f32.mrf.mxu0
  %v5426 = vadd.f32 %v1405, %v5425
  %v5427 = vpop.f32.mrf.mxu0
  %5428 = vdwg.mxu0
  %5429 = vmatpush.bf16.msra.mxu0 %v1925
  %5430 = vmatpush.bf16.msra.mxu0 %v1917
  %5431 = vmatpush.bf16.msra.mxu0 %v1909
  %5432 = vmatpush.bf16.msra.mxu0 %v1901
  %5433 = vmatpush.bf16.msra.mxu0 %v1893
  %5434 = vmatpush.bf16.msra.mxu0 %v1885
  %5435 = vmatpush.bf16.msra.mxu0 %v1877
  %5436 = vmatpush.bf16.msra.mxu0 %v1869
  %5437 = vmatmul.bf16.gmra.mxu0 %v5415
  %v5438 = vpop.f32.mrf.mxu0
  %v5439 = vadd.f32 %v5426, %v5438
  %v5440 = vpop.f32.mrf.mxu0
  %5441 = vdwg.mxu0
  %5442 = vmatpush.bf16.msra.mxu0 %v1862
  %5443 = vmatpush.bf16.msra.mxu0 %v1854
  %5444 = vmatpush.bf16.msra.mxu0 %v1846
  %5445 = vmatpush.bf16.msra.mxu0 %v1838
  %5446 = vmatpush.bf16.msra.mxu0 %v1830
  %5447 = vmatpush.bf16.msra.mxu0 %v1822
  %5448 = vmatpush.bf16.msra.mxu0 %v1814
  %5449 = vmatpush.bf16.msra.mxu0 %v1806
  %5450 = vmatmul.bf16.gmra.mxu0 %v5414
  %v5451 = vpop.f32.mrf.mxu0
  %v5452 = vadd.f32 %v1406, %v5451
  %v5453 = vpop.f32.mrf.mxu0
  %5454 = vdwg.mxu0
  %5455 = vmatpush.bf16.msra.mxu0 %v1926
  %5456 = vmatpush.bf16.msra.mxu0 %v1918
  %5457 = vmatpush.bf16.msra.mxu0 %v1910
  %5458 = vmatpush.bf16.msra.mxu0 %v1902
  %5459 = vmatpush.bf16.msra.mxu0 %v1894
  %5460 = vmatpush.bf16.msra.mxu0 %v1886
  %5461 = vmatpush.bf16.msra.mxu0 %v1878
  %5462 = vmatpush.bf16.msra.mxu0 %v1870
  %5463 = vmatmul.bf16.gmra.mxu0 %v5415
  %v5464 = vpop.f32.mrf.mxu0
  %v5465 = vadd.f32 %v5452, %v5464
  %v5466 = vpop.f32.mrf.mxu0
  %5467 = vdwg.mxu0
  %5468 = vmatpush.bf16.msra.mxu0 %v1863
  %5469 = vmatpush.bf16.msra.mxu0 %v1855
  %5470 = vmatpush.bf16.msra.mxu0 %v1847
  %5471 = vmatpush.bf16.msra.mxu0 %v1839
  %5472 = vmatpush.bf16.msra.mxu0 %v1831
  %5473 = vmatpush.bf16.msra.mxu0 %v1823
  %5474 = vmatpush.bf16.msra.mxu0 %v1815
  %5475 = vmatpush.bf16.msra.mxu0 %v1807
  %5476 = vmatmul.bf16.gmra.mxu0 %v5414
  %v5477 = vpop.f32.mrf.mxu0
  %v5478 = vadd.f32 %v1407, %v5477
  %v5479 = vpop.f32.mrf.mxu0
  %5480 = vdwg.mxu0
  %5481 = vmatpush.bf16.msra.mxu0 %v1927
  %5482 = vmatpush.bf16.msra.mxu0 %v1919
  %5483 = vmatpush.bf16.msra.mxu0 %v1911
  %5484 = vmatpush.bf16.msra.mxu0 %v1903
  %5485 = vmatpush.bf16.msra.mxu0 %v1895
  %5486 = vmatpush.bf16.msra.mxu0 %v1887
  %5487 = vmatpush.bf16.msra.mxu0 %v1879
  %5488 = vmatpush.bf16.msra.mxu0 %v1871
  %5489 = vmatmul.bf16.gmra.mxu0 %v5415
  %v5490 = vpop.f32.mrf.mxu0
  %v5491 = vadd.f32 %v5478, %v5490
  %v5492 = vpop.f32.mrf.mxu0
  %5493 = vdwg.mxu0
  %5494 = vmatpush.bf16.msra.mxu0 %v1864
  %5495 = vmatpush.bf16.msra.mxu0 %v1856
  %5496 = vmatpush.bf16.msra.mxu0 %v1848
  %5497 = vmatpush.bf16.msra.mxu0 %v1840
  %5498 = vmatpush.bf16.msra.mxu0 %v1832
  %5499 = vmatpush.bf16.msra.mxu0 %v1824
  %5500 = vmatpush.bf16.msra.mxu0 %v1816
  %5501 = vmatpush.bf16.msra.mxu0 %v1808
  %5502 = vmatmul.bf16.gmra.mxu0 %v5414
  %v5503 = vpop.f32.mrf.mxu0
  %v5504 = vadd.f32 %v1408, %v5503
  %v5505 = vpop.f32.mrf.mxu0
  %5506 = vdwg.mxu0
  %5507 = vmatpush.bf16.msra.mxu0 %v1928
  %5508 = vmatpush.bf16.msra.mxu0 %v1920
  %5509 = vmatpush.bf16.msra.mxu0 %v1912
  %5510 = vmatpush.bf16.msra.mxu0 %v1904
  %5511 = vmatpush.bf16.msra.mxu0 %v1896
  %5512 = vmatpush.bf16.msra.mxu0 %v1888
  %5513 = vmatpush.bf16.msra.mxu0 %v1880
  %5514 = vmatpush.bf16.msra.mxu0 %v1872
  %5515 = vmatmul.bf16.gmra.mxu0 %v5415
  %v5516 = vpop.f32.mrf.mxu0
  %v5517 = vadd.f32 %v5504, %v5516
  %v5518 = vpop.f32.mrf.mxu0
  %5519 = vdwg.mxu0
  %5520 = vmatpush.bf16.msra.mxu0 %v1865
  %5521 = vmatpush.bf16.msra.mxu0 %v1857
  %5522 = vmatpush.bf16.msra.mxu0 %v1849
  %5523 = vmatpush.bf16.msra.mxu0 %v1841
  %5524 = vmatpush.bf16.msra.mxu0 %v1833
  %5525 = vmatpush.bf16.msra.mxu0 %v1825
  %5526 = vmatpush.bf16.msra.mxu0 %v1817
  %5527 = vmatpush.bf16.msra.mxu0 %v1809
  %5528 = vmatmul.bf16.gmra.mxu0 %v5414
  %v5529 = vpop.f32.mrf.mxu0
  %v5530 = vadd.f32 %v1409, %v5529
  %v5531 = vpop.f32.mrf.mxu0
  %5532 = vdwg.mxu0
  %5533 = vmatpush.bf16.msra.mxu0 %v1929
  %5534 = vmatpush.bf16.msra.mxu0 %v1921
  %5535 = vmatpush.bf16.msra.mxu0 %v1913
  %5536 = vmatpush.bf16.msra.mxu0 %v1905
  %5537 = vmatpush.bf16.msra.mxu0 %v1897
  %5538 = vmatpush.bf16.msra.mxu0 %v1889
  %5539 = vmatpush.bf16.msra.mxu0 %v1881
  %5540 = vmatpush.bf16.msra.mxu0 %v1873
  %5541 = vmatmul.bf16.gmra.mxu0 %v5415
  %v5542 = vpop.f32.mrf.mxu0
  %v5543 = vadd.f32 %v5530, %v5542
  %v5544 = vpop.f32.mrf.mxu0
  %5545 = vdwg.mxu0
  %5546 = vmatpush.bf16.msra.mxu0 %v1866
  %5547 = vmatpush.bf16.msra.mxu0 %v1858
  %5548 = vmatpush.bf16.msra.mxu0 %v1850
  %5549 = vmatpush.bf16.msra.mxu0 %v1842
  %5550 = vmatpush.bf16.msra.mxu0 %v1834
  %5551 = vmatpush.bf16.msra.mxu0 %v1826
  %5552 = vmatpush.bf16.msra.mxu0 %v1818
  %5553 = vmatpush.bf16.msra.mxu0 %v1810
  %5554 = vmatmul.bf16.gmra.mxu0 %v5414
  %v5555 = vpop.f32.mrf.mxu0
  %v5556 = vadd.f32 %v1410, %v5555
  %v5557 = vpop.f32.mrf.mxu0
  %5558 = vdwg.mxu0
  %5559 = vmatpush.bf16.msra.mxu0 %v1930
  %5560 = vmatpush.bf16.msra.mxu0 %v1922
  %5561 = vmatpush.bf16.msra.mxu0 %v1914
  %5562 = vmatpush.bf16.msra.mxu0 %v1906
  %5563 = vmatpush.bf16.msra.mxu0 %v1898
  %5564 = vmatpush.bf16.msra.mxu0 %v1890
  %5565 = vmatpush.bf16.msra.mxu0 %v1882
  %5566 = vmatpush.bf16.msra.mxu0 %v1874
  %5567 = vmatmul.bf16.gmra.mxu0 %v5415
  %v5568 = vpop.f32.mrf.mxu0
  %v5569 = vadd.f32 %v5556, %v5568
  %v5570 = vpop.f32.mrf.mxu0
  %5571 = vdwg.mxu0
  %5572 = vmatpush.bf16.msra.mxu0 %v1867
  %5573 = vmatpush.bf16.msra.mxu0 %v1859
  %5574 = vmatpush.bf16.msra.mxu0 %v1851
  %5575 = vmatpush.bf16.msra.mxu0 %v1843
  %5576 = vmatpush.bf16.msra.mxu0 %v1835
  %5577 = vmatpush.bf16.msra.mxu0 %v1827
  %5578 = vmatpush.bf16.msra.mxu0 %v1819
  %5579 = vmatpush.bf16.msra.mxu0 %v1811
  %5580 = vmatmul.bf16.gmra.mxu0 %v5414
  %v5581 = vpop.f32.mrf.mxu0
  %v5582 = vadd.f32 %v1411, %v5581
  %v5583 = vpop.f32.mrf.mxu0
  %5584 = vdwg.mxu0
  %5585 = vmatpush.bf16.msra.mxu0 %v1931
  %5586 = vmatpush.bf16.msra.mxu0 %v1923
  %5587 = vmatpush.bf16.msra.mxu0 %v1915
  %5588 = vmatpush.bf16.msra.mxu0 %v1907
  %5589 = vmatpush.bf16.msra.mxu0 %v1899
  %5590 = vmatpush.bf16.msra.mxu0 %v1891
  %5591 = vmatpush.bf16.msra.mxu0 %v1883
  %5592 = vmatpush.bf16.msra.mxu0 %v1875
  %5593 = vmatmul.bf16.gmra.mxu0 %v5415
  %v5594 = vpop.f32.mrf.mxu0
  %v5595 = vadd.f32 %v5582, %v5594
  %v5596 = vpop.f32.mrf.mxu0
  %5597 = vdwg.mxu0
  %5598 = vmatpush.bf16.msra.mxu0 %v1868
  %5599 = vmatpush.bf16.msra.mxu0 %v1860
  %5600 = vmatpush.bf16.msra.mxu0 %v1852
  %5601 = vmatpush.bf16.msra.mxu0 %v1844
  %5602 = vmatpush.bf16.msra.mxu0 %v1836
  %5603 = vmatpush.bf16.msra.mxu0 %v1828
  %5604 = vmatpush.bf16.msra.mxu0 %v1820
  %5605 = vmatpush.bf16.msra.mxu0 %v1812
  %5606 = vmatmul.bf16.gmra.mxu0 %v5414
  %v5607 = vpop.f32.mrf.mxu0
  %v5608 = vadd.f32 %v1412, %v5607
  %v5609 = vpop.f32.mrf.mxu0
  %5610 = vdwg.mxu0
  %5611 = vmatpush.bf16.msra.mxu0 %v1932
  %5612 = vmatpush.bf16.msra.mxu0 %v1924
  %5613 = vmatpush.bf16.msra.mxu0 %v1916
  %5614 = vmatpush.bf16.msra.mxu0 %v1908
  %5615 = vmatpush.bf16.msra.mxu0 %v1900
  %5616 = vmatpush.bf16.msra.mxu0 %v1892
  %5617 = vmatpush.bf16.msra.mxu0 %v1884
  %5618 = vmatpush.bf16.msra.mxu0 %v1876
  %5619 = vmatmul.bf16.gmra.mxu0 %v5415
  %v5620 = vpop.f32.mrf.mxu0
  %v5621 = vadd.f32 %v5608, %v5620
  %v5622 = vpop.f32.mrf.mxu0
  %5623 = vdwg.mxu0
  %5624 = vmatpush.bf16.msra.mxu0 %v2709
  %5625 = vmatpush.bf16.msra.mxu0 %v2701
  %5626 = vmatpush.bf16.msra.mxu0 %v2693
  %5627 = vmatpush.bf16.msra.mxu0 %v2685
  %5628 = vmatpush.bf16.msra.mxu0 %v2677
  %5629 = vmatpush.bf16.msra.mxu0 %v2669
  %5630 = vmatpush.bf16.msra.mxu0 %v2661
  %5631 = vmatpush.bf16.msra.mxu0 %v2653
  %5632 = vmatmul.bf16.gmra.mxu0 %v5061
  %v5633 = vpop.f32.mrf.mxu0
  %v5634 = vadd.f32 0.0, %v5633
  %v5635 = vpop.f32.mrf.mxu0
  %5636 = vdwg.mxu0
  %5637 = vmatpush.bf16.msra.mxu0 %v2773
  %5638 = vmatpush.bf16.msra.mxu0 %v2765
  %5639 = vmatpush.bf16.msra.mxu0 %v2757
  %5640 = vmatpush.bf16.msra.mxu0 %v2749
  %5641 = vmatpush.bf16.msra.mxu0 %v2741
  %5642 = vmatpush.bf16.msra.mxu0 %v2733
  %5643 = vmatpush.bf16.msra.mxu0 %v2725
  %5644 = vmatpush.bf16.msra.mxu0 %v2717
  %5645 = vmatmul.bf16.gmra.mxu0 %v5062
  %v5646 = vpop.f32.mrf.mxu0
  %v5647 = vadd.f32 %v5634, %v5646
  %v5648 = vpop.f32.mrf.mxu0
  %5649 = vdwg.mxu0
  %5650 = vmatpush.bf16.msra.mxu0 %v2710
  %5651 = vmatpush.bf16.msra.mxu0 %v2702
  %5652 = vmatpush.bf16.msra.mxu0 %v2694
  %5653 = vmatpush.bf16.msra.mxu0 %v2686
  %5654 = vmatpush.bf16.msra.mxu0 %v2678
  %5655 = vmatpush.bf16.msra.mxu0 %v2670
  %5656 = vmatpush.bf16.msra.mxu0 %v2662
  %5657 = vmatpush.bf16.msra.mxu0 %v2654
  %5658 = vmatmul.bf16.gmra.mxu0 %v5061
  %v5659 = vpop.f32.mrf.mxu0
  %v5660 = vadd.f32 0.0, %v5659
  %v5661 = vpop.f32.mrf.mxu0
  %5662 = vdwg.mxu0
  %5663 = vmatpush.bf16.msra.mxu0 %v2774
  %5664 = vmatpush.bf16.msra.mxu0 %v2766
  %5665 = vmatpush.bf16.msra.mxu0 %v2758
  %5666 = vmatpush.bf16.msra.mxu0 %v2750
  %5667 = vmatpush.bf16.msra.mxu0 %v2742
  %5668 = vmatpush.bf16.msra.mxu0 %v2734
  %5669 = vmatpush.bf16.msra.mxu0 %v2726
  %5670 = vmatpush.bf16.msra.mxu0 %v2718
  %5671 = vmatmul.bf16.gmra.mxu0 %v5062
  %v5672 = vpop.f32.mrf.mxu0
  %v5673 = vadd.f32 %v5660, %v5672
  %v5674 = vpop.f32.mrf.mxu0
  %5675 = vdwg.mxu0
  %5676 = vmatpush.bf16.msra.mxu0 %v2711
  %5677 = vmatpush.bf16.msra.mxu0 %v2703
  %5678 = vmatpush.bf16.msra.mxu0 %v2695
  %5679 = vmatpush.bf16.msra.mxu0 %v2687
  %5680 = vmatpush.bf16.msra.mxu0 %v2679
  %5681 = vmatpush.bf16.msra.mxu0 %v2671
  %5682 = vmatpush.bf16.msra.mxu0 %v2663
  %5683 = vmatpush.bf16.msra.mxu0 %v2655
  %5684 = vmatmul.bf16.gmra.mxu0 %v5061
  %v5685 = vpop.f32.mrf.mxu0
  %v5686 = vadd.f32 0.0, %v5685
  %v5687 = vpop.f32.mrf.mxu0
  %5688 = vdwg.mxu0
  %5689 = vmatpush.bf16.msra.mxu0 %v2775
  %5690 = vmatpush.bf16.msra.mxu0 %v2767
  %5691 = vmatpush.bf16.msra.mxu0 %v2759
  %5692 = vmatpush.bf16.msra.mxu0 %v2751
  %5693 = vmatpush.bf16.msra.mxu0 %v2743
  %5694 = vmatpush.bf16.msra.mxu0 %v2735
  %5695 = vmatpush.bf16.msra.mxu0 %v2727
  %5696 = vmatpush.bf16.msra.mxu0 %v2719
  %5697 = vmatmul.bf16.gmra.mxu0 %v5062
  %v5698 = vpop.f32.mrf.mxu0
  %v5699 = vadd.f32 %v5686, %v5698
  %v5700 = vpop.f32.mrf.mxu0
  %5701 = vdwg.mxu0
  %5702 = vmatpush.bf16.msra.mxu0 %v2712
  %5703 = vmatpush.bf16.msra.mxu0 %v2704
  %5704 = vmatpush.bf16.msra.mxu0 %v2696
  %5705 = vmatpush.bf16.msra.mxu0 %v2688
  %5706 = vmatpush.bf16.msra.mxu0 %v2680
  %5707 = vmatpush.bf16.msra.mxu0 %v2672
  %5708 = vmatpush.bf16.msra.mxu0 %v2664
  %5709 = vmatpush.bf16.msra.mxu0 %v2656
  %5710 = vmatmul.bf16.gmra.mxu0 %v5061
  %v5711 = vpop.f32.mrf.mxu0
  %v5712 = vadd.f32 0.0, %v5711
  %v5713 = vpop.f32.mrf.mxu0
  %5714 = vdwg.mxu0
  %5715 = vmatpush.bf16.msra.mxu0 %v2776
  %5716 = vmatpush.bf16.msra.mxu0 %v2768
  %5717 = vmatpush.bf16.msra.mxu0 %v2760
  %5718 = vmatpush.bf16.msra.mxu0 %v2752
  %5719 = vmatpush.bf16.msra.mxu0 %v2744
  %5720 = vmatpush.bf16.msra.mxu0 %v2736
  %5721 = vmatpush.bf16.msra.mxu0 %v2728
  %5722 = vmatpush.bf16.msra.mxu0 %v2720
  %5723 = vmatmul.bf16.gmra.mxu0 %v5062
  %v5724 = vpop.f32.mrf.mxu0
  %v5725 = vadd.f32 %v5712, %v5724
  %v5726 = vpop.f32.mrf.mxu0
  %5727 = vdwg.mxu0
  %5728 = vmatpush.bf16.msra.mxu0 %v2713
  %5729 = vmatpush.bf16.msra.mxu0 %v2705
  %5730 = vmatpush.bf16.msra.mxu0 %v2697
  %5731 = vmatpush.bf16.msra.mxu0 %v2689
  %5732 = vmatpush.bf16.msra.mxu0 %v2681
  %5733 = vmatpush.bf16.msra.mxu0 %v2673
  %5734 = vmatpush.bf16.msra.mxu0 %v2665
  %5735 = vmatpush.bf16.msra.mxu0 %v2657
  %5736 = vmatmul.bf16.gmra.mxu0 %v5061
  %v5737 = vpop.f32.mrf.mxu0
  %v5738 = vadd.f32 0.0, %v5737
  %v5739 = vpop.f32.mrf.mxu0
  %5740 = vdwg.mxu0
  %5741 = vmatpush.bf16.msra.mxu0 %v2777
  %5742 = vmatpush.bf16.msra.mxu0 %v2769
  %5743 = vmatpush.bf16.msra.mxu0 %v2761
  %5744 = vmatpush.bf16.msra.mxu0 %v2753
  %5745 = vmatpush.bf16.msra.mxu0 %v2745
  %5746 = vmatpush.bf16.msra.mxu0 %v2737
  %5747 = vmatpush.bf16.msra.mxu0 %v2729
  %5748 = vmatpush.bf16.msra.mxu0 %v2721
  %5749 = vmatmul.bf16.gmra.mxu0 %v5062
  %v5750 = vpop.f32.mrf.mxu0
  %v5751 = vadd.f32 %v5738, %v5750
  %v5752 = vpop.f32.mrf.mxu0
  %5753 = vdwg.mxu0
  %5754 = vmatpush.bf16.msra.mxu0 %v2714
  %5755 = vmatpush.bf16.msra.mxu0 %v2706
  %5756 = vmatpush.bf16.msra.mxu0 %v2698
  %5757 = vmatpush.bf16.msra.mxu0 %v2690
  %5758 = vmatpush.bf16.msra.mxu0 %v2682
  %5759 = vmatpush.bf16.msra.mxu0 %v2674
  %5760 = vmatpush.bf16.msra.mxu0 %v2666
  %5761 = vmatpush.bf16.msra.mxu0 %v2658
  %5762 = vmatmul.bf16.gmra.mxu0 %v5061
  %v5763 = vpop.f32.mrf.mxu0
  %v5764 = vadd.f32 0.0, %v5763
  %v5765 = vpop.f32.mrf.mxu0
  %5766 = vdwg.mxu0
  %5767 = vmatpush.bf16.msra.mxu0 %v2778
  %5768 = vmatpush.bf16.msra.mxu0 %v2770
  %5769 = vmatpush.bf16.msra.mxu0 %v2762
  %5770 = vmatpush.bf16.msra.mxu0 %v2754
  %5771 = vmatpush.bf16.msra.mxu0 %v2746
  %5772 = vmatpush.bf16.msra.mxu0 %v2738
  %5773 = vmatpush.bf16.msra.mxu0 %v2730
  %5774 = vmatpush.bf16.msra.mxu0 %v2722
  %5775 = vmatmul.bf16.gmra.mxu0 %v5062
  %v5776 = vpop.f32.mrf.mxu0
  %v5777 = vadd.f32 %v5764, %v5776
  %v5778 = vpop.f32.mrf.mxu0
  %5779 = vdwg.mxu0
  %5780 = vmatpush.bf16.msra.mxu0 %v2715
  %5781 = vmatpush.bf16.msra.mxu0 %v2707
  %5782 = vmatpush.bf16.msra.mxu0 %v2699
  %5783 = vmatpush.bf16.msra.mxu0 %v2691
  %5784 = vmatpush.bf16.msra.mxu0 %v2683
  %5785 = vmatpush.bf16.msra.mxu0 %v2675
  %5786 = vmatpush.bf16.msra.mxu0 %v2667
  %5787 = vmatpush.bf16.msra.mxu0 %v2659
  %5788 = vmatmul.bf16.gmra.mxu0 %v5061
  %v5789 = vpop.f32.mrf.mxu0
  %v5790 = vadd.f32 0.0, %v5789
  %v5791 = vpop.f32.mrf.mxu0
  %5792 = vdwg.mxu0
  %5793 = vmatpush.bf16.msra.mxu0 %v2779
  %5794 = vmatpush.bf16.msra.mxu0 %v2771
  %5795 = vmatpush.bf16.msra.mxu0 %v2763
  %5796 = vmatpush.bf16.msra.mxu0 %v2755
  %5797 = vmatpush.bf16.msra.mxu0 %v2747
  %5798 = vmatpush.bf16.msra.mxu0 %v2739
  %5799 = vmatpush.bf16.msra.mxu0 %v2731
  %5800 = vmatpush.bf16.msra.mxu0 %v2723
  %5801 = vmatmul.bf16.gmra.mxu0 %v5062
  %v5802 = vpop.f32.mrf.mxu0
  %v5803 = vadd.f32 %v5790, %v5802
  %v5804 = vpop.f32.mrf.mxu0
  %5805 = vdwg.mxu0
  %5806 = vmatpush.bf16.msra.mxu0 %v2716
  %5807 = vmatpush.bf16.msra.mxu0 %v2708
  %5808 = vmatpush.bf16.msra.mxu0 %v2700
  %5809 = vmatpush.bf16.msra.mxu0 %v2692
  %5810 = vmatpush.bf16.msra.mxu0 %v2684
  %5811 = vmatpush.bf16.msra.mxu0 %v2676
  %5812 = vmatpush.bf16.msra.mxu0 %v2668
  %5813 = vmatpush.bf16.msra.mxu0 %v2660
  %5814 = vmatmul.bf16.gmra.mxu0 %v5061
  %v5815 = vpop.f32.mrf.mxu0
  %v5816 = vadd.f32 0.0, %v5815
  %v5817 = vpop.f32.mrf.mxu0
  %5818 = vdwg.mxu0
  %5819 = vmatpush.bf16.msra.mxu0 %v2780
  %5820 = vmatpush.bf16.msra.mxu0 %v2772
  %5821 = vmatpush.bf16.msra.mxu0 %v2764
  %5822 = vmatpush.bf16.msra.mxu0 %v2756
  %5823 = vmatpush.bf16.msra.mxu0 %v2748
  %5824 = vmatpush.bf16.msra.mxu0 %v2740
  %5825 = vmatpush.bf16.msra.mxu0 %v2732
  %5826 = vmatpush.bf16.msra.mxu0 %v2724
  %5827 = vmatmul.bf16.gmra.mxu0 %v5062
  %v5828 = vpop.f32.mrf.mxu0
  %v5829 = vadd.f32 %v5816, %v5828
  %v5830 = vpop.f32.mrf.mxu0
  %5831 = vdwg.mxu0
  %v5832 = vadd.f32 %v5439, %v5647
  %v5833 = vadd.f32 %v5465, %v5673
  %v5834 = vadd.f32 %v5491, %v5699
  %v5835 = vadd.f32 %v5517, %v5725
  %v5836 = vadd.f32 %v5543, %v5751
  %v5837 = vadd.f32 %v5569, %v5777
  %v5838 = vadd.f32 %v5595, %v5803
  %v5839 = vadd.f32 %v5621, %v5829
  %v5840 = vxor.u32 %v5832, 2147483648
  %v5841 = vxor.u32 %v5833, 2147483648
  %v5842 = vmul.f32 %v5840, 1.442695
  %v5843 = vpow.pop %v5842
  %v5844 = vmul.f32 %v5841, 1.442695
  %v5845 = vpow.pop %v5844
  %v5846 = vadd.f32 %v5843, 1.0
  %v5847 = vadd.f32 %v5845, 1.0
  %v5848 = vrcp.pop %v5846
  %v5849 = vmul.f32 %v5846, %v5848
  %v5850 = vsub.f32 1.0, %v5849
  %v5851 = vmul.f32 %v5848, %v5850
  %v5852 = vadd.f32 %v5848, %v5851
  %vm5853 = vweird.f32 %v5846
  %vm5854 = vweird.f32 %v5848
  %vm5855 = vmor %vm5853, %vm5854
  %v5856 = vsel %vm5855, %v5848, %v5852
  %v5857 = vand.u32 2147483647, %v5846
  %vm5858 = vcmp.eq.f32.partialorder %v5857, 8.507059e+37
  %v5859 = vand.u32 %v5846, 2147483648
  %v5860 = vor.u32 1.1754944e-38, %v5859
  %v5861 = vsel %vm5858, %v5860, %v5856
  %v5862 = vmul.f32 1.0, %v5861
  %v5863 = vrcp.pop %v5847
  %v5864 = vmul.f32 %v5847, %v5863
  %v5865 = vsub.f32 1.0, %v5864
  %v5866 = vmul.f32 %v5863, %v5865
  %v5867 = vadd.f32 %v5863, %v5866
  %vm5868 = vweird.f32 %v5847
  %vm5869 = vweird.f32 %v5863
  %vm5870 = vmor %vm5868, %vm5869
  %v5871 = vsel %vm5870, %v5863, %v5867
  %v5872 = vand.u32 2147483647, %v5847
  %vm5873 = vcmp.eq.f32.partialorder %v5872, 8.507059e+37
  %v5874 = vand.u32 %v5847, 2147483648
  %v5875 = vor.u32 1.1754944e-38, %v5874
  %v5876 = vsel %vm5873, %v5875, %v5871
  %v5877 = vmul.f32 1.0, %v5876
  %v5878 = vxor.u32 %v5834, 2147483648
  %v5879 = vxor.u32 %v5835, 2147483648
  %v5880 = vmul.f32 %v5878, 1.442695
  %v5881 = vpow.pop %v5880
  %v5882 = vmul.f32 %v5879, 1.442695
  %v5883 = vpow.pop %v5882
  %v5884 = vadd.f32 %v5881, 1.0
  %v5885 = vadd.f32 %v5883, 1.0
  %v5886 = vrcp.pop %v5884
  %v5887 = vmul.f32 %v5884, %v5886
  %v5888 = vsub.f32 1.0, %v5887
  %v5889 = vmul.f32 %v5886, %v5888
  %v5890 = vadd.f32 %v5886, %v5889
  %vm5891 = vweird.f32 %v5884
  %vm5892 = vweird.f32 %v5886
  %vm5893 = vmor %vm5891, %vm5892
  %v5894 = vsel %vm5893, %v5886, %v5890
  %v5895 = vand.u32 2147483647, %v5884
  %vm5896 = vcmp.eq.f32.partialorder %v5895, 8.507059e+37
  %v5897 = vand.u32 %v5884, 2147483648
  %v5898 = vor.u32 1.1754944e-38, %v5897
  %v5899 = vsel %vm5896, %v5898, %v5894
  %v5900 = vmul.f32 1.0, %v5899
  %v5901 = vrcp.pop %v5885
  %v5902 = vmul.f32 %v5885, %v5901
  %v5903 = vsub.f32 1.0, %v5902
  %v5904 = vmul.f32 %v5901, %v5903
  %v5905 = vadd.f32 %v5901, %v5904
  %vm5906 = vweird.f32 %v5885
  %vm5907 = vweird.f32 %v5901
  %vm5908 = vmor %vm5906, %vm5907
  %v5909 = vsel %vm5908, %v5901, %v5905
  %v5910 = vand.u32 2147483647, %v5885
  %vm5911 = vcmp.eq.f32.partialorder %v5910, 8.507059e+37
  %v5912 = vand.u32 %v5885, 2147483648
  %v5913 = vor.u32 1.1754944e-38, %v5912
  %v5914 = vsel %vm5911, %v5913, %v5909
  %v5915 = vmul.f32 1.0, %v5914
  %v5916 = vtanh.pop %v5836
  %v5917 = vtanh.pop %v5837
  %v5918 = vxor.u32 %v5838, 2147483648
  %v5919 = vxor.u32 %v5839, 2147483648
  %v5920 = vmul.f32 %v5918, 1.442695
  %v5921 = vpow.pop %v5920
  %v5922 = vmul.f32 %v5919, 1.442695
  %v5923 = vpow.pop %v5922
  %v5924 = vadd.f32 %v5921, 1.0
  %v5925 = vadd.f32 %v5923, 1.0
  %v5926 = vrcp.pop %v5924
  %v5927 = vmul.f32 %v5924, %v5926
  %v5928 = vsub.f32 1.0, %v5927
  %v5929 = vmul.f32 %v5926, %v5928
  %v5930 = vadd.f32 %v5926, %v5929
  %vm5931 = vweird.f32 %v5924
  %vm5932 = vweird.f32 %v5926
  %vm5933 = vmor %vm5931, %vm5932
  %v5934 = vsel %vm5933, %v5926, %v5930
  %v5935 = vand.u32 2147483647, %v5924
  %vm5936 = vcmp.eq.f32.partialorder %v5935, 8.507059e+37
  %v5937 = vand.u32 %v5924, 2147483648
  %v5938 = vor.u32 1.1754944e-38, %v5937
  %v5939 = vsel %vm5936, %v5938, %v5934
  %v5940 = vmul.f32 1.0, %v5939
  %v5941 = vrcp.pop %v5925
  %v5942 = vmul.f32 %v5925, %v5941
  %v5943 = vsub.f32 1.0, %v5942
  %v5944 = vmul.f32 %v5941, %v5943
  %v5945 = vadd.f32 %v5941, %v5944
  %vm5946 = vweird.f32 %v5925
  %vm5947 = vweird.f32 %v5941
  %vm5948 = vmor %vm5946, %vm5947
  %v5949 = vsel %vm5948, %v5941, %v5945
  %v5950 = vand.u32 2147483647, %v5925
  %vm5951 = vcmp.eq.f32.partialorder %v5950, 8.507059e+37
  %v5952 = vand.u32 %v5925, 2147483648
  %v5953 = vor.u32 1.1754944e-38, %v5952
  %v5954 = vsel %vm5951, %v5953, %v5949
  %v5955 = vmul.f32 1.0, %v5954
  %v5956 = vmul.f32 %v5900, %v5055
  %v5957 = vmul.f32 %v5915, %v5056
  %v5958 = vmul.f32 %v5862, %v5916
  %v5959 = vmul.f32 %v5877, %v5917
  %v5960 = vadd.f32 %v5956, %v5958
  %v5961 = vadd.f32 %v5957, %v5959
  %v5962 = vtanh.pop %v5960
  %v5963 = vtanh.pop %v5961
  %v5964 = vmul.f32 %v5940, %v5962
  %v5965 = vmul.f32 %v5955, %v5963
  %v5966 = vpack.c.bf16 %v5964, %v5964
  %v5967 = vpack.c.bf16 %v5965, %v5965
  %s5968 = scalar_lea.vmem %s0, 256
  %v5969 = vld [vmem:[%s5968] sm:$0xff]
  %v5970 = vld [vmem:[%s5968 + $0x8] sm:$0xff]
  %v5971 = vld [vmem:[%s5968 + $0x10] sm:$0xff]
  %v5972 = vld [vmem:[%s5968 + $0x18] sm:$0xff]
  %v5973 = vld [vmem:[%s5968 + $0x20] sm:$0xff]
  %v5974 = vld [vmem:[%s5968 + $0x28] sm:$0xff]
  %v5975 = vld [vmem:[%s5968 + $0x30] sm:$0xff]
  %v5976 = vld [vmem:[%s5968 + $0x38] sm:$0xff]
  %5977 = vmatpush.bf16.msra.mxu0 %v860
  %5978 = vmatpush.bf16.msra.mxu0 %v852
  %5979 = vmatpush.bf16.msra.mxu0 %v844
  %5980 = vmatpush.bf16.msra.mxu0 %v836
  %5981 = vmatpush.bf16.msra.mxu0 %v828
  %5982 = vmatpush.bf16.msra.mxu0 %v820
  %5983 = vmatpush.bf16.msra.mxu0 %v812
  %5984 = vmatpush.bf16.msra.mxu0 %v804
  %5985 = vmatmul.bf16.gmra.mxu0 %v5414
  %v5986 = vpop.f32.mrf.mxu0
  %v5987 = vadd.f32 0.0, %v5986
  %v5988 = vpop.f32.mrf.mxu0
  %5989 = vdwg.mxu0
  %5990 = vmatpush.bf16.msra.mxu0 %v924
  %5991 = vmatpush.bf16.msra.mxu0 %v916
  %5992 = vmatpush.bf16.msra.mxu0 %v908
  %5993 = vmatpush.bf16.msra.mxu0 %v900
  %5994 = vmatpush.bf16.msra.mxu0 %v892
  %5995 = vmatpush.bf16.msra.mxu0 %v884
  %5996 = vmatpush.bf16.msra.mxu0 %v876
  %5997 = vmatpush.bf16.msra.mxu0 %v868
  %5998 = vmatmul.bf16.gmra.mxu0 %v5415
  %v5999 = vpop.f32.mrf.mxu0
  %v6000 = vadd.f32 %v5987, %v5999
  %v6001 = vpop.f32.mrf.mxu0
  %6002 = vdwg.mxu0
  %6003 = vmatpush.bf16.msra.mxu0 %v861
  %6004 = vmatpush.bf16.msra.mxu0 %v853
  %6005 = vmatpush.bf16.msra.mxu0 %v845
  %6006 = vmatpush.bf16.msra.mxu0 %v837
  %6007 = vmatpush.bf16.msra.mxu0 %v829
  %6008 = vmatpush.bf16.msra.mxu0 %v821
  %6009 = vmatpush.bf16.msra.mxu0 %v813
  %6010 = vmatpush.bf16.msra.mxu0 %v805
  %6011 = vmatmul.bf16.gmra.mxu0 %v5414
  %v6012 = vpop.f32.mrf.mxu0
  %v6013 = vadd.f32 0.0, %v6012
  %v6014 = vpop.f32.mrf.mxu0
  %6015 = vdwg.mxu0
  %6016 = vmatpush.bf16.msra.mxu0 %v925
  %6017 = vmatpush.bf16.msra.mxu0 %v917
  %6018 = vmatpush.bf16.msra.mxu0 %v909
  %6019 = vmatpush.bf16.msra.mxu0 %v901
  %6020 = vmatpush.bf16.msra.mxu0 %v893
  %6021 = vmatpush.bf16.msra.mxu0 %v885
  %6022 = vmatpush.bf16.msra.mxu0 %v877
  %6023 = vmatpush.bf16.msra.mxu0 %v869
  %6024 = vmatmul.bf16.gmra.mxu0 %v5415
  %v6025 = vpop.f32.mrf.mxu0
  %v6026 = vadd.f32 %v6013, %v6025
  %v6027 = vpop.f32.mrf.mxu0
  %6028 = vdwg.mxu0
  %6029 = vmatpush.bf16.msra.mxu0 %v862
  %6030 = vmatpush.bf16.msra.mxu0 %v854
  %6031 = vmatpush.bf16.msra.mxu0 %v846
  %6032 = vmatpush.bf16.msra.mxu0 %v838
  %6033 = vmatpush.bf16.msra.mxu0 %v830
  %6034 = vmatpush.bf16.msra.mxu0 %v822
  %6035 = vmatpush.bf16.msra.mxu0 %v814
  %6036 = vmatpush.bf16.msra.mxu0 %v806
  %6037 = vmatmul.bf16.gmra.mxu0 %v5414
  %v6038 = vpop.f32.mrf.mxu0
  %v6039 = vadd.f32 0.0, %v6038
  %v6040 = vpop.f32.mrf.mxu0
  %6041 = vdwg.mxu0
  %6042 = vmatpush.bf16.msra.mxu0 %v926
  %6043 = vmatpush.bf16.msra.mxu0 %v918
  %6044 = vmatpush.bf16.msra.mxu0 %v910
  %6045 = vmatpush.bf16.msra.mxu0 %v902
  %6046 = vmatpush.bf16.msra.mxu0 %v894
  %6047 = vmatpush.bf16.msra.mxu0 %v886
  %6048 = vmatpush.bf16.msra.mxu0 %v878
  %6049 = vmatpush.bf16.msra.mxu0 %v870
  %6050 = vmatmul.bf16.gmra.mxu0 %v5415
  %v6051 = vpop.f32.mrf.mxu0
  %v6052 = vadd.f32 %v6039, %v6051
  %v6053 = vpop.f32.mrf.mxu0
  %6054 = vdwg.mxu0
  %6055 = vmatpush.bf16.msra.mxu0 %v863
  %6056 = vmatpush.bf16.msra.mxu0 %v855
  %6057 = vmatpush.bf16.msra.mxu0 %v847
  %6058 = vmatpush.bf16.msra.mxu0 %v839
  %6059 = vmatpush.bf16.msra.mxu0 %v831
  %6060 = vmatpush.bf16.msra.mxu0 %v823
  %6061 = vmatpush.bf16.msra.mxu0 %v815
  %6062 = vmatpush.bf16.msra.mxu0 %v807
  %6063 = vmatmul.bf16.gmra.mxu0 %v5414
  %v6064 = vpop.f32.mrf.mxu0
  %v6065 = vadd.f32 0.0, %v6064
  %v6066 = vpop.f32.mrf.mxu0
  %6067 = vdwg.mxu0
  %6068 = vmatpush.bf16.msra.mxu0 %v927
  %6069 = vmatpush.bf16.msra.mxu0 %v919
  %6070 = vmatpush.bf16.msra.mxu0 %v911
  %6071 = vmatpush.bf16.msra.mxu0 %v903
  %6072 = vmatpush.bf16.msra.mxu0 %v895
  %6073 = vmatpush.bf16.msra.mxu0 %v887
  %6074 = vmatpush.bf16.msra.mxu0 %v879
  %6075 = vmatpush.bf16.msra.mxu0 %v871
  %6076 = vmatmul.bf16.gmra.mxu0 %v5415
  %v6077 = vpop.f32.mrf.mxu0
  %v6078 = vadd.f32 %v6065, %v6077
  %v6079 = vpop.f32.mrf.mxu0
  %6080 = vdwg.mxu0
  %6081 = vmatpush.bf16.msra.mxu0 %v864
  %6082 = vmatpush.bf16.msra.mxu0 %v856
  %6083 = vmatpush.bf16.msra.mxu0 %v848
  %6084 = vmatpush.bf16.msra.mxu0 %v840
  %6085 = vmatpush.bf16.msra.mxu0 %v832
  %6086 = vmatpush.bf16.msra.mxu0 %v824
  %6087 = vmatpush.bf16.msra.mxu0 %v816
  %6088 = vmatpush.bf16.msra.mxu0 %v808
  %6089 = vmatmul.bf16.gmra.mxu0 %v5414
  %v6090 = vpop.f32.mrf.mxu0
  %v6091 = vadd.f32 0.0, %v6090
  %v6092 = vpop.f32.mrf.mxu0
  %6093 = vdwg.mxu0
  %6094 = vmatpush.bf16.msra.mxu0 %v928
  %6095 = vmatpush.bf16.msra.mxu0 %v920
  %6096 = vmatpush.bf16.msra.mxu0 %v912
  %6097 = vmatpush.bf16.msra.mxu0 %v904
  %6098 = vmatpush.bf16.msra.mxu0 %v896
  %6099 = vmatpush.bf16.msra.mxu0 %v888
  %6100 = vmatpush.bf16.msra.mxu0 %v880
  %6101 = vmatpush.bf16.msra.mxu0 %v872
  %6102 = vmatmul.bf16.gmra.mxu0 %v5415
  %v6103 = vpop.f32.mrf.mxu0
  %v6104 = vadd.f32 %v6091, %v6103
  %v6105 = vpop.f32.mrf.mxu0
  %6106 = vdwg.mxu0
  %6107 = vmatpush.bf16.msra.mxu0 %v865
  %6108 = vmatpush.bf16.msra.mxu0 %v857
  %6109 = vmatpush.bf16.msra.mxu0 %v849
  %6110 = vmatpush.bf16.msra.mxu0 %v841
  %6111 = vmatpush.bf16.msra.mxu0 %v833
  %6112 = vmatpush.bf16.msra.mxu0 %v825
  %6113 = vmatpush.bf16.msra.mxu0 %v817
  %6114 = vmatpush.bf16.msra.mxu0 %v809
  %6115 = vmatmul.bf16.gmra.mxu0 %v5414
  %v6116 = vpop.f32.mrf.mxu0
  %v6117 = vadd.f32 0.0, %v6116
  %v6118 = vpop.f32.mrf.mxu0
  %6119 = vdwg.mxu0
  %6120 = vmatpush.bf16.msra.mxu0 %v929
  %6121 = vmatpush.bf16.msra.mxu0 %v921
  %6122 = vmatpush.bf16.msra.mxu0 %v913
  %6123 = vmatpush.bf16.msra.mxu0 %v905
  %6124 = vmatpush.bf16.msra.mxu0 %v897
  %6125 = vmatpush.bf16.msra.mxu0 %v889
  %6126 = vmatpush.bf16.msra.mxu0 %v881
  %6127 = vmatpush.bf16.msra.mxu0 %v873
  %6128 = vmatmul.bf16.gmra.mxu0 %v5415
  %v6129 = vpop.f32.mrf.mxu0
  %v6130 = vadd.f32 %v6117, %v6129
  %v6131 = vpop.f32.mrf.mxu0
  %6132 = vdwg.mxu0
  %6133 = vmatpush.bf16.msra.mxu0 %v866
  %6134 = vmatpush.bf16.msra.mxu0 %v858
  %6135 = vmatpush.bf16.msra.mxu0 %v850
  %6136 = vmatpush.bf16.msra.mxu0 %v842
  %6137 = vmatpush.bf16.msra.mxu0 %v834
  %6138 = vmatpush.bf16.msra.mxu0 %v826
  %6139 = vmatpush.bf16.msra.mxu0 %v818
  %6140 = vmatpush.bf16.msra.mxu0 %v810
  %6141 = vmatmul.bf16.gmra.mxu0 %v5414
  %v6142 = vpop.f32.mrf.mxu0
  %v6143 = vadd.f32 0.0, %v6142
  %v6144 = vpop.f32.mrf.mxu0
  %6145 = vdwg.mxu0
  %6146 = vmatpush.bf16.msra.mxu0 %v930
  %6147 = vmatpush.bf16.msra.mxu0 %v922
  %6148 = vmatpush.bf16.msra.mxu0 %v914
  %6149 = vmatpush.bf16.msra.mxu0 %v906
  %6150 = vmatpush.bf16.msra.mxu0 %v898
  %6151 = vmatpush.bf16.msra.mxu0 %v890
  %6152 = vmatpush.bf16.msra.mxu0 %v882
  %6153 = vmatpush.bf16.msra.mxu0 %v874
  %6154 = vmatmul.bf16.gmra.mxu0 %v5415
  %v6155 = vpop.f32.mrf.mxu0
  %v6156 = vadd.f32 %v6143, %v6155
  %v6157 = vpop.f32.mrf.mxu0
  %6158 = vdwg.mxu0
  %6159 = vmatpush.bf16.msra.mxu0 %v867
  %6160 = vmatpush.bf16.msra.mxu0 %v859
  %6161 = vmatpush.bf16.msra.mxu0 %v851
  %6162 = vmatpush.bf16.msra.mxu0 %v843
  %6163 = vmatpush.bf16.msra.mxu0 %v835
  %6164 = vmatpush.bf16.msra.mxu0 %v827
  %6165 = vmatpush.bf16.msra.mxu0 %v819
  %6166 = vmatpush.bf16.msra.mxu0 %v811
  %6167 = vmatmul.bf16.gmra.mxu0 %v5414
  %v6168 = vpop.f32.mrf.mxu0
  %v6169 = vadd.f32 0.0, %v6168
  %v6170 = vpop.f32.mrf.mxu0
  %6171 = vdwg.mxu0
  %6172 = vmatpush.bf16.msra.mxu0 %v931
  %6173 = vmatpush.bf16.msra.mxu0 %v923
  %6174 = vmatpush.bf16.msra.mxu0 %v915
  %6175 = vmatpush.bf16.msra.mxu0 %v907
  %6176 = vmatpush.bf16.msra.mxu0 %v899
  %6177 = vmatpush.bf16.msra.mxu0 %v891
  %6178 = vmatpush.bf16.msra.mxu0 %v883
  %6179 = vmatpush.bf16.msra.mxu0 %v875
  %6180 = vmatmul.bf16.gmra.mxu0 %v5415
  %v6181 = vpop.f32.mrf.mxu0
  %v6182 = vadd.f32 %v6169, %v6181
  %v6183 = vpop.f32.mrf.mxu0
  %6184 = vdwg.mxu0
  %v6185 = vadd.f32 %v5969, %v6000
  %v6186 = vadd.f32 %v5970, %v6026
  %v6187 = vadd.f32 %v5971, %v6052
  %v6188 = vadd.f32 %v5972, %v6078
  %v6189 = vadd.f32 %v5973, %v6104
  %v6190 = vadd.f32 %v5974, %v6130
  %v6191 = vadd.f32 %v5975, %v6156
  %v6192 = vadd.f32 %v5976, %v6182
  %v6193 = vxor.u32 %v6185, 2147483648
  %v6194 = vxor.u32 %v6186, 2147483648
  %v6195 = vmul.f32 %v6193, 1.442695
  %v6196 = vpow.pop %v6195
  %v6197 = vmul.f32 %v6194, 1.442695
  %v6198 = vpow.pop %v6197
  %v6199 = vadd.f32 %v6196, 1.0
  %v6200 = vadd.f32 %v6198, 1.0
  %v6201 = vrcp.pop %v6199
  %v6202 = vmul.f32 %v6199, %v6201
  %v6203 = vsub.f32 1.0, %v6202
  %v6204 = vmul.f32 %v6201, %v6203
  %v6205 = vadd.f32 %v6201, %v6204
  %vm6206 = vweird.f32 %v6199
  %vm6207 = vweird.f32 %v6201
  %vm6208 = vmor %vm6206, %vm6207
  %v6209 = vsel %vm6208, %v6201, %v6205
  %v6210 = vand.u32 2147483647, %v6199
  %vm6211 = vcmp.eq.f32.partialorder %v6210, 8.507059e+37
  %v6212 = vand.u32 %v6199, 2147483648
  %v6213 = vor.u32 1.1754944e-38, %v6212
  %v6214 = vsel %vm6211, %v6213, %v6209
  %v6215 = vmul.f32 1.0, %v6214
  %v6216 = vrcp.pop %v6200
  %v6217 = vmul.f32 %v6200, %v6216
  %v6218 = vsub.f32 1.0, %v6217
  %v6219 = vmul.f32 %v6216, %v6218
  %v6220 = vadd.f32 %v6216, %v6219
  %vm6221 = vweird.f32 %v6200
  %vm6222 = vweird.f32 %v6216
  %vm6223 = vmor %vm6221, %vm6222
  %v6224 = vsel %vm6223, %v6216, %v6220
  %v6225 = vand.u32 2147483647, %v6200
  %vm6226 = vcmp.eq.f32.partialorder %v6225, 8.507059e+37
  %v6227 = vand.u32 %v6200, 2147483648
  %v6228 = vor.u32 1.1754944e-38, %v6227
  %v6229 = vsel %vm6226, %v6228, %v6224
  %v6230 = vmul.f32 1.0, %v6229
  %v6231 = vxor.u32 %v6187, 2147483648
  %v6232 = vxor.u32 %v6188, 2147483648
  %v6233 = vmul.f32 %v6231, 1.442695
  %v6234 = vpow.pop %v6233
  %v6235 = vmul.f32 %v6232, 1.442695
  %v6236 = vpow.pop %v6235
  %v6237 = vadd.f32 %v6234, 1.0
  %v6238 = vadd.f32 %v6236, 1.0
  %v6239 = vrcp.pop %v6237
  %v6240 = vmul.f32 %v6237, %v6239
  %v6241 = vsub.f32 1.0, %v6240
  %v6242 = vmul.f32 %v6239, %v6241
  %v6243 = vadd.f32 %v6239, %v6242
  %vm6244 = vweird.f32 %v6237
  %vm6245 = vweird.f32 %v6239
  %vm6246 = vmor %vm6244, %vm6245
  %v6247 = vsel %vm6246, %v6239, %v6243
  %v6248 = vand.u32 2147483647, %v6237
  %vm6249 = vcmp.eq.f32.partialorder %v6248, 8.507059e+37
  %v6250 = vand.u32 %v6237, 2147483648
  %v6251 = vor.u32 1.1754944e-38, %v6250
  %v6252 = vsel %vm6249, %v6251, %v6247
  %v6253 = vmul.f32 1.0, %v6252
  %v6254 = vrcp.pop %v6238
  %v6255 = vmul.f32 %v6238, %v6254
  %v6256 = vsub.f32 1.0, %v6255
  %v6257 = vmul.f32 %v6254, %v6256
  %v6258 = vadd.f32 %v6254, %v6257
  %vm6259 = vweird.f32 %v6238
  %vm6260 = vweird.f32 %v6254
  %vm6261 = vmor %vm6259, %vm6260
  %v6262 = vsel %vm6261, %v6254, %v6258
  %v6263 = vand.u32 2147483647, %v6238
  %vm6264 = vcmp.eq.f32.partialorder %v6263, 8.507059e+37
  %v6265 = vand.u32 %v6238, 2147483648
  %v6266 = vor.u32 1.1754944e-38, %v6265
  %v6267 = vsel %vm6264, %v6266, %v6262
  %v6268 = vmul.f32 1.0, %v6267
  %v6269 = vtanh.pop %v6189
  %v6270 = vtanh.pop %v6190
  %v6271 = vxor.u32 %v6191, 2147483648
  %v6272 = vxor.u32 %v6192, 2147483648
  %v6273 = vmul.f32 %v6271, 1.442695
  %v6274 = vpow.pop %v6273
  %v6275 = vmul.f32 %v6272, 1.442695
  %v6276 = vpow.pop %v6275
  %v6277 = vadd.f32 %v6274, 1.0
  %v6278 = vadd.f32 %v6276, 1.0
  %v6279 = vrcp.pop %v6277
  %v6280 = vmul.f32 %v6277, %v6279
  %v6281 = vsub.f32 1.0, %v6280
  %v6282 = vmul.f32 %v6279, %v6281
  %v6283 = vadd.f32 %v6279, %v6282
  %vm6284 = vweird.f32 %v6277
  %vm6285 = vweird.f32 %v6279
  %vm6286 = vmor %vm6284, %vm6285
  %v6287 = vsel %vm6286, %v6279, %v6283
  %v6288 = vand.u32 2147483647, %v6277
  %vm6289 = vcmp.eq.f32.partialorder %v6288, 8.507059e+37
  %v6290 = vand.u32 %v6277, 2147483648
  %v6291 = vor.u32 1.1754944e-38, %v6290
  %v6292 = vsel %vm6289, %v6291, %v6287
  %v6293 = vmul.f32 1.0, %v6292
  %v6294 = vrcp.pop %v6278
  %v6295 = vmul.f32 %v6278, %v6294
  %v6296 = vsub.f32 1.0, %v6295
  %v6297 = vmul.f32 %v6294, %v6296
  %v6298 = vadd.f32 %v6294, %v6297
  %vm6299 = vweird.f32 %v6278
  %vm6300 = vweird.f32 %v6294
  %vm6301 = vmor %vm6299, %vm6300
  %v6302 = vsel %vm6301, %v6294, %v6298
  %v6303 = vand.u32 2147483647, %v6278
  %vm6304 = vcmp.eq.f32.partialorder %v6303, 8.507059e+37
  %v6305 = vand.u32 %v6278, 2147483648
  %v6306 = vor.u32 1.1754944e-38, %v6305
  %v6307 = vsel %vm6304, %v6306, %v6302
  %v6308 = vmul.f32 1.0, %v6307
  %v6309 = vmul.f32 %v6253, %v5408
  %v6310 = vmul.f32 %v6268, %v5409
  %v6311 = vmul.f32 %v6215, %v6269
  %v6312 = vmul.f32 %v6230, %v6270
  %v6313 = vadd.f32 %v6309, %v6311
  %v6314 = vadd.f32 %v6310, %v6312
  %v6315 = vtanh.pop %v6313
  %v6316 = vtanh.pop %v6314
  %v6317 = vmul.f32 %v6293, %v6315
  %v6318 = vmul.f32 %v6308, %v6316
  %v6319 = vpack.c.bf16 %v6317, %v6317
  %v6320 = vpack.c.bf16 %v6318, %v6318
  %6321 = vmatpush.bf16.msra.mxu0 %v1861
  %6322 = vmatpush.bf16.msra.mxu0 %v1853
  %6323 = vmatpush.bf16.msra.mxu0 %v1845
  %6324 = vmatpush.bf16.msra.mxu0 %v1837
  %6325 = vmatpush.bf16.msra.mxu0 %v1829
  %6326 = vmatpush.bf16.msra.mxu0 %v1821
  %6327 = vmatpush.bf16.msra.mxu0 %v1813
  %6328 = vmatpush.bf16.msra.mxu0 %v1805
  %6329 = vmatmul.bf16.gmra.mxu0 %v6319
  %v6330 = vpop.f32.mrf.mxu0
  %v6331 = vadd.f32 %v1405, %v6330
  %v6332 = vpop.f32.mrf.mxu0
  %6333 = vdwg.mxu0
  %6334 = vmatpush.bf16.msra.mxu0 %v1925
  %6335 = vmatpush.bf16.msra.mxu0 %v1917
  %6336 = vmatpush.bf16.msra.mxu0 %v1909
  %6337 = vmatpush.bf16.msra.mxu0 %v1901
  %6338 = vmatpush.bf16.msra.mxu0 %v1893
  %6339 = vmatpush.bf16.msra.mxu0 %v1885
  %6340 = vmatpush.bf16.msra.mxu0 %v1877
  %6341 = vmatpush.bf16.msra.mxu0 %v1869
  %6342 = vmatmul.bf16.gmra.mxu0 %v6320
  %v6343 = vpop.f32.mrf.mxu0
  %v6344 = vadd.f32 %v6331, %v6343
  %v6345 = vpop.f32.mrf.mxu0
  %6346 = vdwg.mxu0
  %6347 = vmatpush.bf16.msra.mxu0 %v1862
  %6348 = vmatpush.bf16.msra.mxu0 %v1854
  %6349 = vmatpush.bf16.msra.mxu0 %v1846
  %6350 = vmatpush.bf16.msra.mxu0 %v1838
  %6351 = vmatpush.bf16.msra.mxu0 %v1830
  %6352 = vmatpush.bf16.msra.mxu0 %v1822
  %6353 = vmatpush.bf16.msra.mxu0 %v1814
  %6354 = vmatpush.bf16.msra.mxu0 %v1806
  %6355 = vmatmul.bf16.gmra.mxu0 %v6319
  %v6356 = vpop.f32.mrf.mxu0
  %v6357 = vadd.f32 %v1406, %v6356
  %v6358 = vpop.f32.mrf.mxu0
  %6359 = vdwg.mxu0
  %6360 = vmatpush.bf16.msra.mxu0 %v1926
  %6361 = vmatpush.bf16.msra.mxu0 %v1918
  %6362 = vmatpush.bf16.msra.mxu0 %v1910
  %6363 = vmatpush.bf16.msra.mxu0 %v1902
  %6364 = vmatpush.bf16.msra.mxu0 %v1894
  %6365 = vmatpush.bf16.msra.mxu0 %v1886
  %6366 = vmatpush.bf16.msra.mxu0 %v1878
  %6367 = vmatpush.bf16.msra.mxu0 %v1870
  %6368 = vmatmul.bf16.gmra.mxu0 %v6320
  %v6369 = vpop.f32.mrf.mxu0
  %v6370 = vadd.f32 %v6357, %v6369
  %v6371 = vpop.f32.mrf.mxu0
  %6372 = vdwg.mxu0
  %6373 = vmatpush.bf16.msra.mxu0 %v1863
  %6374 = vmatpush.bf16.msra.mxu0 %v1855
  %6375 = vmatpush.bf16.msra.mxu0 %v1847
  %6376 = vmatpush.bf16.msra.mxu0 %v1839
  %6377 = vmatpush.bf16.msra.mxu0 %v1831
  %6378 = vmatpush.bf16.msra.mxu0 %v1823
  %6379 = vmatpush.bf16.msra.mxu0 %v1815
  %6380 = vmatpush.bf16.msra.mxu0 %v1807
  %6381 = vmatmul.bf16.gmra.mxu0 %v6319
  %v6382 = vpop.f32.mrf.mxu0
  %v6383 = vadd.f32 %v1407, %v6382
  %v6384 = vpop.f32.mrf.mxu0
  %6385 = vdwg.mxu0
  %6386 = vmatpush.bf16.msra.mxu0 %v1927
  %6387 = vmatpush.bf16.msra.mxu0 %v1919
  %6388 = vmatpush.bf16.msra.mxu0 %v1911
  %6389 = vmatpush.bf16.msra.mxu0 %v1903
  %6390 = vmatpush.bf16.msra.mxu0 %v1895
  %6391 = vmatpush.bf16.msra.mxu0 %v1887
  %6392 = vmatpush.bf16.msra.mxu0 %v1879
  %6393 = vmatpush.bf16.msra.mxu0 %v1871
  %6394 = vmatmul.bf16.gmra.mxu0 %v6320
  %v6395 = vpop.f32.mrf.mxu0
  %v6396 = vadd.f32 %v6383, %v6395
  %v6397 = vpop.f32.mrf.mxu0
  %6398 = vdwg.mxu0
  %6399 = vmatpush.bf16.msra.mxu0 %v1864
  %6400 = vmatpush.bf16.msra.mxu0 %v1856
  %6401 = vmatpush.bf16.msra.mxu0 %v1848
  %6402 = vmatpush.bf16.msra.mxu0 %v1840
  %6403 = vmatpush.bf16.msra.mxu0 %v1832
  %6404 = vmatpush.bf16.msra.mxu0 %v1824
  %6405 = vmatpush.bf16.msra.mxu0 %v1816
  %6406 = vmatpush.bf16.msra.mxu0 %v1808
  %6407 = vmatmul.bf16.gmra.mxu0 %v6319
  %v6408 = vpop.f32.mrf.mxu0
  %v6409 = vadd.f32 %v1408, %v6408
  %v6410 = vpop.f32.mrf.mxu0
  %6411 = vdwg.mxu0
  %6412 = vmatpush.bf16.msra.mxu0 %v1928
  %6413 = vmatpush.bf16.msra.mxu0 %v1920
  %6414 = vmatpush.bf16.msra.mxu0 %v1912
  %6415 = vmatpush.bf16.msra.mxu0 %v1904
  %6416 = vmatpush.bf16.msra.mxu0 %v1896
  %6417 = vmatpush.bf16.msra.mxu0 %v1888
  %6418 = vmatpush.bf16.msra.mxu0 %v1880
  %6419 = vmatpush.bf16.msra.mxu0 %v1872
  %6420 = vmatmul.bf16.gmra.mxu0 %v6320
  %v6421 = vpop.f32.mrf.mxu0
  %v6422 = vadd.f32 %v6409, %v6421
  %v6423 = vpop.f32.mrf.mxu0
  %6424 = vdwg.mxu0
  %6425 = vmatpush.bf16.msra.mxu0 %v1865
  %6426 = vmatpush.bf16.msra.mxu0 %v1857
  %6427 = vmatpush.bf16.msra.mxu0 %v1849
  %6428 = vmatpush.bf16.msra.mxu0 %v1841
  %6429 = vmatpush.bf16.msra.mxu0 %v1833
  %6430 = vmatpush.bf16.msra.mxu0 %v1825
  %6431 = vmatpush.bf16.msra.mxu0 %v1817
  %6432 = vmatpush.bf16.msra.mxu0 %v1809
  %6433 = vmatmul.bf16.gmra.mxu0 %v6319
  %v6434 = vpop.f32.mrf.mxu0
  %v6435 = vadd.f32 %v1409, %v6434
  %v6436 = vpop.f32.mrf.mxu0
  %6437 = vdwg.mxu0
  %6438 = vmatpush.bf16.msra.mxu0 %v1929
  %6439 = vmatpush.bf16.msra.mxu0 %v1921
  %6440 = vmatpush.bf16.msra.mxu0 %v1913
  %6441 = vmatpush.bf16.msra.mxu0 %v1905
  %6442 = vmatpush.bf16.msra.mxu0 %v1897
  %6443 = vmatpush.bf16.msra.mxu0 %v1889
  %6444 = vmatpush.bf16.msra.mxu0 %v1881
  %6445 = vmatpush.bf16.msra.mxu0 %v1873
  %6446 = vmatmul.bf16.gmra.mxu0 %v6320
  %v6447 = vpop.f32.mrf.mxu0
  %v6448 = vadd.f32 %v6435, %v6447
  %v6449 = vpop.f32.mrf.mxu0
  %6450 = vdwg.mxu0
  %6451 = vmatpush.bf16.msra.mxu0 %v1866
  %6452 = vmatpush.bf16.msra.mxu0 %v1858
  %6453 = vmatpush.bf16.msra.mxu0 %v1850
  %6454 = vmatpush.bf16.msra.mxu0 %v1842
  %6455 = vmatpush.bf16.msra.mxu0 %v1834
  %6456 = vmatpush.bf16.msra.mxu0 %v1826
  %6457 = vmatpush.bf16.msra.mxu0 %v1818
  %6458 = vmatpush.bf16.msra.mxu0 %v1810
  %6459 = vmatmul.bf16.gmra.mxu0 %v6319
  %v6460 = vpop.f32.mrf.mxu0
  %v6461 = vadd.f32 %v1410, %v6460
  %v6462 = vpop.f32.mrf.mxu0
  %6463 = vdwg.mxu0
  %6464 = vmatpush.bf16.msra.mxu0 %v1930
  %6465 = vmatpush.bf16.msra.mxu0 %v1922
  %6466 = vmatpush.bf16.msra.mxu0 %v1914
  %6467 = vmatpush.bf16.msra.mxu0 %v1906
  %6468 = vmatpush.bf16.msra.mxu0 %v1898
  %6469 = vmatpush.bf16.msra.mxu0 %v1890
  %6470 = vmatpush.bf16.msra.mxu0 %v1882
  %6471 = vmatpush.bf16.msra.mxu0 %v1874
  %6472 = vmatmul.bf16.gmra.mxu0 %v6320
  %v6473 = vpop.f32.mrf.mxu0
  %v6474 = vadd.f32 %v6461, %v6473
  %v6475 = vpop.f32.mrf.mxu0
  %6476 = vdwg.mxu0
  %6477 = vmatpush.bf16.msra.mxu0 %v1867
  %6478 = vmatpush.bf16.msra.mxu0 %v1859
  %6479 = vmatpush.bf16.msra.mxu0 %v1851
  %6480 = vmatpush.bf16.msra.mxu0 %v1843
  %6481 = vmatpush.bf16.msra.mxu0 %v1835
  %6482 = vmatpush.bf16.msra.mxu0 %v1827
  %6483 = vmatpush.bf16.msra.mxu0 %v1819
  %6484 = vmatpush.bf16.msra.mxu0 %v1811
  %6485 = vmatmul.bf16.gmra.mxu0 %v6319
  %v6486 = vpop.f32.mrf.mxu0
  %v6487 = vadd.f32 %v1411, %v6486
  %v6488 = vpop.f32.mrf.mxu0
  %6489 = vdwg.mxu0
  %6490 = vmatpush.bf16.msra.mxu0 %v1931
  %6491 = vmatpush.bf16.msra.mxu0 %v1923
  %6492 = vmatpush.bf16.msra.mxu0 %v1915
  %6493 = vmatpush.bf16.msra.mxu0 %v1907
  %6494 = vmatpush.bf16.msra.mxu0 %v1899
  %6495 = vmatpush.bf16.msra.mxu0 %v1891
  %6496 = vmatpush.bf16.msra.mxu0 %v1883
  %6497 = vmatpush.bf16.msra.mxu0 %v1875
  %6498 = vmatmul.bf16.gmra.mxu0 %v6320
  %v6499 = vpop.f32.mrf.mxu0
  %v6500 = vadd.f32 %v6487, %v6499
  %v6501 = vpop.f32.mrf.mxu0
  %6502 = vdwg.mxu0
  %6503 = vmatpush.bf16.msra.mxu0 %v1868
  %6504 = vmatpush.bf16.msra.mxu0 %v1860
  %6505 = vmatpush.bf16.msra.mxu0 %v1852
  %6506 = vmatpush.bf16.msra.mxu0 %v1844
  %6507 = vmatpush.bf16.msra.mxu0 %v1836
  %6508 = vmatpush.bf16.msra.mxu0 %v1828
  %6509 = vmatpush.bf16.msra.mxu0 %v1820
  %6510 = vmatpush.bf16.msra.mxu0 %v1812
  %6511 = vmatmul.bf16.gmra.mxu0 %v6319
  %v6512 = vpop.f32.mrf.mxu0
  %v6513 = vadd.f32 %v1412, %v6512
  %v6514 = vpop.f32.mrf.mxu0
  %6515 = vdwg.mxu0
  %6516 = vmatpush.bf16.msra.mxu0 %v1932
  %6517 = vmatpush.bf16.msra.mxu0 %v1924
  %6518 = vmatpush.bf16.msra.mxu0 %v1916
  %6519 = vmatpush.bf16.msra.mxu0 %v1908
  %6520 = vmatpush.bf16.msra.mxu0 %v1900
  %6521 = vmatpush.bf16.msra.mxu0 %v1892
  %6522 = vmatpush.bf16.msra.mxu0 %v1884
  %6523 = vmatpush.bf16.msra.mxu0 %v1876
  %6524 = vmatmul.bf16.gmra.mxu0 %v6320
  %v6525 = vpop.f32.mrf.mxu0
  %v6526 = vadd.f32 %v6513, %v6525
  %v6527 = vpop.f32.mrf.mxu0
  %6528 = vdwg.mxu0
  %6529 = vmatpush.bf16.msra.mxu0 %v2709
  %6530 = vmatpush.bf16.msra.mxu0 %v2701
  %6531 = vmatpush.bf16.msra.mxu0 %v2693
  %6532 = vmatpush.bf16.msra.mxu0 %v2685
  %6533 = vmatpush.bf16.msra.mxu0 %v2677
  %6534 = vmatpush.bf16.msra.mxu0 %v2669
  %6535 = vmatpush.bf16.msra.mxu0 %v2661
  %6536 = vmatpush.bf16.msra.mxu0 %v2653
  %6537 = vmatmul.bf16.gmra.mxu0 %v5966
  %v6538 = vpop.f32.mrf.mxu0
  %v6539 = vadd.f32 0.0, %v6538
  %v6540 = vpop.f32.mrf.mxu0
  %6541 = vdwg.mxu0
  %6542 = vmatpush.bf16.msra.mxu0 %v2773
  %6543 = vmatpush.bf16.msra.mxu0 %v2765
  %6544 = vmatpush.bf16.msra.mxu0 %v2757
  %6545 = vmatpush.bf16.msra.mxu0 %v2749
  %6546 = vmatpush.bf16.msra.mxu0 %v2741
  %6547 = vmatpush.bf16.msra.mxu0 %v2733
  %6548 = vmatpush.bf16.msra.mxu0 %v2725
  %6549 = vmatpush.bf16.msra.mxu0 %v2717
  %6550 = vmatmul.bf16.gmra.mxu0 %v5967
  %v6551 = vpop.f32.mrf.mxu0
  %v6552 = vadd.f32 %v6539, %v6551
  %v6553 = vpop.f32.mrf.mxu0
  %6554 = vdwg.mxu0
  %6555 = vmatpush.bf16.msra.mxu0 %v2710
  %6556 = vmatpush.bf16.msra.mxu0 %v2702
  %6557 = vmatpush.bf16.msra.mxu0 %v2694
  %6558 = vmatpush.bf16.msra.mxu0 %v2686
  %6559 = vmatpush.bf16.msra.mxu0 %v2678
  %6560 = vmatpush.bf16.msra.mxu0 %v2670
  %6561 = vmatpush.bf16.msra.mxu0 %v2662
  %6562 = vmatpush.bf16.msra.mxu0 %v2654
  %6563 = vmatmul.bf16.gmra.mxu0 %v5966
  %v6564 = vpop.f32.mrf.mxu0
  %v6565 = vadd.f32 0.0, %v6564
  %v6566 = vpop.f32.mrf.mxu0
  %6567 = vdwg.mxu0
  %6568 = vmatpush.bf16.msra.mxu0 %v2774
  %6569 = vmatpush.bf16.msra.mxu0 %v2766
  %6570 = vmatpush.bf16.msra.mxu0 %v2758
  %6571 = vmatpush.bf16.msra.mxu0 %v2750
  %6572 = vmatpush.bf16.msra.mxu0 %v2742
  %6573 = vmatpush.bf16.msra.mxu0 %v2734
  %6574 = vmatpush.bf16.msra.mxu0 %v2726
  %6575 = vmatpush.bf16.msra.mxu0 %v2718
  %6576 = vmatmul.bf16.gmra.mxu0 %v5967
  %v6577 = vpop.f32.mrf.mxu0
  %v6578 = vadd.f32 %v6565, %v6577
  %v6579 = vpop.f32.mrf.mxu0
  %6580 = vdwg.mxu0
  %6581 = vmatpush.bf16.msra.mxu0 %v2711
  %6582 = vmatpush.bf16.msra.mxu0 %v2703
  %6583 = vmatpush.bf16.msra.mxu0 %v2695
  %6584 = vmatpush.bf16.msra.mxu0 %v2687
  %6585 = vmatpush.bf16.msra.mxu0 %v2679
  %6586 = vmatpush.bf16.msra.mxu0 %v2671
  %6587 = vmatpush.bf16.msra.mxu0 %v2663
  %6588 = vmatpush.bf16.msra.mxu0 %v2655
  %6589 = vmatmul.bf16.gmra.mxu0 %v5966
  %v6590 = vpop.f32.mrf.mxu0
  %v6591 = vadd.f32 0.0, %v6590
  %v6592 = vpop.f32.mrf.mxu0
  %6593 = vdwg.mxu0
  %6594 = vmatpush.bf16.msra.mxu0 %v2775
  %6595 = vmatpush.bf16.msra.mxu0 %v2767
  %6596 = vmatpush.bf16.msra.mxu0 %v2759
  %6597 = vmatpush.bf16.msra.mxu0 %v2751
  %6598 = vmatpush.bf16.msra.mxu0 %v2743
  %6599 = vmatpush.bf16.msra.mxu0 %v2735
  %6600 = vmatpush.bf16.msra.mxu0 %v2727
  %6601 = vmatpush.bf16.msra.mxu0 %v2719
  %6602 = vmatmul.bf16.gmra.mxu0 %v5967
  %v6603 = vpop.f32.mrf.mxu0
  %v6604 = vadd.f32 %v6591, %v6603
  %v6605 = vpop.f32.mrf.mxu0
  %6606 = vdwg.mxu0
  %6607 = vmatpush.bf16.msra.mxu0 %v2712
  %6608 = vmatpush.bf16.msra.mxu0 %v2704
  %6609 = vmatpush.bf16.msra.mxu0 %v2696
  %6610 = vmatpush.bf16.msra.mxu0 %v2688
  %6611 = vmatpush.bf16.msra.mxu0 %v2680
  %6612 = vmatpush.bf16.msra.mxu0 %v2672
  %6613 = vmatpush.bf16.msra.mxu0 %v2664
  %6614 = vmatpush.bf16.msra.mxu0 %v2656
  %6615 = vmatmul.bf16.gmra.mxu0 %v5966
  %v6616 = vpop.f32.mrf.mxu0
  %v6617 = vadd.f32 0.0, %v6616
  %v6618 = vpop.f32.mrf.mxu0
  %6619 = vdwg.mxu0
  %6620 = vmatpush.bf16.msra.mxu0 %v2776
  %6621 = vmatpush.bf16.msra.mxu0 %v2768
  %6622 = vmatpush.bf16.msra.mxu0 %v2760
  %6623 = vmatpush.bf16.msra.mxu0 %v2752
  %6624 = vmatpush.bf16.msra.mxu0 %v2744
  %6625 = vmatpush.bf16.msra.mxu0 %v2736
  %6626 = vmatpush.bf16.msra.mxu0 %v2728
  %6627 = vmatpush.bf16.msra.mxu0 %v2720
  %6628 = vmatmul.bf16.gmra.mxu0 %v5967
  %v6629 = vpop.f32.mrf.mxu0
  %v6630 = vadd.f32 %v6617, %v6629
  %v6631 = vpop.f32.mrf.mxu0
  %6632 = vdwg.mxu0
  %6633 = vmatpush.bf16.msra.mxu0 %v2713
  %6634 = vmatpush.bf16.msra.mxu0 %v2705
  %6635 = vmatpush.bf16.msra.mxu0 %v2697
  %6636 = vmatpush.bf16.msra.mxu0 %v2689
  %6637 = vmatpush.bf16.msra.mxu0 %v2681
  %6638 = vmatpush.bf16.msra.mxu0 %v2673
  %6639 = vmatpush.bf16.msra.mxu0 %v2665
  %6640 = vmatpush.bf16.msra.mxu0 %v2657
  %6641 = vmatmul.bf16.gmra.mxu0 %v5966
  %v6642 = vpop.f32.mrf.mxu0
  %v6643 = vadd.f32 0.0, %v6642
  %v6644 = vpop.f32.mrf.mxu0
  %6645 = vdwg.mxu0
  %6646 = vmatpush.bf16.msra.mxu0 %v2777
  %6647 = vmatpush.bf16.msra.mxu0 %v2769
  %6648 = vmatpush.bf16.msra.mxu0 %v2761
  %6649 = vmatpush.bf16.msra.mxu0 %v2753
  %6650 = vmatpush.bf16.msra.mxu0 %v2745
  %6651 = vmatpush.bf16.msra.mxu0 %v2737
  %6652 = vmatpush.bf16.msra.mxu0 %v2729
  %6653 = vmatpush.bf16.msra.mxu0 %v2721
  %6654 = vmatmul.bf16.gmra.mxu0 %v5967
  %v6655 = vpop.f32.mrf.mxu0
  %v6656 = vadd.f32 %v6643, %v6655
  %v6657 = vpop.f32.mrf.mxu0
  %6658 = vdwg.mxu0
  %6659 = vmatpush.bf16.msra.mxu0 %v2714
  %6660 = vmatpush.bf16.msra.mxu0 %v2706
  %6661 = vmatpush.bf16.msra.mxu0 %v2698
  %6662 = vmatpush.bf16.msra.mxu0 %v2690
  %6663 = vmatpush.bf16.msra.mxu0 %v2682
  %6664 = vmatpush.bf16.msra.mxu0 %v2674
  %6665 = vmatpush.bf16.msra.mxu0 %v2666
  %6666 = vmatpush.bf16.msra.mxu0 %v2658
  %6667 = vmatmul.bf16.gmra.mxu0 %v5966
  %v6668 = vpop.f32.mrf.mxu0
  %v6669 = vadd.f32 0.0, %v6668
  %v6670 = vpop.f32.mrf.mxu0
  %6671 = vdwg.mxu0
  %6672 = vmatpush.bf16.msra.mxu0 %v2778
  %6673 = vmatpush.bf16.msra.mxu0 %v2770
  %6674 = vmatpush.bf16.msra.mxu0 %v2762
  %6675 = vmatpush.bf16.msra.mxu0 %v2754
  %6676 = vmatpush.bf16.msra.mxu0 %v2746
  %6677 = vmatpush.bf16.msra.mxu0 %v2738
  %6678 = vmatpush.bf16.msra.mxu0 %v2730
  %6679 = vmatpush.bf16.msra.mxu0 %v2722
  %6680 = vmatmul.bf16.gmra.mxu0 %v5967
  %v6681 = vpop.f32.mrf.mxu0
  %v6682 = vadd.f32 %v6669, %v6681
  %v6683 = vpop.f32.mrf.mxu0
  %6684 = vdwg.mxu0
  %6685 = vmatpush.bf16.msra.mxu0 %v2715
  %6686 = vmatpush.bf16.msra.mxu0 %v2707
  %6687 = vmatpush.bf16.msra.mxu0 %v2699
  %6688 = vmatpush.bf16.msra.mxu0 %v2691
  %6689 = vmatpush.bf16.msra.mxu0 %v2683
  %6690 = vmatpush.bf16.msra.mxu0 %v2675
  %6691 = vmatpush.bf16.msra.mxu0 %v2667
  %6692 = vmatpush.bf16.msra.mxu0 %v2659
  %6693 = vmatmul.bf16.gmra.mxu0 %v5966
  %v6694 = vpop.f32.mrf.mxu0
  %v6695 = vadd.f32 0.0, %v6694
  %v6696 = vpop.f32.mrf.mxu0
  %6697 = vdwg.mxu0
  %6698 = vmatpush.bf16.msra.mxu0 %v2779
  %6699 = vmatpush.bf16.msra.mxu0 %v2771
  %6700 = vmatpush.bf16.msra.mxu0 %v2763
  %6701 = vmatpush.bf16.msra.mxu0 %v2755
  %6702 = vmatpush.bf16.msra.mxu0 %v2747
  %6703 = vmatpush.bf16.msra.mxu0 %v2739
  %6704 = vmatpush.bf16.msra.mxu0 %v2731
  %6705 = vmatpush.bf16.msra.mxu0 %v2723
  %6706 = vmatmul.bf16.gmra.mxu0 %v5967
  %v6707 = vpop.f32.mrf.mxu0
  %v6708 = vadd.f32 %v6695, %v6707
  %v6709 = vpop.f32.mrf.mxu0
  %6710 = vdwg.mxu0
  %6711 = vmatpush.bf16.msra.mxu0 %v2716
  %6712 = vmatpush.bf16.msra.mxu0 %v2708
  %6713 = vmatpush.bf16.msra.mxu0 %v2700
  %6714 = vmatpush.bf16.msra.mxu0 %v2692
  %6715 = vmatpush.bf16.msra.mxu0 %v2684
  %6716 = vmatpush.bf16.msra.mxu0 %v2676
  %6717 = vmatpush.bf16.msra.mxu0 %v2668
  %6718 = vmatpush.bf16.msra.mxu0 %v2660
  %6719 = vmatmul.bf16.gmra.mxu0 %v5966
  %v6720 = vpop.f32.mrf.mxu0
  %v6721 = vadd.f32 0.0, %v6720
  %v6722 = vpop.f32.mrf.mxu0
  %6723 = vdwg.mxu0
  %6724 = vmatpush.bf16.msra.mxu0 %v2780
  %6725 = vmatpush.bf16.msra.mxu0 %v2772
  %6726 = vmatpush.bf16.msra.mxu0 %v2764
  %6727 = vmatpush.bf16.msra.mxu0 %v2756
  %6728 = vmatpush.bf16.msra.mxu0 %v2748
  %6729 = vmatpush.bf16.msra.mxu0 %v2740
  %6730 = vmatpush.bf16.msra.mxu0 %v2732
  %6731 = vmatpush.bf16.msra.mxu0 %v2724
  %6732 = vmatmul.bf16.gmra.mxu0 %v5967
  %v6733 = vpop.f32.mrf.mxu0
  %v6734 = vadd.f32 %v6721, %v6733
  %v6735 = vpop.f32.mrf.mxu0
  %6736 = vdwg.mxu0
  %v6737 = vadd.f32 %v6344, %v6552
  %v6738 = vadd.f32 %v6370, %v6578
  %v6739 = vadd.f32 %v6396, %v6604
  %v6740 = vadd.f32 %v6422, %v6630
  %v6741 = vadd.f32 %v6448, %v6656
  %v6742 = vadd.f32 %v6474, %v6682
  %v6743 = vadd.f32 %v6500, %v6708
  %v6744 = vadd.f32 %v6526, %v6734
  %v6745 = vxor.u32 %v6737, 2147483648
  %v6746 = vxor.u32 %v6738, 2147483648
  %v6747 = vmul.f32 %v6745, 1.442695
  %v6748 = vpow.pop %v6747
  %v6749 = vmul.f32 %v6746, 1.442695
  %v6750 = vpow.pop %v6749
  %v6751 = vadd.f32 %v6748, 1.0
  %v6752 = vadd.f32 %v6750, 1.0
  %v6753 = vrcp.pop %v6751
  %v6754 = vmul.f32 %v6751, %v6753
  %v6755 = vsub.f32 1.0, %v6754
  %v6756 = vmul.f32 %v6753, %v6755
  %v6757 = vadd.f32 %v6753, %v6756
  %vm6758 = vweird.f32 %v6751
  %vm6759 = vweird.f32 %v6753
  %vm6760 = vmor %vm6758, %vm6759
  %v6761 = vsel %vm6760, %v6753, %v6757
  %v6762 = vand.u32 2147483647, %v6751
  %vm6763 = vcmp.eq.f32.partialorder %v6762, 8.507059e+37
  %v6764 = vand.u32 %v6751, 2147483648
  %v6765 = vor.u32 1.1754944e-38, %v6764
  %v6766 = vsel %vm6763, %v6765, %v6761
  %v6767 = vmul.f32 1.0, %v6766
  %v6768 = vrcp.pop %v6752
  %v6769 = vmul.f32 %v6752, %v6768
  %v6770 = vsub.f32 1.0, %v6769
  %v6771 = vmul.f32 %v6768, %v6770
  %v6772 = vadd.f32 %v6768, %v6771
  %vm6773 = vweird.f32 %v6752
  %vm6774 = vweird.f32 %v6768
  %vm6775 = vmor %vm6773, %vm6774
  %v6776 = vsel %vm6775, %v6768, %v6772
  %v6777 = vand.u32 2147483647, %v6752
  %vm6778 = vcmp.eq.f32.partialorder %v6777, 8.507059e+37
  %v6779 = vand.u32 %v6752, 2147483648
  %v6780 = vor.u32 1.1754944e-38, %v6779
  %v6781 = vsel %vm6778, %v6780, %v6776
  %v6782 = vmul.f32 1.0, %v6781
  %v6783 = vxor.u32 %v6739, 2147483648
  %v6784 = vxor.u32 %v6740, 2147483648
  %v6785 = vmul.f32 %v6783, 1.442695
  %v6786 = vpow.pop %v6785
  %v6787 = vmul.f32 %v6784, 1.442695
  %v6788 = vpow.pop %v6787
  %v6789 = vadd.f32 %v6786, 1.0
  %v6790 = vadd.f32 %v6788, 1.0
  %v6791 = vrcp.pop %v6789
  %v6792 = vmul.f32 %v6789, %v6791
  %v6793 = vsub.f32 1.0, %v6792
  %v6794 = vmul.f32 %v6791, %v6793
  %v6795 = vadd.f32 %v6791, %v6794
  %vm6796 = vweird.f32 %v6789
  %vm6797 = vweird.f32 %v6791
  %vm6798 = vmor %vm6796, %vm6797
  %v6799 = vsel %vm6798, %v6791, %v6795
  %v6800 = vand.u32 2147483647, %v6789
  %vm6801 = vcmp.eq.f32.partialorder %v6800, 8.507059e+37
  %v6802 = vand.u32 %v6789, 2147483648
  %v6803 = vor.u32 1.1754944e-38, %v6802
  %v6804 = vsel %vm6801, %v6803, %v6799
  %v6805 = vmul.f32 1.0, %v6804
  %v6806 = vrcp.pop %v6790
  %v6807 = vmul.f32 %v6790, %v6806
  %v6808 = vsub.f32 1.0, %v6807
  %v6809 = vmul.f32 %v6806, %v6808
  %v6810 = vadd.f32 %v6806, %v6809
  %vm6811 = vweird.f32 %v6790
  %vm6812 = vweird.f32 %v6806
  %vm6813 = vmor %vm6811, %vm6812
  %v6814 = vsel %vm6813, %v6806, %v6810
  %v6815 = vand.u32 2147483647, %v6790
  %vm6816 = vcmp.eq.f32.partialorder %v6815, 8.507059e+37
  %v6817 = vand.u32 %v6790, 2147483648
  %v6818 = vor.u32 1.1754944e-38, %v6817
  %v6819 = vsel %vm6816, %v6818, %v6814
  %v6820 = vmul.f32 1.0, %v6819
  %v6821 = vtanh.pop %v6741
  %v6822 = vtanh.pop %v6742
  %v6823 = vxor.u32 %v6743, 2147483648
  %v6824 = vxor.u32 %v6744, 2147483648
  %v6825 = vmul.f32 %v6823, 1.442695
  %v6826 = vpow.pop %v6825
  %v6827 = vmul.f32 %v6824, 1.442695
  %v6828 = vpow.pop %v6827
  %v6829 = vadd.f32 %v6826, 1.0
  %v6830 = vadd.f32 %v6828, 1.0
  %v6831 = vrcp.pop %v6829
  %v6832 = vmul.f32 %v6829, %v6831
  %v6833 = vsub.f32 1.0, %v6832
  %v6834 = vmul.f32 %v6831, %v6833
  %v6835 = vadd.f32 %v6831, %v6834
  %vm6836 = vweird.f32 %v6829
  %vm6837 = vweird.f32 %v6831
  %vm6838 = vmor %vm6836, %vm6837
  %v6839 = vsel %vm6838, %v6831, %v6835
  %v6840 = vand.u32 2147483647, %v6829
  %vm6841 = vcmp.eq.f32.partialorder %v6840, 8.507059e+37
  %v6842 = vand.u32 %v6829, 2147483648
  %v6843 = vor.u32 1.1754944e-38, %v6842
  %v6844 = vsel %vm6841, %v6843, %v6839
  %v6845 = vmul.f32 1.0, %v6844
  %v6846 = vrcp.pop %v6830
  %v6847 = vmul.f32 %v6830, %v6846
  %v6848 = vsub.f32 1.0, %v6847
  %v6849 = vmul.f32 %v6846, %v6848
  %v6850 = vadd.f32 %v6846, %v6849
  %vm6851 = vweird.f32 %v6830
  %vm6852 = vweird.f32 %v6846
  %vm6853 = vmor %vm6851, %vm6852
  %v6854 = vsel %vm6853, %v6846, %v6850
  %v6855 = vand.u32 2147483647, %v6830
  %vm6856 = vcmp.eq.f32.partialorder %v6855, 8.507059e+37
  %v6857 = vand.u32 %v6830, 2147483648
  %v6858 = vor.u32 1.1754944e-38, %v6857
  %v6859 = vsel %vm6856, %v6858, %v6854
  %v6860 = vmul.f32 1.0, %v6859
  %v6861 = vmul.f32 %v6805, %v5960
  %v6862 = vmul.f32 %v6820, %v5961
  %v6863 = vmul.f32 %v6767, %v6821
  %v6864 = vmul.f32 %v6782, %v6822
  %v6865 = vadd.f32 %v6861, %v6863
  %v6866 = vadd.f32 %v6862, %v6864
  %v6867 = vtanh.pop %v6865
  %v6868 = vtanh.pop %v6866
  %v6869 = vmul.f32 %v6845, %v6867
  %v6870 = vmul.f32 %v6860, %v6868
  %v6871 = vpack.c.bf16 %v6869, %v6869
  %v6872 = vpack.c.bf16 %v6870, %v6870
  %s6873 = scalar_lea.vmem %s0, 320
  %v6874 = vld [vmem:[%s6873] sm:$0xff]
  %v6875 = vld [vmem:[%s6873 + $0x8] sm:$0xff]
  %v6876 = vld [vmem:[%s6873 + $0x10] sm:$0xff]
  %v6877 = vld [vmem:[%s6873 + $0x18] sm:$0xff]
  %v6878 = vld [vmem:[%s6873 + $0x20] sm:$0xff]
  %v6879 = vld [vmem:[%s6873 + $0x28] sm:$0xff]
  %v6880 = vld [vmem:[%s6873 + $0x30] sm:$0xff]
  %v6881 = vld [vmem:[%s6873 + $0x38] sm:$0xff]
  %6882 = vmatpush.bf16.msra.mxu0 %v860
  %6883 = vmatpush.bf16.msra.mxu0 %v852
  %6884 = vmatpush.bf16.msra.mxu0 %v844
  %6885 = vmatpush.bf16.msra.mxu0 %v836
  %6886 = vmatpush.bf16.msra.mxu0 %v828
  %6887 = vmatpush.bf16.msra.mxu0 %v820
  %6888 = vmatpush.bf16.msra.mxu0 %v812
  %6889 = vmatpush.bf16.msra.mxu0 %v804
  %6890 = vmatmul.bf16.gmra.mxu0 %v6319
  %v6891 = vpop.f32.mrf.mxu0
  %v6892 = vadd.f32 0.0, %v6891
  %v6893 = vpop.f32.mrf.mxu0
  %6894 = vdwg.mxu0
  %6895 = vmatpush.bf16.msra.mxu0 %v924
  %6896 = vmatpush.bf16.msra.mxu0 %v916
  %6897 = vmatpush.bf16.msra.mxu0 %v908
  %6898 = vmatpush.bf16.msra.mxu0 %v900
  %6899 = vmatpush.bf16.msra.mxu0 %v892
  %6900 = vmatpush.bf16.msra.mxu0 %v884
  %6901 = vmatpush.bf16.msra.mxu0 %v876
  %6902 = vmatpush.bf16.msra.mxu0 %v868
  %6903 = vmatmul.bf16.gmra.mxu0 %v6320
  %v6904 = vpop.f32.mrf.mxu0
  %v6905 = vadd.f32 %v6892, %v6904
  %v6906 = vpop.f32.mrf.mxu0
  %6907 = vdwg.mxu0
  %6908 = vmatpush.bf16.msra.mxu0 %v861
  %6909 = vmatpush.bf16.msra.mxu0 %v853
  %6910 = vmatpush.bf16.msra.mxu0 %v845
  %6911 = vmatpush.bf16.msra.mxu0 %v837
  %6912 = vmatpush.bf16.msra.mxu0 %v829
  %6913 = vmatpush.bf16.msra.mxu0 %v821
  %6914 = vmatpush.bf16.msra.mxu0 %v813
  %6915 = vmatpush.bf16.msra.mxu0 %v805
  %6916 = vmatmul.bf16.gmra.mxu0 %v6319
  %v6917 = vpop.f32.mrf.mxu0
  %v6918 = vadd.f32 0.0, %v6917
  %v6919 = vpop.f32.mrf.mxu0
  %6920 = vdwg.mxu0
  %6921 = vmatpush.bf16.msra.mxu0 %v925
  %6922 = vmatpush.bf16.msra.mxu0 %v917
  %6923 = vmatpush.bf16.msra.mxu0 %v909
  %6924 = vmatpush.bf16.msra.mxu0 %v901
  %6925 = vmatpush.bf16.msra.mxu0 %v893
  %6926 = vmatpush.bf16.msra.mxu0 %v885
  %6927 = vmatpush.bf16.msra.mxu0 %v877
  %6928 = vmatpush.bf16.msra.mxu0 %v869
  %6929 = vmatmul.bf16.gmra.mxu0 %v6320
  %v6930 = vpop.f32.mrf.mxu0
  %v6931 = vadd.f32 %v6918, %v6930
  %v6932 = vpop.f32.mrf.mxu0
  %6933 = vdwg.mxu0
  %6934 = vmatpush.bf16.msra.mxu0 %v862
  %6935 = vmatpush.bf16.msra.mxu0 %v854
  %6936 = vmatpush.bf16.msra.mxu0 %v846
  %6937 = vmatpush.bf16.msra.mxu0 %v838
  %6938 = vmatpush.bf16.msra.mxu0 %v830
  %6939 = vmatpush.bf16.msra.mxu0 %v822
  %6940 = vmatpush.bf16.msra.mxu0 %v814
  %6941 = vmatpush.bf16.msra.mxu0 %v806
  %6942 = vmatmul.bf16.gmra.mxu0 %v6319
  %v6943 = vpop.f32.mrf.mxu0
  %v6944 = vadd.f32 0.0, %v6943
  %v6945 = vpop.f32.mrf.mxu0
  %6946 = vdwg.mxu0
  %6947 = vmatpush.bf16.msra.mxu0 %v926
  %6948 = vmatpush.bf16.msra.mxu0 %v918
  %6949 = vmatpush.bf16.msra.mxu0 %v910
  %6950 = vmatpush.bf16.msra.mxu0 %v902
  %6951 = vmatpush.bf16.msra.mxu0 %v894
  %6952 = vmatpush.bf16.msra.mxu0 %v886
  %6953 = vmatpush.bf16.msra.mxu0 %v878
  %6954 = vmatpush.bf16.msra.mxu0 %v870
  %6955 = vmatmul.bf16.gmra.mxu0 %v6320
  %v6956 = vpop.f32.mrf.mxu0
  %v6957 = vadd.f32 %v6944, %v6956
  %v6958 = vpop.f32.mrf.mxu0
  %6959 = vdwg.mxu0
  %6960 = vmatpush.bf16.msra.mxu0 %v863
  %6961 = vmatpush.bf16.msra.mxu0 %v855
  %6962 = vmatpush.bf16.msra.mxu0 %v847
  %6963 = vmatpush.bf16.msra.mxu0 %v839
  %6964 = vmatpush.bf16.msra.mxu0 %v831
  %6965 = vmatpush.bf16.msra.mxu0 %v823
  %6966 = vmatpush.bf16.msra.mxu0 %v815
  %6967 = vmatpush.bf16.msra.mxu0 %v807
  %6968 = vmatmul.bf16.gmra.mxu0 %v6319
  %v6969 = vpop.f32.mrf.mxu0
  %v6970 = vadd.f32 0.0, %v6969
  %v6971 = vpop.f32.mrf.mxu0
  %6972 = vdwg.mxu0
  %6973 = vmatpush.bf16.msra.mxu0 %v927
  %6974 = vmatpush.bf16.msra.mxu0 %v919
  %6975 = vmatpush.bf16.msra.mxu0 %v911
  %6976 = vmatpush.bf16.msra.mxu0 %v903
  %6977 = vmatpush.bf16.msra.mxu0 %v895
  %6978 = vmatpush.bf16.msra.mxu0 %v887
  %6979 = vmatpush.bf16.msra.mxu0 %v879
  %6980 = vmatpush.bf16.msra.mxu0 %v871
  %6981 = vmatmul.bf16.gmra.mxu0 %v6320
  %v6982 = vpop.f32.mrf.mxu0
  %v6983 = vadd.f32 %v6970, %v6982
  %v6984 = vpop.f32.mrf.mxu0
  %6985 = vdwg.mxu0
  %6986 = vmatpush.bf16.msra.mxu0 %v864
  %6987 = vmatpush.bf16.msra.mxu0 %v856
  %6988 = vmatpush.bf16.msra.mxu0 %v848
  %6989 = vmatpush.bf16.msra.mxu0 %v840
  %6990 = vmatpush.bf16.msra.mxu0 %v832
  %6991 = vmatpush.bf16.msra.mxu0 %v824
  %6992 = vmatpush.bf16.msra.mxu0 %v816
  %6993 = vmatpush.bf16.msra.mxu0 %v808
  %6994 = vmatmul.bf16.gmra.mxu0 %v6319
  %v6995 = vpop.f32.mrf.mxu0
  %v6996 = vadd.f32 0.0, %v6995
  %v6997 = vpop.f32.mrf.mxu0
  %6998 = vdwg.mxu0
  %6999 = vmatpush.bf16.msra.mxu0 %v928
  %7000 = vmatpush.bf16.msra.mxu0 %v920
  %7001 = vmatpush.bf16.msra.mxu0 %v912
  %7002 = vmatpush.bf16.msra.mxu0 %v904
  %7003 = vmatpush.bf16.msra.mxu0 %v896
  %7004 = vmatpush.bf16.msra.mxu0 %v888
  %7005 = vmatpush.bf16.msra.mxu0 %v880
  %7006 = vmatpush.bf16.msra.mxu0 %v872
  %7007 = vmatmul.bf16.gmra.mxu0 %v6320
  %v7008 = vpop.f32.mrf.mxu0
  %v7009 = vadd.f32 %v6996, %v7008
  %v7010 = vpop.f32.mrf.mxu0
  %7011 = vdwg.mxu0
  %7012 = vmatpush.bf16.msra.mxu0 %v865
  %7013 = vmatpush.bf16.msra.mxu0 %v857
  %7014 = vmatpush.bf16.msra.mxu0 %v849
  %7015 = vmatpush.bf16.msra.mxu0 %v841
  %7016 = vmatpush.bf16.msra.mxu0 %v833
  %7017 = vmatpush.bf16.msra.mxu0 %v825
  %7018 = vmatpush.bf16.msra.mxu0 %v817
  %7019 = vmatpush.bf16.msra.mxu0 %v809
  %7020 = vmatmul.bf16.gmra.mxu0 %v6319
  %v7021 = vpop.f32.mrf.mxu0
  %v7022 = vadd.f32 0.0, %v7021
  %v7023 = vpop.f32.mrf.mxu0
  %7024 = vdwg.mxu0
  %7025 = vmatpush.bf16.msra.mxu0 %v929
  %7026 = vmatpush.bf16.msra.mxu0 %v921
  %7027 = vmatpush.bf16.msra.mxu0 %v913
  %7028 = vmatpush.bf16.msra.mxu0 %v905
  %7029 = vmatpush.bf16.msra.mxu0 %v897
  %7030 = vmatpush.bf16.msra.mxu0 %v889
  %7031 = vmatpush.bf16.msra.mxu0 %v881
  %7032 = vmatpush.bf16.msra.mxu0 %v873
  %7033 = vmatmul.bf16.gmra.mxu0 %v6320
  %v7034 = vpop.f32.mrf.mxu0
  %v7035 = vadd.f32 %v7022, %v7034
  %v7036 = vpop.f32.mrf.mxu0
  %7037 = vdwg.mxu0
  %7038 = vmatpush.bf16.msra.mxu0 %v866
  %7039 = vmatpush.bf16.msra.mxu0 %v858
  %7040 = vmatpush.bf16.msra.mxu0 %v850
  %7041 = vmatpush.bf16.msra.mxu0 %v842
  %7042 = vmatpush.bf16.msra.mxu0 %v834
  %7043 = vmatpush.bf16.msra.mxu0 %v826
  %7044 = vmatpush.bf16.msra.mxu0 %v818
  %7045 = vmatpush.bf16.msra.mxu0 %v810
  %7046 = vmatmul.bf16.gmra.mxu0 %v6319
  %v7047 = vpop.f32.mrf.mxu0
  %v7048 = vadd.f32 0.0, %v7047
  %v7049 = vpop.f32.mrf.mxu0
  %7050 = vdwg.mxu0
  %7051 = vmatpush.bf16.msra.mxu0 %v930
  %7052 = vmatpush.bf16.msra.mxu0 %v922
  %7053 = vmatpush.bf16.msra.mxu0 %v914
  %7054 = vmatpush.bf16.msra.mxu0 %v906
  %7055 = vmatpush.bf16.msra.mxu0 %v898
  %7056 = vmatpush.bf16.msra.mxu0 %v890
  %7057 = vmatpush.bf16.msra.mxu0 %v882
  %7058 = vmatpush.bf16.msra.mxu0 %v874
  %7059 = vmatmul.bf16.gmra.mxu0 %v6320
  %v7060 = vpop.f32.mrf.mxu0
  %v7061 = vadd.f32 %v7048, %v7060
  %v7062 = vpop.f32.mrf.mxu0
  %7063 = vdwg.mxu0
  %7064 = vmatpush.bf16.msra.mxu0 %v867
  %7065 = vmatpush.bf16.msra.mxu0 %v859
  %7066 = vmatpush.bf16.msra.mxu0 %v851
  %7067 = vmatpush.bf16.msra.mxu0 %v843
  %7068 = vmatpush.bf16.msra.mxu0 %v835
  %7069 = vmatpush.bf16.msra.mxu0 %v827
  %7070 = vmatpush.bf16.msra.mxu0 %v819
  %7071 = vmatpush.bf16.msra.mxu0 %v811
  %7072 = vmatmul.bf16.gmra.mxu0 %v6319
  %v7073 = vpop.f32.mrf.mxu0
  %v7074 = vadd.f32 0.0, %v7073
  %v7075 = vpop.f32.mrf.mxu0
  %7076 = vdwg.mxu0
  %7077 = vmatpush.bf16.msra.mxu0 %v931
  %7078 = vmatpush.bf16.msra.mxu0 %v923
  %7079 = vmatpush.bf16.msra.mxu0 %v915
  %7080 = vmatpush.bf16.msra.mxu0 %v907
  %7081 = vmatpush.bf16.msra.mxu0 %v899
  %7082 = vmatpush.bf16.msra.mxu0 %v891
  %7083 = vmatpush.bf16.msra.mxu0 %v883
  %7084 = vmatpush.bf16.msra.mxu0 %v875
  %7085 = vmatmul.bf16.gmra.mxu0 %v6320
  %v7086 = vpop.f32.mrf.mxu0
  %v7087 = vadd.f32 %v7074, %v7086
  %v7088 = vpop.f32.mrf.mxu0
  %7089 = vdwg.mxu0
  %v7090 = vadd.f32 %v6874, %v6905
  %v7091 = vadd.f32 %v6875, %v6931
  %v7092 = vadd.f32 %v6876, %v6957
  %v7093 = vadd.f32 %v6877, %v6983
  %v7094 = vadd.f32 %v6878, %v7009
  %v7095 = vadd.f32 %v6879, %v7035
  %v7096 = vadd.f32 %v6880, %v7061
  %v7097 = vadd.f32 %v6881, %v7087
  %v7098 = vxor.u32 %v7090, 2147483648
  %v7099 = vxor.u32 %v7091, 2147483648
  %v7100 = vmul.f32 %v7098, 1.442695
  %v7101 = vpow.pop %v7100
  %v7102 = vmul.f32 %v7099, 1.442695
  %v7103 = vpow.pop %v7102
  %v7104 = vadd.f32 %v7101, 1.0
  %v7105 = vadd.f32 %v7103, 1.0
  %v7106 = vrcp.pop %v7104
  %v7107 = vmul.f32 %v7104, %v7106
  %v7108 = vsub.f32 1.0, %v7107
  %v7109 = vmul.f32 %v7106, %v7108
  %v7110 = vadd.f32 %v7106, %v7109
  %vm7111 = vweird.f32 %v7104
  %vm7112 = vweird.f32 %v7106
  %vm7113 = vmor %vm7111, %vm7112
  %v7114 = vsel %vm7113, %v7106, %v7110
  %v7115 = vand.u32 2147483647, %v7104
  %vm7116 = vcmp.eq.f32.partialorder %v7115, 8.507059e+37
  %v7117 = vand.u32 %v7104, 2147483648
  %v7118 = vor.u32 1.1754944e-38, %v7117
  %v7119 = vsel %vm7116, %v7118, %v7114
  %v7120 = vmul.f32 1.0, %v7119
  %v7121 = vrcp.pop %v7105
  %v7122 = vmul.f32 %v7105, %v7121
  %v7123 = vsub.f32 1.0, %v7122
  %v7124 = vmul.f32 %v7121, %v7123
  %v7125 = vadd.f32 %v7121, %v7124
  %vm7126 = vweird.f32 %v7105
  %vm7127 = vweird.f32 %v7121
  %vm7128 = vmor %vm7126, %vm7127
  %v7129 = vsel %vm7128, %v7121, %v7125
  %v7130 = vand.u32 2147483647, %v7105
  %vm7131 = vcmp.eq.f32.partialorder %v7130, 8.507059e+37
  %v7132 = vand.u32 %v7105, 2147483648
  %v7133 = vor.u32 1.1754944e-38, %v7132
  %v7134 = vsel %vm7131, %v7133, %v7129
  %v7135 = vmul.f32 1.0, %v7134
  %v7136 = vxor.u32 %v7092, 2147483648
  %v7137 = vxor.u32 %v7093, 2147483648
  %v7138 = vmul.f32 %v7136, 1.442695
  %v7139 = vpow.pop %v7138
  %v7140 = vmul.f32 %v7137, 1.442695
  %v7141 = vpow.pop %v7140
  %v7142 = vadd.f32 %v7139, 1.0
  %v7143 = vadd.f32 %v7141, 1.0
  %v7144 = vrcp.pop %v7142
  %v7145 = vmul.f32 %v7142, %v7144
  %v7146 = vsub.f32 1.0, %v7145
  %v7147 = vmul.f32 %v7144, %v7146
  %v7148 = vadd.f32 %v7144, %v7147
  %vm7149 = vweird.f32 %v7142
  %vm7150 = vweird.f32 %v7144
  %vm7151 = vmor %vm7149, %vm7150
  %v7152 = vsel %vm7151, %v7144, %v7148
  %v7153 = vand.u32 2147483647, %v7142
  %vm7154 = vcmp.eq.f32.partialorder %v7153, 8.507059e+37
  %v7155 = vand.u32 %v7142, 2147483648
  %v7156 = vor.u32 1.1754944e-38, %v7155
  %v7157 = vsel %vm7154, %v7156, %v7152
  %v7158 = vmul.f32 1.0, %v7157
  %v7159 = vrcp.pop %v7143
  %v7160 = vmul.f32 %v7143, %v7159
  %v7161 = vsub.f32 1.0, %v7160
  %v7162 = vmul.f32 %v7159, %v7161
  %v7163 = vadd.f32 %v7159, %v7162
  %vm7164 = vweird.f32 %v7143
  %vm7165 = vweird.f32 %v7159
  %vm7166 = vmor %vm7164, %vm7165
  %v7167 = vsel %vm7166, %v7159, %v7163
  %v7168 = vand.u32 2147483647, %v7143
  %vm7169 = vcmp.eq.f32.partialorder %v7168, 8.507059e+37
  %v7170 = vand.u32 %v7143, 2147483648
  %v7171 = vor.u32 1.1754944e-38, %v7170
  %v7172 = vsel %vm7169, %v7171, %v7167
  %v7173 = vmul.f32 1.0, %v7172
  %v7174 = vtanh.pop %v7094
  %v7175 = vtanh.pop %v7095
  %v7176 = vxor.u32 %v7096, 2147483648
  %v7177 = vxor.u32 %v7097, 2147483648
  %v7178 = vmul.f32 %v7176, 1.442695
  %v7179 = vpow.pop %v7178
  %v7180 = vmul.f32 %v7177, 1.442695
  %v7181 = vpow.pop %v7180
  %v7182 = vadd.f32 %v7179, 1.0
  %v7183 = vadd.f32 %v7181, 1.0
  %v7184 = vrcp.pop %v7182
  %v7185 = vmul.f32 %v7182, %v7184
  %v7186 = vsub.f32 1.0, %v7185
  %v7187 = vmul.f32 %v7184, %v7186
  %v7188 = vadd.f32 %v7184, %v7187
  %vm7189 = vweird.f32 %v7182
  %vm7190 = vweird.f32 %v7184
  %vm7191 = vmor %vm7189, %vm7190
  %v7192 = vsel %vm7191, %v7184, %v7188
  %v7193 = vand.u32 2147483647, %v7182
  %vm7194 = vcmp.eq.f32.partialorder %v7193, 8.507059e+37
  %v7195 = vand.u32 %v7182, 2147483648
  %v7196 = vor.u32 1.1754944e-38, %v7195
  %v7197 = vsel %vm7194, %v7196, %v7192
  %v7198 = vmul.f32 1.0, %v7197
  %v7199 = vrcp.pop %v7183
  %v7200 = vmul.f32 %v7183, %v7199
  %v7201 = vsub.f32 1.0, %v7200
  %v7202 = vmul.f32 %v7199, %v7201
  %v7203 = vadd.f32 %v7199, %v7202
  %vm7204 = vweird.f32 %v7183
  %vm7205 = vweird.f32 %v7199
  %vm7206 = vmor %vm7204, %vm7205
  %v7207 = vsel %vm7206, %v7199, %v7203
  %v7208 = vand.u32 2147483647, %v7183
  %vm7209 = vcmp.eq.f32.partialorder %v7208, 8.507059e+37
  %v7210 = vand.u32 %v7183, 2147483648
  %v7211 = vor.u32 1.1754944e-38, %v7210
  %v7212 = vsel %vm7209, %v7211, %v7207
  %v7213 = vmul.f32 1.0, %v7212
  %v7214 = vmul.f32 %v7158, %v6313
  %v7215 = vmul.f32 %v7173, %v6314
  %v7216 = vmul.f32 %v7120, %v7174
  %v7217 = vmul.f32 %v7135, %v7175
  %v7218 = vadd.f32 %v7214, %v7216
  %v7219 = vadd.f32 %v7215, %v7217
  %v7220 = vtanh.pop %v7218
  %v7221 = vtanh.pop %v7219
  %v7222 = vmul.f32 %v7198, %v7220
  %v7223 = vmul.f32 %v7213, %v7221
  %v7224 = vpack.c.bf16 %v7222, %v7222
  %v7225 = vpack.c.bf16 %v7223, %v7223
  %7226 = vmatpush.bf16.msra.mxu0 %v1861
  %7227 = vmatpush.bf16.msra.mxu0 %v1853
  %7228 = vmatpush.bf16.msra.mxu0 %v1845
  %7229 = vmatpush.bf16.msra.mxu0 %v1837
  %7230 = vmatpush.bf16.msra.mxu0 %v1829
  %7231 = vmatpush.bf16.msra.mxu0 %v1821
  %7232 = vmatpush.bf16.msra.mxu0 %v1813
  %7233 = vmatpush.bf16.msra.mxu0 %v1805
  %7234 = vmatmul.bf16.gmra.mxu0 %v7224
  %v7235 = vpop.f32.mrf.mxu0
  %v7236 = vadd.f32 %v1405, %v7235
  %v7237 = vpop.f32.mrf.mxu0
  %7238 = vdwg.mxu0
  %7239 = vmatpush.bf16.msra.mxu0 %v1925
  %7240 = vmatpush.bf16.msra.mxu0 %v1917
  %7241 = vmatpush.bf16.msra.mxu0 %v1909
  %7242 = vmatpush.bf16.msra.mxu0 %v1901
  %7243 = vmatpush.bf16.msra.mxu0 %v1893
  %7244 = vmatpush.bf16.msra.mxu0 %v1885
  %7245 = vmatpush.bf16.msra.mxu0 %v1877
  %7246 = vmatpush.bf16.msra.mxu0 %v1869
  %7247 = vmatmul.bf16.gmra.mxu0 %v7225
  %v7248 = vpop.f32.mrf.mxu0
  %v7249 = vadd.f32 %v7236, %v7248
  %v7250 = vpop.f32.mrf.mxu0
  %7251 = vdwg.mxu0
  %7252 = vmatpush.bf16.msra.mxu0 %v1862
  %7253 = vmatpush.bf16.msra.mxu0 %v1854
  %7254 = vmatpush.bf16.msra.mxu0 %v1846
  %7255 = vmatpush.bf16.msra.mxu0 %v1838
  %7256 = vmatpush.bf16.msra.mxu0 %v1830
  %7257 = vmatpush.bf16.msra.mxu0 %v1822
  %7258 = vmatpush.bf16.msra.mxu0 %v1814
  %7259 = vmatpush.bf16.msra.mxu0 %v1806
  %7260 = vmatmul.bf16.gmra.mxu0 %v7224
  %v7261 = vpop.f32.mrf.mxu0
  %v7262 = vadd.f32 %v1406, %v7261
  %v7263 = vpop.f32.mrf.mxu0
  %7264 = vdwg.mxu0
  %7265 = vmatpush.bf16.msra.mxu0 %v1926
  %7266 = vmatpush.bf16.msra.mxu0 %v1918
  %7267 = vmatpush.bf16.msra.mxu0 %v1910
  %7268 = vmatpush.bf16.msra.mxu0 %v1902
  %7269 = vmatpush.bf16.msra.mxu0 %v1894
  %7270 = vmatpush.bf16.msra.mxu0 %v1886
  %7271 = vmatpush.bf16.msra.mxu0 %v1878
  %7272 = vmatpush.bf16.msra.mxu0 %v1870
  %7273 = vmatmul.bf16.gmra.mxu0 %v7225
  %v7274 = vpop.f32.mrf.mxu0
  %v7275 = vadd.f32 %v7262, %v7274
  %v7276 = vpop.f32.mrf.mxu0
  %7277 = vdwg.mxu0
  %7278 = vmatpush.bf16.msra.mxu0 %v1863
  %7279 = vmatpush.bf16.msra.mxu0 %v1855
  %7280 = vmatpush.bf16.msra.mxu0 %v1847
  %7281 = vmatpush.bf16.msra.mxu0 %v1839
  %7282 = vmatpush.bf16.msra.mxu0 %v1831
  %7283 = vmatpush.bf16.msra.mxu0 %v1823
  %7284 = vmatpush.bf16.msra.mxu0 %v1815
  %7285 = vmatpush.bf16.msra.mxu0 %v1807
  %7286 = vmatmul.bf16.gmra.mxu0 %v7224
  %v7287 = vpop.f32.mrf.mxu0
  %v7288 = vadd.f32 %v1407, %v7287
  %v7289 = vpop.f32.mrf.mxu0
  %7290 = vdwg.mxu0
  %7291 = vmatpush.bf16.msra.mxu0 %v1927
  %7292 = vmatpush.bf16.msra.mxu0 %v1919
  %7293 = vmatpush.bf16.msra.mxu0 %v1911
  %7294 = vmatpush.bf16.msra.mxu0 %v1903
  %7295 = vmatpush.bf16.msra.mxu0 %v1895
  %7296 = vmatpush.bf16.msra.mxu0 %v1887
  %7297 = vmatpush.bf16.msra.mxu0 %v1879
  %7298 = vmatpush.bf16.msra.mxu0 %v1871
  %7299 = vmatmul.bf16.gmra.mxu0 %v7225
  %v7300 = vpop.f32.mrf.mxu0
  %v7301 = vadd.f32 %v7288, %v7300
  %v7302 = vpop.f32.mrf.mxu0
  %7303 = vdwg.mxu0
  %7304 = vmatpush.bf16.msra.mxu0 %v1864
  %7305 = vmatpush.bf16.msra.mxu0 %v1856
  %7306 = vmatpush.bf16.msra.mxu0 %v1848
  %7307 = vmatpush.bf16.msra.mxu0 %v1840
  %7308 = vmatpush.bf16.msra.mxu0 %v1832
  %7309 = vmatpush.bf16.msra.mxu0 %v1824
  %7310 = vmatpush.bf16.msra.mxu0 %v1816
  %7311 = vmatpush.bf16.msra.mxu0 %v1808
  %7312 = vmatmul.bf16.gmra.mxu0 %v7224
  %v7313 = vpop.f32.mrf.mxu0
  %v7314 = vadd.f32 %v1408, %v7313
  %v7315 = vpop.f32.mrf.mxu0
  %7316 = vdwg.mxu0
  %7317 = vmatpush.bf16.msra.mxu0 %v1928
  %7318 = vmatpush.bf16.msra.mxu0 %v1920
  %7319 = vmatpush.bf16.msra.mxu0 %v1912
  %7320 = vmatpush.bf16.msra.mxu0 %v1904
  %7321 = vmatpush.bf16.msra.mxu0 %v1896
  %7322 = vmatpush.bf16.msra.mxu0 %v1888
  %7323 = vmatpush.bf16.msra.mxu0 %v1880
  %7324 = vmatpush.bf16.msra.mxu0 %v1872
  %7325 = vmatmul.bf16.gmra.mxu0 %v7225
  %v7326 = vpop.f32.mrf.mxu0
  %v7327 = vadd.f32 %v7314, %v7326
  %v7328 = vpop.f32.mrf.mxu0
  %7329 = vdwg.mxu0
  %7330 = vmatpush.bf16.msra.mxu0 %v1865
  %7331 = vmatpush.bf16.msra.mxu0 %v1857
  %7332 = vmatpush.bf16.msra.mxu0 %v1849
  %7333 = vmatpush.bf16.msra.mxu0 %v1841
  %7334 = vmatpush.bf16.msra.mxu0 %v1833
  %7335 = vmatpush.bf16.msra.mxu0 %v1825
  %7336 = vmatpush.bf16.msra.mxu0 %v1817
  %7337 = vmatpush.bf16.msra.mxu0 %v1809
  %7338 = vmatmul.bf16.gmra.mxu0 %v7224
  %v7339 = vpop.f32.mrf.mxu0
  %v7340 = vadd.f32 %v1409, %v7339
  %v7341 = vpop.f32.mrf.mxu0
  %7342 = vdwg.mxu0
  %7343 = vmatpush.bf16.msra.mxu0 %v1929
  %7344 = vmatpush.bf16.msra.mxu0 %v1921
  %7345 = vmatpush.bf16.msra.mxu0 %v1913
  %7346 = vmatpush.bf16.msra.mxu0 %v1905
  %7347 = vmatpush.bf16.msra.mxu0 %v1897
  %7348 = vmatpush.bf16.msra.mxu0 %v1889
  %7349 = vmatpush.bf16.msra.mxu0 %v1881
  %7350 = vmatpush.bf16.msra.mxu0 %v1873
  %7351 = vmatmul.bf16.gmra.mxu0 %v7225
  %v7352 = vpop.f32.mrf.mxu0
  %v7353 = vadd.f32 %v7340, %v7352
  %v7354 = vpop.f32.mrf.mxu0
  %7355 = vdwg.mxu0
  %7356 = vmatpush.bf16.msra.mxu0 %v1866
  %7357 = vmatpush.bf16.msra.mxu0 %v1858
  %7358 = vmatpush.bf16.msra.mxu0 %v1850
  %7359 = vmatpush.bf16.msra.mxu0 %v1842
  %7360 = vmatpush.bf16.msra.mxu0 %v1834
  %7361 = vmatpush.bf16.msra.mxu0 %v1826
  %7362 = vmatpush.bf16.msra.mxu0 %v1818
  %7363 = vmatpush.bf16.msra.mxu0 %v1810
  %7364 = vmatmul.bf16.gmra.mxu0 %v7224
  %v7365 = vpop.f32.mrf.mxu0
  %v7366 = vadd.f32 %v1410, %v7365
  %v7367 = vpop.f32.mrf.mxu0
  %7368 = vdwg.mxu0
  %7369 = vmatpush.bf16.msra.mxu0 %v1930
  %7370 = vmatpush.bf16.msra.mxu0 %v1922
  %7371 = vmatpush.bf16.msra.mxu0 %v1914
  %7372 = vmatpush.bf16.msra.mxu0 %v1906
  %7373 = vmatpush.bf16.msra.mxu0 %v1898
  %7374 = vmatpush.bf16.msra.mxu0 %v1890
  %7375 = vmatpush.bf16.msra.mxu0 %v1882
  %7376 = vmatpush.bf16.msra.mxu0 %v1874
  %7377 = vmatmul.bf16.gmra.mxu0 %v7225
  %v7378 = vpop.f32.mrf.mxu0
  %v7379 = vadd.f32 %v7366, %v7378
  %v7380 = vpop.f32.mrf.mxu0
  %7381 = vdwg.mxu0
  %7382 = vmatpush.bf16.msra.mxu0 %v1867
  %7383 = vmatpush.bf16.msra.mxu0 %v1859
  %7384 = vmatpush.bf16.msra.mxu0 %v1851
  %7385 = vmatpush.bf16.msra.mxu0 %v1843
  %7386 = vmatpush.bf16.msra.mxu0 %v1835
  %7387 = vmatpush.bf16.msra.mxu0 %v1827
  %7388 = vmatpush.bf16.msra.mxu0 %v1819
  %7389 = vmatpush.bf16.msra.mxu0 %v1811
  %7390 = vmatmul.bf16.gmra.mxu0 %v7224
  %v7391 = vpop.f32.mrf.mxu0
  %v7392 = vadd.f32 %v1411, %v7391
  %v7393 = vpop.f32.mrf.mxu0
  %7394 = vdwg.mxu0
  %7395 = vmatpush.bf16.msra.mxu0 %v1931
  %7396 = vmatpush.bf16.msra.mxu0 %v1923
  %7397 = vmatpush.bf16.msra.mxu0 %v1915
  %7398 = vmatpush.bf16.msra.mxu0 %v1907
  %7399 = vmatpush.bf16.msra.mxu0 %v1899
  %7400 = vmatpush.bf16.msra.mxu0 %v1891
  %7401 = vmatpush.bf16.msra.mxu0 %v1883
  %7402 = vmatpush.bf16.msra.mxu0 %v1875
  %7403 = vmatmul.bf16.gmra.mxu0 %v7225
  %v7404 = vpop.f32.mrf.mxu0
  %v7405 = vadd.f32 %v7392, %v7404
  %v7406 = vpop.f32.mrf.mxu0
  %7407 = vdwg.mxu0
  %7408 = vmatpush.bf16.msra.mxu0 %v1868
  %7409 = vmatpush.bf16.msra.mxu0 %v1860
  %7410 = vmatpush.bf16.msra.mxu0 %v1852
  %7411 = vmatpush.bf16.msra.mxu0 %v1844
  %7412 = vmatpush.bf16.msra.mxu0 %v1836
  %7413 = vmatpush.bf16.msra.mxu0 %v1828
  %7414 = vmatpush.bf16.msra.mxu0 %v1820
  %7415 = vmatpush.bf16.msra.mxu0 %v1812
  %7416 = vmatmul.bf16.gmra.mxu0 %v7224
  %v7417 = vpop.f32.mrf.mxu0
  %v7418 = vadd.f32 %v1412, %v7417
  %v7419 = vpop.f32.mrf.mxu0
  %7420 = vdwg.mxu0
  %7421 = vmatpush.bf16.msra.mxu0 %v1932
  %7422 = vmatpush.bf16.msra.mxu0 %v1924
  %7423 = vmatpush.bf16.msra.mxu0 %v1916
  %7424 = vmatpush.bf16.msra.mxu0 %v1908
  %7425 = vmatpush.bf16.msra.mxu0 %v1900
  %7426 = vmatpush.bf16.msra.mxu0 %v1892
  %7427 = vmatpush.bf16.msra.mxu0 %v1884
  %7428 = vmatpush.bf16.msra.mxu0 %v1876
  %7429 = vmatmul.bf16.gmra.mxu0 %v7225
  %v7430 = vpop.f32.mrf.mxu0
  %v7431 = vadd.f32 %v7418, %v7430
  %v7432 = vpop.f32.mrf.mxu0
  %7433 = vdwg.mxu0
  %7434 = vmatpush.bf16.msra.mxu0 %v2709
  %7435 = vmatpush.bf16.msra.mxu0 %v2701
  %7436 = vmatpush.bf16.msra.mxu0 %v2693
  %7437 = vmatpush.bf16.msra.mxu0 %v2685
  %7438 = vmatpush.bf16.msra.mxu0 %v2677
  %7439 = vmatpush.bf16.msra.mxu0 %v2669
  %7440 = vmatpush.bf16.msra.mxu0 %v2661
  %7441 = vmatpush.bf16.msra.mxu0 %v2653
  %7442 = vmatmul.bf16.gmra.mxu0 %v6871
  %v7443 = vpop.f32.mrf.mxu0
  %v7444 = vadd.f32 0.0, %v7443
  %v7445 = vpop.f32.mrf.mxu0
  %7446 = vdwg.mxu0
  %7447 = vmatpush.bf16.msra.mxu0 %v2773
  %7448 = vmatpush.bf16.msra.mxu0 %v2765
  %7449 = vmatpush.bf16.msra.mxu0 %v2757
  %7450 = vmatpush.bf16.msra.mxu0 %v2749
  %7451 = vmatpush.bf16.msra.mxu0 %v2741
  %7452 = vmatpush.bf16.msra.mxu0 %v2733
  %7453 = vmatpush.bf16.msra.mxu0 %v2725
  %7454 = vmatpush.bf16.msra.mxu0 %v2717
  %7455 = vmatmul.bf16.gmra.mxu0 %v6872
  %v7456 = vpop.f32.mrf.mxu0
  %v7457 = vadd.f32 %v7444, %v7456
  %v7458 = vpop.f32.mrf.mxu0
  %7459 = vdwg.mxu0
  %7460 = vmatpush.bf16.msra.mxu0 %v2710
  %7461 = vmatpush.bf16.msra.mxu0 %v2702
  %7462 = vmatpush.bf16.msra.mxu0 %v2694
  %7463 = vmatpush.bf16.msra.mxu0 %v2686
  %7464 = vmatpush.bf16.msra.mxu0 %v2678
  %7465 = vmatpush.bf16.msra.mxu0 %v2670
  %7466 = vmatpush.bf16.msra.mxu0 %v2662
  %7467 = vmatpush.bf16.msra.mxu0 %v2654
  %7468 = vmatmul.bf16.gmra.mxu0 %v6871
  %v7469 = vpop.f32.mrf.mxu0
  %v7470 = vadd.f32 0.0, %v7469
  %v7471 = vpop.f32.mrf.mxu0
  %7472 = vdwg.mxu0
  %7473 = vmatpush.bf16.msra.mxu0 %v2774
  %7474 = vmatpush.bf16.msra.mxu0 %v2766
  %7475 = vmatpush.bf16.msra.mxu0 %v2758
  %7476 = vmatpush.bf16.msra.mxu0 %v2750
  %7477 = vmatpush.bf16.msra.mxu0 %v2742
  %7478 = vmatpush.bf16.msra.mxu0 %v2734
  %7479 = vmatpush.bf16.msra.mxu0 %v2726
  %7480 = vmatpush.bf16.msra.mxu0 %v2718
  %7481 = vmatmul.bf16.gmra.mxu0 %v6872
  %v7482 = vpop.f32.mrf.mxu0
  %v7483 = vadd.f32 %v7470, %v7482
  %v7484 = vpop.f32.mrf.mxu0
  %7485 = vdwg.mxu0
  %7486 = vmatpush.bf16.msra.mxu0 %v2711
  %7487 = vmatpush.bf16.msra.mxu0 %v2703
  %7488 = vmatpush.bf16.msra.mxu0 %v2695
  %7489 = vmatpush.bf16.msra.mxu0 %v2687
  %7490 = vmatpush.bf16.msra.mxu0 %v2679
  %7491 = vmatpush.bf16.msra.mxu0 %v2671
  %7492 = vmatpush.bf16.msra.mxu0 %v2663
  %7493 = vmatpush.bf16.msra.mxu0 %v2655
  %7494 = vmatmul.bf16.gmra.mxu0 %v6871
  %v7495 = vpop.f32.mrf.mxu0
  %v7496 = vadd.f32 0.0, %v7495
  %v7497 = vpop.f32.mrf.mxu0
  %7498 = vdwg.mxu0
  %7499 = vmatpush.bf16.msra.mxu0 %v2775
  %7500 = vmatpush.bf16.msra.mxu0 %v2767
  %7501 = vmatpush.bf16.msra.mxu0 %v2759
  %7502 = vmatpush.bf16.msra.mxu0 %v2751
  %7503 = vmatpush.bf16.msra.mxu0 %v2743
  %7504 = vmatpush.bf16.msra.mxu0 %v2735
  %7505 = vmatpush.bf16.msra.mxu0 %v2727
  %7506 = vmatpush.bf16.msra.mxu0 %v2719
  %7507 = vmatmul.bf16.gmra.mxu0 %v6872
  %v7508 = vpop.f32.mrf.mxu0
  %v7509 = vadd.f32 %v7496, %v7508
  %v7510 = vpop.f32.mrf.mxu0
  %7511 = vdwg.mxu0
  %7512 = vmatpush.bf16.msra.mxu0 %v2712
  %7513 = vmatpush.bf16.msra.mxu0 %v2704
  %7514 = vmatpush.bf16.msra.mxu0 %v2696
  %7515 = vmatpush.bf16.msra.mxu0 %v2688
  %7516 = vmatpush.bf16.msra.mxu0 %v2680
  %7517 = vmatpush.bf16.msra.mxu0 %v2672
  %7518 = vmatpush.bf16.msra.mxu0 %v2664
  %7519 = vmatpush.bf16.msra.mxu0 %v2656
  %7520 = vmatmul.bf16.gmra.mxu0 %v6871
  %v7521 = vpop.f32.mrf.mxu0
  %v7522 = vadd.f32 0.0, %v7521
  %v7523 = vpop.f32.mrf.mxu0
  %7524 = vdwg.mxu0
  %7525 = vmatpush.bf16.msra.mxu0 %v2776
  %7526 = vmatpush.bf16.msra.mxu0 %v2768
  %7527 = vmatpush.bf16.msra.mxu0 %v2760
  %7528 = vmatpush.bf16.msra.mxu0 %v2752
  %7529 = vmatpush.bf16.msra.mxu0 %v2744
  %7530 = vmatpush.bf16.msra.mxu0 %v2736
  %7531 = vmatpush.bf16.msra.mxu0 %v2728
  %7532 = vmatpush.bf16.msra.mxu0 %v2720
  %7533 = vmatmul.bf16.gmra.mxu0 %v6872
  %v7534 = vpop.f32.mrf.mxu0
  %v7535 = vadd.f32 %v7522, %v7534
  %v7536 = vpop.f32.mrf.mxu0
  %7537 = vdwg.mxu0
  %7538 = vmatpush.bf16.msra.mxu0 %v2713
  %7539 = vmatpush.bf16.msra.mxu0 %v2705
  %7540 = vmatpush.bf16.msra.mxu0 %v2697
  %7541 = vmatpush.bf16.msra.mxu0 %v2689
  %7542 = vmatpush.bf16.msra.mxu0 %v2681
  %7543 = vmatpush.bf16.msra.mxu0 %v2673
  %7544 = vmatpush.bf16.msra.mxu0 %v2665
  %7545 = vmatpush.bf16.msra.mxu0 %v2657
  %7546 = vmatmul.bf16.gmra.mxu0 %v6871
  %v7547 = vpop.f32.mrf.mxu0
  %v7548 = vadd.f32 0.0, %v7547
  %v7549 = vpop.f32.mrf.mxu0
  %7550 = vdwg.mxu0
  %7551 = vmatpush.bf16.msra.mxu0 %v2777
  %7552 = vmatpush.bf16.msra.mxu0 %v2769
  %7553 = vmatpush.bf16.msra.mxu0 %v2761
  %7554 = vmatpush.bf16.msra.mxu0 %v2753
  %7555 = vmatpush.bf16.msra.mxu0 %v2745
  %7556 = vmatpush.bf16.msra.mxu0 %v2737
  %7557 = vmatpush.bf16.msra.mxu0 %v2729
  %7558 = vmatpush.bf16.msra.mxu0 %v2721
  %7559 = vmatmul.bf16.gmra.mxu0 %v6872
  %v7560 = vpop.f32.mrf.mxu0
  %v7561 = vadd.f32 %v7548, %v7560
  %v7562 = vpop.f32.mrf.mxu0
  %7563 = vdwg.mxu0
  %7564 = vmatpush.bf16.msra.mxu0 %v2714
  %7565 = vmatpush.bf16.msra.mxu0 %v2706
  %7566 = vmatpush.bf16.msra.mxu0 %v2698
  %7567 = vmatpush.bf16.msra.mxu0 %v2690
  %7568 = vmatpush.bf16.msra.mxu0 %v2682
  %7569 = vmatpush.bf16.msra.mxu0 %v2674
  %7570 = vmatpush.bf16.msra.mxu0 %v2666
  %7571 = vmatpush.bf16.msra.mxu0 %v2658
  %7572 = vmatmul.bf16.gmra.mxu0 %v6871
  %v7573 = vpop.f32.mrf.mxu0
  %v7574 = vadd.f32 0.0, %v7573
  %v7575 = vpop.f32.mrf.mxu0
  %7576 = vdwg.mxu0
  %7577 = vmatpush.bf16.msra.mxu0 %v2778
  %7578 = vmatpush.bf16.msra.mxu0 %v2770
  %7579 = vmatpush.bf16.msra.mxu0 %v2762
  %7580 = vmatpush.bf16.msra.mxu0 %v2754
  %7581 = vmatpush.bf16.msra.mxu0 %v2746
  %7582 = vmatpush.bf16.msra.mxu0 %v2738
  %7583 = vmatpush.bf16.msra.mxu0 %v2730
  %7584 = vmatpush.bf16.msra.mxu0 %v2722
  %7585 = vmatmul.bf16.gmra.mxu0 %v6872
  %v7586 = vpop.f32.mrf.mxu0
  %v7587 = vadd.f32 %v7574, %v7586
  %v7588 = vpop.f32.mrf.mxu0
  %7589 = vdwg.mxu0
  %7590 = vmatpush.bf16.msra.mxu0 %v2715
  %7591 = vmatpush.bf16.msra.mxu0 %v2707
  %7592 = vmatpush.bf16.msra.mxu0 %v2699
  %7593 = vmatpush.bf16.msra.mxu0 %v2691
  %7594 = vmatpush.bf16.msra.mxu0 %v2683
  %7595 = vmatpush.bf16.msra.mxu0 %v2675
  %7596 = vmatpush.bf16.msra.mxu0 %v2667
  %7597 = vmatpush.bf16.msra.mxu0 %v2659
  %7598 = vmatmul.bf16.gmra.mxu0 %v6871
  %v7599 = vpop.f32.mrf.mxu0
  %v7600 = vadd.f32 0.0, %v7599
  %v7601 = vpop.f32.mrf.mxu0
  %7602 = vdwg.mxu0
  %7603 = vmatpush.bf16.msra.mxu0 %v2779
  %7604 = vmatpush.bf16.msra.mxu0 %v2771
  %7605 = vmatpush.bf16.msra.mxu0 %v2763
  %7606 = vmatpush.bf16.msra.mxu0 %v2755
  %7607 = vmatpush.bf16.msra.mxu0 %v2747
  %7608 = vmatpush.bf16.msra.mxu0 %v2739
  %7609 = vmatpush.bf16.msra.mxu0 %v2731
  %7610 = vmatpush.bf16.msra.mxu0 %v2723
  %7611 = vmatmul.bf16.gmra.mxu0 %v6872
  %v7612 = vpop.f32.mrf.mxu0
  %v7613 = vadd.f32 %v7600, %v7612
  %v7614 = vpop.f32.mrf.mxu0
  %7615 = vdwg.mxu0
  %7616 = vmatpush.bf16.msra.mxu0 %v2716
  %7617 = vmatpush.bf16.msra.mxu0 %v2708
  %7618 = vmatpush.bf16.msra.mxu0 %v2700
  %7619 = vmatpush.bf16.msra.mxu0 %v2692
  %7620 = vmatpush.bf16.msra.mxu0 %v2684
  %7621 = vmatpush.bf16.msra.mxu0 %v2676
  %7622 = vmatpush.bf16.msra.mxu0 %v2668
  %7623 = vmatpush.bf16.msra.mxu0 %v2660
  %7624 = vmatmul.bf16.gmra.mxu0 %v6871
  %v7625 = vpop.f32.mrf.mxu0
  %v7626 = vadd.f32 0.0, %v7625
  %v7627 = vpop.f32.mrf.mxu0
  %7628 = vdwg.mxu0
  %7629 = vmatpush.bf16.msra.mxu0 %v2780
  %7630 = vmatpush.bf16.msra.mxu0 %v2772
  %7631 = vmatpush.bf16.msra.mxu0 %v2764
  %7632 = vmatpush.bf16.msra.mxu0 %v2756
  %7633 = vmatpush.bf16.msra.mxu0 %v2748
  %7634 = vmatpush.bf16.msra.mxu0 %v2740
  %7635 = vmatpush.bf16.msra.mxu0 %v2732
  %7636 = vmatpush.bf16.msra.mxu0 %v2724
  %7637 = vmatmul.bf16.gmra.mxu0 %v6872
  %v7638 = vpop.f32.mrf.mxu0
  %v7639 = vadd.f32 %v7626, %v7638
  %v7640 = vpop.f32.mrf.mxu0
  %7641 = vdwg.mxu0
  %v7642 = vadd.f32 %v7249, %v7457
  %v7643 = vadd.f32 %v7275, %v7483
  %v7644 = vadd.f32 %v7301, %v7509
  %v7645 = vadd.f32 %v7327, %v7535
  %v7646 = vadd.f32 %v7353, %v7561
  %v7647 = vadd.f32 %v7379, %v7587
  %v7648 = vadd.f32 %v7405, %v7613
  %v7649 = vadd.f32 %v7431, %v7639
  %v7650 = vxor.u32 %v7642, 2147483648
  %v7651 = vxor.u32 %v7643, 2147483648
  %v7652 = vmul.f32 %v7650, 1.442695
  %v7653 = vpow.pop %v7652
  %v7654 = vmul.f32 %v7651, 1.442695
  %v7655 = vpow.pop %v7654
  %v7656 = vadd.f32 %v7653, 1.0
  %v7657 = vadd.f32 %v7655, 1.0
  %v7658 = vrcp.pop %v7656
  %v7659 = vmul.f32 %v7656, %v7658
  %v7660 = vsub.f32 1.0, %v7659
  %v7661 = vmul.f32 %v7658, %v7660
  %v7662 = vadd.f32 %v7658, %v7661
  %vm7663 = vweird.f32 %v7656
  %vm7664 = vweird.f32 %v7658
  %vm7665 = vmor %vm7663, %vm7664
  %v7666 = vsel %vm7665, %v7658, %v7662
  %v7667 = vand.u32 2147483647, %v7656
  %vm7668 = vcmp.eq.f32.partialorder %v7667, 8.507059e+37
  %v7669 = vand.u32 %v7656, 2147483648
  %v7670 = vor.u32 1.1754944e-38, %v7669
  %v7671 = vsel %vm7668, %v7670, %v7666
  %v7672 = vmul.f32 1.0, %v7671
  %v7673 = vrcp.pop %v7657
  %v7674 = vmul.f32 %v7657, %v7673
  %v7675 = vsub.f32 1.0, %v7674
  %v7676 = vmul.f32 %v7673, %v7675
  %v7677 = vadd.f32 %v7673, %v7676
  %vm7678 = vweird.f32 %v7657
  %vm7679 = vweird.f32 %v7673
  %vm7680 = vmor %vm7678, %vm7679
  %v7681 = vsel %vm7680, %v7673, %v7677
  %v7682 = vand.u32 2147483647, %v7657
  %vm7683 = vcmp.eq.f32.partialorder %v7682, 8.507059e+37
  %v7684 = vand.u32 %v7657, 2147483648
  %v7685 = vor.u32 1.1754944e-38, %v7684
  %v7686 = vsel %vm7683, %v7685, %v7681
  %v7687 = vmul.f32 1.0, %v7686
  %v7688 = vxor.u32 %v7644, 2147483648
  %v7689 = vxor.u32 %v7645, 2147483648
  %v7690 = vmul.f32 %v7688, 1.442695
  %v7691 = vpow.pop %v7690
  %v7692 = vmul.f32 %v7689, 1.442695
  %v7693 = vpow.pop %v7692
  %v7694 = vadd.f32 %v7691, 1.0
  %v7695 = vadd.f32 %v7693, 1.0
  %v7696 = vrcp.pop %v7694
  %v7697 = vmul.f32 %v7694, %v7696
  %v7698 = vsub.f32 1.0, %v7697
  %v7699 = vmul.f32 %v7696, %v7698
  %v7700 = vadd.f32 %v7696, %v7699
  %vm7701 = vweird.f32 %v7694
  %vm7702 = vweird.f32 %v7696
  %vm7703 = vmor %vm7701, %vm7702
  %v7704 = vsel %vm7703, %v7696, %v7700
  %v7705 = vand.u32 2147483647, %v7694
  %vm7706 = vcmp.eq.f32.partialorder %v7705, 8.507059e+37
  %v7707 = vand.u32 %v7694, 2147483648
  %v7708 = vor.u32 1.1754944e-38, %v7707
  %v7709 = vsel %vm7706, %v7708, %v7704
  %v7710 = vmul.f32 1.0, %v7709
  %v7711 = vrcp.pop %v7695
  %v7712 = vmul.f32 %v7695, %v7711
  %v7713 = vsub.f32 1.0, %v7712
  %v7714 = vmul.f32 %v7711, %v7713
  %v7715 = vadd.f32 %v7711, %v7714
  %vm7716 = vweird.f32 %v7695
  %vm7717 = vweird.f32 %v7711
  %vm7718 = vmor %vm7716, %vm7717
  %v7719 = vsel %vm7718, %v7711, %v7715
  %v7720 = vand.u32 2147483647, %v7695
  %vm7721 = vcmp.eq.f32.partialorder %v7720, 8.507059e+37
  %v7722 = vand.u32 %v7695, 2147483648
  %v7723 = vor.u32 1.1754944e-38, %v7722
  %v7724 = vsel %vm7721, %v7723, %v7719
  %v7725 = vmul.f32 1.0, %v7724
  %v7726 = vtanh.pop %v7646
  %v7727 = vtanh.pop %v7647
  %v7728 = vxor.u32 %v7648, 2147483648
  %v7729 = vxor.u32 %v7649, 2147483648
  %v7730 = vmul.f32 %v7728, 1.442695
  %v7731 = vpow.pop %v7730
  %v7732 = vmul.f32 %v7729, 1.442695
  %v7733 = vpow.pop %v7732
  %v7734 = vadd.f32 %v7731, 1.0
  %v7735 = vadd.f32 %v7733, 1.0
  %v7736 = vrcp.pop %v7734
  %v7737 = vmul.f32 %v7734, %v7736
  %v7738 = vsub.f32 1.0, %v7737
  %v7739 = vmul.f32 %v7736, %v7738
  %v7740 = vadd.f32 %v7736, %v7739
  %vm7741 = vweird.f32 %v7734
  %vm7742 = vweird.f32 %v7736
  %vm7743 = vmor %vm7741, %vm7742
  %v7744 = vsel %vm7743, %v7736, %v7740
  %v7745 = vand.u32 2147483647, %v7734
  %vm7746 = vcmp.eq.f32.partialorder %v7745, 8.507059e+37
  %v7747 = vand.u32 %v7734, 2147483648
  %v7748 = vor.u32 1.1754944e-38, %v7747
  %v7749 = vsel %vm7746, %v7748, %v7744
  %v7750 = vmul.f32 1.0, %v7749
  %v7751 = vrcp.pop %v7735
  %v7752 = vmul.f32 %v7735, %v7751
  %v7753 = vsub.f32 1.0, %v7752
  %v7754 = vmul.f32 %v7751, %v7753
  %v7755 = vadd.f32 %v7751, %v7754
  %vm7756 = vweird.f32 %v7735
  %vm7757 = vweird.f32 %v7751
  %vm7758 = vmor %vm7756, %vm7757
  %v7759 = vsel %vm7758, %v7751, %v7755
  %v7760 = vand.u32 2147483647, %v7735
  %vm7761 = vcmp.eq.f32.partialorder %v7760, 8.507059e+37
  %v7762 = vand.u32 %v7735, 2147483648
  %v7763 = vor.u32 1.1754944e-38, %v7762
  %v7764 = vsel %vm7761, %v7763, %v7759
  %v7765 = vmul.f32 1.0, %v7764
  %v7766 = vmul.f32 %v7710, %v6865
  %v7767 = vmul.f32 %v7725, %v6866
  %v7768 = vmul.f32 %v7672, %v7726
  %v7769 = vmul.f32 %v7687, %v7727
  %v7770 = vadd.f32 %v7766, %v7768
  %v7771 = vadd.f32 %v7767, %v7769
  %v7772 = vtanh.pop %v7770
  %v7773 = vtanh.pop %v7771
  %v7774 = vmul.f32 %v7750, %v7772
  %v7775 = vmul.f32 %v7765, %v7773
  %v7776 = vpack.c.bf16 %v7774, %v7774
  %v7777 = vpack.c.bf16 %v7775, %v7775
  %s7778 = scalar_lea.vmem %s0, 384
  %v7779 = vld [vmem:[%s7778] sm:$0xff]
  %v7780 = vld [vmem:[%s7778 + $0x8] sm:$0xff]
  %v7781 = vld [vmem:[%s7778 + $0x10] sm:$0xff]
  %v7782 = vld [vmem:[%s7778 + $0x18] sm:$0xff]
  %v7783 = vld [vmem:[%s7778 + $0x20] sm:$0xff]
  %v7784 = vld [vmem:[%s7778 + $0x28] sm:$0xff]
  %v7785 = vld [vmem:[%s7778 + $0x30] sm:$0xff]
  %v7786 = vld [vmem:[%s7778 + $0x38] sm:$0xff]
  %7787 = vmatpush.bf16.msra.mxu0 %v860
  %7788 = vmatpush.bf16.msra.mxu0 %v852
  %7789 = vmatpush.bf16.msra.mxu0 %v844
  %7790 = vmatpush.bf16.msra.mxu0 %v836
  %7791 = vmatpush.bf16.msra.mxu0 %v828
  %7792 = vmatpush.bf16.msra.mxu0 %v820
  %7793 = vmatpush.bf16.msra.mxu0 %v812
  %7794 = vmatpush.bf16.msra.mxu0 %v804
  %7795 = vmatmul.bf16.gmra.mxu0 %v7224
  %v7796 = vpop.f32.mrf.mxu0
  %v7797 = vadd.f32 0.0, %v7796
  %v7798 = vpop.f32.mrf.mxu0
  %7799 = vdwg.mxu0
  %7800 = vmatpush.bf16.msra.mxu0 %v924
  %7801 = vmatpush.bf16.msra.mxu0 %v916
  %7802 = vmatpush.bf16.msra.mxu0 %v908
  %7803 = vmatpush.bf16.msra.mxu0 %v900
  %7804 = vmatpush.bf16.msra.mxu0 %v892
  %7805 = vmatpush.bf16.msra.mxu0 %v884
  %7806 = vmatpush.bf16.msra.mxu0 %v876
  %7807 = vmatpush.bf16.msra.mxu0 %v868
  %7808 = vmatmul.bf16.gmra.mxu0 %v7225
  %v7809 = vpop.f32.mrf.mxu0
  %v7810 = vadd.f32 %v7797, %v7809
  %v7811 = vpop.f32.mrf.mxu0
  %7812 = vdwg.mxu0
  %7813 = vmatpush.bf16.msra.mxu0 %v861
  %7814 = vmatpush.bf16.msra.mxu0 %v853
  %7815 = vmatpush.bf16.msra.mxu0 %v845
  %7816 = vmatpush.bf16.msra.mxu0 %v837
  %7817 = vmatpush.bf16.msra.mxu0 %v829
  %7818 = vmatpush.bf16.msra.mxu0 %v821
  %7819 = vmatpush.bf16.msra.mxu0 %v813
  %7820 = vmatpush.bf16.msra.mxu0 %v805
  %7821 = vmatmul.bf16.gmra.mxu0 %v7224
  %v7822 = vpop.f32.mrf.mxu0
  %v7823 = vadd.f32 0.0, %v7822
  %v7824 = vpop.f32.mrf.mxu0
  %7825 = vdwg.mxu0
  %7826 = vmatpush.bf16.msra.mxu0 %v925
  %7827 = vmatpush.bf16.msra.mxu0 %v917
  %7828 = vmatpush.bf16.msra.mxu0 %v909
  %7829 = vmatpush.bf16.msra.mxu0 %v901
  %7830 = vmatpush.bf16.msra.mxu0 %v893
  %7831 = vmatpush.bf16.msra.mxu0 %v885
  %7832 = vmatpush.bf16.msra.mxu0 %v877
  %7833 = vmatpush.bf16.msra.mxu0 %v869
  %7834 = vmatmul.bf16.gmra.mxu0 %v7225
  %v7835 = vpop.f32.mrf.mxu0
  %v7836 = vadd.f32 %v7823, %v7835
  %v7837 = vpop.f32.mrf.mxu0
  %7838 = vdwg.mxu0
  %7839 = vmatpush.bf16.msra.mxu0 %v862
  %7840 = vmatpush.bf16.msra.mxu0 %v854
  %7841 = vmatpush.bf16.msra.mxu0 %v846
  %7842 = vmatpush.bf16.msra.mxu0 %v838
  %7843 = vmatpush.bf16.msra.mxu0 %v830
  %7844 = vmatpush.bf16.msra.mxu0 %v822
  %7845 = vmatpush.bf16.msra.mxu0 %v814
  %7846 = vmatpush.bf16.msra.mxu0 %v806
  %7847 = vmatmul.bf16.gmra.mxu0 %v7224
  %v7848 = vpop.f32.mrf.mxu0
  %v7849 = vadd.f32 0.0, %v7848
  %v7850 = vpop.f32.mrf.mxu0
  %7851 = vdwg.mxu0
  %7852 = vmatpush.bf16.msra.mxu0 %v926
  %7853 = vmatpush.bf16.msra.mxu0 %v918
  %7854 = vmatpush.bf16.msra.mxu0 %v910
  %7855 = vmatpush.bf16.msra.mxu0 %v902
  %7856 = vmatpush.bf16.msra.mxu0 %v894
  %7857 = vmatpush.bf16.msra.mxu0 %v886
  %7858 = vmatpush.bf16.msra.mxu0 %v878
  %7859 = vmatpush.bf16.msra.mxu0 %v870
  %7860 = vmatmul.bf16.gmra.mxu0 %v7225
  %v7861 = vpop.f32.mrf.mxu0
  %v7862 = vadd.f32 %v7849, %v7861
  %v7863 = vpop.f32.mrf.mxu0
  %7864 = vdwg.mxu0
  %7865 = vmatpush.bf16.msra.mxu0 %v863
  %7866 = vmatpush.bf16.msra.mxu0 %v855
  %7867 = vmatpush.bf16.msra.mxu0 %v847
  %7868 = vmatpush.bf16.msra.mxu0 %v839
  %7869 = vmatpush.bf16.msra.mxu0 %v831
  %7870 = vmatpush.bf16.msra.mxu0 %v823
  %7871 = vmatpush.bf16.msra.mxu0 %v815
  %7872 = vmatpush.bf16.msra.mxu0 %v807
  %7873 = vmatmul.bf16.gmra.mxu0 %v7224
  %v7874 = vpop.f32.mrf.mxu0
  %v7875 = vadd.f32 0.0, %v7874
  %v7876 = vpop.f32.mrf.mxu0
  %7877 = vdwg.mxu0
  %7878 = vmatpush.bf16.msra.mxu0 %v927
  %7879 = vmatpush.bf16.msra.mxu0 %v919
  %7880 = vmatpush.bf16.msra.mxu0 %v911
  %7881 = vmatpush.bf16.msra.mxu0 %v903
  %7882 = vmatpush.bf16.msra.mxu0 %v895
  %7883 = vmatpush.bf16.msra.mxu0 %v887
  %7884 = vmatpush.bf16.msra.mxu0 %v879
  %7885 = vmatpush.bf16.msra.mxu0 %v871
  %7886 = vmatmul.bf16.gmra.mxu0 %v7225
  %v7887 = vpop.f32.mrf.mxu0
  %v7888 = vadd.f32 %v7875, %v7887
  %v7889 = vpop.f32.mrf.mxu0
  %7890 = vdwg.mxu0
  %7891 = vmatpush.bf16.msra.mxu0 %v864
  %7892 = vmatpush.bf16.msra.mxu0 %v856
  %7893 = vmatpush.bf16.msra.mxu0 %v848
  %7894 = vmatpush.bf16.msra.mxu0 %v840
  %7895 = vmatpush.bf16.msra.mxu0 %v832
  %7896 = vmatpush.bf16.msra.mxu0 %v824
  %7897 = vmatpush.bf16.msra.mxu0 %v816
  %7898 = vmatpush.bf16.msra.mxu0 %v808
  %7899 = vmatmul.bf16.gmra.mxu0 %v7224
  %v7900 = vpop.f32.mrf.mxu0
  %v7901 = vadd.f32 0.0, %v7900
  %v7902 = vpop.f32.mrf.mxu0
  %7903 = vdwg.mxu0
  %7904 = vmatpush.bf16.msra.mxu0 %v928
  %7905 = vmatpush.bf16.msra.mxu0 %v920
  %7906 = vmatpush.bf16.msra.mxu0 %v912
  %7907 = vmatpush.bf16.msra.mxu0 %v904
  %7908 = vmatpush.bf16.msra.mxu0 %v896
  %7909 = vmatpush.bf16.msra.mxu0 %v888
  %7910 = vmatpush.bf16.msra.mxu0 %v880
  %7911 = vmatpush.bf16.msra.mxu0 %v872
  %7912 = vmatmul.bf16.gmra.mxu0 %v7225
  %v7913 = vpop.f32.mrf.mxu0
  %v7914 = vadd.f32 %v7901, %v7913
  %v7915 = vpop.f32.mrf.mxu0
  %7916 = vdwg.mxu0
  %7917 = vmatpush.bf16.msra.mxu0 %v865
  %7918 = vmatpush.bf16.msra.mxu0 %v857
  %7919 = vmatpush.bf16.msra.mxu0 %v849
  %7920 = vmatpush.bf16.msra.mxu0 %v841
  %7921 = vmatpush.bf16.msra.mxu0 %v833
  %7922 = vmatpush.bf16.msra.mxu0 %v825
  %7923 = vmatpush.bf16.msra.mxu0 %v817
  %7924 = vmatpush.bf16.msra.mxu0 %v809
  %7925 = vmatmul.bf16.gmra.mxu0 %v7224
  %v7926 = vpop.f32.mrf.mxu0
  %v7927 = vadd.f32 0.0, %v7926
  %v7928 = vpop.f32.mrf.mxu0
  %7929 = vdwg.mxu0
  %7930 = vmatpush.bf16.msra.mxu0 %v929
  %7931 = vmatpush.bf16.msra.mxu0 %v921
  %7932 = vmatpush.bf16.msra.mxu0 %v913
  %7933 = vmatpush.bf16.msra.mxu0 %v905
  %7934 = vmatpush.bf16.msra.mxu0 %v897
  %7935 = vmatpush.bf16.msra.mxu0 %v889
  %7936 = vmatpush.bf16.msra.mxu0 %v881
  %7937 = vmatpush.bf16.msra.mxu0 %v873
  %7938 = vmatmul.bf16.gmra.mxu0 %v7225
  %v7939 = vpop.f32.mrf.mxu0
  %v7940 = vadd.f32 %v7927, %v7939
  %v7941 = vpop.f32.mrf.mxu0
  %7942 = vdwg.mxu0
  %7943 = vmatpush.bf16.msra.mxu0 %v866
  %7944 = vmatpush.bf16.msra.mxu0 %v858
  %7945 = vmatpush.bf16.msra.mxu0 %v850
  %7946 = vmatpush.bf16.msra.mxu0 %v842
  %7947 = vmatpush.bf16.msra.mxu0 %v834
  %7948 = vmatpush.bf16.msra.mxu0 %v826
  %7949 = vmatpush.bf16.msra.mxu0 %v818
  %7950 = vmatpush.bf16.msra.mxu0 %v810
  %7951 = vmatmul.bf16.gmra.mxu0 %v7224
  %v7952 = vpop.f32.mrf.mxu0
  %v7953 = vadd.f32 0.0, %v7952
  %v7954 = vpop.f32.mrf.mxu0
  %7955 = vdwg.mxu0
  %7956 = vmatpush.bf16.msra.mxu0 %v930
  %7957 = vmatpush.bf16.msra.mxu0 %v922
  %7958 = vmatpush.bf16.msra.mxu0 %v914
  %7959 = vmatpush.bf16.msra.mxu0 %v906
  %7960 = vmatpush.bf16.msra.mxu0 %v898
  %7961 = vmatpush.bf16.msra.mxu0 %v890
  %7962 = vmatpush.bf16.msra.mxu0 %v882
  %7963 = vmatpush.bf16.msra.mxu0 %v874
  %7964 = vmatmul.bf16.gmra.mxu0 %v7225
  %v7965 = vpop.f32.mrf.mxu0
  %v7966 = vadd.f32 %v7953, %v7965
  %v7967 = vpop.f32.mrf.mxu0
  %7968 = vdwg.mxu0
  %7969 = vmatpush.bf16.msra.mxu0 %v867
  %7970 = vmatpush.bf16.msra.mxu0 %v859
  %7971 = vmatpush.bf16.msra.mxu0 %v851
  %7972 = vmatpush.bf16.msra.mxu0 %v843
  %7973 = vmatpush.bf16.msra.mxu0 %v835
  %7974 = vmatpush.bf16.msra.mxu0 %v827
  %7975 = vmatpush.bf16.msra.mxu0 %v819
  %7976 = vmatpush.bf16.msra.mxu0 %v811
  %7977 = vmatmul.bf16.gmra.mxu0 %v7224
  %v7978 = vpop.f32.mrf.mxu0
  %v7979 = vadd.f32 0.0, %v7978
  %v7980 = vpop.f32.mrf.mxu0
  %7981 = vdwg.mxu0
  %7982 = vmatpush.bf16.msra.mxu0 %v931
  %7983 = vmatpush.bf16.msra.mxu0 %v923
  %7984 = vmatpush.bf16.msra.mxu0 %v915
  %7985 = vmatpush.bf16.msra.mxu0 %v907
  %7986 = vmatpush.bf16.msra.mxu0 %v899
  %7987 = vmatpush.bf16.msra.mxu0 %v891
  %7988 = vmatpush.bf16.msra.mxu0 %v883
  %7989 = vmatpush.bf16.msra.mxu0 %v875
  %7990 = vmatmul.bf16.gmra.mxu0 %v7225
  %v7991 = vpop.f32.mrf.mxu0
  %v7992 = vadd.f32 %v7979, %v7991
  %v7993 = vpop.f32.mrf.mxu0
  %7994 = vdwg.mxu0
  %v7995 = vadd.f32 %v7779, %v7810
  %v7996 = vadd.f32 %v7780, %v7836
  %v7997 = vadd.f32 %v7781, %v7862
  %v7998 = vadd.f32 %v7782, %v7888
  %v7999 = vadd.f32 %v7783, %v7914
  %v8000 = vadd.f32 %v7784, %v7940
  %v8001 = vadd.f32 %v7785, %v7966
  %v8002 = vadd.f32 %v7786, %v7992
  %v8003 = vxor.u32 %v7995, 2147483648
  %v8004 = vxor.u32 %v7996, 2147483648
  %v8005 = vmul.f32 %v8003, 1.442695
  %v8006 = vpow.pop %v8005
  %v8007 = vmul.f32 %v8004, 1.442695
  %v8008 = vpow.pop %v8007
  %v8009 = vadd.f32 %v8006, 1.0
  %v8010 = vadd.f32 %v8008, 1.0
  %v8011 = vrcp.pop %v8009
  %v8012 = vmul.f32 %v8009, %v8011
  %v8013 = vsub.f32 1.0, %v8012
  %v8014 = vmul.f32 %v8011, %v8013
  %v8015 = vadd.f32 %v8011, %v8014
  %vm8016 = vweird.f32 %v8009
  %vm8017 = vweird.f32 %v8011
  %vm8018 = vmor %vm8016, %vm8017
  %v8019 = vsel %vm8018, %v8011, %v8015
  %v8020 = vand.u32 2147483647, %v8009
  %vm8021 = vcmp.eq.f32.partialorder %v8020, 8.507059e+37
  %v8022 = vand.u32 %v8009, 2147483648
  %v8023 = vor.u32 1.1754944e-38, %v8022
  %v8024 = vsel %vm8021, %v8023, %v8019
  %v8025 = vmul.f32 1.0, %v8024
  %v8026 = vrcp.pop %v8010
  %v8027 = vmul.f32 %v8010, %v8026
  %v8028 = vsub.f32 1.0, %v8027
  %v8029 = vmul.f32 %v8026, %v8028
  %v8030 = vadd.f32 %v8026, %v8029
  %vm8031 = vweird.f32 %v8010
  %vm8032 = vweird.f32 %v8026
  %vm8033 = vmor %vm8031, %vm8032
  %v8034 = vsel %vm8033, %v8026, %v8030
  %v8035 = vand.u32 2147483647, %v8010
  %vm8036 = vcmp.eq.f32.partialorder %v8035, 8.507059e+37
  %v8037 = vand.u32 %v8010, 2147483648
  %v8038 = vor.u32 1.1754944e-38, %v8037
  %v8039 = vsel %vm8036, %v8038, %v8034
  %v8040 = vmul.f32 1.0, %v8039
  %v8041 = vxor.u32 %v7997, 2147483648
  %v8042 = vxor.u32 %v7998, 2147483648
  %v8043 = vmul.f32 %v8041, 1.442695
  %v8044 = vpow.pop %v8043
  %v8045 = vmul.f32 %v8042, 1.442695
  %v8046 = vpow.pop %v8045
  %v8047 = vadd.f32 %v8044, 1.0
  %v8048 = vadd.f32 %v8046, 1.0
  %v8049 = vrcp.pop %v8047
  %v8050 = vmul.f32 %v8047, %v8049
  %v8051 = vsub.f32 1.0, %v8050
  %v8052 = vmul.f32 %v8049, %v8051
  %v8053 = vadd.f32 %v8049, %v8052
  %vm8054 = vweird.f32 %v8047
  %vm8055 = vweird.f32 %v8049
  %vm8056 = vmor %vm8054, %vm8055
  %v8057 = vsel %vm8056, %v8049, %v8053
  %v8058 = vand.u32 2147483647, %v8047
  %vm8059 = vcmp.eq.f32.partialorder %v8058, 8.507059e+37
  %v8060 = vand.u32 %v8047, 2147483648
  %v8061 = vor.u32 1.1754944e-38, %v8060
  %v8062 = vsel %vm8059, %v8061, %v8057
  %v8063 = vmul.f32 1.0, %v8062
  %v8064 = vrcp.pop %v8048
  %v8065 = vmul.f32 %v8048, %v8064
  %v8066 = vsub.f32 1.0, %v8065
  %v8067 = vmul.f32 %v8064, %v8066
  %v8068 = vadd.f32 %v8064, %v8067
  %vm8069 = vweird.f32 %v8048
  %vm8070 = vweird.f32 %v8064
  %vm8071 = vmor %vm8069, %vm8070
  %v8072 = vsel %vm8071, %v8064, %v8068
  %v8073 = vand.u32 2147483647, %v8048
  %vm8074 = vcmp.eq.f32.partialorder %v8073, 8.507059e+37
  %v8075 = vand.u32 %v8048, 2147483648
  %v8076 = vor.u32 1.1754944e-38, %v8075
  %v8077 = vsel %vm8074, %v8076, %v8072
  %v8078 = vmul.f32 1.0, %v8077
  %v8079 = vtanh.pop %v7999
  %v8080 = vtanh.pop %v8000
  %v8081 = vxor.u32 %v8001, 2147483648
  %v8082 = vxor.u32 %v8002, 2147483648
  %v8083 = vmul.f32 %v8081, 1.442695
  %v8084 = vpow.pop %v8083
  %v8085 = vmul.f32 %v8082, 1.442695
  %v8086 = vpow.pop %v8085
  %v8087 = vadd.f32 %v8084, 1.0
  %v8088 = vadd.f32 %v8086, 1.0
  %v8089 = vrcp.pop %v8087
  %v8090 = vmul.f32 %v8087, %v8089
  %v8091 = vsub.f32 1.0, %v8090
  %v8092 = vmul.f32 %v8089, %v8091
  %v8093 = vadd.f32 %v8089, %v8092
  %vm8094 = vweird.f32 %v8087
  %vm8095 = vweird.f32 %v8089
  %vm8096 = vmor %vm8094, %vm8095
  %v8097 = vsel %vm8096, %v8089, %v8093
  %v8098 = vand.u32 2147483647, %v8087
  %vm8099 = vcmp.eq.f32.partialorder %v8098, 8.507059e+37
  %v8100 = vand.u32 %v8087, 2147483648
  %v8101 = vor.u32 1.1754944e-38, %v8100
  %v8102 = vsel %vm8099, %v8101, %v8097
  %v8103 = vmul.f32 1.0, %v8102
  %v8104 = vrcp.pop %v8088
  %v8105 = vmul.f32 %v8088, %v8104
  %v8106 = vsub.f32 1.0, %v8105
  %v8107 = vmul.f32 %v8104, %v8106
  %v8108 = vadd.f32 %v8104, %v8107
  %vm8109 = vweird.f32 %v8088
  %vm8110 = vweird.f32 %v8104
  %vm8111 = vmor %vm8109, %vm8110
  %v8112 = vsel %vm8111, %v8104, %v8108
  %v8113 = vand.u32 2147483647, %v8088
  %vm8114 = vcmp.eq.f32.partialorder %v8113, 8.507059e+37
  %v8115 = vand.u32 %v8088, 2147483648
  %v8116 = vor.u32 1.1754944e-38, %v8115
  %v8117 = vsel %vm8114, %v8116, %v8112
  %v8118 = vmul.f32 1.0, %v8117
  %v8119 = vmul.f32 %v8063, %v7218
  %v8120 = vmul.f32 %v8078, %v7219
  %v8121 = vmul.f32 %v8025, %v8079
  %v8122 = vmul.f32 %v8040, %v8080
  %v8123 = vadd.f32 %v8119, %v8121
  %v8124 = vadd.f32 %v8120, %v8122
  %v8125 = vtanh.pop %v8123
  %v8126 = vtanh.pop %v8124
  %v8127 = vmul.f32 %v8103, %v8125
  %v8128 = vmul.f32 %v8118, %v8126
  %v8129 = vpack.c.bf16 %v8127, %v8127
  %v8130 = vpack.c.bf16 %v8128, %v8128
  %8131 = vmatpush.bf16.msra.mxu0 %v1861
  %8132 = vmatpush.bf16.msra.mxu0 %v1853
  %8133 = vmatpush.bf16.msra.mxu0 %v1845
  %8134 = vmatpush.bf16.msra.mxu0 %v1837
  %8135 = vmatpush.bf16.msra.mxu0 %v1829
  %8136 = vmatpush.bf16.msra.mxu0 %v1821
  %8137 = vmatpush.bf16.msra.mxu0 %v1813
  %8138 = vmatpush.bf16.msra.mxu0 %v1805
  %8139 = vmatmul.bf16.gmra.mxu0 %v8129
  %v8140 = vpop.f32.mrf.mxu0
  %v8141 = vadd.f32 %v1405, %v8140
  %v8142 = vpop.f32.mrf.mxu0
  %8143 = vdwg.mxu0
  %8144 = vmatpush.bf16.msra.mxu0 %v1925
  %8145 = vmatpush.bf16.msra.mxu0 %v1917
  %8146 = vmatpush.bf16.msra.mxu0 %v1909
  %8147 = vmatpush.bf16.msra.mxu0 %v1901
  %8148 = vmatpush.bf16.msra.mxu0 %v1893
  %8149 = vmatpush.bf16.msra.mxu0 %v1885
  %8150 = vmatpush.bf16.msra.mxu0 %v1877
  %8151 = vmatpush.bf16.msra.mxu0 %v1869
  %8152 = vmatmul.bf16.gmra.mxu0 %v8130
  %v8153 = vpop.f32.mrf.mxu0
  %v8154 = vadd.f32 %v8141, %v8153
  %v8155 = vpop.f32.mrf.mxu0
  %8156 = vdwg.mxu0
  %8157 = vmatpush.bf16.msra.mxu0 %v1862
  %8158 = vmatpush.bf16.msra.mxu0 %v1854
  %8159 = vmatpush.bf16.msra.mxu0 %v1846
  %8160 = vmatpush.bf16.msra.mxu0 %v1838
  %8161 = vmatpush.bf16.msra.mxu0 %v1830
  %8162 = vmatpush.bf16.msra.mxu0 %v1822
  %8163 = vmatpush.bf16.msra.mxu0 %v1814
  %8164 = vmatpush.bf16.msra.mxu0 %v1806
  %8165 = vmatmul.bf16.gmra.mxu0 %v8129
  %v8166 = vpop.f32.mrf.mxu0
  %v8167 = vadd.f32 %v1406, %v8166
  %v8168 = vpop.f32.mrf.mxu0
  %8169 = vdwg.mxu0
  %8170 = vmatpush.bf16.msra.mxu0 %v1926
  %8171 = vmatpush.bf16.msra.mxu0 %v1918
  %8172 = vmatpush.bf16.msra.mxu0 %v1910
  %8173 = vmatpush.bf16.msra.mxu0 %v1902
  %8174 = vmatpush.bf16.msra.mxu0 %v1894
  %8175 = vmatpush.bf16.msra.mxu0 %v1886
  %8176 = vmatpush.bf16.msra.mxu0 %v1878
  %8177 = vmatpush.bf16.msra.mxu0 %v1870
  %8178 = vmatmul.bf16.gmra.mxu0 %v8130
  %v8179 = vpop.f32.mrf.mxu0
  %v8180 = vadd.f32 %v8167, %v8179
  %v8181 = vpop.f32.mrf.mxu0
  %8182 = vdwg.mxu0
  %8183 = vmatpush.bf16.msra.mxu0 %v1863
  %8184 = vmatpush.bf16.msra.mxu0 %v1855
  %8185 = vmatpush.bf16.msra.mxu0 %v1847
  %8186 = vmatpush.bf16.msra.mxu0 %v1839
  %8187 = vmatpush.bf16.msra.mxu0 %v1831
  %8188 = vmatpush.bf16.msra.mxu0 %v1823
  %8189 = vmatpush.bf16.msra.mxu0 %v1815
  %8190 = vmatpush.bf16.msra.mxu0 %v1807
  %8191 = vmatmul.bf16.gmra.mxu0 %v8129
  %v8192 = vpop.f32.mrf.mxu0
  %v8193 = vadd.f32 %v1407, %v8192
  %v8194 = vpop.f32.mrf.mxu0
  %8195 = vdwg.mxu0
  %8196 = vmatpush.bf16.msra.mxu0 %v1927
  %8197 = vmatpush.bf16.msra.mxu0 %v1919
  %8198 = vmatpush.bf16.msra.mxu0 %v1911
  %8199 = vmatpush.bf16.msra.mxu0 %v1903
  %8200 = vmatpush.bf16.msra.mxu0 %v1895
  %8201 = vmatpush.bf16.msra.mxu0 %v1887
  %8202 = vmatpush.bf16.msra.mxu0 %v1879
  %8203 = vmatpush.bf16.msra.mxu0 %v1871
  %8204 = vmatmul.bf16.gmra.mxu0 %v8130
  %v8205 = vpop.f32.mrf.mxu0
  %v8206 = vadd.f32 %v8193, %v8205
  %v8207 = vpop.f32.mrf.mxu0
  %8208 = vdwg.mxu0
  %8209 = vmatpush.bf16.msra.mxu0 %v1864
  %8210 = vmatpush.bf16.msra.mxu0 %v1856
  %8211 = vmatpush.bf16.msra.mxu0 %v1848
  %8212 = vmatpush.bf16.msra.mxu0 %v1840
  %8213 = vmatpush.bf16.msra.mxu0 %v1832
  %8214 = vmatpush.bf16.msra.mxu0 %v1824
  %8215 = vmatpush.bf16.msra.mxu0 %v1816
  %8216 = vmatpush.bf16.msra.mxu0 %v1808
  %8217 = vmatmul.bf16.gmra.mxu0 %v8129
  %v8218 = vpop.f32.mrf.mxu0
  %v8219 = vadd.f32 %v1408, %v8218
  %v8220 = vpop.f32.mrf.mxu0
  %8221 = vdwg.mxu0
  %8222 = vmatpush.bf16.msra.mxu0 %v1928
  %8223 = vmatpush.bf16.msra.mxu0 %v1920
  %8224 = vmatpush.bf16.msra.mxu0 %v1912
  %8225 = vmatpush.bf16.msra.mxu0 %v1904
  %8226 = vmatpush.bf16.msra.mxu0 %v1896
  %8227 = vmatpush.bf16.msra.mxu0 %v1888
  %8228 = vmatpush.bf16.msra.mxu0 %v1880
  %8229 = vmatpush.bf16.msra.mxu0 %v1872
  %8230 = vmatmul.bf16.gmra.mxu0 %v8130
  %v8231 = vpop.f32.mrf.mxu0
  %v8232 = vadd.f32 %v8219, %v8231
  %v8233 = vpop.f32.mrf.mxu0
  %8234 = vdwg.mxu0
  %8235 = vmatpush.bf16.msra.mxu0 %v1865
  %8236 = vmatpush.bf16.msra.mxu0 %v1857
  %8237 = vmatpush.bf16.msra.mxu0 %v1849
  %8238 = vmatpush.bf16.msra.mxu0 %v1841
  %8239 = vmatpush.bf16.msra.mxu0 %v1833
  %8240 = vmatpush.bf16.msra.mxu0 %v1825
  %8241 = vmatpush.bf16.msra.mxu0 %v1817
  %8242 = vmatpush.bf16.msra.mxu0 %v1809
  %8243 = vmatmul.bf16.gmra.mxu0 %v8129
  %v8244 = vpop.f32.mrf.mxu0
  %v8245 = vadd.f32 %v1409, %v8244
  %v8246 = vpop.f32.mrf.mxu0
  %8247 = vdwg.mxu0
  %8248 = vmatpush.bf16.msra.mxu0 %v1929
  %8249 = vmatpush.bf16.msra.mxu0 %v1921
  %8250 = vmatpush.bf16.msra.mxu0 %v1913
  %8251 = vmatpush.bf16.msra.mxu0 %v1905
  %8252 = vmatpush.bf16.msra.mxu0 %v1897
  %8253 = vmatpush.bf16.msra.mxu0 %v1889
  %8254 = vmatpush.bf16.msra.mxu0 %v1881
  %8255 = vmatpush.bf16.msra.mxu0 %v1873
  %8256 = vmatmul.bf16.gmra.mxu0 %v8130
  %v8257 = vpop.f32.mrf.mxu0
  %v8258 = vadd.f32 %v8245, %v8257
  %v8259 = vpop.f32.mrf.mxu0
  %8260 = vdwg.mxu0
  %8261 = vmatpush.bf16.msra.mxu0 %v1866
  %8262 = vmatpush.bf16.msra.mxu0 %v1858
  %8263 = vmatpush.bf16.msra.mxu0 %v1850
  %8264 = vmatpush.bf16.msra.mxu0 %v1842
  %8265 = vmatpush.bf16.msra.mxu0 %v1834
  %8266 = vmatpush.bf16.msra.mxu0 %v1826
  %8267 = vmatpush.bf16.msra.mxu0 %v1818
  %8268 = vmatpush.bf16.msra.mxu0 %v1810
  %8269 = vmatmul.bf16.gmra.mxu0 %v8129
  %v8270 = vpop.f32.mrf.mxu0
  %v8271 = vadd.f32 %v1410, %v8270
  %v8272 = vpop.f32.mrf.mxu0
  %8273 = vdwg.mxu0
  %8274 = vmatpush.bf16.msra.mxu0 %v1930
  %8275 = vmatpush.bf16.msra.mxu0 %v1922
  %8276 = vmatpush.bf16.msra.mxu0 %v1914
  %8277 = vmatpush.bf16.msra.mxu0 %v1906
  %8278 = vmatpush.bf16.msra.mxu0 %v1898
  %8279 = vmatpush.bf16.msra.mxu0 %v1890
  %8280 = vmatpush.bf16.msra.mxu0 %v1882
  %8281 = vmatpush.bf16.msra.mxu0 %v1874
  %8282 = vmatmul.bf16.gmra.mxu0 %v8130
  %v8283 = vpop.f32.mrf.mxu0
  %v8284 = vadd.f32 %v8271, %v8283
  %v8285 = vpop.f32.mrf.mxu0
  %8286 = vdwg.mxu0
  %8287 = vmatpush.bf16.msra.mxu0 %v1867
  %8288 = vmatpush.bf16.msra.mxu0 %v1859
  %8289 = vmatpush.bf16.msra.mxu0 %v1851
  %8290 = vmatpush.bf16.msra.mxu0 %v1843
  %8291 = vmatpush.bf16.msra.mxu0 %v1835
  %8292 = vmatpush.bf16.msra.mxu0 %v1827
  %8293 = vmatpush.bf16.msra.mxu0 %v1819
  %8294 = vmatpush.bf16.msra.mxu0 %v1811
  %8295 = vmatmul.bf16.gmra.mxu0 %v8129
  %v8296 = vpop.f32.mrf.mxu0
  %v8297 = vadd.f32 %v1411, %v8296
  %v8298 = vpop.f32.mrf.mxu0
  %8299 = vdwg.mxu0
  %8300 = vmatpush.bf16.msra.mxu0 %v1931
  %8301 = vmatpush.bf16.msra.mxu0 %v1923
  %8302 = vmatpush.bf16.msra.mxu0 %v1915
  %8303 = vmatpush.bf16.msra.mxu0 %v1907
  %8304 = vmatpush.bf16.msra.mxu0 %v1899
  %8305 = vmatpush.bf16.msra.mxu0 %v1891
  %8306 = vmatpush.bf16.msra.mxu0 %v1883
  %8307 = vmatpush.bf16.msra.mxu0 %v1875
  %8308 = vmatmul.bf16.gmra.mxu0 %v8130
  %v8309 = vpop.f32.mrf.mxu0
  %v8310 = vadd.f32 %v8297, %v8309
  %v8311 = vpop.f32.mrf.mxu0
  %8312 = vdwg.mxu0
  %8313 = vmatpush.bf16.msra.mxu0 %v1868
  %8314 = vmatpush.bf16.msra.mxu0 %v1860
  %8315 = vmatpush.bf16.msra.mxu0 %v1852
  %8316 = vmatpush.bf16.msra.mxu0 %v1844
  %8317 = vmatpush.bf16.msra.mxu0 %v1836
  %8318 = vmatpush.bf16.msra.mxu0 %v1828
  %8319 = vmatpush.bf16.msra.mxu0 %v1820
  %8320 = vmatpush.bf16.msra.mxu0 %v1812
  %8321 = vmatmul.bf16.gmra.mxu0 %v8129
  %v8322 = vpop.f32.mrf.mxu0
  %v8323 = vadd.f32 %v1412, %v8322
  %v8324 = vpop.f32.mrf.mxu0
  %8325 = vdwg.mxu0
  %8326 = vmatpush.bf16.msra.mxu0 %v1932
  %8327 = vmatpush.bf16.msra.mxu0 %v1924
  %8328 = vmatpush.bf16.msra.mxu0 %v1916
  %8329 = vmatpush.bf16.msra.mxu0 %v1908
  %8330 = vmatpush.bf16.msra.mxu0 %v1900
  %8331 = vmatpush.bf16.msra.mxu0 %v1892
  %8332 = vmatpush.bf16.msra.mxu0 %v1884
  %8333 = vmatpush.bf16.msra.mxu0 %v1876
  %8334 = vmatmul.bf16.gmra.mxu0 %v8130
  %v8335 = vpop.f32.mrf.mxu0
  %v8336 = vadd.f32 %v8323, %v8335
  %v8337 = vpop.f32.mrf.mxu0
  %8338 = vdwg.mxu0
  %8339 = vmatpush.bf16.msra.mxu0 %v2709
  %8340 = vmatpush.bf16.msra.mxu0 %v2701
  %8341 = vmatpush.bf16.msra.mxu0 %v2693
  %8342 = vmatpush.bf16.msra.mxu0 %v2685
  %8343 = vmatpush.bf16.msra.mxu0 %v2677
  %8344 = vmatpush.bf16.msra.mxu0 %v2669
  %8345 = vmatpush.bf16.msra.mxu0 %v2661
  %8346 = vmatpush.bf16.msra.mxu0 %v2653
  %8347 = vmatmul.bf16.gmra.mxu0 %v7776
  %v8348 = vpop.f32.mrf.mxu0
  %v8349 = vadd.f32 0.0, %v8348
  %v8350 = vpop.f32.mrf.mxu0
  %8351 = vdwg.mxu0
  %8352 = vmatpush.bf16.msra.mxu0 %v2773
  %8353 = vmatpush.bf16.msra.mxu0 %v2765
  %8354 = vmatpush.bf16.msra.mxu0 %v2757
  %8355 = vmatpush.bf16.msra.mxu0 %v2749
  %8356 = vmatpush.bf16.msra.mxu0 %v2741
  %8357 = vmatpush.bf16.msra.mxu0 %v2733
  %8358 = vmatpush.bf16.msra.mxu0 %v2725
  %8359 = vmatpush.bf16.msra.mxu0 %v2717
  %8360 = vmatmul.bf16.gmra.mxu0 %v7777
  %v8361 = vpop.f32.mrf.mxu0
  %v8362 = vadd.f32 %v8349, %v8361
  %v8363 = vpop.f32.mrf.mxu0
  %8364 = vdwg.mxu0
  %8365 = vmatpush.bf16.msra.mxu0 %v2710
  %8366 = vmatpush.bf16.msra.mxu0 %v2702
  %8367 = vmatpush.bf16.msra.mxu0 %v2694
  %8368 = vmatpush.bf16.msra.mxu0 %v2686
  %8369 = vmatpush.bf16.msra.mxu0 %v2678
  %8370 = vmatpush.bf16.msra.mxu0 %v2670
  %8371 = vmatpush.bf16.msra.mxu0 %v2662
  %8372 = vmatpush.bf16.msra.mxu0 %v2654
  %8373 = vmatmul.bf16.gmra.mxu0 %v7776
  %v8374 = vpop.f32.mrf.mxu0
  %v8375 = vadd.f32 0.0, %v8374
  %v8376 = vpop.f32.mrf.mxu0
  %8377 = vdwg.mxu0
  %8378 = vmatpush.bf16.msra.mxu0 %v2774
  %8379 = vmatpush.bf16.msra.mxu0 %v2766
  %8380 = vmatpush.bf16.msra.mxu0 %v2758
  %8381 = vmatpush.bf16.msra.mxu0 %v2750
  %8382 = vmatpush.bf16.msra.mxu0 %v2742
  %8383 = vmatpush.bf16.msra.mxu0 %v2734
  %8384 = vmatpush.bf16.msra.mxu0 %v2726
  %8385 = vmatpush.bf16.msra.mxu0 %v2718
  %8386 = vmatmul.bf16.gmra.mxu0 %v7777
  %v8387 = vpop.f32.mrf.mxu0
  %v8388 = vadd.f32 %v8375, %v8387
  %v8389 = vpop.f32.mrf.mxu0
  %8390 = vdwg.mxu0
  %8391 = vmatpush.bf16.msra.mxu0 %v2711
  %8392 = vmatpush.bf16.msra.mxu0 %v2703
  %8393 = vmatpush.bf16.msra.mxu0 %v2695
  %8394 = vmatpush.bf16.msra.mxu0 %v2687
  %8395 = vmatpush.bf16.msra.mxu0 %v2679
  %8396 = vmatpush.bf16.msra.mxu0 %v2671
  %8397 = vmatpush.bf16.msra.mxu0 %v2663
  %8398 = vmatpush.bf16.msra.mxu0 %v2655
  %8399 = vmatmul.bf16.gmra.mxu0 %v7776
  %v8400 = vpop.f32.mrf.mxu0
  %v8401 = vadd.f32 0.0, %v8400
  %v8402 = vpop.f32.mrf.mxu0
  %8403 = vdwg.mxu0
  %8404 = vmatpush.bf16.msra.mxu0 %v2775
  %8405 = vmatpush.bf16.msra.mxu0 %v2767
  %8406 = vmatpush.bf16.msra.mxu0 %v2759
  %8407 = vmatpush.bf16.msra.mxu0 %v2751
  %8408 = vmatpush.bf16.msra.mxu0 %v2743
  %8409 = vmatpush.bf16.msra.mxu0 %v2735
  %8410 = vmatpush.bf16.msra.mxu0 %v2727
  %8411 = vmatpush.bf16.msra.mxu0 %v2719
  %8412 = vmatmul.bf16.gmra.mxu0 %v7777
  %v8413 = vpop.f32.mrf.mxu0
  %v8414 = vadd.f32 %v8401, %v8413
  %v8415 = vpop.f32.mrf.mxu0
  %8416 = vdwg.mxu0
  %8417 = vmatpush.bf16.msra.mxu0 %v2712
  %8418 = vmatpush.bf16.msra.mxu0 %v2704
  %8419 = vmatpush.bf16.msra.mxu0 %v2696
  %8420 = vmatpush.bf16.msra.mxu0 %v2688
  %8421 = vmatpush.bf16.msra.mxu0 %v2680
  %8422 = vmatpush.bf16.msra.mxu0 %v2672
  %8423 = vmatpush.bf16.msra.mxu0 %v2664
  %8424 = vmatpush.bf16.msra.mxu0 %v2656
  %8425 = vmatmul.bf16.gmra.mxu0 %v7776
  %v8426 = vpop.f32.mrf.mxu0
  %v8427 = vadd.f32 0.0, %v8426
  %v8428 = vpop.f32.mrf.mxu0
  %8429 = vdwg.mxu0
  %8430 = vmatpush.bf16.msra.mxu0 %v2776
  %8431 = vmatpush.bf16.msra.mxu0 %v2768
  %8432 = vmatpush.bf16.msra.mxu0 %v2760
  %8433 = vmatpush.bf16.msra.mxu0 %v2752
  %8434 = vmatpush.bf16.msra.mxu0 %v2744
  %8435 = vmatpush.bf16.msra.mxu0 %v2736
  %8436 = vmatpush.bf16.msra.mxu0 %v2728
  %8437 = vmatpush.bf16.msra.mxu0 %v2720
  %8438 = vmatmul.bf16.gmra.mxu0 %v7777
  %v8439 = vpop.f32.mrf.mxu0
  %v8440 = vadd.f32 %v8427, %v8439
  %v8441 = vpop.f32.mrf.mxu0
  %8442 = vdwg.mxu0
  %8443 = vmatpush.bf16.msra.mxu0 %v2713
  %8444 = vmatpush.bf16.msra.mxu0 %v2705
  %8445 = vmatpush.bf16.msra.mxu0 %v2697
  %8446 = vmatpush.bf16.msra.mxu0 %v2689
  %8447 = vmatpush.bf16.msra.mxu0 %v2681
  %8448 = vmatpush.bf16.msra.mxu0 %v2673
  %8449 = vmatpush.bf16.msra.mxu0 %v2665
  %8450 = vmatpush.bf16.msra.mxu0 %v2657
  %8451 = vmatmul.bf16.gmra.mxu0 %v7776
  %v8452 = vpop.f32.mrf.mxu0
  %v8453 = vadd.f32 0.0, %v8452
  %v8454 = vpop.f32.mrf.mxu0
  %8455 = vdwg.mxu0
  %8456 = vmatpush.bf16.msra.mxu0 %v2777
  %8457 = vmatpush.bf16.msra.mxu0 %v2769
  %8458 = vmatpush.bf16.msra.mxu0 %v2761
  %8459 = vmatpush.bf16.msra.mxu0 %v2753
  %8460 = vmatpush.bf16.msra.mxu0 %v2745
  %8461 = vmatpush.bf16.msra.mxu0 %v2737
  %8462 = vmatpush.bf16.msra.mxu0 %v2729
  %8463 = vmatpush.bf16.msra.mxu0 %v2721
  %8464 = vmatmul.bf16.gmra.mxu0 %v7777
  %v8465 = vpop.f32.mrf.mxu0
  %v8466 = vadd.f32 %v8453, %v8465
  %v8467 = vpop.f32.mrf.mxu0
  %8468 = vdwg.mxu0
  %8469 = vmatpush.bf16.msra.mxu0 %v2714
  %8470 = vmatpush.bf16.msra.mxu0 %v2706
  %8471 = vmatpush.bf16.msra.mxu0 %v2698
  %8472 = vmatpush.bf16.msra.mxu0 %v2690
  %8473 = vmatpush.bf16.msra.mxu0 %v2682
  %8474 = vmatpush.bf16.msra.mxu0 %v2674
  %8475 = vmatpush.bf16.msra.mxu0 %v2666
  %8476 = vmatpush.bf16.msra.mxu0 %v2658
  %8477 = vmatmul.bf16.gmra.mxu0 %v7776
  %v8478 = vpop.f32.mrf.mxu0
  %v8479 = vadd.f32 0.0, %v8478
  %v8480 = vpop.f32.mrf.mxu0
  %8481 = vdwg.mxu0
  %8482 = vmatpush.bf16.msra.mxu0 %v2778
  %8483 = vmatpush.bf16.msra.mxu0 %v2770
  %8484 = vmatpush.bf16.msra.mxu0 %v2762
  %8485 = vmatpush.bf16.msra.mxu0 %v2754
  %8486 = vmatpush.bf16.msra.mxu0 %v2746
  %8487 = vmatpush.bf16.msra.mxu0 %v2738
  %8488 = vmatpush.bf16.msra.mxu0 %v2730
  %8489 = vmatpush.bf16.msra.mxu0 %v2722
  %8490 = vmatmul.bf16.gmra.mxu0 %v7777
  %v8491 = vpop.f32.mrf.mxu0
  %v8492 = vadd.f32 %v8479, %v8491
  %v8493 = vpop.f32.mrf.mxu0
  %8494 = vdwg.mxu0
  %8495 = vmatpush.bf16.msra.mxu0 %v2715
  %8496 = vmatpush.bf16.msra.mxu0 %v2707
  %8497 = vmatpush.bf16.msra.mxu0 %v2699
  %8498 = vmatpush.bf16.msra.mxu0 %v2691
  %8499 = vmatpush.bf16.msra.mxu0 %v2683
  %8500 = vmatpush.bf16.msra.mxu0 %v2675
  %8501 = vmatpush.bf16.msra.mxu0 %v2667
  %8502 = vmatpush.bf16.msra.mxu0 %v2659
  %8503 = vmatmul.bf16.gmra.mxu0 %v7776
  %v8504 = vpop.f32.mrf.mxu0
  %v8505 = vadd.f32 0.0, %v8504
  %v8506 = vpop.f32.mrf.mxu0
  %8507 = vdwg.mxu0
  %8508 = vmatpush.bf16.msra.mxu0 %v2779
  %8509 = vmatpush.bf16.msra.mxu0 %v2771
  %8510 = vmatpush.bf16.msra.mxu0 %v2763
  %8511 = vmatpush.bf16.msra.mxu0 %v2755
  %8512 = vmatpush.bf16.msra.mxu0 %v2747
  %8513 = vmatpush.bf16.msra.mxu0 %v2739
  %8514 = vmatpush.bf16.msra.mxu0 %v2731
  %8515 = vmatpush.bf16.msra.mxu0 %v2723
  %8516 = vmatmul.bf16.gmra.mxu0 %v7777
  %v8517 = vpop.f32.mrf.mxu0
  %v8518 = vadd.f32 %v8505, %v8517
  %v8519 = vpop.f32.mrf.mxu0
  %8520 = vdwg.mxu0
  %8521 = vmatpush.bf16.msra.mxu0 %v2716
  %8522 = vmatpush.bf16.msra.mxu0 %v2708
  %8523 = vmatpush.bf16.msra.mxu0 %v2700
  %8524 = vmatpush.bf16.msra.mxu0 %v2692
  %8525 = vmatpush.bf16.msra.mxu0 %v2684
  %8526 = vmatpush.bf16.msra.mxu0 %v2676
  %8527 = vmatpush.bf16.msra.mxu0 %v2668
  %8528 = vmatpush.bf16.msra.mxu0 %v2660
  %8529 = vmatmul.bf16.gmra.mxu0 %v7776
  %v8530 = vpop.f32.mrf.mxu0
  %v8531 = vadd.f32 0.0, %v8530
  %v8532 = vpop.f32.mrf.mxu0
  %8533 = vdwg.mxu0
  %8534 = vmatpush.bf16.msra.mxu0 %v2780
  %8535 = vmatpush.bf16.msra.mxu0 %v2772
  %8536 = vmatpush.bf16.msra.mxu0 %v2764
  %8537 = vmatpush.bf16.msra.mxu0 %v2756
  %8538 = vmatpush.bf16.msra.mxu0 %v2748
  %8539 = vmatpush.bf16.msra.mxu0 %v2740
  %8540 = vmatpush.bf16.msra.mxu0 %v2732
  %8541 = vmatpush.bf16.msra.mxu0 %v2724
  %8542 = vmatmul.bf16.gmra.mxu0 %v7777
  %v8543 = vpop.f32.mrf.mxu0
  %v8544 = vadd.f32 %v8531, %v8543
  %v8545 = vpop.f32.mrf.mxu0
  %8546 = vdwg.mxu0
  %v8547 = vadd.f32 %v8154, %v8362
  %v8548 = vadd.f32 %v8180, %v8388
  %v8549 = vadd.f32 %v8206, %v8414
  %v8550 = vadd.f32 %v8232, %v8440
  %v8551 = vadd.f32 %v8258, %v8466
  %v8552 = vadd.f32 %v8284, %v8492
  %v8553 = vadd.f32 %v8310, %v8518
  %v8554 = vadd.f32 %v8336, %v8544
  %v8555 = vxor.u32 %v8547, 2147483648
  %v8556 = vxor.u32 %v8548, 2147483648
  %v8557 = vmul.f32 %v8555, 1.442695
  %v8558 = vpow.pop %v8557
  %v8559 = vmul.f32 %v8556, 1.442695
  %v8560 = vpow.pop %v8559
  %v8561 = vadd.f32 %v8558, 1.0
  %v8562 = vadd.f32 %v8560, 1.0
  %v8563 = vrcp.pop %v8561
  %v8564 = vmul.f32 %v8561, %v8563
  %v8565 = vsub.f32 1.0, %v8564
  %v8566 = vmul.f32 %v8563, %v8565
  %v8567 = vadd.f32 %v8563, %v8566
  %vm8568 = vweird.f32 %v8561
  %vm8569 = vweird.f32 %v8563
  %vm8570 = vmor %vm8568, %vm8569
  %v8571 = vsel %vm8570, %v8563, %v8567
  %v8572 = vand.u32 2147483647, %v8561
  %vm8573 = vcmp.eq.f32.partialorder %v8572, 8.507059e+37
  %v8574 = vand.u32 %v8561, 2147483648
  %v8575 = vor.u32 1.1754944e-38, %v8574
  %v8576 = vsel %vm8573, %v8575, %v8571
  %v8577 = vmul.f32 1.0, %v8576
  %v8578 = vrcp.pop %v8562
  %v8579 = vmul.f32 %v8562, %v8578
  %v8580 = vsub.f32 1.0, %v8579
  %v8581 = vmul.f32 %v8578, %v8580
  %v8582 = vadd.f32 %v8578, %v8581
  %vm8583 = vweird.f32 %v8562
  %vm8584 = vweird.f32 %v8578
  %vm8585 = vmor %vm8583, %vm8584
  %v8586 = vsel %vm8585, %v8578, %v8582
  %v8587 = vand.u32 2147483647, %v8562
  %vm8588 = vcmp.eq.f32.partialorder %v8587, 8.507059e+37
  %v8589 = vand.u32 %v8562, 2147483648
  %v8590 = vor.u32 1.1754944e-38, %v8589
  %v8591 = vsel %vm8588, %v8590, %v8586
  %v8592 = vmul.f32 1.0, %v8591
  %v8593 = vxor.u32 %v8549, 2147483648
  %v8594 = vxor.u32 %v8550, 2147483648
  %v8595 = vmul.f32 %v8593, 1.442695
  %v8596 = vpow.pop %v8595
  %v8597 = vmul.f32 %v8594, 1.442695
  %v8598 = vpow.pop %v8597
  %v8599 = vadd.f32 %v8596, 1.0
  %v8600 = vadd.f32 %v8598, 1.0
  %v8601 = vrcp.pop %v8599
  %v8602 = vmul.f32 %v8599, %v8601
  %v8603 = vsub.f32 1.0, %v8602
  %v8604 = vmul.f32 %v8601, %v8603
  %v8605 = vadd.f32 %v8601, %v8604
  %vm8606 = vweird.f32 %v8599
  %vm8607 = vweird.f32 %v8601
  %vm8608 = vmor %vm8606, %vm8607
  %v8609 = vsel %vm8608, %v8601, %v8605
  %v8610 = vand.u32 2147483647, %v8599
  %vm8611 = vcmp.eq.f32.partialorder %v8610, 8.507059e+37
  %v8612 = vand.u32 %v8599, 2147483648
  %v8613 = vor.u32 1.1754944e-38, %v8612
  %v8614 = vsel %vm8611, %v8613, %v8609
  %v8615 = vmul.f32 1.0, %v8614
  %v8616 = vrcp.pop %v8600
  %v8617 = vmul.f32 %v8600, %v8616
  %v8618 = vsub.f32 1.0, %v8617
  %v8619 = vmul.f32 %v8616, %v8618
  %v8620 = vadd.f32 %v8616, %v8619
  %vm8621 = vweird.f32 %v8600
  %vm8622 = vweird.f32 %v8616
  %vm8623 = vmor %vm8621, %vm8622
  %v8624 = vsel %vm8623, %v8616, %v8620
  %v8625 = vand.u32 2147483647, %v8600
  %vm8626 = vcmp.eq.f32.partialorder %v8625, 8.507059e+37
  %v8627 = vand.u32 %v8600, 2147483648
  %v8628 = vor.u32 1.1754944e-38, %v8627
  %v8629 = vsel %vm8626, %v8628, %v8624
  %v8630 = vmul.f32 1.0, %v8629
  %v8631 = vtanh.pop %v8551
  %v8632 = vtanh.pop %v8552
  %v8633 = vxor.u32 %v8553, 2147483648
  %v8634 = vxor.u32 %v8554, 2147483648
  %v8635 = vmul.f32 %v8633, 1.442695
  %v8636 = vpow.pop %v8635
  %v8637 = vmul.f32 %v8634, 1.442695
  %v8638 = vpow.pop %v8637
  %v8639 = vadd.f32 %v8636, 1.0
  %v8640 = vadd.f32 %v8638, 1.0
  %v8641 = vrcp.pop %v8639
  %v8642 = vmul.f32 %v8639, %v8641
  %v8643 = vsub.f32 1.0, %v8642
  %v8644 = vmul.f32 %v8641, %v8643
  %v8645 = vadd.f32 %v8641, %v8644
  %vm8646 = vweird.f32 %v8639
  %vm8647 = vweird.f32 %v8641
  %vm8648 = vmor %vm8646, %vm8647
  %v8649 = vsel %vm8648, %v8641, %v8645
  %v8650 = vand.u32 2147483647, %v8639
  %vm8651 = vcmp.eq.f32.partialorder %v8650, 8.507059e+37
  %v8652 = vand.u32 %v8639, 2147483648
  %v8653 = vor.u32 1.1754944e-38, %v8652
  %v8654 = vsel %vm8651, %v8653, %v8649
  %v8655 = vmul.f32 1.0, %v8654
  %v8656 = vrcp.pop %v8640
  %v8657 = vmul.f32 %v8640, %v8656
  %v8658 = vsub.f32 1.0, %v8657
  %v8659 = vmul.f32 %v8656, %v8658
  %v8660 = vadd.f32 %v8656, %v8659
  %vm8661 = vweird.f32 %v8640
  %vm8662 = vweird.f32 %v8656
  %vm8663 = vmor %vm8661, %vm8662
  %v8664 = vsel %vm8663, %v8656, %v8660
  %v8665 = vand.u32 2147483647, %v8640
  %vm8666 = vcmp.eq.f32.partialorder %v8665, 8.507059e+37
  %v8667 = vand.u32 %v8640, 2147483648
  %v8668 = vor.u32 1.1754944e-38, %v8667
  %v8669 = vsel %vm8666, %v8668, %v8664
  %v8670 = vmul.f32 1.0, %v8669
  %v8671 = vmul.f32 %v8615, %v7770
  %v8672 = vmul.f32 %v8630, %v7771
  %v8673 = vmul.f32 %v8577, %v8631
  %v8674 = vmul.f32 %v8592, %v8632
  %v8675 = vadd.f32 %v8671, %v8673
  %v8676 = vadd.f32 %v8672, %v8674
  %v8677 = vtanh.pop %v8675
  %v8678 = vtanh.pop %v8676
  %v8679 = vmul.f32 %v8655, %v8677
  %v8680 = vmul.f32 %v8670, %v8678
  %v8681 = vpack.c.bf16 %v8679, %v8679
  %v8682 = vpack.c.bf16 %v8680, %v8680
  %s8683 = scalar_lea.vmem %s0, 448
  %v8684 = vld [vmem:[%s8683] sm:$0xff]
  %v8685 = vld [vmem:[%s8683 + $0x8] sm:$0xff]
  %v8686 = vld [vmem:[%s8683 + $0x10] sm:$0xff]
  %v8687 = vld [vmem:[%s8683 + $0x18] sm:$0xff]
  %v8688 = vld [vmem:[%s8683 + $0x20] sm:$0xff]
  %v8689 = vld [vmem:[%s8683 + $0x28] sm:$0xff]
  %v8690 = vld [vmem:[%s8683 + $0x30] sm:$0xff]
  %v8691 = vld [vmem:[%s8683 + $0x38] sm:$0xff]
  %8692 = vmatpush.bf16.msra.mxu0 %v860
  %8693 = vmatpush.bf16.msra.mxu0 %v852
  %8694 = vmatpush.bf16.msra.mxu0 %v844
  %8695 = vmatpush.bf16.msra.mxu0 %v836
  %8696 = vmatpush.bf16.msra.mxu0 %v828
  %8697 = vmatpush.bf16.msra.mxu0 %v820
  %8698 = vmatpush.bf16.msra.mxu0 %v812
  %8699 = vmatpush.bf16.msra.mxu0 %v804
  %8700 = vmatmul.bf16.gmra.mxu0 %v8129
  %v8701 = vpop.f32.mrf.mxu0
  %v8702 = vadd.f32 0.0, %v8701
  %v8703 = vpop.f32.mrf.mxu0
  %8704 = vdwg.mxu0
  %8705 = vmatpush.bf16.msra.mxu0 %v924
  %8706 = vmatpush.bf16.msra.mxu0 %v916
  %8707 = vmatpush.bf16.msra.mxu0 %v908
  %8708 = vmatpush.bf16.msra.mxu0 %v900
  %8709 = vmatpush.bf16.msra.mxu0 %v892
  %8710 = vmatpush.bf16.msra.mxu0 %v884
  %8711 = vmatpush.bf16.msra.mxu0 %v876
  %8712 = vmatpush.bf16.msra.mxu0 %v868
  %8713 = vmatmul.bf16.gmra.mxu0 %v8130
  %v8714 = vpop.f32.mrf.mxu0
  %v8715 = vadd.f32 %v8702, %v8714
  %v8716 = vpop.f32.mrf.mxu0
  %8717 = vdwg.mxu0
  %8718 = vmatpush.bf16.msra.mxu0 %v861
  %8719 = vmatpush.bf16.msra.mxu0 %v853
  %8720 = vmatpush.bf16.msra.mxu0 %v845
  %8721 = vmatpush.bf16.msra.mxu0 %v837
  %8722 = vmatpush.bf16.msra.mxu0 %v829
  %8723 = vmatpush.bf16.msra.mxu0 %v821
  %8724 = vmatpush.bf16.msra.mxu0 %v813
  %8725 = vmatpush.bf16.msra.mxu0 %v805
  %8726 = vmatmul.bf16.gmra.mxu0 %v8129
  %v8727 = vpop.f32.mrf.mxu0
  %v8728 = vadd.f32 0.0, %v8727
  %v8729 = vpop.f32.mrf.mxu0
  %8730 = vdwg.mxu0
  %8731 = vmatpush.bf16.msra.mxu0 %v925
  %8732 = vmatpush.bf16.msra.mxu0 %v917
  %8733 = vmatpush.bf16.msra.mxu0 %v909
  %8734 = vmatpush.bf16.msra.mxu0 %v901
  %8735 = vmatpush.bf16.msra.mxu0 %v893
  %8736 = vmatpush.bf16.msra.mxu0 %v885
  %8737 = vmatpush.bf16.msra.mxu0 %v877
  %8738 = vmatpush.bf16.msra.mxu0 %v869
  %8739 = vmatmul.bf16.gmra.mxu0 %v8130
  %v8740 = vpop.f32.mrf.mxu0
  %v8741 = vadd.f32 %v8728, %v8740
  %v8742 = vpop.f32.mrf.mxu0
  %8743 = vdwg.mxu0
  %8744 = vmatpush.bf16.msra.mxu0 %v862
  %8745 = vmatpush.bf16.msra.mxu0 %v854
  %8746 = vmatpush.bf16.msra.mxu0 %v846
  %8747 = vmatpush.bf16.msra.mxu0 %v838
  %8748 = vmatpush.bf16.msra.mxu0 %v830
  %8749 = vmatpush.bf16.msra.mxu0 %v822
  %8750 = vmatpush.bf16.msra.mxu0 %v814
  %8751 = vmatpush.bf16.msra.mxu0 %v806
  %8752 = vmatmul.bf16.gmra.mxu0 %v8129
  %v8753 = vpop.f32.mrf.mxu0
  %v8754 = vadd.f32 0.0, %v8753
  %v8755 = vpop.f32.mrf.mxu0
  %8756 = vdwg.mxu0
  %8757 = vmatpush.bf16.msra.mxu0 %v926
  %8758 = vmatpush.bf16.msra.mxu0 %v918
  %8759 = vmatpush.bf16.msra.mxu0 %v910
  %8760 = vmatpush.bf16.msra.mxu0 %v902
  %8761 = vmatpush.bf16.msra.mxu0 %v894
  %8762 = vmatpush.bf16.msra.mxu0 %v886
  %8763 = vmatpush.bf16.msra.mxu0 %v878
  %8764 = vmatpush.bf16.msra.mxu0 %v870
  %8765 = vmatmul.bf16.gmra.mxu0 %v8130
  %v8766 = vpop.f32.mrf.mxu0
  %v8767 = vadd.f32 %v8754, %v8766
  %v8768 = vpop.f32.mrf.mxu0
  %8769 = vdwg.mxu0
  %8770 = vmatpush.bf16.msra.mxu0 %v863
  %8771 = vmatpush.bf16.msra.mxu0 %v855
  %8772 = vmatpush.bf16.msra.mxu0 %v847
  %8773 = vmatpush.bf16.msra.mxu0 %v839
  %8774 = vmatpush.bf16.msra.mxu0 %v831
  %8775 = vmatpush.bf16.msra.mxu0 %v823
  %8776 = vmatpush.bf16.msra.mxu0 %v815
  %8777 = vmatpush.bf16.msra.mxu0 %v807
  %8778 = vmatmul.bf16.gmra.mxu0 %v8129
  %v8779 = vpop.f32.mrf.mxu0
  %v8780 = vadd.f32 0.0, %v8779
  %v8781 = vpop.f32.mrf.mxu0
  %8782 = vdwg.mxu0
  %8783 = vmatpush.bf16.msra.mxu0 %v927
  %8784 = vmatpush.bf16.msra.mxu0 %v919
  %8785 = vmatpush.bf16.msra.mxu0 %v911
  %8786 = vmatpush.bf16.msra.mxu0 %v903
  %8787 = vmatpush.bf16.msra.mxu0 %v895
  %8788 = vmatpush.bf16.msra.mxu0 %v887
  %8789 = vmatpush.bf16.msra.mxu0 %v879
  %8790 = vmatpush.bf16.msra.mxu0 %v871
  %8791 = vmatmul.bf16.gmra.mxu0 %v8130
  %v8792 = vpop.f32.mrf.mxu0
  %v8793 = vadd.f32 %v8780, %v8792
  %v8794 = vpop.f32.mrf.mxu0
  %8795 = vdwg.mxu0
  %8796 = vmatpush.bf16.msra.mxu0 %v864
  %8797 = vmatpush.bf16.msra.mxu0 %v856
  %8798 = vmatpush.bf16.msra.mxu0 %v848
  %8799 = vmatpush.bf16.msra.mxu0 %v840
  %8800 = vmatpush.bf16.msra.mxu0 %v832
  %8801 = vmatpush.bf16.msra.mxu0 %v824
  %8802 = vmatpush.bf16.msra.mxu0 %v816
  %8803 = vmatpush.bf16.msra.mxu0 %v808
  %8804 = vmatmul.bf16.gmra.mxu0 %v8129
  %v8805 = vpop.f32.mrf.mxu0
  %v8806 = vadd.f32 0.0, %v8805
  %v8807 = vpop.f32.mrf.mxu0
  %8808 = vdwg.mxu0
  %8809 = vmatpush.bf16.msra.mxu0 %v928
  %8810 = vmatpush.bf16.msra.mxu0 %v920
  %8811 = vmatpush.bf16.msra.mxu0 %v912
  %8812 = vmatpush.bf16.msra.mxu0 %v904
  %8813 = vmatpush.bf16.msra.mxu0 %v896
  %8814 = vmatpush.bf16.msra.mxu0 %v888
  %8815 = vmatpush.bf16.msra.mxu0 %v880
  %8816 = vmatpush.bf16.msra.mxu0 %v872
  %8817 = vmatmul.bf16.gmra.mxu0 %v8130
  %v8818 = vpop.f32.mrf.mxu0
  %v8819 = vadd.f32 %v8806, %v8818
  %v8820 = vpop.f32.mrf.mxu0
  %8821 = vdwg.mxu0
  %8822 = vmatpush.bf16.msra.mxu0 %v865
  %8823 = vmatpush.bf16.msra.mxu0 %v857
  %8824 = vmatpush.bf16.msra.mxu0 %v849
  %8825 = vmatpush.bf16.msra.mxu0 %v841
  %8826 = vmatpush.bf16.msra.mxu0 %v833
  %8827 = vmatpush.bf16.msra.mxu0 %v825
  %8828 = vmatpush.bf16.msra.mxu0 %v817
  %8829 = vmatpush.bf16.msra.mxu0 %v809
  %8830 = vmatmul.bf16.gmra.mxu0 %v8129
  %v8831 = vpop.f32.mrf.mxu0
  %v8832 = vadd.f32 0.0, %v8831
  %v8833 = vpop.f32.mrf.mxu0
  %8834 = vdwg.mxu0
  %8835 = vmatpush.bf16.msra.mxu0 %v929
  %8836 = vmatpush.bf16.msra.mxu0 %v921
  %8837 = vmatpush.bf16.msra.mxu0 %v913
  %8838 = vmatpush.bf16.msra.mxu0 %v905
  %8839 = vmatpush.bf16.msra.mxu0 %v897
  %8840 = vmatpush.bf16.msra.mxu0 %v889
  %8841 = vmatpush.bf16.msra.mxu0 %v881
  %8842 = vmatpush.bf16.msra.mxu0 %v873
  %8843 = vmatmul.bf16.gmra.mxu0 %v8130
  %v8844 = vpop.f32.mrf.mxu0
  %v8845 = vadd.f32 %v8832, %v8844
  %v8846 = vpop.f32.mrf.mxu0
  %8847 = vdwg.mxu0
  %8848 = vmatpush.bf16.msra.mxu0 %v866
  %8849 = vmatpush.bf16.msra.mxu0 %v858
  %8850 = vmatpush.bf16.msra.mxu0 %v850
  %8851 = vmatpush.bf16.msra.mxu0 %v842
  %8852 = vmatpush.bf16.msra.mxu0 %v834
  %8853 = vmatpush.bf16.msra.mxu0 %v826
  %8854 = vmatpush.bf16.msra.mxu0 %v818
  %8855 = vmatpush.bf16.msra.mxu0 %v810
  %8856 = vmatmul.bf16.gmra.mxu0 %v8129
  %v8857 = vpop.f32.mrf.mxu0
  %v8858 = vadd.f32 0.0, %v8857
  %v8859 = vpop.f32.mrf.mxu0
  %8860 = vdwg.mxu0
  %8861 = vmatpush.bf16.msra.mxu0 %v930
  %8862 = vmatpush.bf16.msra.mxu0 %v922
  %8863 = vmatpush.bf16.msra.mxu0 %v914
  %8864 = vmatpush.bf16.msra.mxu0 %v906
  %8865 = vmatpush.bf16.msra.mxu0 %v898
  %8866 = vmatpush.bf16.msra.mxu0 %v890
  %8867 = vmatpush.bf16.msra.mxu0 %v882
  %8868 = vmatpush.bf16.msra.mxu0 %v874
  %8869 = vmatmul.bf16.gmra.mxu0 %v8130
  %v8870 = vpop.f32.mrf.mxu0
  %v8871 = vadd.f32 %v8858, %v8870
  %v8872 = vpop.f32.mrf.mxu0
  %8873 = vdwg.mxu0
  %8874 = vmatpush.bf16.msra.mxu0 %v867
  %8875 = vmatpush.bf16.msra.mxu0 %v859
  %8876 = vmatpush.bf16.msra.mxu0 %v851
  %8877 = vmatpush.bf16.msra.mxu0 %v843
  %8878 = vmatpush.bf16.msra.mxu0 %v835
  %8879 = vmatpush.bf16.msra.mxu0 %v827
  %8880 = vmatpush.bf16.msra.mxu0 %v819
  %8881 = vmatpush.bf16.msra.mxu0 %v811
  %8882 = vmatmul.bf16.gmra.mxu0 %v8129
  %v8883 = vpop.f32.mrf.mxu0
  %v8884 = vadd.f32 0.0, %v8883
  %v8885 = vpop.f32.mrf.mxu0
  %8886 = vdwg.mxu0
  %8887 = vmatpush.bf16.msra.mxu0 %v931
  %8888 = vmatpush.bf16.msra.mxu0 %v923
  %8889 = vmatpush.bf16.msra.mxu0 %v915
  %8890 = vmatpush.bf16.msra.mxu0 %v907
  %8891 = vmatpush.bf16.msra.mxu0 %v899
  %8892 = vmatpush.bf16.msra.mxu0 %v891
  %8893 = vmatpush.bf16.msra.mxu0 %v883
  %8894 = vmatpush.bf16.msra.mxu0 %v875
  %8895 = vmatmul.bf16.gmra.mxu0 %v8130
  %v8896 = vpop.f32.mrf.mxu0
  %v8897 = vadd.f32 %v8884, %v8896
  %v8898 = vpop.f32.mrf.mxu0
  %8899 = vdwg.mxu0
  %v8900 = vadd.f32 %v8684, %v8715
  %v8901 = vadd.f32 %v8685, %v8741
  %v8902 = vadd.f32 %v8686, %v8767
  %v8903 = vadd.f32 %v8687, %v8793
  %v8904 = vadd.f32 %v8688, %v8819
  %v8905 = vadd.f32 %v8689, %v8845
  %v8906 = vadd.f32 %v8690, %v8871
  %v8907 = vadd.f32 %v8691, %v8897
  %v8908 = vxor.u32 %v8900, 2147483648
  %v8909 = vxor.u32 %v8901, 2147483648
  %v8910 = vmul.f32 %v8908, 1.442695
  %v8911 = vpow.pop %v8910
  %v8912 = vmul.f32 %v8909, 1.442695
  %v8913 = vpow.pop %v8912
  %v8914 = vadd.f32 %v8911, 1.0
  %v8915 = vadd.f32 %v8913, 1.0
  %v8916 = vrcp.pop %v8914
  %v8917 = vmul.f32 %v8914, %v8916
  %v8918 = vsub.f32 1.0, %v8917
  %v8919 = vmul.f32 %v8916, %v8918
  %v8920 = vadd.f32 %v8916, %v8919
  %vm8921 = vweird.f32 %v8914
  %vm8922 = vweird.f32 %v8916
  %vm8923 = vmor %vm8921, %vm8922
  %v8924 = vsel %vm8923, %v8916, %v8920
  %v8925 = vand.u32 2147483647, %v8914
  %vm8926 = vcmp.eq.f32.partialorder %v8925, 8.507059e+37
  %v8927 = vand.u32 %v8914, 2147483648
  %v8928 = vor.u32 1.1754944e-38, %v8927
  %v8929 = vsel %vm8926, %v8928, %v8924
  %v8930 = vmul.f32 1.0, %v8929
  %v8931 = vrcp.pop %v8915
  %v8932 = vmul.f32 %v8915, %v8931
  %v8933 = vsub.f32 1.0, %v8932
  %v8934 = vmul.f32 %v8931, %v8933
  %v8935 = vadd.f32 %v8931, %v8934
  %vm8936 = vweird.f32 %v8915
  %vm8937 = vweird.f32 %v8931
  %vm8938 = vmor %vm8936, %vm8937
  %v8939 = vsel %vm8938, %v8931, %v8935
  %v8940 = vand.u32 2147483647, %v8915
  %vm8941 = vcmp.eq.f32.partialorder %v8940, 8.507059e+37
  %v8942 = vand.u32 %v8915, 2147483648
  %v8943 = vor.u32 1.1754944e-38, %v8942
  %v8944 = vsel %vm8941, %v8943, %v8939
  %v8945 = vmul.f32 1.0, %v8944
  %v8946 = vxor.u32 %v8902, 2147483648
  %v8947 = vxor.u32 %v8903, 2147483648
  %v8948 = vmul.f32 %v8946, 1.442695
  %v8949 = vpow.pop %v8948
  %v8950 = vmul.f32 %v8947, 1.442695
  %v8951 = vpow.pop %v8950
  %v8952 = vadd.f32 %v8949, 1.0
  %v8953 = vadd.f32 %v8951, 1.0
  %v8954 = vrcp.pop %v8952
  %v8955 = vmul.f32 %v8952, %v8954
  %v8956 = vsub.f32 1.0, %v8955
  %v8957 = vmul.f32 %v8954, %v8956
  %v8958 = vadd.f32 %v8954, %v8957
  %vm8959 = vweird.f32 %v8952
  %vm8960 = vweird.f32 %v8954
  %vm8961 = vmor %vm8959, %vm8960
  %v8962 = vsel %vm8961, %v8954, %v8958
  %v8963 = vand.u32 2147483647, %v8952
  %vm8964 = vcmp.eq.f32.partialorder %v8963, 8.507059e+37
  %v8965 = vand.u32 %v8952, 2147483648
  %v8966 = vor.u32 1.1754944e-38, %v8965
  %v8967 = vsel %vm8964, %v8966, %v8962
  %v8968 = vmul.f32 1.0, %v8967
  %v8969 = vrcp.pop %v8953
  %v8970 = vmul.f32 %v8953, %v8969
  %v8971 = vsub.f32 1.0, %v8970
  %v8972 = vmul.f32 %v8969, %v8971
  %v8973 = vadd.f32 %v8969, %v8972
  %vm8974 = vweird.f32 %v8953
  %vm8975 = vweird.f32 %v8969
  %vm8976 = vmor %vm8974, %vm8975
  %v8977 = vsel %vm8976, %v8969, %v8973
  %v8978 = vand.u32 2147483647, %v8953
  %vm8979 = vcmp.eq.f32.partialorder %v8978, 8.507059e+37
  %v8980 = vand.u32 %v8953, 2147483648
  %v8981 = vor.u32 1.1754944e-38, %v8980
  %v8982 = vsel %vm8979, %v8981, %v8977
  %v8983 = vmul.f32 1.0, %v8982
  %v8984 = vtanh.pop %v8904
  %v8985 = vtanh.pop %v8905
  %v8986 = vxor.u32 %v8906, 2147483648
  %v8987 = vxor.u32 %v8907, 2147483648
  %v8988 = vmul.f32 %v8986, 1.442695
  %v8989 = vpow.pop %v8988
  %v8990 = vmul.f32 %v8987, 1.442695
  %v8991 = vpow.pop %v8990
  %v8992 = vadd.f32 %v8989, 1.0
  %v8993 = vadd.f32 %v8991, 1.0
  %v8994 = vrcp.pop %v8992
  %v8995 = vmul.f32 %v8992, %v8994
  %v8996 = vsub.f32 1.0, %v8995
  %v8997 = vmul.f32 %v8994, %v8996
  %v8998 = vadd.f32 %v8994, %v8997
  %vm8999 = vweird.f32 %v8992
  %vm9000 = vweird.f32 %v8994
  %vm9001 = vmor %vm8999, %vm9000
  %v9002 = vsel %vm9001, %v8994, %v8998
  %v9003 = vand.u32 2147483647, %v8992
  %vm9004 = vcmp.eq.f32.partialorder %v9003, 8.507059e+37
  %v9005 = vand.u32 %v8992, 2147483648
  %v9006 = vor.u32 1.1754944e-38, %v9005
  %v9007 = vsel %vm9004, %v9006, %v9002
  %v9008 = vmul.f32 1.0, %v9007
  %v9009 = vrcp.pop %v8993
  %v9010 = vmul.f32 %v8993, %v9009
  %v9011 = vsub.f32 1.0, %v9010
  %v9012 = vmul.f32 %v9009, %v9011
  %v9013 = vadd.f32 %v9009, %v9012
  %vm9014 = vweird.f32 %v8993
  %vm9015 = vweird.f32 %v9009
  %vm9016 = vmor %vm9014, %vm9015
  %v9017 = vsel %vm9016, %v9009, %v9013
  %v9018 = vand.u32 2147483647, %v8993
  %vm9019 = vcmp.eq.f32.partialorder %v9018, 8.507059e+37
  %v9020 = vand.u32 %v8993, 2147483648
  %v9021 = vor.u32 1.1754944e-38, %v9020
  %v9022 = vsel %vm9019, %v9021, %v9017
  %v9023 = vmul.f32 1.0, %v9022
  %v9024 = vmul.f32 %v8968, %v8123
  %v9025 = vmul.f32 %v8983, %v8124
  %v9026 = vmul.f32 %v8930, %v8984
  %v9027 = vmul.f32 %v8945, %v8985
  %v9028 = vadd.f32 %v9024, %v9026
  %v9029 = vadd.f32 %v9025, %v9027
  %v9030 = vtanh.pop %v9028
  %v9031 = vtanh.pop %v9029
  %v9032 = vmul.f32 %v9008, %v9030
  %v9033 = vmul.f32 %v9023, %v9031
  %v9034 = vpack.c.bf16 %v9032, %v9032
  %v9035 = vpack.c.bf16 %v9033, %v9033
  %9036 = vmatpush.bf16.msra.mxu0 %v1861
  %9037 = vmatpush.bf16.msra.mxu0 %v1853
  %9038 = vmatpush.bf16.msra.mxu0 %v1845
  %9039 = vmatpush.bf16.msra.mxu0 %v1837
  %9040 = vmatpush.bf16.msra.mxu0 %v1829
  %9041 = vmatpush.bf16.msra.mxu0 %v1821
  %9042 = vmatpush.bf16.msra.mxu0 %v1813
  %9043 = vmatpush.bf16.msra.mxu0 %v1805
  %9044 = vmatmul.bf16.gmra.mxu0 %v9034
  %v9045 = vpop.f32.mrf.mxu0
  %v9046 = vadd.f32 %v1405, %v9045
  %v9047 = vpop.f32.mrf.mxu0
  %9048 = vdwg.mxu0
  %9049 = vmatpush.bf16.msra.mxu0 %v1925
  %9050 = vmatpush.bf16.msra.mxu0 %v1917
  %9051 = vmatpush.bf16.msra.mxu0 %v1909
  %9052 = vmatpush.bf16.msra.mxu0 %v1901
  %9053 = vmatpush.bf16.msra.mxu0 %v1893
  %9054 = vmatpush.bf16.msra.mxu0 %v1885
  %9055 = vmatpush.bf16.msra.mxu0 %v1877
  %9056 = vmatpush.bf16.msra.mxu0 %v1869
  %9057 = vmatmul.bf16.gmra.mxu0 %v9035
  %v9058 = vpop.f32.mrf.mxu0
  %v9059 = vadd.f32 %v9046, %v9058
  %v9060 = vpop.f32.mrf.mxu0
  %9061 = vdwg.mxu0
  %9062 = vmatpush.bf16.msra.mxu0 %v1862
  %9063 = vmatpush.bf16.msra.mxu0 %v1854
  %9064 = vmatpush.bf16.msra.mxu0 %v1846
  %9065 = vmatpush.bf16.msra.mxu0 %v1838
  %9066 = vmatpush.bf16.msra.mxu0 %v1830
  %9067 = vmatpush.bf16.msra.mxu0 %v1822
  %9068 = vmatpush.bf16.msra.mxu0 %v1814
  %9069 = vmatpush.bf16.msra.mxu0 %v1806
  %9070 = vmatmul.bf16.gmra.mxu0 %v9034
  %v9071 = vpop.f32.mrf.mxu0
  %v9072 = vadd.f32 %v1406, %v9071
  %v9073 = vpop.f32.mrf.mxu0
  %9074 = vdwg.mxu0
  %9075 = vmatpush.bf16.msra.mxu0 %v1926
  %9076 = vmatpush.bf16.msra.mxu0 %v1918
  %9077 = vmatpush.bf16.msra.mxu0 %v1910
  %9078 = vmatpush.bf16.msra.mxu0 %v1902
  %9079 = vmatpush.bf16.msra.mxu0 %v1894
  %9080 = vmatpush.bf16.msra.mxu0 %v1886
  %9081 = vmatpush.bf16.msra.mxu0 %v1878
  %9082 = vmatpush.bf16.msra.mxu0 %v1870
  %9083 = vmatmul.bf16.gmra.mxu0 %v9035
  %v9084 = vpop.f32.mrf.mxu0
  %v9085 = vadd.f32 %v9072, %v9084
  %v9086 = vpop.f32.mrf.mxu0
  %9087 = vdwg.mxu0
  %9088 = vmatpush.bf16.msra.mxu0 %v1863
  %9089 = vmatpush.bf16.msra.mxu0 %v1855
  %9090 = vmatpush.bf16.msra.mxu0 %v1847
  %9091 = vmatpush.bf16.msra.mxu0 %v1839
  %9092 = vmatpush.bf16.msra.mxu0 %v1831
  %9093 = vmatpush.bf16.msra.mxu0 %v1823
  %9094 = vmatpush.bf16.msra.mxu0 %v1815
  %9095 = vmatpush.bf16.msra.mxu0 %v1807
  %9096 = vmatmul.bf16.gmra.mxu0 %v9034
  %v9097 = vpop.f32.mrf.mxu0
  %v9098 = vadd.f32 %v1407, %v9097
  %v9099 = vpop.f32.mrf.mxu0
  %9100 = vdwg.mxu0
  %9101 = vmatpush.bf16.msra.mxu0 %v1927
  %9102 = vmatpush.bf16.msra.mxu0 %v1919
  %9103 = vmatpush.bf16.msra.mxu0 %v1911
  %9104 = vmatpush.bf16.msra.mxu0 %v1903
  %9105 = vmatpush.bf16.msra.mxu0 %v1895
  %9106 = vmatpush.bf16.msra.mxu0 %v1887
  %9107 = vmatpush.bf16.msra.mxu0 %v1879
  %9108 = vmatpush.bf16.msra.mxu0 %v1871
  %9109 = vmatmul.bf16.gmra.mxu0 %v9035
  %v9110 = vpop.f32.mrf.mxu0
  %v9111 = vadd.f32 %v9098, %v9110
  %v9112 = vpop.f32.mrf.mxu0
  %9113 = vdwg.mxu0
  %9114 = vmatpush.bf16.msra.mxu0 %v1864
  %9115 = vmatpush.bf16.msra.mxu0 %v1856
  %9116 = vmatpush.bf16.msra.mxu0 %v1848
  %9117 = vmatpush.bf16.msra.mxu0 %v1840
  %9118 = vmatpush.bf16.msra.mxu0 %v1832
  %9119 = vmatpush.bf16.msra.mxu0 %v1824
  %9120 = vmatpush.bf16.msra.mxu0 %v1816
  %9121 = vmatpush.bf16.msra.mxu0 %v1808
  %9122 = vmatmul.bf16.gmra.mxu0 %v9034
  %v9123 = vpop.f32.mrf.mxu0
  %v9124 = vadd.f32 %v1408, %v9123
  %v9125 = vpop.f32.mrf.mxu0
  %9126 = vdwg.mxu0
  %9127 = vmatpush.bf16.msra.mxu0 %v1928
  %9128 = vmatpush.bf16.msra.mxu0 %v1920
  %9129 = vmatpush.bf16.msra.mxu0 %v1912
  %9130 = vmatpush.bf16.msra.mxu0 %v1904
  %9131 = vmatpush.bf16.msra.mxu0 %v1896
  %9132 = vmatpush.bf16.msra.mxu0 %v1888
  %9133 = vmatpush.bf16.msra.mxu0 %v1880
  %9134 = vmatpush.bf16.msra.mxu0 %v1872
  %9135 = vmatmul.bf16.gmra.mxu0 %v9035
  %v9136 = vpop.f32.mrf.mxu0
  %v9137 = vadd.f32 %v9124, %v9136
  %v9138 = vpop.f32.mrf.mxu0
  %9139 = vdwg.mxu0
  %9140 = vmatpush.bf16.msra.mxu0 %v1865
  %9141 = vmatpush.bf16.msra.mxu0 %v1857
  %9142 = vmatpush.bf16.msra.mxu0 %v1849
  %9143 = vmatpush.bf16.msra.mxu0 %v1841
  %9144 = vmatpush.bf16.msra.mxu0 %v1833
  %9145 = vmatpush.bf16.msra.mxu0 %v1825
  %9146 = vmatpush.bf16.msra.mxu0 %v1817
  %9147 = vmatpush.bf16.msra.mxu0 %v1809
  %9148 = vmatmul.bf16.gmra.mxu0 %v9034
  %v9149 = vpop.f32.mrf.mxu0
  %v9150 = vadd.f32 %v1409, %v9149
  %v9151 = vpop.f32.mrf.mxu0
  %9152 = vdwg.mxu0
  %9153 = vmatpush.bf16.msra.mxu0 %v1929
  %9154 = vmatpush.bf16.msra.mxu0 %v1921
  %9155 = vmatpush.bf16.msra.mxu0 %v1913
  %9156 = vmatpush.bf16.msra.mxu0 %v1905
  %9157 = vmatpush.bf16.msra.mxu0 %v1897
  %9158 = vmatpush.bf16.msra.mxu0 %v1889
  %9159 = vmatpush.bf16.msra.mxu0 %v1881
  %9160 = vmatpush.bf16.msra.mxu0 %v1873
  %9161 = vmatmul.bf16.gmra.mxu0 %v9035
  %v9162 = vpop.f32.mrf.mxu0
  %v9163 = vadd.f32 %v9150, %v9162
  %v9164 = vpop.f32.mrf.mxu0
  %9165 = vdwg.mxu0
  %9166 = vmatpush.bf16.msra.mxu0 %v1866
  %9167 = vmatpush.bf16.msra.mxu0 %v1858
  %9168 = vmatpush.bf16.msra.mxu0 %v1850
  %9169 = vmatpush.bf16.msra.mxu0 %v1842
  %9170 = vmatpush.bf16.msra.mxu0 %v1834
  %9171 = vmatpush.bf16.msra.mxu0 %v1826
  %9172 = vmatpush.bf16.msra.mxu0 %v1818
  %9173 = vmatpush.bf16.msra.mxu0 %v1810
  %9174 = vmatmul.bf16.gmra.mxu0 %v9034
  %v9175 = vpop.f32.mrf.mxu0
  %v9176 = vadd.f32 %v1410, %v9175
  %v9177 = vpop.f32.mrf.mxu0
  %9178 = vdwg.mxu0
  %9179 = vmatpush.bf16.msra.mxu0 %v1930
  %9180 = vmatpush.bf16.msra.mxu0 %v1922
  %9181 = vmatpush.bf16.msra.mxu0 %v1914
  %9182 = vmatpush.bf16.msra.mxu0 %v1906
  %9183 = vmatpush.bf16.msra.mxu0 %v1898
  %9184 = vmatpush.bf16.msra.mxu0 %v1890
  %9185 = vmatpush.bf16.msra.mxu0 %v1882
  %9186 = vmatpush.bf16.msra.mxu0 %v1874
  %9187 = vmatmul.bf16.gmra.mxu0 %v9035
  %v9188 = vpop.f32.mrf.mxu0
  %v9189 = vadd.f32 %v9176, %v9188
  %v9190 = vpop.f32.mrf.mxu0
  %9191 = vdwg.mxu0
  %9192 = vmatpush.bf16.msra.mxu0 %v1867
  %9193 = vmatpush.bf16.msra.mxu0 %v1859
  %9194 = vmatpush.bf16.msra.mxu0 %v1851
  %9195 = vmatpush.bf16.msra.mxu0 %v1843
  %9196 = vmatpush.bf16.msra.mxu0 %v1835
  %9197 = vmatpush.bf16.msra.mxu0 %v1827
  %9198 = vmatpush.bf16.msra.mxu0 %v1819
  %9199 = vmatpush.bf16.msra.mxu0 %v1811
  %9200 = vmatmul.bf16.gmra.mxu0 %v9034
  %v9201 = vpop.f32.mrf.mxu0
  %v9202 = vadd.f32 %v1411, %v9201
  %v9203 = vpop.f32.mrf.mxu0
  %9204 = vdwg.mxu0
  %9205 = vmatpush.bf16.msra.mxu0 %v1931
  %9206 = vmatpush.bf16.msra.mxu0 %v1923
  %9207 = vmatpush.bf16.msra.mxu0 %v1915
  %9208 = vmatpush.bf16.msra.mxu0 %v1907
  %9209 = vmatpush.bf16.msra.mxu0 %v1899
  %9210 = vmatpush.bf16.msra.mxu0 %v1891
  %9211 = vmatpush.bf16.msra.mxu0 %v1883
  %9212 = vmatpush.bf16.msra.mxu0 %v1875
  %9213 = vmatmul.bf16.gmra.mxu0 %v9035
  %v9214 = vpop.f32.mrf.mxu0
  %v9215 = vadd.f32 %v9202, %v9214
  %v9216 = vpop.f32.mrf.mxu0
  %9217 = vdwg.mxu0
  %9218 = vmatpush.bf16.msra.mxu0 %v1868
  %9219 = vmatpush.bf16.msra.mxu0 %v1860
  %9220 = vmatpush.bf16.msra.mxu0 %v1852
  %9221 = vmatpush.bf16.msra.mxu0 %v1844
  %9222 = vmatpush.bf16.msra.mxu0 %v1836
  %9223 = vmatpush.bf16.msra.mxu0 %v1828
  %9224 = vmatpush.bf16.msra.mxu0 %v1820
  %9225 = vmatpush.bf16.msra.mxu0 %v1812
  %9226 = vmatmul.bf16.gmra.mxu0 %v9034
  %v9227 = vpop.f32.mrf.mxu0
  %v9228 = vadd.f32 %v1412, %v9227
  %v9229 = vpop.f32.mrf.mxu0
  %9230 = vdwg.mxu0
  %9231 = vmatpush.bf16.msra.mxu0 %v1932
  %9232 = vmatpush.bf16.msra.mxu0 %v1924
  %9233 = vmatpush.bf16.msra.mxu0 %v1916
  %9234 = vmatpush.bf16.msra.mxu0 %v1908
  %9235 = vmatpush.bf16.msra.mxu0 %v1900
  %9236 = vmatpush.bf16.msra.mxu0 %v1892
  %9237 = vmatpush.bf16.msra.mxu0 %v1884
  %9238 = vmatpush.bf16.msra.mxu0 %v1876
  %9239 = vmatmul.bf16.gmra.mxu0 %v9035
  %v9240 = vpop.f32.mrf.mxu0
  %v9241 = vadd.f32 %v9228, %v9240
  %v9242 = vpop.f32.mrf.mxu0
  %9243 = vdwg.mxu0
  %9244 = vmatpush.bf16.msra.mxu0 %v2709
  %9245 = vmatpush.bf16.msra.mxu0 %v2701
  %9246 = vmatpush.bf16.msra.mxu0 %v2693
  %9247 = vmatpush.bf16.msra.mxu0 %v2685
  %9248 = vmatpush.bf16.msra.mxu0 %v2677
  %9249 = vmatpush.bf16.msra.mxu0 %v2669
  %9250 = vmatpush.bf16.msra.mxu0 %v2661
  %9251 = vmatpush.bf16.msra.mxu0 %v2653
  %9252 = vmatmul.bf16.gmra.mxu0 %v8681
  %v9253 = vpop.f32.mrf.mxu0
  %v9254 = vadd.f32 0.0, %v9253
  %v9255 = vpop.f32.mrf.mxu0
  %9256 = vdwg.mxu0
  %9257 = vmatpush.bf16.msra.mxu0 %v2773
  %9258 = vmatpush.bf16.msra.mxu0 %v2765
  %9259 = vmatpush.bf16.msra.mxu0 %v2757
  %9260 = vmatpush.bf16.msra.mxu0 %v2749
  %9261 = vmatpush.bf16.msra.mxu0 %v2741
  %9262 = vmatpush.bf16.msra.mxu0 %v2733
  %9263 = vmatpush.bf16.msra.mxu0 %v2725
  %9264 = vmatpush.bf16.msra.mxu0 %v2717
  %9265 = vmatmul.bf16.gmra.mxu0 %v8682
  %v9266 = vpop.f32.mrf.mxu0
  %v9267 = vadd.f32 %v9254, %v9266
  %v9268 = vpop.f32.mrf.mxu0
  %9269 = vdwg.mxu0
  %9270 = vmatpush.bf16.msra.mxu0 %v2710
  %9271 = vmatpush.bf16.msra.mxu0 %v2702
  %9272 = vmatpush.bf16.msra.mxu0 %v2694
  %9273 = vmatpush.bf16.msra.mxu0 %v2686
  %9274 = vmatpush.bf16.msra.mxu0 %v2678
  %9275 = vmatpush.bf16.msra.mxu0 %v2670
  %9276 = vmatpush.bf16.msra.mxu0 %v2662
  %9277 = vmatpush.bf16.msra.mxu0 %v2654
  %9278 = vmatmul.bf16.gmra.mxu0 %v8681
  %v9279 = vpop.f32.mrf.mxu0
  %v9280 = vadd.f32 0.0, %v9279
  %v9281 = vpop.f32.mrf.mxu0
  %9282 = vdwg.mxu0
  %9283 = vmatpush.bf16.msra.mxu0 %v2774
  %9284 = vmatpush.bf16.msra.mxu0 %v2766
  %9285 = vmatpush.bf16.msra.mxu0 %v2758
  %9286 = vmatpush.bf16.msra.mxu0 %v2750
  %9287 = vmatpush.bf16.msra.mxu0 %v2742
  %9288 = vmatpush.bf16.msra.mxu0 %v2734
  %9289 = vmatpush.bf16.msra.mxu0 %v2726
  %9290 = vmatpush.bf16.msra.mxu0 %v2718
  %9291 = vmatmul.bf16.gmra.mxu0 %v8682
  %v9292 = vpop.f32.mrf.mxu0
  %v9293 = vadd.f32 %v9280, %v9292
  %v9294 = vpop.f32.mrf.mxu0
  %9295 = vdwg.mxu0
  %9296 = vmatpush.bf16.msra.mxu0 %v2711
  %9297 = vmatpush.bf16.msra.mxu0 %v2703
  %9298 = vmatpush.bf16.msra.mxu0 %v2695
  %9299 = vmatpush.bf16.msra.mxu0 %v2687
  %9300 = vmatpush.bf16.msra.mxu0 %v2679
  %9301 = vmatpush.bf16.msra.mxu0 %v2671
  %9302 = vmatpush.bf16.msra.mxu0 %v2663
  %9303 = vmatpush.bf16.msra.mxu0 %v2655
  %9304 = vmatmul.bf16.gmra.mxu0 %v8681
  %v9305 = vpop.f32.mrf.mxu0
  %v9306 = vadd.f32 0.0, %v9305
  %v9307 = vpop.f32.mrf.mxu0
  %9308 = vdwg.mxu0
  %9309 = vmatpush.bf16.msra.mxu0 %v2775
  %9310 = vmatpush.bf16.msra.mxu0 %v2767
  %9311 = vmatpush.bf16.msra.mxu0 %v2759
  %9312 = vmatpush.bf16.msra.mxu0 %v2751
  %9313 = vmatpush.bf16.msra.mxu0 %v2743
  %9314 = vmatpush.bf16.msra.mxu0 %v2735
  %9315 = vmatpush.bf16.msra.mxu0 %v2727
  %9316 = vmatpush.bf16.msra.mxu0 %v2719
  %9317 = vmatmul.bf16.gmra.mxu0 %v8682
  %v9318 = vpop.f32.mrf.mxu0
  %v9319 = vadd.f32 %v9306, %v9318
  %v9320 = vpop.f32.mrf.mxu0
  %9321 = vdwg.mxu0
  %9322 = vmatpush.bf16.msra.mxu0 %v2712
  %9323 = vmatpush.bf16.msra.mxu0 %v2704
  %9324 = vmatpush.bf16.msra.mxu0 %v2696
  %9325 = vmatpush.bf16.msra.mxu0 %v2688
  %9326 = vmatpush.bf16.msra.mxu0 %v2680
  %9327 = vmatpush.bf16.msra.mxu0 %v2672
  %9328 = vmatpush.bf16.msra.mxu0 %v2664
  %9329 = vmatpush.bf16.msra.mxu0 %v2656
  %9330 = vmatmul.bf16.gmra.mxu0 %v8681
  %v9331 = vpop.f32.mrf.mxu0
  %v9332 = vadd.f32 0.0, %v9331
  %v9333 = vpop.f32.mrf.mxu0
  %9334 = vdwg.mxu0
  %9335 = vmatpush.bf16.msra.mxu0 %v2776
  %9336 = vmatpush.bf16.msra.mxu0 %v2768
  %9337 = vmatpush.bf16.msra.mxu0 %v2760
  %9338 = vmatpush.bf16.msra.mxu0 %v2752
  %9339 = vmatpush.bf16.msra.mxu0 %v2744
  %9340 = vmatpush.bf16.msra.mxu0 %v2736
  %9341 = vmatpush.bf16.msra.mxu0 %v2728
  %9342 = vmatpush.bf16.msra.mxu0 %v2720
  %9343 = vmatmul.bf16.gmra.mxu0 %v8682
  %v9344 = vpop.f32.mrf.mxu0
  %v9345 = vadd.f32 %v9332, %v9344
  %v9346 = vpop.f32.mrf.mxu0
  %9347 = vdwg.mxu0
  %9348 = vmatpush.bf16.msra.mxu0 %v2713
  %9349 = vmatpush.bf16.msra.mxu0 %v2705
  %9350 = vmatpush.bf16.msra.mxu0 %v2697
  %9351 = vmatpush.bf16.msra.mxu0 %v2689
  %9352 = vmatpush.bf16.msra.mxu0 %v2681
  %9353 = vmatpush.bf16.msra.mxu0 %v2673
  %9354 = vmatpush.bf16.msra.mxu0 %v2665
  %9355 = vmatpush.bf16.msra.mxu0 %v2657
  %9356 = vmatmul.bf16.gmra.mxu0 %v8681
  %v9357 = vpop.f32.mrf.mxu0
  %v9358 = vadd.f32 0.0, %v9357
  %v9359 = vpop.f32.mrf.mxu0
  %9360 = vdwg.mxu0
  %9361 = vmatpush.bf16.msra.mxu0 %v2777
  %9362 = vmatpush.bf16.msra.mxu0 %v2769
  %9363 = vmatpush.bf16.msra.mxu0 %v2761
  %9364 = vmatpush.bf16.msra.mxu0 %v2753
  %9365 = vmatpush.bf16.msra.mxu0 %v2745
  %9366 = vmatpush.bf16.msra.mxu0 %v2737
  %9367 = vmatpush.bf16.msra.mxu0 %v2729
  %9368 = vmatpush.bf16.msra.mxu0 %v2721
  %9369 = vmatmul.bf16.gmra.mxu0 %v8682
  %v9370 = vpop.f32.mrf.mxu0
  %v9371 = vadd.f32 %v9358, %v9370
  %v9372 = vpop.f32.mrf.mxu0
  %9373 = vdwg.mxu0
  %9374 = vmatpush.bf16.msra.mxu0 %v2714
  %9375 = vmatpush.bf16.msra.mxu0 %v2706
  %9376 = vmatpush.bf16.msra.mxu0 %v2698
  %9377 = vmatpush.bf16.msra.mxu0 %v2690
  %9378 = vmatpush.bf16.msra.mxu0 %v2682
  %9379 = vmatpush.bf16.msra.mxu0 %v2674
  %9380 = vmatpush.bf16.msra.mxu0 %v2666
  %9381 = vmatpush.bf16.msra.mxu0 %v2658
  %9382 = vmatmul.bf16.gmra.mxu0 %v8681
  %v9383 = vpop.f32.mrf.mxu0
  %v9384 = vadd.f32 0.0, %v9383
  %v9385 = vpop.f32.mrf.mxu0
  %9386 = vdwg.mxu0
  %9387 = vmatpush.bf16.msra.mxu0 %v2778
  %9388 = vmatpush.bf16.msra.mxu0 %v2770
  %9389 = vmatpush.bf16.msra.mxu0 %v2762
  %9390 = vmatpush.bf16.msra.mxu0 %v2754
  %9391 = vmatpush.bf16.msra.mxu0 %v2746
  %9392 = vmatpush.bf16.msra.mxu0 %v2738
  %9393 = vmatpush.bf16.msra.mxu0 %v2730
  %9394 = vmatpush.bf16.msra.mxu0 %v2722
  %9395 = vmatmul.bf16.gmra.mxu0 %v8682
  %v9396 = vpop.f32.mrf.mxu0
  %v9397 = vadd.f32 %v9384, %v9396
  %v9398 = vpop.f32.mrf.mxu0
  %9399 = vdwg.mxu0
  %9400 = vmatpush.bf16.msra.mxu0 %v2715
  %9401 = vmatpush.bf16.msra.mxu0 %v2707
  %9402 = vmatpush.bf16.msra.mxu0 %v2699
  %9403 = vmatpush.bf16.msra.mxu0 %v2691
  %9404 = vmatpush.bf16.msra.mxu0 %v2683
  %9405 = vmatpush.bf16.msra.mxu0 %v2675
  %9406 = vmatpush.bf16.msra.mxu0 %v2667
  %9407 = vmatpush.bf16.msra.mxu0 %v2659
  %9408 = vmatmul.bf16.gmra.mxu0 %v8681
  %v9409 = vpop.f32.mrf.mxu0
  %v9410 = vadd.f32 0.0, %v9409
  %v9411 = vpop.f32.mrf.mxu0
  %9412 = vdwg.mxu0
  %9413 = vmatpush.bf16.msra.mxu0 %v2779
  %9414 = vmatpush.bf16.msra.mxu0 %v2771
  %9415 = vmatpush.bf16.msra.mxu0 %v2763
  %9416 = vmatpush.bf16.msra.mxu0 %v2755
  %9417 = vmatpush.bf16.msra.mxu0 %v2747
  %9418 = vmatpush.bf16.msra.mxu0 %v2739
  %9419 = vmatpush.bf16.msra.mxu0 %v2731
  %9420 = vmatpush.bf16.msra.mxu0 %v2723
  %9421 = vmatmul.bf16.gmra.mxu0 %v8682
  %v9422 = vpop.f32.mrf.mxu0
  %v9423 = vadd.f32 %v9410, %v9422
  %v9424 = vpop.f32.mrf.mxu0
  %9425 = vdwg.mxu0
  %9426 = vmatpush.bf16.msra.mxu0 %v2716
  %9427 = vmatpush.bf16.msra.mxu0 %v2708
  %9428 = vmatpush.bf16.msra.mxu0 %v2700
  %9429 = vmatpush.bf16.msra.mxu0 %v2692
  %9430 = vmatpush.bf16.msra.mxu0 %v2684
  %9431 = vmatpush.bf16.msra.mxu0 %v2676
  %9432 = vmatpush.bf16.msra.mxu0 %v2668
  %9433 = vmatpush.bf16.msra.mxu0 %v2660
  %9434 = vmatmul.bf16.gmra.mxu0 %v8681
  %v9435 = vpop.f32.mrf.mxu0
  %v9436 = vadd.f32 0.0, %v9435
  %v9437 = vpop.f32.mrf.mxu0
  %9438 = vdwg.mxu0
  %9439 = vmatpush.bf16.msra.mxu0 %v2780
  %9440 = vmatpush.bf16.msra.mxu0 %v2772
  %9441 = vmatpush.bf16.msra.mxu0 %v2764
  %9442 = vmatpush.bf16.msra.mxu0 %v2756
  %9443 = vmatpush.bf16.msra.mxu0 %v2748
  %9444 = vmatpush.bf16.msra.mxu0 %v2740
  %9445 = vmatpush.bf16.msra.mxu0 %v2732
  %9446 = vmatpush.bf16.msra.mxu0 %v2724
  %9447 = vmatmul.bf16.gmra.mxu0 %v8682
  %v9448 = vpop.f32.mrf.mxu0
  %v9449 = vadd.f32 %v9436, %v9448
  %v9450 = vpop.f32.mrf.mxu0
  %9451 = vdwg.mxu0
  %v9452 = vadd.f32 %v9059, %v9267
  %v9453 = vadd.f32 %v9085, %v9293
  %v9454 = vadd.f32 %v9111, %v9319
  %v9455 = vadd.f32 %v9137, %v9345
  %v9456 = vadd.f32 %v9163, %v9371
  %v9457 = vadd.f32 %v9189, %v9397
  %v9458 = vadd.f32 %v9215, %v9423
  %v9459 = vadd.f32 %v9241, %v9449
  %v9460 = vxor.u32 %v9452, 2147483648
  %v9461 = vxor.u32 %v9453, 2147483648
  %v9462 = vmul.f32 %v9460, 1.442695
  %v9463 = vpow.pop %v9462
  %v9464 = vmul.f32 %v9461, 1.442695
  %v9465 = vpow.pop %v9464
  %v9466 = vadd.f32 %v9463, 1.0
  %v9467 = vadd.f32 %v9465, 1.0
  %v9468 = vrcp.pop %v9466
  %v9469 = vmul.f32 %v9466, %v9468
  %v9470 = vsub.f32 1.0, %v9469
  %v9471 = vmul.f32 %v9468, %v9470
  %v9472 = vadd.f32 %v9468, %v9471
  %vm9473 = vweird.f32 %v9466
  %vm9474 = vweird.f32 %v9468
  %vm9475 = vmor %vm9473, %vm9474
  %v9476 = vsel %vm9475, %v9468, %v9472
  %v9477 = vand.u32 2147483647, %v9466
  %vm9478 = vcmp.eq.f32.partialorder %v9477, 8.507059e+37
  %v9479 = vand.u32 %v9466, 2147483648
  %v9480 = vor.u32 1.1754944e-38, %v9479
  %v9481 = vsel %vm9478, %v9480, %v9476
  %v9482 = vmul.f32 1.0, %v9481
  %v9483 = vrcp.pop %v9467
  %v9484 = vmul.f32 %v9467, %v9483
  %v9485 = vsub.f32 1.0, %v9484
  %v9486 = vmul.f32 %v9483, %v9485
  %v9487 = vadd.f32 %v9483, %v9486
  %vm9488 = vweird.f32 %v9467
  %vm9489 = vweird.f32 %v9483
  %vm9490 = vmor %vm9488, %vm9489
  %v9491 = vsel %vm9490, %v9483, %v9487
  %v9492 = vand.u32 2147483647, %v9467
  %vm9493 = vcmp.eq.f32.partialorder %v9492, 8.507059e+37
  %v9494 = vand.u32 %v9467, 2147483648
  %v9495 = vor.u32 1.1754944e-38, %v9494
  %v9496 = vsel %vm9493, %v9495, %v9491
  %v9497 = vmul.f32 1.0, %v9496
  %v9498 = vxor.u32 %v9454, 2147483648
  %v9499 = vxor.u32 %v9455, 2147483648
  %v9500 = vmul.f32 %v9498, 1.442695
  %v9501 = vpow.pop %v9500
  %v9502 = vmul.f32 %v9499, 1.442695
  %v9503 = vpow.pop %v9502
  %v9504 = vadd.f32 %v9501, 1.0
  %v9505 = vadd.f32 %v9503, 1.0
  %v9506 = vrcp.pop %v9504
  %v9507 = vmul.f32 %v9504, %v9506
  %v9508 = vsub.f32 1.0, %v9507
  %v9509 = vmul.f32 %v9506, %v9508
  %v9510 = vadd.f32 %v9506, %v9509
  %vm9511 = vweird.f32 %v9504
  %vm9512 = vweird.f32 %v9506
  %vm9513 = vmor %vm9511, %vm9512
  %v9514 = vsel %vm9513, %v9506, %v9510
  %v9515 = vand.u32 2147483647, %v9504
  %vm9516 = vcmp.eq.f32.partialorder %v9515, 8.507059e+37
  %v9517 = vand.u32 %v9504, 2147483648
  %v9518 = vor.u32 1.1754944e-38, %v9517
  %v9519 = vsel %vm9516, %v9518, %v9514
  %v9520 = vmul.f32 1.0, %v9519
  %v9521 = vrcp.pop %v9505
  %v9522 = vmul.f32 %v9505, %v9521
  %v9523 = vsub.f32 1.0, %v9522
  %v9524 = vmul.f32 %v9521, %v9523
  %v9525 = vadd.f32 %v9521, %v9524
  %vm9526 = vweird.f32 %v9505
  %vm9527 = vweird.f32 %v9521
  %vm9528 = vmor %vm9526, %vm9527
  %v9529 = vsel %vm9528, %v9521, %v9525
  %v9530 = vand.u32 2147483647, %v9505
  %vm9531 = vcmp.eq.f32.partialorder %v9530, 8.507059e+37
  %v9532 = vand.u32 %v9505, 2147483648
  %v9533 = vor.u32 1.1754944e-38, %v9532
  %v9534 = vsel %vm9531, %v9533, %v9529
  %v9535 = vmul.f32 1.0, %v9534
  %v9536 = vtanh.pop %v9456
  %v9537 = vtanh.pop %v9457
  %v9538 = vxor.u32 %v9458, 2147483648
  %v9539 = vxor.u32 %v9459, 2147483648
  %v9540 = vmul.f32 %v9538, 1.442695
  %v9541 = vpow.pop %v9540
  %v9542 = vmul.f32 %v9539, 1.442695
  %v9543 = vpow.pop %v9542
  %v9544 = vadd.f32 %v9541, 1.0
  %v9545 = vadd.f32 %v9543, 1.0
  %v9546 = vrcp.pop %v9544
  %v9547 = vmul.f32 %v9544, %v9546
  %v9548 = vsub.f32 1.0, %v9547
  %v9549 = vmul.f32 %v9546, %v9548
  %v9550 = vadd.f32 %v9546, %v9549
  %vm9551 = vweird.f32 %v9544
  %vm9552 = vweird.f32 %v9546
  %vm9553 = vmor %vm9551, %vm9552
  %v9554 = vsel %vm9553, %v9546, %v9550
  %v9555 = vand.u32 2147483647, %v9544
  %vm9556 = vcmp.eq.f32.partialorder %v9555, 8.507059e+37
  %v9557 = vand.u32 %v9544, 2147483648
  %v9558 = vor.u32 1.1754944e-38, %v9557
  %v9559 = vsel %vm9556, %v9558, %v9554
  %v9560 = vmul.f32 1.0, %v9559
  %v9561 = vrcp.pop %v9545
  %v9562 = vmul.f32 %v9545, %v9561
  %v9563 = vsub.f32 1.0, %v9562
  %v9564 = vmul.f32 %v9561, %v9563
  %v9565 = vadd.f32 %v9561, %v9564
  %vm9566 = vweird.f32 %v9545
  %vm9567 = vweird.f32 %v9561
  %vm9568 = vmor %vm9566, %vm9567
  %v9569 = vsel %vm9568, %v9561, %v9565
  %v9570 = vand.u32 2147483647, %v9545
  %vm9571 = vcmp.eq.f32.partialorder %v9570, 8.507059e+37
  %v9572 = vand.u32 %v9545, 2147483648
  %v9573 = vor.u32 1.1754944e-38, %v9572
  %v9574 = vsel %vm9571, %v9573, %v9569
  %v9575 = vmul.f32 1.0, %v9574
  %v9576 = vmul.f32 %v9520, %v8675
  %v9577 = vmul.f32 %v9535, %v8676
  %v9578 = vmul.f32 %v9482, %v9536
  %v9579 = vmul.f32 %v9497, %v9537
  %v9580 = vadd.f32 %v9576, %v9578
  %v9581 = vadd.f32 %v9577, %v9579
  %v9582 = vtanh.pop %v9580
  %v9583 = vtanh.pop %v9581
  %v9584 = vmul.f32 %v9560, %v9582
  %v9585 = vmul.f32 %v9575, %v9583
  %v9586 = vpack.c.bf16 %v9584, %v9584
  %v9587 = vpack.c.bf16 %v9585, %v9585
  %v9588 = vld [vmem:[%s5] sm:$0xf]
  %v9589 = vld [vmem:[%s5 + $0x4] sm:$0xf]
  %v9590 = vld [vmem:[%s5 + $0x8] sm:$0xf]
  %v9591 = vld [vmem:[%s5 + $0xc] sm:$0xf]
  %v9592 = vld [vmem:[%s5 + $0x10] sm:$0xf]
  %v9593 = vld [vmem:[%s5 + $0x14] sm:$0xf]
  %v9594 = vld [vmem:[%s5 + $0x18] sm:$0xf]
  %v9595 = vld [vmem:[%s5 + $0x1c] sm:$0xf]
  %v9596 = vld [vmem:[%s5 + $0x20] sm:$0xf]
  %v9597 = vld [vmem:[%s5 + $0x24] sm:$0xf]
  %v9598 = vld [vmem:[%s5 + $0x28] sm:$0xf]
  %v9599 = vld [vmem:[%s5 + $0x2c] sm:$0xf]
  %v9600 = vld [vmem:[%s5 + $0x30] sm:$0xf]
  %v9601 = vld [vmem:[%s5 + $0x34] sm:$0xf]
  %v9602 = vld [vmem:[%s5 + $0x38] sm:$0xf]
  %v9603 = vld [vmem:[%s5 + $0x3c] sm:$0xf]
  %v9604 = vld [vmem:[%s5 + $0x40] sm:$0xf]
  %v9605 = vld [vmem:[%s5 + $0x44] sm:$0xf]
  %v9606 = vld [vmem:[%s5 + $0x48] sm:$0xf]
  %v9607 = vld [vmem:[%s5 + $0x4c] sm:$0xf]
  %v9608 = vld [vmem:[%s5 + $0x50] sm:$0xf]
  %v9609 = vld [vmem:[%s5 + $0x54] sm:$0xf]
  %v9610 = vld [vmem:[%s5 + $0x58] sm:$0xf]
  %v9611 = vld [vmem:[%s5 + $0x5c] sm:$0xf]
  %v9612 = vld [vmem:[%s5 + $0x60] sm:$0xf]
  %v9613 = vld [vmem:[%s5 + $0x64] sm:$0xf]
  %v9614 = vld [vmem:[%s5 + $0x68] sm:$0xf]
  %v9615 = vld [vmem:[%s5 + $0x6c] sm:$0xf]
  %v9616 = vld [vmem:[%s5 + $0x70] sm:$0xf]
  %v9617 = vld [vmem:[%s5 + $0x74] sm:$0xf]
  %v9618 = vld [vmem:[%s5 + $0x78] sm:$0xf]
  %v9619 = vld [vmem:[%s5 + $0x7c] sm:$0xf]
  %v9620 = vld [vmem:[%s6] sm:$0x1]
  %v9622 = vperm.slane %v9620, 0
  %v9656 = vunpack.c.l.b16 %v9588
  %v9657 = vunpack.c.l.b16 %v9589
  %v9658 = vunpack.c.l.b16 %v9590
  %v9659 = vunpack.c.l.b16 %v9591
  %v9660 = vunpack.c.l.b16 %v9592
  %v9661 = vunpack.c.l.b16 %v9593
  %v9662 = vunpack.c.l.b16 %v9594
  %v9663 = vunpack.c.l.b16 %v9595
  %v9664 = vunpack.c.l.b16 %v9596
  %v9665 = vunpack.c.l.b16 %v9597
  %v9666 = vunpack.c.l.b16 %v9598
  %v9667 = vunpack.c.l.b16 %v9599
  %v9668 = vunpack.c.l.b16 %v9600
  %v9669 = vunpack.c.l.b16 %v9601
  %v9670 = vunpack.c.l.b16 %v9602
  %v9671 = vunpack.c.l.b16 %v9603
  %v9672 = vunpack.c.l.b16 %v9604
  %v9673 = vunpack.c.l.b16 %v9605
  %v9674 = vunpack.c.l.b16 %v9606
  %v9675 = vunpack.c.l.b16 %v9607
  %v9676 = vunpack.c.l.b16 %v9608
  %v9677 = vunpack.c.l.b16 %v9609
  %v9678 = vunpack.c.l.b16 %v9610
  %v9679 = vunpack.c.l.b16 %v9611
  %v9680 = vunpack.c.l.b16 %v9612
  %v9681 = vunpack.c.l.b16 %v9613
  %v9682 = vunpack.c.l.b16 %v9614
  %v9683 = vunpack.c.l.b16 %v9615
  %v9684 = vunpack.c.l.b16 %v9616
  %v9685 = vunpack.c.l.b16 %v9617
  %v9686 = vunpack.c.l.b16 %v9618
  %v9687 = vunpack.c.l.b16 %v9619
  %v9688 = vpack.c.b16 %v9657, %v9656
  %v9689 = vpack.c.b16 %v9659, %v9658
  %v9690 = vpack.c.b16 %v9661, %v9660
  %v9691 = vpack.c.b16 %v9663, %v9662
  %v9692 = vpack.c.b16 %v9665, %v9664
  %v9693 = vpack.c.b16 %v9667, %v9666
  %v9694 = vpack.c.b16 %v9669, %v9668
  %v9695 = vpack.c.b16 %v9671, %v9670
  %v9696 = vpack.c.b16 %v9673, %v9672
  %v9697 = vpack.c.b16 %v9675, %v9674
  %v9698 = vpack.c.b16 %v9677, %v9676
  %v9699 = vpack.c.b16 %v9679, %v9678
  %v9700 = vpack.c.b16 %v9681, %v9680
  %v9701 = vpack.c.b16 %v9683, %v9682
  %v9702 = vpack.c.b16 %v9685, %v9684
  %v9703 = vpack.c.b16 %v9687, %v9686
  %9720 = vmatpush.bf16.msra.mxu0 %v9695
  %9721 = vmatpush.bf16.msra.mxu0 %v9694
  %9722 = vmatpush.bf16.msra.mxu0 %v9693
  %9723 = vmatpush.bf16.msra.mxu0 %v9692
  %9724 = vmatpush.bf16.msra.mxu0 %v9691
  %9725 = vmatpush.bf16.msra.mxu0 %v9690
  %9726 = vmatpush.bf16.msra.mxu0 %v9689
  %9727 = vmatpush.bf16.msra.mxu0 %v9688
  %9728 = vmatmul.bf16.gmra.mxu0 %v9586
  %v9729 = vpop.f32.mrf.mxu0
  %v9730 = vadd.f32 %v9622, %v9729
  %v9731 = vpop.f32.mrf.mxu0
  %9732 = vdwg.mxu0
  %9733 = vmatpush.bf16.msra.mxu0 %v9703
  %9734 = vmatpush.bf16.msra.mxu0 %v9702
  %9735 = vmatpush.bf16.msra.mxu0 %v9701
  %9736 = vmatpush.bf16.msra.mxu0 %v9700
  %9737 = vmatpush.bf16.msra.mxu0 %v9699
  %9738 = vmatpush.bf16.msra.mxu0 %v9698
  %9739 = vmatpush.bf16.msra.mxu0 %v9697
  %9740 = vmatpush.bf16.msra.mxu0 %v9696
  %9741 = vmatmul.bf16.gmra.mxu0 %v9587
  %v9742 = vpop.f32.mrf.mxu0
  %v9743 = vadd.f32 %v9730, %v9742
  %v9744 = vpop.f32.mrf.mxu0
  %9745 = vdwg.mxu0
  %9746 = vst [vmem:[%s7] sm:$0xff] %v9743
  // Predicated region
  $region30: #{lstm_forward.1} parent=0 // pred_check
    _
  $region31: #{lstm_forward.1} parent=0 // pred_check_branch
    %9748 = sbr.rel (0) target = $region33
  $region32: #{lstm_forward.1} parent=0 // pred_region
    _
  $region33: #{lstm_forward.1} parent=0 // pred_fallthru
    _
  // Predicated region
  $region34: #{lstm_forward.1} parent=0 // pred_check
    _
  $region35: #{lstm_forward.1} parent=0 // pred_check_branch
    %9750 = sbr.rel (0) target = $region37
  $region36: #{lstm_forward.1} parent=0 // pred_region
    _
  $region37: #{lstm_forward.1} parent=0 // pred_fallthru
    _

</llo_original>
